<compile_context>
chip_gen: v5e
topology: v5e:2x2
jax: 0.10.0
libtpu: 0.0.40
codegen_flags: <defaults>
</compile_context>

<pallas_src>
import functools
import math

import jax
import jax.numpy as jnp
from jax.experimental import pallas as pl
from jax.experimental.pallas import tpu as pltpu

# ----------------------------- config (small, synthetic) -----------------------------
N_EMBD = 32
N_HEAD = 4
HEAD_DIM = N_EMBD // N_HEAD
BLOCK_SIZE = 16
VOCAB = 64
VOCAB_PAD = 128                    # lane-dense lm_head output (zero pad, sliced off outside)
N_LAYER = 2
LORA_R = 16
LORA_SCALE = 1.0 / LORA_R          # loralib default lora_alpha=1 -> alpha / r
LN_EPS = 1e-5                      # nn.LayerNorm default
VIS_IN = 1408                      # visual_projection: 1408 -> 1088 -> n_embd
VIS_MID = 1088

VMEM_SPEC = pl.BlockSpec(memory_space=pltpu.MemorySpace.VMEM)
GELU_C = math.sqrt(2.0 / math.pi)
NEG_INF = -1e30                    # safe masked_fill value (every row has >=1 valid col)


# ------------------------------- in-kernel helpers -------------------------------------
def _ln(x, g, b):
    mu = jnp.mean(x, axis=-1, keepdims=True)
    xc = x - mu
    var = jnp.mean(xc * xc, axis=-1, keepdims=True)
    return xc * jax.lax.rsqrt(var + LN_EPS) * g + b


def _gelu_tanh(x):
    # matches nn.GELU(approximate='tanh')
    return 0.5 * x * (1.0 + jnp.tanh(GELU_C * (x + 0.044715 * x * x * x)))


def _bf16(x):
    return x.astype(jnp.bfloat16)


# --------------------------------- Pallas kernels -------------------------------------
def _visproj_kernel(vf_ref, w1_ref, b1_ref, w2_ref, b2_ref, g_ref, b_ref, o_ref):
    # Linear(1408->1088) -> Linear(1088->C) -> LayerNorm, fused.  bf16 MXU operands,
    # f32 accumulation; all elementwise in f32 (v5e has no bf16 VPU/EUP).
    h = jnp.dot(vf_ref[...], w1_ref[...], preferred_element_type=jnp.float32) + b1_ref[...]
    h = jnp.dot(_bf16(h), w2_ref[...], preferred_element_type=jnp.float32) + b2_ref[...]
    o_ref[...] = _ln(h, g_ref[...], b_ref[...])


def _token_kernel(*refs, batch, n_vis, n_txt, seq):
    """Entire token path in ONE kernel: prefix assembly + position add, N_LAYER
    transformer blocks, final LayerNorm and lm_head.

    Attention is computed per head over ALL rows at once; batches are kept separate
    with a block-diagonal causal mask on the (M, M) score matrix (built once, reused by
    every layer).  Raw scaled pre-mask scores (PyTorch `att1`) are stored per layer
    directly in (B, H, T, T).  Head outputs land in lane slices of a (M, C) VMEM
    scratch so c_proj is a single matmul per layer.
    """
    n_in = 6 + 12 * N_LAYER
    vis_ref, tok_ref, wpe_ref, lnf_g, lnf_b, lm_w = refs[:6]
    layer_refs = refs[6:n_in]
    logits_ref = refs[n_in]
    att_refs = refs[n_in + 1:n_in + 1 + N_LAYER]
    acc_ref = refs[n_in + 1 + N_LAYER]                               # (M, C) f32 scratch

    B, T, C, H, Dh = batch, seq, N_EMBD, N_HEAD, HEAD_DIM
    M = B * T
    scale = 1.0 / math.sqrt(Dh)

    # ---- prefix concat + narrow(block_size) + position add (flat (M, C), 8-aligned) ----
    vis = vis_ref[...]                                               # (B*n_vis, C) f32
    tok = tok_ref[...]                                               # (B*n_txt, C) f32
    pos = wpe_ref[...][:T]                                           # (T, C) f32
    pieces = []
    for b in range(B):
        xb = jnp.concatenate(
            [vis[b * n_vis:(b + 1) * n_vis], tok[b * n_txt:(b + 1) * n_txt]], axis=0)[:T]
        pieces.append(xb + pos)
    x = pieces[0] if B == 1 else jnp.concatenate(pieces, axis=0)     # (M, C) f32

    # ---- block-diagonal causal mask: built ONCE, reused across all layers ----
    rows = jax.lax.broadcasted_iota(jnp.int32, (M, M), 0)
    cols = jax.lax.broadcasted_iota(jnp.int32, (M, M), 1)
    same_batch = rows < 0                                            # all-False init
    for b in range(B):
        in_r = (rows >= b * T) & (rows < (b + 1) * T)
        in_c = (cols >= b * T) & (cols < (b + 1) * T)
        same_batch = same_batch | (in_r & in_c)
    valid = same_batch & (cols <= rows)
    trans = (((1,), (1,)), ((), ()))                                 # q @ k^T, no transpose

    # ---- transformer blocks (static layer loop, everything resident in vregs) ----
    for layer in range(N_LAYER):
        (ln1_g, ln1_b, attn_w, attn_b, proj_w, proj_b,
         ln2_g, ln2_b, fc_w, fc_b, mproj_w, mproj_b) = layer_refs[12 * layer:12 * (layer + 1)]
        att_ref = att_refs[layer]

        h = _ln(x, ln1_g[...], ln1_b[...])
        qkv = jnp.dot(_bf16(h), attn_w[...],
                      preferred_element_type=jnp.float32) + attn_b[...]    # (M, 3C) f32

        for hh in range(H):
            qh = _bf16(qkv[:, hh * Dh:(hh + 1) * Dh])                      # (M, Dh)
            kh = _bf16(qkv[:, C + hh * Dh:C + (hh + 1) * Dh])
            vh = _bf16(qkv[:, 2 * C + hh * Dh:2 * C + (hh + 1) * Dh])
            s = jax.lax.dot_general(qh, kh, trans,
                                    preferred_element_type=jnp.float32) * scale   # (M, M)
            # raw scaled pre-mask scores (PyTorch att1), written straight as (B, H, T, T)
            for b in range(B):
                att_ref[b, hh] = s[b * T:(b + 1) * T, b * T:(b + 1) * T]
            sm = jnp.where(valid, s, NEG_INF)
            sm = sm - jnp.max(sm, axis=-1, keepdims=True)
            p = jnp.exp(sm)
            p = p * pl.reciprocal(jnp.sum(p, axis=-1, keepdims=True), approx=True)
            # place this head's output in its lane slice of the (M, C) scratch
            acc_ref[:, hh * Dh:(hh + 1) * Dh] = jnp.dot(
                _bf16(p), vh, preferred_element_type=jnp.float32)

        heads = acc_ref[...]                                               # (M, C) f32
        x = x + jnp.dot(_bf16(heads), proj_w[...],
                        preferred_element_type=jnp.float32) + proj_b[...]  # residual 1

        h2 = _ln(x, ln2_g[...], ln2_b[...])
        m = _gelu_tanh(jnp.dot(_bf16(h2), fc_w[...],
                               preferred_element_type=jnp.float32) + fc_b[...])
        x = x + jnp.dot(_bf16(m), mproj_w[...],
                        preferred_element_type=jnp.float32) + mproj_b[...]  # residual 2

    # ---- final LayerNorm + bias-less (LoRA-merged, tied) lm_head ----
    hf = _ln(x, lnf_g[...], lnf_b[...])
    logits_ref[...] = jnp.dot(_bf16(hf), lm_w[...],
                              preferred_element_type=jnp.float32)           # (M, 128) f32


# --------------------------------- kernel wrappers -------------------------------------
def visual_prefix(params, image_features):
    B, Nv, _ = image_features.shape
    # bf16 cast in the wrapper (halves the activation DMA, no in-kernel astype copy)
    vf = image_features.astype(jnp.bfloat16).reshape(B * Nv, VIS_IN)
    return pl.pallas_call(
        _visproj_kernel,
        in_specs=[VMEM_SPEC] * 7,
        out_specs=VMEM_SPEC,
        out_shape=jax.ShapeDtypeStruct((B * Nv, N_EMBD), jnp.float32),
    )(vf, params['vp_w'], params['vp_b'], params['vp2_w'], params['vp2_b'],
      params['ln_g'], params['ln_b'])                                  # (B*Nv, C) f32


def token_path(params, vis_flat, tok_flat, batch, n_vis, n_txt):
    T = min(n_vis + n_txt, BLOCK_SIZE)                                # torch.narrow
    M = batch * T
    layer_args = []
    for blk in params['blocks']:
        layer_args += [blk[k] for k in ('ln1_g', 'ln1_b', 'attn_w', 'attn_b',
                                        'proj_w', 'proj_b', 'ln2_g', 'ln2_b',
                                        'fc_w', 'fc_b', 'mproj_w', 'mproj_b')]
    n_in = 6 + len(layer_args)
    out_shape = (jax.ShapeDtypeStruct((M, VOCAB_PAD), jnp.float32),) + tuple(
        jax.ShapeDtypeStruct((batch, N_HEAD, T, T), jnp.float32) for _ in range(N_LAYER))

    outs = pl.pallas_call(
        functools.partial(_token_kernel, batch=batch, n_vis=n_vis, n_txt=n_txt, seq=T),
        in_specs=[VMEM_SPEC] * n_in,
        out_specs=(VMEM_SPEC,) * (1 + N_LAYER),
        out_shape=out_shape,
        scratch_shapes=[pltpu.VMEM((M, N_EMBD), jnp.float32)],
    )(vis_flat, tok_flat, params['wpe'], params['lnf_g'], params['lnf_b'],
      params['lm_w'], *layer_args)

    logits = outs[0][:, :VOCAB].reshape(batch, T, VOCAB)              # drop lane padding
    return logits, list(outs[1:])


# ------------------------------ parameter construction --------------------------------
def init_params(key):
    keys = iter(jax.random.split(key, 64))

    def nrm(shape, scale=0.02):
        return scale * jax.random.normal(next(keys), shape, dtype=jnp.float32)

    def lora_merged(in_dim, out_dim):
        # loralib merged weight: W_eff = W + scaling * (B @ A), pytorch layout (out, in)
        w = nrm((out_dim, in_dim))
        a = nrm((LORA_R, in_dim))
        b = nrm((out_dim, LORA_R))
        return ((w + LORA_SCALE * (b @ a)).T).astype(jnp.bfloat16)    # stored (in, out) bf16

    # tied embedding / lm_head (LoRA, bias=False): wte uses the BASE weight,
    # lm_head uses the merged weight; vocab axis zero-padded 64 -> 128 for lane-dense stores
    wte = nrm((VOCAB, N_EMBD))
    lm_a = nrm((LORA_R, N_EMBD))
    lm_b = nrm((VOCAB, LORA_R))
    lm_full = (wte + LORA_SCALE * (lm_b @ lm_a)).T                    # (C, VOCAB)
    lm_w = jnp.zeros((N_EMBD, VOCAB_PAD), jnp.float32).at[:, :VOCAB].set(lm_full)
    lm_w = lm_w.astype(jnp.bfloat16)

    blocks = []
    for _ in range(N_LAYER):
        blocks.append(dict(
            ln1_g=jnp.ones((1, N_EMBD), jnp.float32), ln1_b=jnp.zeros((1, N_EMBD), jnp.float32),
            ln2_g=jnp.ones((1, N_EMBD), jnp.float32), ln2_b=jnp.zeros((1, N_EMBD), jnp.float32),
            attn_w=nrm((N_EMBD, 3 * N_EMBD)).astype(jnp.bfloat16), attn_b=nrm((1, 3 * N_EMBD)),
            proj_w=nrm((N_EMBD, N_EMBD)).astype(jnp.bfloat16), proj_b=nrm((1, N_EMBD)),
            fc_w=lora_merged(N_EMBD, 4 * N_EMBD), fc_b=nrm((1, 4 * N_EMBD)),
            mproj_w=lora_merged(4 * N_EMBD, N_EMBD), mproj_b=nrm((1, N_EMBD)),
        ))
        # NOTE: Block.ln_3 exists in __init__ but is unused in forward -> omitted.

    return dict(
        wte=wte,
        wpe=nrm((BLOCK_SIZE, N_EMBD)),
        blocks=blocks,
        lnf_g=jnp.ones((1, N_EMBD), jnp.float32), lnf_b=jnp.zeros((1, N_EMBD), jnp.float32),
        ln_g=jnp.ones((1, N_EMBD), jnp.float32), ln_b=jnp.zeros((1, N_EMBD), jnp.float32),
        # visual-projection weights in bf16: halves the only meaningful HBM traffic
        vp_w=nrm((VIS_IN, VIS_MID)).astype(jnp.bfloat16), vp_b=nrm((1, VIS_MID)),
        vp2_w=nrm((VIS_MID, N_EMBD)).astype(jnp.bfloat16), vp2_b=nrm((1, N_EMBD)),
        lm_w=lm_w,
    )


# ------------------------------------ forward ------------------------------------------
def modified_decoder_forward(params, tokens, image_features):
    B, n_txt = tokens.shape
    n_vis = image_features.shape[1]

    # kernel 1: fused visual projection (Linear -> Linear -> LayerNorm)
    vis_flat = visual_prefix(params, image_features)                  # (B*Nv, C)

    # embedding gather stays as thin XLA glue (flat, no extra reshapes downstream)
    tok_flat = jnp.take(params['wte'], tokens.reshape(-1), axis=0)    # (B*n_txt, C)

    # kernel 2: entire token path (prefix assembly + pos add + 2 blocks + ln_f + lm_head)
    logits, attn_list = token_path(params, vis_flat, tok_flat, B, n_vis, n_txt)
    return logits, attn_list


# -------------------------------------- main --------------------------------------------
if __name__ == "__main__":
    key = jax.random.PRNGKey(0)
    k_params, k_tok, k_img = jax.random.split(key, 3)

    params = init_params(k_params)

    # 8 visual + 8 text tokens -> T = 16 = block_size (keeps every in-kernel slice/concat
    # on 8-sublane boundaries, i.e. layout-trivial).
    B, T_TXT, N_VIS = 2, 8, 8
    tokens = jax.random.randint(k_tok, (B, T_TXT), 0, VOCAB)                     # (2, 8) int32
    image_features = jax.random.normal(k_img, (B, N_VIS, VIS_IN), jnp.float32)   # (2, 8, 1408)

    fwd = jax.jit(modified_decoder_forward)
    logits, attn_list = fwd(params, tokens, image_features)
    jax.block_until_ready(logits)
    jax.block_until_ready(attn_list)

    T = N_VIS + T_TXT
    assert logits.shape == (B, T, VOCAB)
    assert len(attn_list) == N_LAYER
    assert attn_list[0].shape == (B, N_HEAD, T, T)
    assert bool(jnp.all(jnp.isfinite(logits)))
    assert bool(jnp.all(jnp.isfinite(attn_list[0])))
    print("KERNEL_OK")
</pallas_src>

<mosaic_0001>
module attributes {stable_mosaic.version = 11 : i64} {
  func.func @_visproj_kernel(%arg0: memref<16x1408xbf16, #tpu.memory_space<vmem>>, %arg1: memref<1408x1088xbf16, #tpu.memory_space<vmem>>, %arg2: memref<1x1088xf32, #tpu.memory_space<vmem>>, %arg3: memref<1088x32xbf16, #tpu.memory_space<vmem>>, %arg4: memref<1x32xf32, #tpu.memory_space<vmem>>, %arg5: memref<1x32xf32, #tpu.memory_space<vmem>>, %arg6: memref<1x32xf32, #tpu.memory_space<vmem>>, %arg7: memref<16x32xf32, #tpu.memory_space<vmem>>) attributes {dimension_semantics = [], scalar_prefetch = 0 : i64, scratch_operands = 0 : i64, tpu.core_type = #tpu.core_type<tc>} {
    %c0 = arith.constant 0 : index
    %c0_0 = arith.constant 0 : index
    %0 = vector.load %arg0[%c0, %c0_0] : memref<16x1408xbf16, #tpu.memory_space<vmem>>, vector<16x1408xbf16>
    %c0_1 = arith.constant 0 : index
    %c0_2 = arith.constant 0 : index
    %1 = vector.load %arg1[%c0_1, %c0_2] : memref<1408x1088xbf16, #tpu.memory_space<vmem>>, vector<1408x1088xbf16>
    %cst = arith.constant dense<0.000000e+00> : vector<16x1088xf32>
    %2 = tpu.matmul %0, %1, %cst {dimension_numbers = #tpu.dot_dimension_numbers<[1], [0], [0], [1], [0, 0, 1, 1], [], []>} : vector<16x1408xbf16>, vector<1408x1088xbf16>, vector<16x1088xf32> -> vector<16x1088xf32>
    %c0_3 = arith.constant 0 : index
    %c0_4 = arith.constant 0 : index
    %3 = vector.load %arg2[%c0_3, %c0_4] : memref<1x1088xf32, #tpu.memory_space<vmem>>, vector<1x1088xf32>
    %4 = vector.broadcast %3 : vector<1x1088xf32> to vector<16x1088xf32>
    %5 = arith.addf %2, %4 : vector<16x1088xf32>
    %6 = arith.truncf %5 : vector<16x1088xf32> to vector<16x1088xbf16>
    %c0_5 = arith.constant 0 : index
    %c0_6 = arith.constant 0 : index
    %7 = vector.load %arg3[%c0_5, %c0_6] : memref<1088x32xbf16, #tpu.memory_space<vmem>>, vector<1088x32xbf16>
    %cst_7 = arith.constant dense<0.000000e+00> : vector<16x32xf32>
    %8 = tpu.matmul %6, %7, %cst_7 {dimension_numbers = #tpu.dot_dimension_numbers<[1], [0], [0], [1], [0, 0, 1, 1], [], []>} : vector<16x1088xbf16>, vector<1088x32xbf16>, vector<16x32xf32> -> vector<16x32xf32>
    %c0_8 = arith.constant 0 : index
    %c0_9 = arith.constant 0 : index
    %9 = vector.load %arg4[%c0_8, %c0_9] : memref<1x32xf32, #tpu.memory_space<vmem>>, vector<1x32xf32>
    %10 = vector.broadcast %9 : vector<1x32xf32> to vector<16x32xf32>
    %11 = arith.addf %8, %10 : vector<16x32xf32>
    %c0_10 = arith.constant 0 : index
    %c0_11 = arith.constant 0 : index
    %12 = vector.load %arg5[%c0_10, %c0_11] : memref<1x32xf32, #tpu.memory_space<vmem>>, vector<1x32xf32>
    %c0_12 = arith.constant 0 : index
    %c0_13 = arith.constant 0 : index
    %13 = vector.load %arg6[%c0_12, %c0_13] : memref<1x32xf32, #tpu.memory_space<vmem>>, vector<1x32xf32>
    %cst_14 = arith.constant dense<0.000000e+00> : vector<16xf32>
    %14 = vector.multi_reduction <add>, %11, %cst_14 [1] : vector<16x32xf32> to vector<16xf32>
    %15 = vector.shape_cast %14 : vector<16xf32> to vector<16x1xf32>
    %cst_15 = arith.constant 3.200000e+01 : f32
    %16 = vector.broadcast %cst_15 : f32 to vector<16x1xf32>
    %17 = arith.divf %15, %16 : vector<16x1xf32>
    %18 = vector.broadcast %17 : vector<16x1xf32> to vector<16x32xf32>
    %19 = arith.subf %11, %18 : vector<16x32xf32>
    %20 = arith.mulf %19, %19 : vector<16x32xf32>
    %cst_16 = arith.constant dense<0.000000e+00> : vector<16xf32>
    %21 = vector.multi_reduction <add>, %20, %cst_16 [1] : vector<16x32xf32> to vector<16xf32>
    %22 = vector.shape_cast %21 : vector<16xf32> to vector<16x1xf32>
    %cst_17 = arith.constant 3.200000e+01 : f32
    %23 = vector.broadcast %cst_17 : f32 to vector<16x1xf32>
    %24 = arith.divf %22, %23 : vector<16x1xf32>
    %cst_18 = arith.constant 9.99999974E-6 : f32
    %25 = vector.broadcast %cst_18 : f32 to vector<16x1xf32>
    %26 = arith.addf %24, %25 : vector<16x1xf32>
    %27 = math.rsqrt %26 : vector<16x1xf32>
    %28 = vector.broadcast %27 : vector<16x1xf32> to vector<16x32xf32>
    %29 = arith.mulf %19, %28 : vector<16x32xf32>
    %30 = vector.broadcast %12 : vector<1x32xf32> to vector<16x32xf32>
    %31 = arith.mulf %29, %30 : vector<16x32xf32>
    %32 = vector.broadcast %13 : vector<1x32xf32> to vector<16x32xf32>
    %33 = arith.addf %31, %32 : vector<16x32xf32>
    %c0_19 = arith.constant 0 : index
    %c0_20 = arith.constant 0 : index
    %34 = vector.load %arg7[%c0_19, %c0_20] : memref<16x32xf32, #tpu.memory_space<vmem>>, vector<16x32xf32>
    tpu.vector_store %arg7[%c0_19, %c0_20], %33 {strides = array<i32>} : memref<16x32xf32, #tpu.memory_space<vmem>>, vector<16x32xf32>,
    return
  }
}

module attributes {stable_mosaic.version = 11 : i64} {
  func.func @_token_kernel(%arg0: memref<16x32xf32, #tpu.memory_space<vmem>>, %arg1: memref<16x32xf32, #tpu.memory_space<vmem>>, %arg2: memref<16x32xf32, #tpu.memory_space<vmem>>, %arg3: memref<1x32xf32, #tpu.memory_space<vmem>>, %arg4: memref<1x32xf32, #tpu.memory_space<vmem>>, %arg5: memref<32x128xbf16, #tpu.memory_space<vmem>>, %arg6: memref<1x32xf32, #tpu.memory_space<vmem>>, %arg7: memref<1x32xf32, #tpu.memory_space<vmem>>, %arg8: memref<32x96xbf16, #tpu.memory_space<vmem>>, %arg9: memref<1x96xf32, #tpu.memory_space<vmem>>, %arg10: memref<32x32xbf16, #tpu.memory_space<vmem>>, %arg11: memref<1x32xf32, #tpu.memory_space<vmem>>, %arg12: memref<1x32xf32, #tpu.memory_space<vmem>>, %arg13: memref<1x32xf32, #tpu.memory_space<vmem>>, %arg14: memref<32x128xbf16, #tpu.memory_space<vmem>>, %arg15: memref<1x128xf32, #tpu.memory_space<vmem>>, %arg16: memref<128x32xbf16, #tpu.memory_space<vmem>>, %arg17: memref<1x32xf32, #tpu.memory_space<vmem>>, %arg18: memref<1x32xf32, #tpu.memory_space<vmem>>, %arg19: memref<1x32xf32, #tpu.memory_space<vmem>>, %arg20: memref<32x96xbf16, #tpu.memory_space<vmem>>, %arg21: memref<1x96xf32, #tpu.memory_space<vmem>>, %arg22: memref<32x32xbf16, #tpu.memory_space<vmem>>, %arg23: memref<1x32xf32, #tpu.memory_space<vmem>>, %arg24: memref<1x32xf32, #tpu.memory_space<vmem>>, %arg25: memref<1x32xf32, #tpu.memory_space<vmem>>, %arg26: memref<32x128xbf16, #tpu.memory_space<vmem>>, %arg27: memref<1x128xf32, #tpu.memory_space<vmem>>, %arg28: memref<128x32xbf16, #tpu.memory_space<vmem>>, %arg29: memref<1x32xf32, #tpu.memory_space<vmem>>, %arg30: memref<32x128xf32, #tpu.memory_space<vmem>>, %arg31: memref<2x4x16x16xf32, #tpu.memory_space<vmem>>, %arg32: memref<2x4x16x16xf32, #tpu.memory_space<vmem>>, %arg33: memref<32x32xf32, #tpu.memory_space<vmem>>) attributes {dimension_semantics = [], scalar_prefetch = 0 : i64, scratch_operands = 1 : i64, tpu.core_type = #tpu.core_type<tc>} {
    %c0 = arith.constant 0 : index
    %c0_0 = arith.constant 0 : index
    %0 = vector.load %arg0[%c0, %c0_0] : memref<16x32xf32, #tpu.memory_space<vmem>>, vector<16x32xf32>
    %c0_1 = arith.constant 0 : index
    %c0_2 = arith.constant 0 : index
    %1 = vector.load %arg1[%c0_1, %c0_2] : memref<16x32xf32, #tpu.memory_space<vmem>>, vector<16x32xf32>
    %c0_3 = arith.constant 0 : index
    %c0_4 = arith.constant 0 : index
    %2 = vector.load %arg2[%c0_3, %c0_4] : memref<16x32xf32, #tpu.memory_space<vmem>>, vector<16x32xf32>
    %3 = vector.extract_strided_slice %0 {offsets = [0, 0], sizes = [8, 32], strides = [1, 1]} : vector<16x32xf32> to vector<8x32xf32>
    %4 = vector.extract_strided_slice %1 {offsets = [0, 0], sizes = [8, 32], strides = [1, 1]} : vector<16x32xf32> to vector<8x32xf32>
    %5 = tpu.concatenate %3, %4 in 0 : vector<8x32xf32>, vector<8x32xf32> -> vector<16x32xf32>
    %6 = arith.addf %5, %2 : vector<16x32xf32>
    %7 = vector.extract_strided_slice %0 {offsets = [8, 0], sizes = [8, 32], strides = [1, 1]} : vector<16x32xf32> to vector<8x32xf32>
    %8 = vector.extract_strided_slice %1 {offsets = [8, 0], sizes = [8, 32], strides = [1, 1]} : vector<16x32xf32> to vector<8x32xf32>
    %9 = tpu.concatenate %7, %8 in 0 : vector<8x32xf32>, vector<8x32xf32> -> vector<16x32xf32>
    %10 = arith.addf %9, %2 : vector<16x32xf32>
    %11 = tpu.concatenate %6, %10 in 0 : vector<16x32xf32>, vector<16x32xf32> -> vector<32x32xf32>
    %12 = tpu.iota {dimensions = array<i32: 0>} : vector<32x32xi32>
    %13 = tpu.iota {dimensions = array<i32: 1>} : vector<32x32xi32>
    %c0_i32 = arith.constant 0 : i32
    %14 = vector.broadcast %c0_i32 : i32 to vector<32x32xi32>
    %15 = arith.cmpi slt, %12, %14 : vector<32x32xi32>
    %c0_i32_5 = arith.constant 0 : i32
    %16 = vector.broadcast %c0_i32_5 : i32 to vector<32x32xi32>
    %17 = arith.cmpi sge, %12, %16 : vector<32x32xi32>
    %c16_i32 = arith.constant 16 : i32
    %18 = vector.broadcast %c16_i32 : i32 to vector<32x32xi32>
    %19 = arith.cmpi slt, %12, %18 : vector<32x32xi32>
    %20 = arith.andi %17, %19 : vector<32x32xi1>
    %c0_i32_6 = arith.constant 0 : i32
    %21 = vector.broadcast %c0_i32_6 : i32 to vector<32x32xi32>
    %22 = arith.cmpi sge, %13, %21 : vector<32x32xi32>
    %c16_i32_7 = arith.constant 16 : i32
    %23 = vector.broadcast %c16_i32_7 : i32 to vector<32x32xi32>
    %24 = arith.cmpi slt, %13, %23 : vector<32x32xi32>
    %25 = arith.andi %22, %24 : vector<32x32xi1>
    %26 = arith.andi %20, %25 : vector<32x32xi1>
    %27 = arith.ori %15, %26 : vector<32x32xi1>
    %c16_i32_8 = arith.constant 16 : i32
    %28 = vector.broadcast %c16_i32_8 : i32 to vector<32x32xi32>
    %29 = arith.cmpi sge, %12, %28 : vector<32x32xi32>
    %c32_i32 = arith.constant 32 : i32
    %30 = vector.broadcast %c32_i32 : i32 to vector<32x32xi32>
    %31 = arith.cmpi slt, %12, %30 : vector<32x32xi32>
    %32 = arith.andi %29, %31 : vector<32x32xi1>
    %c16_i32_9 = arith.constant 16 : i32
    %33 = vector.broadcast %c16_i32_9 : i32 to vector<32x32xi32>
    %34 = arith.cmpi sge, %13, %33 : vector<32x32xi32>
    %c32_i32_10 = arith.constant 32 : i32
    %35 = vector.broadcast %c32_i32_10 : i32 to vector<32x32xi32>
    %36 = arith.cmpi slt, %13, %35 : vector<32x32xi32>
    %37 = arith.andi %34, %36 : vector<32x32xi1>
    %38 = arith.andi %32, %37 : vector<32x32xi1>
    %39 = arith.ori %27, %38 : vector<32x32xi1>
    %40 = arith.cmpi sle, %13, %12 : vector<32x32xi32>
    %41 = arith.andi %39, %40 : vector<32x32xi1>
    %c0_11 = arith.constant 0 : index
    %c0_12 = arith.constant 0 : index
    %42 = vector.load %arg6[%c0_11, %c0_12] : memref<1x32xf32, #tpu.memory_space<vmem>>, vector<1x32xf32>
    %c0_13 = arith.constant 0 : index
    %c0_14 = arith.constant 0 : index
    %43 = vector.load %arg7[%c0_13, %c0_14] : memref<1x32xf32, #tpu.memory_space<vmem>>, vector<1x32xf32>
    %cst = arith.constant dense<0.000000e+00> : vector<32xf32>
    %44 = vector.multi_reduction <add>, %11, %cst [1] : vector<32x32xf32> to vector<32xf32>
    %45 = vector.shape_cast %44 : vector<32xf32> to vector<32x1xf32>
    %cst_15 = arith.constant 3.200000e+01 : f32
    %46 = vector.broadcast %cst_15 : f32 to vector<32x1xf32>
    %47 = arith.divf %45, %46 : vector<32x1xf32>
    %48 = vector.broadcast %47 : vector<32x1xf32> to vector<32x32xf32>
    %49 = arith.subf %11, %48 : vector<32x32xf32>
    %50 = arith.mulf %49, %49 : vector<32x32xf32>
    %cst_16 = arith.constant dense<0.000000e+00> : vector<32xf32>
    %51 = vector.multi_reduction <add>, %50, %cst_16 [1] : vector<32x32xf32> to vector<32xf32>
    %52 = vector.shape_cast %51 : vector<32xf32> to vector<32x1xf32>
    %cst_17 = arith.constant 3.200000e+01 : f32
    %53 = vector.broadcast %cst_17 : f32 to vector<32x1xf32>
    %54 = arith.divf %52, %53 : vector<32x1xf32>
    %cst_18 = arith.constant 9.99999974E-6 : f32
    %55 = vector.broadcast %cst_18 : f32 to vector<32x1xf32>
    %56 = arith.addf %54, %55 : vector<32x1xf32>
    %57 = math.rsqrt %56 : vector<32x1xf32>
    %58 = vector.broadcast %57 : vector<32x1xf32> to vector<32x32xf32>
    %59 = arith.mulf %49, %58 : vector<32x32xf32>
    %60 = vector.broadcast %42 : vector<1x32xf32> to vector<32x32xf32>
    %61 = arith.mulf %59, %60 : vector<32x32xf32>
    %62 = vector.broadcast %43 : vector<1x32xf32> to vector<32x32xf32>
    %63 = arith.addf %61, %62 : vector<32x32xf32>
    %64 = arith.truncf %63 : vector<32x32xf32> to vector<32x32xbf16>
    %c0_19 = arith.constant 0 : index
    %c0_20 = arith.constant 0 : index
    %65 = vector.load %arg8[%c0_19, %c0_20] : memref<32x96xbf16, #tpu.memory_space<vmem>>, vector<32x96xbf16>
    %cst_21 = arith.constant dense<0.000000e+00> : vector<32x96xf32>
    %66 = tpu.matmul %64, %65, %cst_21 {dimension_numbers = #tpu.dot_dimension_numbers<[1], [0], [0], [1], [0, 0, 1, 1], [], []>} : vector<32x32xbf16>, vector<32x96xbf16>, vector<32x96xf32> -> vector<32x96xf32>
    %c0_22 = arith.constant 0 : index
    %c0_23 = arith.constant 0 : index
    %67 = vector.load %arg9[%c0_22, %c0_23] : memref<1x96xf32, #tpu.memory_space<vmem>>, vector<1x96xf32>
    %68 = vector.broadcast %67 : vector<1x96xf32> to vector<32x96xf32>
    %69 = arith.addf %66, %68 : vector<32x96xf32>
    %70 = vector.extract_strided_slice %69 {offsets = [0, 0], sizes = [32, 8], strides = [1, 1]} : vector<32x96xf32> to vector<32x8xf32>
    %71 = arith.truncf %70 : vector<32x8xf32> to vector<32x8xbf16>
    %72 = vector.extract_strided_slice %69 {offsets = [0, 32], sizes = [32, 8], strides = [1, 1]} : vector<32x96xf32> to vector<32x8xf32>
    %73 = arith.truncf %72 : vector<32x8xf32> to vector<32x8xbf16>
    %74 = vector.extract_strided_slice %69 {offsets = [0, 64], sizes = [32, 8], strides = [1, 1]} : vector<32x96xf32> to vector<32x8xf32>
    %75 = arith.truncf %74 : vector<32x8xf32> to vector<32x8xbf16>
    %cst_24 = arith.constant dense<0.000000e+00> : vector<32x32xf32>
    %76 = tpu.matmul %71, %73, %cst_24 {dimension_numbers = #tpu.dot_dimension_numbers<[1], [1], [0], [0], [0, 0, 1, 0], [], []>} : vector<32x8xbf16>, vector<32x8xbf16>, vector<32x32xf32> -> vector<32x32xf32>
    %cst_25 = arith.constant 0.353553385 : f32
    %77 = vector.broadcast %cst_25 : f32 to vector<32x32xf32>
    %78 = arith.mulf %76, %77 : vector<32x32xf32>
    %79 = vector.extract_strided_slice %78 {offsets = [0, 0], sizes = [16, 16], strides = [1, 1]} : vector<32x32xf32> to vector<16x16xf32>
    %c0_26 = arith.constant 0 : index
    %c0_27 = arith.constant 0 : index
    %c0_28 = arith.constant 0 : index
    %c0_29 = arith.constant 0 : index
    %80 = vector.load %arg31[%c0_26, %c0_27, %c0_28, %c0_29] : memref<2x4x16x16xf32, #tpu.memory_space<vmem>>, vector<1x1x16x16xf32>
    %81 = vector.shape_cast %80 : vector<1x1x16x16xf32> to vector<16x16xf32>
    %82 = vector.shape_cast %79 : vector<16x16xf32> to vector<1x1x16x16xf32>
    tpu.vector_store %arg31[%c0_26, %c0_27, %c0_28, %c0_29], %82 {strides = array<i32>} : memref<2x4x16x16xf32, #tpu.memory_space<vmem>>, vector<1x1x16x16xf32>,
    %83 = vector.extract_strided_slice %78 {offsets = [16, 16], sizes = [16, 16], strides = [1, 1]} : vector<32x32xf32> to vector<16x16xf32>
    %c1 = arith.constant 1 : index
    %c0_30 = arith.constant 0 : index
    %c0_31 = arith.constant 0 : index
    %c0_32 = arith.constant 0 : index
    %84 = vector.load %arg31[%c1, %c0_30, %c0_31, %c0_32] : memref<2x4x16x16xf32, #tpu.memory_space<vmem>>, vector<1x1x16x16xf32>
    %85 = vector.shape_cast %84 : vector<1x1x16x16xf32> to vector<16x16xf32>
    %86 = vector.shape_cast %83 : vector<16x16xf32> to vector<1x1x16x16xf32>
    tpu.vector_store %arg31[%c1, %c0_30, %c0_31, %c0_32], %86 {strides = array<i32>} : memref<2x4x16x16xf32, #tpu.memory_space<vmem>>, vector<1x1x16x16xf32>,
    %cst_33 = arith.constant -1.000000e+30 : f32
    %87 = vector.broadcast %cst_33 : f32 to vector<32x32xf32>
    %88 = arith.select %41, %78, %87 : vector<32x32xi1>, vector<32x32xf32>
    %cst_34 = arith.constant dense<0xFF800000> : vector<32xf32>
    %89 = vector.multi_reduction <maximumf>, %88, %cst_34 [1] : vector<32x32xf32> to vector<32xf32>
    %90 = vector.shape_cast %89 : vector<32xf32> to vector<32x1xf32>
    %91 = vector.broadcast %90 : vector<32x1xf32> to vector<32x32xf32>
    %92 = arith.subf %88, %91 : vector<32x32xf32>
    %93 = math.exp %92 : vector<32x32xf32>
    %cst_35 = arith.constant dense<0.000000e+00> : vector<32xf32>
    %94 = vector.multi_reduction <add>, %93, %cst_35 [1] : vector<32x32xf32> to vector<32xf32>
    %95 = vector.shape_cast %94 : vector<32xf32> to vector<32x1xf32>
    %96 = tpu.reciprocal %95 {approx = true} : vector<32x1xf32> -> vector<32x1xf32>
    %97 = vector.broadcast %96 : vector<32x1xf32> to vector<32x32xf32>
    %98 = arith.mulf %93, %97 : vector<32x32xf32>
    %99 = arith.truncf %98 : vector<32x32xf32> to vector<32x32xbf16>
    %cst_36 = arith.constant dense<0.000000e+00> : vector<32x8xf32>
    %100 = tpu.matmul %99, %75, %cst_36 {dimension_numbers = #tpu.dot_dimension_numbers<[1], [0], [0], [1], [0, 0, 1, 1], [], []>} : vector<32x32xbf16>, vector<32x8xbf16>, vector<32x8xf32> -> vector<32x8xf32>
    %c0_37 = arith.constant 0 : index
    %c0_38 = arith.constant 0 : index
    %101 = vector.load %arg33[%c0_37, %c0_38] : memref<32x32xf32, #tpu.memory_space<vmem>>, vector<32x8xf32>
    tpu.vector_store %arg33[%c0_37, %c0_38], %100 {strides = array<i32>} : memref<32x32xf32, #tpu.memory_space<vmem>>, vector<32x8xf32>,
    %102 = vector.extract_strided_slice %69 {offsets = [0, 8], sizes = [32, 8], strides = [1, 1]} : vector<32x96xf32> to vector<32x8xf32>
    %103 = arith.truncf %102 : vector<32x8xf32> to vector<32x8xbf16>
    %104 = vector.extract_strided_slice %69 {offsets = [0, 40], sizes = [32, 8], strides = [1, 1]} : vector<32x96xf32> to vector<32x8xf32>
    %105 = arith.truncf %104 : vector<32x8xf32> to vector<32x8xbf16>
    %106 = vector.extract_strided_slice %69 {offsets = [0, 72], sizes = [32, 8], strides = [1, 1]} : vector<32x96xf32> to vector<32x8xf32>
    %107 = arith.truncf %106 : vector<32x8xf32> to vector<32x8xbf16>
    %cst_39 = arith.constant dense<0.000000e+00> : vector<32x32xf32>
    %108 = tpu.matmul %103, %105, %cst_39 {dimension_numbers = #tpu.dot_dimension_numbers<[1], [1], [0], [0], [0, 0, 1, 0], [], []>} : vector<32x8xbf16>, vector<32x8xbf16>, vector<32x32xf32> -> vector<32x32xf32>
    %cst_40 = arith.constant 0.353553385 : f32
    %109 = vector.broadcast %cst_40 : f32 to vector<32x32xf32>
    %110 = arith.mulf %108, %109 : vector<32x32xf32>
    %111 = vector.extract_strided_slice %110 {offsets = [0, 0], sizes = [16, 16], strides = [1, 1]} : vector<32x32xf32> to vector<16x16xf32>
    %c0_41 = arith.constant 0 : index
    %c1_42 = arith.constant 1 : index
    %c0_43 = arith.constant 0 : index
    %c0_44 = arith.constant 0 : index
    %112 = vector.load %arg31[%c0_41, %c1_42, %c0_43, %c0_44] : memref<2x4x16x16xf32, #tpu.memory_space<vmem>>, vector<1x1x16x16xf32>
    %113 = vector.shape_cast %112 : vector<1x1x16x16xf32> to vector<16x16xf32>
    %114 = vector.shape_cast %111 : vector<16x16xf32> to vector<1x1x16x16xf32>
    tpu.vector_store %arg31[%c0_41, %c1_42, %c0_43, %c0_44], %114 {strides = array<i32>} : memref<2x4x16x16xf32, #tpu.memory_space<vmem>>, vector<1x1x16x16xf32>,
    %115 = vector.extract_strided_slice %110 {offsets = [16, 16], sizes = [16, 16], strides = [1, 1]} : vector<32x32xf32> to vector<16x16xf32>
    %c1_45 = arith.constant 1 : index
    %c1_46 = arith.constant 1 : index
    %c0_47 = arith.constant 0 : index
    %c0_48 = arith.constant 0 : index
    %116 = vector.load %arg31[%c1_45, %c1_46, %c0_47, %c0_48] : memref<2x4x16x16xf32, #tpu.memory_space<vmem>>, vector<1x1x16x16xf32>
    %117 = vector.shape_cast %116 : vector<1x1x16x16xf32> to vector<16x16xf32>
    %118 = vector.shape_cast %115 : vector<16x16xf32> to vector<1x1x16x16xf32>
    tpu.vector_store %arg31[%c1_45, %c1_46, %c0_47, %c0_48], %118 {strides = array<i32>} : memref<2x4x16x16xf32, #tpu.memory_space<vmem>>, vector<1x1x16x16xf32>,
    %cst_49 = arith.constant -1.000000e+30 : f32
    %119 = vector.broadcast %cst_49 : f32 to vector<32x32xf32>
    %120 = arith.select %41, %110, %119 : vector<32x32xi1>, vector<32x32xf32>
    %cst_50 = arith.constant dense<0xFF800000> : vector<32xf32>
    %121 = vector.multi_reduction <maximumf>, %120, %cst_50 [1] : vector<32x32xf32> to vector<32xf32>
    %122 = vector.shape_cast %121 : vector<32xf32> to vector<32x1xf32>
    %123 = vector.broadcast %122 : vector<32x1xf32> to vector<32x32xf32>
    %124 = arith.subf %120, %123 : vector<32x32xf32>
    %125 = math.exp %124 : vector<32x32xf32>
    %cst_51 = arith.constant dense<0.000000e+00> : vector<32xf32>
    %126 = vector.multi_reduction <add>, %125, %cst_51 [1] : vector<32x32xf32> to vector<32xf32>
    %127 = vector.shape_cast %126 : vector<32xf32> to vector<32x1xf32>
    %128 = tpu.reciprocal %127 {approx = true} : vector<32x1xf32> -> vector<32x1xf32>
    %129 = vector.broadcast %128 : vector<32x1xf32> to vector<32x32xf32>
    %130 = arith.mulf %125, %129 : vector<32x32xf32>
    %131 = arith.truncf %130 : vector<32x32xf32> to vector<32x32xbf16>
    %cst_52 = arith.constant dense<0.000000e+00> : vector<32x8xf32>
    %132 = tpu.matmul %131, %107, %cst_52 {dimension_numbers = #tpu.dot_dimension_numbers<[1], [0], [0], [1], [0, 0, 1, 1], [], []>} : vector<32x32xbf16>, vector<32x8xbf16>, vector<32x8xf32> -> vector<32x8xf32>
    %c0_53 = arith.constant 0 : index
    %c8 = arith.constant 8 : index
    %133 = vector.load %arg33[%c0_53, %c8] : memref<32x32xf32, #tpu.memory_space<vmem>>, vector<32x8xf32>
    tpu.vector_store %arg33[%c0_53, %c8], %132 {strides = array<i32>} : memref<32x32xf32, #tpu.memory_space<vmem>>, vector<32x8xf32>,
    %134 = vector.extract_strided_slice %69 {offsets = [0, 16], sizes = [32, 8], strides = [1, 1]} : vector<32x96xf32> to vector<32x8xf32>
    %135 = arith.truncf %134 : vector<32x8xf32> to vector<32x8xbf16>
    %136 = vector.extract_strided_slice %69 {offsets = [0, 48], sizes = [32, 8], strides = [1, 1]} : vector<32x96xf32> to vector<32x8xf32>
    %137 = arith.truncf %136 : vector<32x8xf32> to vector<32x8xbf16>
    %138 = vector.extract_strided_slice %69 {offsets = [0, 80], sizes = [32, 8], strides = [1, 1]} : vector<32x96xf32> to vector<32x8xf32>
    %139 = arith.truncf %138 : vector<32x8xf32> to vector<32x8xbf16>
    %cst_54 = arith.constant dense<0.000000e+00> : vector<32x32xf32>
    %140 = tpu.matmul %135, %137, %cst_54 {dimension_numbers = #tpu.dot_dimension_numbers<[1], [1], [0], [0], [0, 0, 1, 0], [], []>} : vector<32x8xbf16>, vector<32x8xbf16>, vector<32x32xf32> -> vector<32x32xf32>
    %cst_55 = arith.constant 0.353553385 : f32
    %141 = vector.broadcast %cst_55 : f32 to vector<32x32xf32>
    %142 = arith.mulf %140, %141 : vector<32x32xf32>
    %143 = vector.extract_strided_slice %142 {offsets = [0, 0], sizes = [16, 16], strides = [1, 1]} : vector<32x32xf32> to vector<16x16xf32>
    %c0_56 = arith.constant 0 : index
    %c2 = arith.constant 2 : index
    %c0_57 = arith.constant 0 : index
    %c0_58 = arith.constant 0 : index
    %144 = vector.load %arg31[%c0_56, %c2, %c0_57, %c0_58] : memref<2x4x16x16xf32, #tpu.memory_space<vmem>>, vector<1x1x16x16xf32>
    %145 = vector.shape_cast %144 : vector<1x1x16x16xf32> to vector<16x16xf32>
    %146 = vector.shape_cast %143 : vector<16x16xf32> to vector<1x1x16x16xf32>
    tpu.vector_store %arg31[%c0_56, %c2, %c0_57, %c0_58], %146 {strides = array<i32>} : memref<2x4x16x16xf32, #tpu.memory_space<vmem>>, vector<1x1x16x16xf32>,
    %147 = vector.extract_strided_slice %142 {offsets = [16, 16], sizes = [16, 16], strides = [1, 1]} : vector<32x32xf32> to vector<16x16xf32>
    %c1_59 = arith.constant 1 : index
    %c2_60 = arith.constant 2 : index
    %c0_61 = arith.constant 0 : index
    %c0_62 = arith.constant 0 : index
    %148 = vector.load %arg31[%c1_59, %c2_60, %c0_61, %c0_62] : memref<2x4x16x16xf32, #tpu.memory_space<vmem>>, vector<1x1x16x16xf32>
    %149 = vector.shape_cast %148 : vector<1x1x16x16xf32> to vector<16x16xf32>
    %150 = vector.shape_cast %147 : vector<16x16xf32> to vector<1x1x16x16xf32>
    tpu.vector_store %arg31[%c1_59, %c2_60, %c0_61, %c0_62], %150 {strides = array<i32>} : memref<2x4x16x16xf32, #tpu.memory_space<vmem>>, vector<1x1x16x16xf32>,
    %cst_63 = arith.constant -1.000000e+30 : f32
    %151 = vector.broadcast %cst_63 : f32 to vector<32x32xf32>
    %152 = arith.select %41, %142, %151 : vector<32x32xi1>, vector<32x32xf32>
    %cst_64 = arith.constant dense<0xFF800000> : vector<32xf32>
    %153 = vector.multi_reduction <maximumf>, %152, %cst_64 [1] : vector<32x32xf32> to vector<32xf32>
    %154 = vector.shape_cast %153 : vector<32xf32> to vector<32x1xf32>
    %155 = vector.broadcast %154 : vector<32x1xf32> to vector<32x32xf32>
    %156 = arith.subf %152, %155 : vector<32x32xf32>
    %157 = math.exp %156 : vector<32x32xf32>
    %cst_65 = arith.constant dense<0.000000e+00> : vector<32xf32>
    %158 = vector.multi_reduction <add>, %157, %cst_65 [1] : vector<32x32xf32> to vector<32xf32>
    %159 = vector.shape_cast %158 : vector<32xf32> to vector<32x1xf32>
    %160 = tpu.reciprocal %159 {approx = true} : vector<32x1xf32> -> vector<32x1xf32>
    %161 = vector.broadcast %160 : vector<32x1xf32> to vector<32x32xf32>
    %162 = arith.mulf %157, %161 : vector<32x32xf32>
    %163 = arith.truncf %162 : vector<32x32xf32> to vector<32x32xbf16>
    %cst_66 = arith.constant dense<0.000000e+00> : vector<32x8xf32>
    %164 = tpu.matmul %163, %139, %cst_66 {dimension_numbers = #tpu.dot_dimension_numbers<[1], [0], [0], [1], [0, 0, 1, 1], [], []>} : vector<32x32xbf16>, vector<32x8xbf16>, vector<32x8xf32> -> vector<32x8xf32>
    %c0_67 = arith.constant 0 : index
    %c16 = arith.constant 16 : index
    %165 = vector.load %arg33[%c0_67, %c16] : memref<32x32xf32, #tpu.memory_space<vmem>>, vector<32x8xf32>
    tpu.vector_store %arg33[%c0_67, %c16], %164 {strides = array<i32>} : memref<32x32xf32, #tpu.memory_space<vmem>>, vector<32x8xf32>,
    %166 = vector.extract_strided_slice %69 {offsets = [0, 24], sizes = [32, 8], strides = [1, 1]} : vector<32x96xf32> to vector<32x8xf32>
    %167 = arith.truncf %166 : vector<32x8xf32> to vector<32x8xbf16>
    %168 = vector.extract_strided_slice %69 {offsets = [0, 56], sizes = [32, 8], strides = [1, 1]} : vector<32x96xf32> to vector<32x8xf32>
    %169 = arith.truncf %168 : vector<32x8xf32> to vector<32x8xbf16>
    %170 = vector.extract_strided_slice %69 {offsets = [0, 88], sizes = [32, 8], strides = [1, 1]} : vector<32x96xf32> to vector<32x8xf32>
    %171 = arith.truncf %170 : vector<32x8xf32> to vector<32x8xbf16>
    %cst_68 = arith.constant dense<0.000000e+00> : vector<32x32xf32>
    %172 = tpu.matmul %167, %169, %cst_68 {dimension_numbers = #tpu.dot_dimension_numbers<[1], [1], [0], [0], [0, 0, 1, 0], [], []>} : vector<32x8xbf16>, vector<32x8xbf16>, vector<32x32xf32> -> vector<32x32xf32>
    %cst_69 = arith.constant 0.353553385 : f32
    %173 = vector.broadcast %cst_69 : f32 to vector<32x32xf32>
    %174 = arith.mulf %172, %173 : vector<32x32xf32>
    %175 = vector.extract_strided_slice %174 {offsets = [0, 0], sizes = [16, 16], strides = [1, 1]} : vector<32x32xf32> to vector<16x16xf32>
    %c0_70 = arith.constant 0 : index
    %c3 = arith.constant 3 : index
    %c0_71 = arith.constant 0 : index
    %c0_72 = arith.constant 0 : index
    %176 = vector.load %arg31[%c0_70, %c3, %c0_71, %c0_72] : memref<2x4x16x16xf32, #tpu.memory_space<vmem>>, vector<1x1x16x16xf32>
    %177 = vector.shape_cast %176 : vector<1x1x16x16xf32> to vector<16x16xf32>
    %178 = vector.shape_cast %175 : vector<16x16xf32> to vector<1x1x16x16xf32>
    tpu.vector_store %arg31[%c0_70, %c3, %c0_71, %c0_72], %178 {strides = array<i32>} : memref<2x4x16x16xf32, #tpu.memory_space<vmem>>, vector<1x1x16x16xf32>,
    %179 = vector.extract_strided_slice %174 {offsets = [16, 16], sizes = [16, 16], strides = [1, 1]} : vector<32x32xf32> to vector<16x16xf32>
    %c1_73 = arith.constant 1 : index
    %c3_74 = arith.constant 3 : index
    %c0_75 = arith.constant 0 : index
    %c0_76 = arith.constant 0 : index
    %180 = vector.load %arg31[%c1_73, %c3_74, %c0_75, %c0_76] : memref<2x4x16x16xf32, #tpu.memory_space<vmem>>, vector<1x1x16x16xf32>
    %181 = vector.shape_cast %180 : vector<1x1x16x16xf32> to vector<16x16xf32>
    %182 = vector.shape_cast %179 : vector<16x16xf32> to vector<1x1x16x16xf32>
    tpu.vector_store %arg31[%c1_73, %c3_74, %c0_75, %c0_76], %182 {strides = array<i32>} : memref<2x4x16x16xf32, #tpu.memory_space<vmem>>, vector<1x1x16x16xf32>,
    %cst_77 = arith.constant -1.000000e+30 : f32
    %183 = vector.broadcast %cst_77 : f32 to vector<32x32xf32>
    %184 = arith.select %41, %174, %183 : vector<32x32xi1>, vector<32x32xf32>
    %cst_78 = arith.constant dense<0xFF800000> : vector<32xf32>
    %185 = vector.multi_reduction <maximumf>, %184, %cst_78 [1] : vector<32x32xf32> to vector<32xf32>
    %186 = vector.shape_cast %185 : vector<32xf32> to vector<32x1xf32>
    %187 = vector.broadcast %186 : vector<32x1xf32> to vector<32x32xf32>
    %188 = arith.subf %184, %187 : vector<32x32xf32>
    %189 = math.exp %188 : vector<32x32xf32>
    %cst_79 = arith.constant dense<0.000000e+00> : vector<32xf32>
    %190 = vector.multi_reduction <add>, %189, %cst_79 [1] : vector<32x32xf32> to vector<32xf32>
    %191 = vector.shape_cast %190 : vector<32xf32> to vector<32x1xf32>
    %192 = tpu.reciprocal %191 {approx = true} : vector<32x1xf32> -> vector<32x1xf32>
    %193 = vector.broadcast %192 : vector<32x1xf32> to vector<32x32xf32>
    %194 = arith.mulf %189, %193 : vector<32x32xf32>
    %195 = arith.truncf %194 : vector<32x32xf32> to vector<32x32xbf16>
    %cst_80 = arith.constant dense<0.000000e+00> : vector<32x8xf32>
    %196 = tpu.matmul %195, %171, %cst_80 {dimension_numbers = #tpu.dot_dimension_numbers<[1], [0], [0], [1], [0, 0, 1, 1], [], []>} : vector<32x32xbf16>, vector<32x8xbf16>, vector<32x8xf32> -> vector<32x8xf32>
    %c0_81 = arith.constant 0 : index
    %c24 = arith.constant 24 : index
    %197 = vector.load %arg33[%c0_81, %c24] : memref<32x32xf32, #tpu.memory_space<vmem>>, vector<32x8xf32>
    tpu.vector_store %arg33[%c0_81, %c24], %196 {strides = array<i32>} : memref<32x32xf32, #tpu.memory_space<vmem>>, vector<32x8xf32>,
    %c0_82 = arith.constant 0 : index
    %c0_83 = arith.constant 0 : index
    %198 = vector.load %arg33[%c0_82, %c0_83] : memref<32x32xf32, #tpu.memory_space<vmem>>, vector<32x32xf32>
    %199 = arith.truncf %198 : vector<32x32xf32> to vector<32x32xbf16>
    %c0_84 = arith.constant 0 : index
    %c0_85 = arith.constant 0 : index
    %200 = vector.load %arg10[%c0_84, %c0_85] : memref<32x32xbf16, #tpu.memory_space<vmem>>, vector<32x32xbf16>
    %cst_86 = arith.constant dense<0.000000e+00> : vector<32x32xf32>
    %201 = tpu.matmul %199, %200, %cst_86 {dimension_numbers = #tpu.dot_dimension_numbers<[1], [0], [0], [1], [0, 0, 1, 1], [], []>} : vector<32x32xbf16>, vector<32x32xbf16>, vector<32x32xf32> -> vector<32x32xf32>
    %202 = arith.addf %11, %201 : vector<32x32xf32>
    %c0_87 = arith.constant 0 : index
    %c0_88 = arith.constant 0 : index
    %203 = vector.load %arg11[%c0_87, %c0_88] : memref<1x32xf32, #tpu.memory_space<vmem>>, vector<1x32xf32>
    %204 = vector.broadcast %203 : vector<1x32xf32> to vector<32x32xf32>
    %205 = arith.addf %202, %204 : vector<32x32xf32>
    %c0_89 = arith.constant 0 : index
    %c0_90 = arith.constant 0 : index
    %206 = vector.load %arg12[%c0_89, %c0_90] : memref<1x32xf32, #tpu.memory_space<vmem>>, vector<1x32xf32>
    %c0_91 = arith.constant 0 : index
    %c0_92 = arith.constant 0 : index
    %207 = vector.load %arg13[%c0_91, %c0_92] : memref<1x32xf32, #tpu.memory_space<vmem>>, vector<1x32xf32>
    %cst_93 = arith.constant dense<0.000000e+00> : vector<32xf32>
    %208 = vector.multi_reduction <add>, %205, %cst_93 [1] : vector<32x32xf32> to vector<32xf32>
    %209 = vector.shape_cast %208 : vector<32xf32> to vector<32x1xf32>
    %cst_94 = arith.constant 3.200000e+01 : f32
    %210 = vector.broadcast %cst_94 : f32 to vector<32x1xf32>
    %211 = arith.divf %209, %210 : vector<32x1xf32>
    %212 = vector.broadcast %211 : vector<32x1xf32> to vector<32x32xf32>
    %213 = arith.subf %205, %212 : vector<32x32xf32>
    %214 = arith.mulf %213, %213 : vector<32x32xf32>
    %cst_95 = arith.constant dense<0.000000e+00> : vector<32xf32>
    %215 = vector.multi_reduction <add>, %214, %cst_95 [1] : vector<32x32xf32> to vector<32xf32>
    %216 = vector.shape_cast %215 : vector<32xf32> to vector<32x1xf32>
    %cst_96 = arith.constant 3.200000e+01 : f32
    %217 = vector.broadcast %cst_96 : f32 to vector<32x1xf32>
    %218 = arith.divf %216, %217 : vector<32x1xf32>
    %cst_97 = arith.constant 9.99999974E-6 : f32
    %219 = vector.broadcast %cst_97 : f32 to vector<32x1xf32>
    %220 = arith.addf %218, %219 : vector<32x1xf32>
    %221 = math.rsqrt %220 : vector<32x1xf32>
    %222 = vector.broadcast %221 : vector<32x1xf32> to vector<32x32xf32>
    %223 = arith.mulf %213, %222 : vector<32x32xf32>
    %224 = vector.broadcast %206 : vector<1x32xf32> to vector<32x32xf32>
    %225 = arith.mulf %223, %224 : vector<32x32xf32>
    %226 = vector.broadcast %207 : vector<1x32xf32> to vector<32x32xf32>
    %227 = arith.addf %225, %226 : vector<32x32xf32>
    %228 = arith.truncf %227 : vector<32x32xf32> to vector<32x32xbf16>
    %c0_98 = arith.constant 0 : index
    %c0_99 = arith.constant 0 : index
    %229 = vector.load %arg14[%c0_98, %c0_99] : memref<32x128xbf16, #tpu.memory_space<vmem>>, vector<32x128xbf16>
    %cst_100 = arith.constant dense<0.000000e+00> : vector<32x128xf32>
    %230 = tpu.matmul %228, %229, %cst_100 {dimension_numbers = #tpu.dot_dimension_numbers<[1], [0], [0], [1], [0, 0, 1, 1], [], []>} : vector<32x32xbf16>, vector<32x128xbf16>, vector<32x128xf32> -> vector<32x128xf32>
    %c0_101 = arith.constant 0 : index
    %c0_102 = arith.constant 0 : index
    %231 = vector.load %arg15[%c0_101, %c0_102] : memref<1x128xf32, #tpu.memory_space<vmem>>, vector<1x128xf32>
    %232 = vector.broadcast %231 : vector<1x128xf32> to vector<32x128xf32>
    %233 = arith.addf %230, %232 : vector<32x128xf32>
    %cst_103 = arith.constant 5.000000e-01 : f32
    %234 = vector.broadcast %cst_103 : f32 to vector<32x128xf32>
    %235 = arith.mulf %234, %233 : vector<32x128xf32>
    %cst_104 = arith.constant 4.471500e-02 : f32
    %236 = vector.broadcast %cst_104 : f32 to vector<32x128xf32>
    %237 = arith.mulf %236, %233 : vector<32x128xf32>
    %238 = arith.mulf %237, %233 : vector<32x128xf32>
    %239 = arith.mulf %238, %233 : vector<32x128xf32>
    %240 = arith.addf %233, %239 : vector<32x128xf32>
    %cst_105 = arith.constant 0.797884583 : f32
    %241 = vector.broadcast %cst_105 : f32 to vector<32x128xf32>
    %242 = arith.mulf %241, %240 : vector<32x128xf32>
    %243 = math.tanh %242 : vector<32x128xf32>
    %cst_106 = arith.constant 1.000000e+00 : f32
    %244 = vector.broadcast %cst_106 : f32 to vector<32x128xf32>
    %245 = arith.addf %244, %243 : vector<32x128xf32>
    %246 = arith.mulf %235, %245 : vector<32x128xf32>
    %247 = arith.truncf %246 : vector<32x128xf32> to vector<32x128xbf16>
    %c0_107 = arith.constant 0 : index
    %c0_108 = arith.constant 0 : index
    %248 = vector.load %arg16[%c0_107, %c0_108] : memref<128x32xbf16, #tpu.memory_space<vmem>>, vector<128x32xbf16>
    %cst_109 = arith.constant dense<0.000000e+00> : vector<32x32xf32>
    %249 = tpu.matmul %247, %248, %cst_109 {dimension_numbers = #tpu.dot_dimension_numbers<[1], [0], [0], [1], [0, 0, 1, 1], [], []>} : vector<32x128xbf16>, vector<128x32xbf16>, vector<32x32xf32> -> vector<32x32xf32>
    %250 = arith.addf %205, %249 : vector<32x32xf32>
    %c0_110 = arith.constant 0 : index
    %c0_111 = arith.constant 0 : index
    %251 = vector.load %arg17[%c0_110, %c0_111] : memref<1x32xf32, #tpu.memory_space<vmem>>, vector<1x32xf32>
    %252 = vector.broadcast %251 : vector<1x32xf32> to vector<32x32xf32>
    %253 = arith.addf %250, %252 : vector<32x32xf32>
    %c0_112 = arith.constant 0 : index
    %c0_113 = arith.constant 0 : index
    %254 = vector.load %arg18[%c0_112, %c0_113] : memref<1x32xf32, #tpu.memory_space<vmem>>, vector<1x32xf32>
    %c0_114 = arith.constant 0 : index
    %c0_115 = arith.constant 0 : index
    %255 = vector.load %arg19[%c0_114, %c0_115] : memref<1x32xf32, #tpu.memory_space<vmem>>, vector<1x32xf32>
    %cst_116 = arith.constant dense<0.000000e+00> : vector<32xf32>
    %256 = vector.multi_reduction <add>, %253, %cst_116 [1] : vector<32x32xf32> to vector<32xf32>
    %257 = vector.shape_cast %256 : vector<32xf32> to vector<32x1xf32>
    %cst_117 = arith.constant 3.200000e+01 : f32
    %258 = vector.broadcast %cst_117 : f32 to vector<32x1xf32>
    %259 = arith.divf %257, %258 : vector<32x1xf32>
    %260 = vector.broadcast %259 : vector<32x1xf32> to vector<32x32xf32>
    %261 = arith.subf %253, %260 : vector<32x32xf32>
    %262 = arith.mulf %261, %261 : vector<32x32xf32>
    %cst_118 = arith.constant dense<0.000000e+00> : vector<32xf32>
    %263 = vector.multi_reduction <add>, %262, %cst_118 [1] : vector<32x32xf32> to vector<32xf32>
    %264 = vector.shape_cast %263 : vector<32xf32> to vector<32x1xf32>
    %cst_119 = arith.constant 3.200000e+01 : f32
    %265 = vector.broadcast %cst_119 : f32 to vector<32x1xf32>
    %266 = arith.divf %264, %265 : vector<32x1xf32>
    %cst_120 = arith.constant 9.99999974E-6 : f32
    %267 = vector.broadcast %cst_120 : f32 to vector<32x1xf32>
    %268 = arith.addf %266, %267 : vector<32x1xf32>
    %269 = math.rsqrt %268 : vector<32x1xf32>
    %270 = vector.broadcast %269 : vector<32x1xf32> to vector<32x32xf32>
    %271 = arith.mulf %261, %270 : vector<32x32xf32>
    %272 = vector.broadcast %254 : vector<1x32xf32> to vector<32x32xf32>
    %273 = arith.mulf %271, %272 : vector<32x32xf32>
    %274 = vector.broadcast %255 : vector<1x32xf32> to vector<32x32xf32>
    %275 = arith.addf %273, %274 : vector<32x32xf32>
    %276 = arith.truncf %275 : vector<32x32xf32> to vector<32x32xbf16>
    %c0_121 = arith.constant 0 : index
    %c0_122 = arith.constant 0 : index
    %277 = vector.load %arg20[%c0_121, %c0_122] : memref<32x96xbf16, #tpu.memory_space<vmem>>, vector<32x96xbf16>
    %cst_123 = arith.constant dense<0.000000e+00> : vector<32x96xf32>
    %278 = tpu.matmul %276, %277, %cst_123 {dimension_numbers = #tpu.dot_dimension_numbers<[1], [0], [0], [1], [0, 0, 1, 1], [], []>} : vector<32x32xbf16>, vector<32x96xbf16>, vector<32x96xf32> -> vector<32x96xf32>
    %c0_124 = arith.constant 0 : index
    %c0_125 = arith.constant 0 : index
    %279 = vector.load %arg21[%c0_124, %c0_125] : memref<1x96xf32, #tpu.memory_space<vmem>>, vector<1x96xf32>
    %280 = vector.broadcast %279 : vector<1x96xf32> to vector<32x96xf32>
    %281 = arith.addf %278, %280 : vector<32x96xf32>
    %282 = vector.extract_strided_slice %281 {offsets = [0, 0], sizes = [32, 8], strides = [1, 1]} : vector<32x96xf32> to vector<32x8xf32>
    %283 = arith.truncf %282 : vector<32x8xf32> to vector<32x8xbf16>
    %284 = vector.extract_strided_slice %281 {offsets = [0, 32], sizes = [32, 8], strides = [1, 1]} : vector<32x96xf32> to vector<32x8xf32>
    %285 = arith.truncf %284 : vector<32x8xf32> to vector<32x8xbf16>
    %286 = vector.extract_strided_slice %281 {offsets = [0, 64], sizes = [32, 8], strides = [1, 1]} : vector<32x96xf32> to vector<32x8xf32>
    %287 = arith.truncf %286 : vector<32x8xf32> to vector<32x8xbf16>
    %cst_126 = arith.constant dense<0.000000e+00> : vector<32x32xf32>
    %288 = tpu.matmul %283, %285, %cst_126 {dimension_numbers = #tpu.dot_dimension_numbers<[1], [1], [0], [0], [0, 0, 1, 0], [], []>} : vector<32x8xbf16>, vector<32x8xbf16>, vector<32x32xf32> -> vector<32x32xf32>
    %cst_127 = arith.constant 0.353553385 : f32
    %289 = vector.broadcast %cst_127 : f32 to vector<32x32xf32>
    %290 = arith.mulf %288, %289 : vector<32x32xf32>
    %291 = vector.extract_strided_slice %290 {offsets = [0, 0], sizes = [16, 16], strides = [1, 1]} : vector<32x32xf32> to vector<16x16xf32>
    %c0_128 = arith.constant 0 : index
    %c0_129 = arith.constant 0 : index
    %c0_130 = arith.constant 0 : index
    %c0_131 = arith.constant 0 : index
    %292 = vector.load %arg32[%c0_128, %c0_129, %c0_130, %c0_131] : memref<2x4x16x16xf32, #tpu.memory_space<vmem>>, vector<1x1x16x16xf32>
    %293 = vector.shape_cast %292 : vector<1x1x16x16xf32> to vector<16x16xf32>
    %294 = vector.shape_cast %291 : vector<16x16xf32> to vector<1x1x16x16xf32>
    tpu.vector_store %arg32[%c0_128, %c0_129, %c0_130, %c0_131], %294 {strides = array<i32>} : memref<2x4x16x16xf32, #tpu.memory_space<vmem>>, vector<1x1x16x16xf32>,
    %295 = vector.extract_strided_slice %290 {offsets = [16, 16], sizes = [16, 16], strides = [1, 1]} : vector<32x32xf32> to vector<16x16xf32>
    %c1_132 = arith.constant 1 : index
    %c0_133 = arith.constant 0 : index
    %c0_134 = arith.constant 0 : index
    %c0_135 = arith.constant 0 : index
    %296 = vector.load %arg32[%c1_132, %c0_133, %c0_134, %c0_135] : memref<2x4x16x16xf32, #tpu.memory_space<vmem>>, vector<1x1x16x16xf32>
    %297 = vector.shape_cast %296 : vector<1x1x16x16xf32> to vector<16x16xf32>
    %298 = vector.shape_cast %295 : vector<16x16xf32> to vector<1x1x16x16xf32>
    tpu.vector_store %arg32[%c1_132, %c0_133, %c0_134, %c0_135], %298 {strides = array<i32>} : memref<2x4x16x16xf32, #tpu.memory_space<vmem>>, vector<1x1x16x16xf32>,
    %cst_136 = arith.constant -1.000000e+30 : f32
    %299 = vector.broadcast %cst_136 : f32 to vector<32x32xf32>
    %300 = arith.select %41, %290, %299 : vector<32x32xi1>, vector<32x32xf32>
    %cst_137 = arith.constant dense<0xFF800000> : vector<32xf32>
    %301 = vector.multi_reduction <maximumf>, %300, %cst_137 [1] : vector<32x32xf32> to vector<32xf32>
    %302 = vector.shape_cast %301 : vector<32xf32> to vector<32x1xf32>
    %303 = vector.broadcast %302 : vector<32x1xf32> to vector<32x32xf32>
    %304 = arith.subf %300, %303 : vector<32x32xf32>
    %305 = math.exp %304 : vector<32x32xf32>
    %cst_138 = arith.constant dense<0.000000e+00> : vector<32xf32>
    %306 = vector.multi_reduction <add>, %305, %cst_138 [1] : vector<32x32xf32> to vector<32xf32>
    %307 = vector.shape_cast %306 : vector<32xf32> to vector<32x1xf32>
    %308 = tpu.reciprocal %307 {approx = true} : vector<32x1xf32> -> vector<32x1xf32>
    %309 = vector.broadcast %308 : vector<32x1xf32> to vector<32x32xf32>
    %310 = arith.mulf %305, %309 : vector<32x32xf32>
    %311 = arith.truncf %310 : vector<32x32xf32> to vector<32x32xbf16>
    %cst_139 = arith.constant dense<0.000000e+00> : vector<32x8xf32>
    %312 = tpu.matmul %311, %287, %cst_139 {dimension_numbers = #tpu.dot_dimension_numbers<[1], [0], [0], [1], [0, 0, 1, 1], [], []>} : vector<32x32xbf16>, vector<32x8xbf16>, vector<32x8xf32> -> vector<32x8xf32>
    %c0_140 = arith.constant 0 : index
    %c0_141 = arith.constant 0 : index
    %313 = vector.load %arg33[%c0_140, %c0_141] : memref<32x32xf32, #tpu.memory_space<vmem>>, vector<32x8xf32>
    tpu.vector_store %arg33[%c0_140, %c0_141], %312 {strides = array<i32>} : memref<32x32xf32, #tpu.memory_space<vmem>>, vector<32x8xf32>,
    %314 = vector.extract_strided_slice %281 {offsets = [0, 8], sizes = [32, 8], strides = [1, 1]} : vector<32x96xf32> to vector<32x8xf32>
    %315 = arith.truncf %314 : vector<32x8xf32> to vector<32x8xbf16>
    %316 = vector.extract_strided_slice %281 {offsets = [0, 40], sizes = [32, 8], strides = [1, 1]} : vector<32x96xf32> to vector<32x8xf32>
    %317 = arith.truncf %316 : vector<32x8xf32> to vector<32x8xbf16>
    %318 = vector.extract_strided_slice %281 {offsets = [0, 72], sizes = [32, 8], strides = [1, 1]} : vector<32x96xf32> to vector<32x8xf32>
    %319 = arith.truncf %318 : vector<32x8xf32> to vector<32x8xbf16>
    %cst_142 = arith.constant dense<0.000000e+00> : vector<32x32xf32>
    %320 = tpu.matmul %315, %317, %cst_142 {dimension_numbers = #tpu.dot_dimension_numbers<[1], [1], [0], [0], [0, 0, 1, 0], [], []>} : vector<32x8xbf16>, vector<32x8xbf16>, vector<32x32xf32> -> vector<32x32xf32>
    %cst_143 = arith.constant 0.353553385 : f32
    %321 = vector.broadcast %cst_143 : f32 to vector<32x32xf32>
    %322 = arith.mulf %320, %321 : vector<32x32xf32>
    %323 = vector.extract_strided_slice %322 {offsets = [0, 0], sizes = [16, 16], strides = [1, 1]} : vector<32x32xf32> to vector<16x16xf32>
    %c0_144 = arith.constant 0 : index
    %c1_145 = arith.constant 1 : index
    %c0_146 = arith.constant 0 : index
    %c0_147 = arith.constant 0 : index
    %324 = vector.load %arg32[%c0_144, %c1_145, %c0_146, %c0_147] : memref<2x4x16x16xf32, #tpu.memory_space<vmem>>, vector<1x1x16x16xf32>
    %325 = vector.shape_cast %324 : vector<1x1x16x16xf32> to vector<16x16xf32>
    %326 = vector.shape_cast %323 : vector<16x16xf32> to vector<1x1x16x16xf32>
    tpu.vector_store %arg32[%c0_144, %c1_145, %c0_146, %c0_147], %326 {strides = array<i32>} : memref<2x4x16x16xf32, #tpu.memory_space<vmem>>, vector<1x1x16x16xf32>,
    %327 = vector.extract_strided_slice %322 {offsets = [16, 16], sizes = [16, 16], strides = [1, 1]} : vector<32x32xf32> to vector<16x16xf32>
    %c1_148 = arith.constant 1 : index
    %c1_149 = arith.constant 1 : index
    %c0_150 = arith.constant 0 : index
    %c0_151 = arith.constant 0 : index
    %328 = vector.load %arg32[%c1_148, %c1_149, %c0_150, %c0_151] : memref<2x4x16x16xf32, #tpu.memory_space<vmem>>, vector<1x1x16x16xf32>
    %329 = vector.shape_cast %328 : vector<1x1x16x16xf32> to vector<16x16xf32>
    %330 = vector.shape_cast %327 : vector<16x16xf32> to vector<1x1x16x16xf32>
    tpu.vector_store %arg32[%c1_148, %c1_149, %c0_150, %c0_151], %330 {strides = array<i32>} : memref<2x4x16x16xf32, #tpu.memory_space<vmem>>, vector<1x1x16x16xf32>,
    %cst_152 = arith.constant -1.000000e+30 : f32
    %331 = vector.broadcast %cst_152 : f32 to vector<32x32xf32>
    %332 = arith.select %41, %322, %331 : vector<32x32xi1>, vector<32x32xf32>
    %cst_153 = arith.constant dense<0xFF800000> : vector<32xf32>
    %333 = vector.multi_reduction <maximumf>, %332, %cst_153 [1] : vector<32x32xf32> to vector<32xf32>
    %334 = vector.shape_cast %333 : vector<32xf32> to vector<32x1xf32>
    %335 = vector.broadcast %334 : vector<32x1xf32> to vector<32x32xf32>
    %336 = arith.subf %332, %335 : vector<32x32xf32>
    %337 = math.exp %336 : vector<32x32xf32>
    %cst_154 = arith.constant dense<0.000000e+00> : vector<32xf32>
    %338 = vector.multi_reduction <add>, %337, %cst_154 [1] : vector<32x32xf32> to vector<32xf32>
    %339 = vector.shape_cast %338 : vector<32xf32> to vector<32x1xf32>
    %340 = tpu.reciprocal %339 {approx = true} : vector<32x1xf32> -> vector<32x1xf32>
    %341 = vector.broadcast %340 : vector<32x1xf32> to vector<32x32xf32>
    %342 = arith.mulf %337, %341 : vector<32x32xf32>
    %343 = arith.truncf %342 : vector<32x32xf32> to vector<32x32xbf16>
    %cst_155 = arith.constant dense<0.000000e+00> : vector<32x8xf32>
    %344 = tpu.matmul %343, %319, %cst_155 {dimension_numbers = #tpu.dot_dimension_numbers<[1], [0], [0], [1], [0, 0, 1, 1], [], []>} : vector<32x32xbf16>, vector<32x8xbf16>, vector<32x8xf32> -> vector<32x8xf32>
    %c0_156 = arith.constant 0 : index
    %c8_157 = arith.constant 8 : index
    %345 = vector.load %arg33[%c0_156, %c8_157] : memref<32x32xf32, #tpu.memory_space<vmem>>, vector<32x8xf32>
    tpu.vector_store %arg33[%c0_156, %c8_157], %344 {strides = array<i32>} : memref<32x32xf32, #tpu.memory_space<vmem>>, vector<32x8xf32>,
    %346 = vector.extract_strided_slice %281 {offsets = [0, 16], sizes = [32, 8], strides = [1, 1]} : vector<32x96xf32> to vector<32x8xf32>
    %347 = arith.truncf %346 : vector<32x8xf32> to vector<32x8xbf16>
    %348 = vector.extract_strided_slice %281 {offsets = [0, 48], sizes = [32, 8], strides = [1, 1]} : vector<32x96xf32> to vector<32x8xf32>
    %349 = arith.truncf %348 : vector<32x8xf32> to vector<32x8xbf16>
    %350 = vector.extract_strided_slice %281 {offsets = [0, 80], sizes = [32, 8], strides = [1, 1]} : vector<32x96xf32> to vector<32x8xf32>
    %351 = arith.truncf %350 : vector<32x8xf32> to vector<32x8xbf16>
    %cst_158 = arith.constant dense<0.000000e+00> : vector<32x32xf32>
    %352 = tpu.matmul %347, %349, %cst_158 {dimension_numbers = #tpu.dot_dimension_numbers<[1], [1], [0], [0], [0, 0, 1, 0], [], []>} : vector<32x8xbf16>, vector<32x8xbf16>, vector<32x32xf32> -> vector<32x32xf32>
    %cst_159 = arith.constant 0.353553385 : f32
    %353 = vector.broadcast %cst_159 : f32 to vector<32x32xf32>
    %354 = arith.mulf %352, %353 : vector<32x32xf32>
    %355 = vector.extract_strided_slice %354 {offsets = [0, 0], sizes = [16, 16], strides = [1, 1]} : vector<32x32xf32> to vector<16x16xf32>
    %c0_160 = arith.constant 0 : index
    %c2_161 = arith.constant 2 : index
    %c0_162 = arith.constant 0 : index
    %c0_163 = arith.constant 0 : index
    %356 = vector.load %arg32[%c0_160, %c2_161, %c0_162, %c0_163] : memref<2x4x16x16xf32, #tpu.memory_space<vmem>>, vector<1x1x16x16xf32>
    %357 = vector.shape_cast %356 : vector<1x1x16x16xf32> to vector<16x16xf32>
    %358 = vector.shape_cast %355 : vector<16x16xf32> to vector<1x1x16x16xf32>
    tpu.vector_store %arg32[%c0_160, %c2_161, %c0_162, %c0_163], %358 {strides = array<i32>} : memref<2x4x16x16xf32, #tpu.memory_space<vmem>>, vector<1x1x16x16xf32>,
    %359 = vector.extract_strided_slice %354 {offsets = [16, 16], sizes = [16, 16], strides = [1, 1]} : vector<32x32xf32> to vector<16x16xf32>
    %c1_164 = arith.constant 1 : index
    %c2_165 = arith.constant 2 : index
    %c0_166 = arith.constant 0 : index
    %c0_167 = arith.constant 0 : index
    %360 = vector.load %arg32[%c1_164, %c2_165, %c0_166, %c0_167] : memref<2x4x16x16xf32, #tpu.memory_space<vmem>>, vector<1x1x16x16xf32>
    %361 = vector.shape_cast %360 : vector<1x1x16x16xf32> to vector<16x16xf32>
    %362 = vector.shape_cast %359 : vector<16x16xf32> to vector<1x1x16x16xf32>
    tpu.vector_store %arg32[%c1_164, %c2_165, %c0_166, %c0_167], %362 {strides = array<i32>} : memref<2x4x16x16xf32, #tpu.memory_space<vmem>>, vector<1x1x16x16xf32>,
    %cst_168 = arith.constant -1.000000e+30 : f32
    %363 = vector.broadcast %cst_168 : f32 to vector<32x32xf32>
    %364 = arith.select %41, %354, %363 : vector<32x32xi1>, vector<32x32xf32>
    %cst_169 = arith.constant dense<0xFF800000> : vector<32xf32>
    %365 = vector.multi_reduction <maximumf>, %364, %cst_169 [1] : vector<32x32xf32> to vector<32xf32>
    %366 = vector.shape_cast %365 : vector<32xf32> to vector<32x1xf32>
    %367 = vector.broadcast %366 : vector<32x1xf32> to vector<32x32xf32>
    %368 = arith.subf %364, %367 : vector<32x32xf32>
    %369 = math.exp %368 : vector<32x32xf32>
    %cst_170 = arith.constant dense<0.000000e+00> : vector<32xf32>
    %370 = vector.multi_reduction <add>, %369, %cst_170 [1] : vector<32x32xf32> to vector<32xf32>
    %371 = vector.shape_cast %370 : vector<32xf32> to vector<32x1xf32>
    %372 = tpu.reciprocal %371 {approx = true} : vector<32x1xf32> -> vector<32x1xf32>
    %373 = vector.broadcast %372 : vector<32x1xf32> to vector<32x32xf32>
    %374 = arith.mulf %369, %373 : vector<32x32xf32>
    %375 = arith.truncf %374 : vector<32x32xf32> to vector<32x32xbf16>
    %cst_171 = arith.constant dense<0.000000e+00> : vector<32x8xf32>
    %376 = tpu.matmul %375, %351, %cst_171 {dimension_numbers = #tpu.dot_dimension_numbers<[1], [0], [0], [1], [0, 0, 1, 1], [], []>} : vector<32x32xbf16>, vector<32x8xbf16>, vector<32x8xf32> -> vector<32x8xf32>
    %c0_172 = arith.constant 0 : index
    %c16_173 = arith.constant 16 : index
    %377 = vector.load %arg33[%c0_172, %c16_173] : memref<32x32xf32, #tpu.memory_space<vmem>>, vector<32x8xf32>
    tpu.vector_store %arg33[%c0_172, %c16_173], %376 {strides = array<i32>} : memref<32x32xf32, #tpu.memory_space<vmem>>, vector<32x8xf32>,
    %378 = vector.extract_strided_slice %281 {offsets = [0, 24], sizes = [32, 8], strides = [1, 1]} : vector<32x96xf32> to vector<32x8xf32>
    %379 = arith.truncf %378 : vector<32x8xf32> to vector<32x8xbf16>
    %380 = vector.extract_strided_slice %281 {offsets = [0, 56], sizes = [32, 8], strides = [1, 1]} : vector<32x96xf32> to vector<32x8xf32>
    %381 = arith.truncf %380 : vector<32x8xf32> to vector<32x8xbf16>
    %382 = vector.extract_strided_slice %281 {offsets = [0, 88], sizes = [32, 8], strides = [1, 1]} : vector<32x96xf32> to vector<32x8xf32>
    %383 = arith.truncf %382 : vector<32x8xf32> to vector<32x8xbf16>
    %cst_174 = arith.constant dense<0.000000e+00> : vector<32x32xf32>
    %384 = tpu.matmul %379, %381, %cst_174 {dimension_numbers = #tpu.dot_dimension_numbers<[1], [1], [0], [0], [0, 0, 1, 0], [], []>} : vector<32x8xbf16>, vector<32x8xbf16>, vector<32x32xf32> -> vector<32x32xf32>
    %cst_175 = arith.constant 0.353553385 : f32
    %385 = vector.broadcast %cst_175 : f32 to vector<32x32xf32>
    %386 = arith.mulf %384, %385 : vector<32x32xf32>
    %387 = vector.extract_strided_slice %386 {offsets = [0, 0], sizes = [16, 16], strides = [1, 1]} : vector<32x32xf32> to vector<16x16xf32>
    %c0_176 = arith.constant 0 : index
    %c3_177 = arith.constant 3 : index
    %c0_178 = arith.constant 0 : index
    %c0_179 = arith.constant 0 : index
    %388 = vector.load %arg32[%c0_176, %c3_177, %c0_178, %c0_179] : memref<2x4x16x16xf32, #tpu.memory_space<vmem>>, vector<1x1x16x16xf32>
    %389 = vector.shape_cast %388 : vector<1x1x16x16xf32> to vector<16x16xf32>
    %390 = vector.shape_cast %387 : vector<16x16xf32> to vector<1x1x16x16xf32>
    tpu.vector_store %arg32[%c0_176, %c3_177, %c0_178, %c0_179], %390 {strides = array<i32>} : memref<2x4x16x16xf32, #tpu.memory_space<vmem>>, vector<1x1x16x16xf32>,
    %391 = vector.extract_strided_slice %386 {offsets = [16, 16], sizes = [16, 16], strides = [1, 1]} : vector<32x32xf32> to vector<16x16xf32>
    %c1_180 = arith.constant 1 : index
    %c3_181 = arith.constant 3 : index
    %c0_182 = arith.constant 0 : index
    %c0_183 = arith.constant 0 : index
    %392 = vector.load %arg32[%c1_180, %c3_181, %c0_182, %c0_183] : memref<2x4x16x16xf32, #tpu.memory_space<vmem>>, vector<1x1x16x16xf32>
    %393 = vector.shape_cast %392 : vector<1x1x16x16xf32> to vector<16x16xf32>
    %394 = vector.shape_cast %391 : vector<16x16xf32> to vector<1x1x16x16xf32>
    tpu.vector_store %arg32[%c1_180, %c3_181, %c0_182, %c0_183], %394 {strides = array<i32>} : memref<2x4x16x16xf32, #tpu.memory_space<vmem>>, vector<1x1x16x16xf32>,
    %cst_184 = arith.constant -1.000000e+30 : f32
    %395 = vector.broadcast %cst_184 : f32 to vector<32x32xf32>
    %396 = arith.select %41, %386, %395 : vector<32x32xi1>, vector<32x32xf32>
    %cst_185 = arith.constant dense<0xFF800000> : vector<32xf32>
    %397 = vector.multi_reduction <maximumf>, %396, %cst_185 [1] : vector<32x32xf32> to vector<32xf32>
    %398 = vector.shape_cast %397 : vector<32xf32> to vector<32x1xf32>
    %399 = vector.broadcast %398 : vector<32x1xf32> to vector<32x32xf32>
    %400 = arith.subf %396, %399 : vector<32x32xf32>
    %401 = math.exp %400 : vector<32x32xf32>
    %cst_186 = arith.constant dense<0.000000e+00> : vector<32xf32>
    %402 = vector.multi_reduction <add>, %401, %cst_186 [1] : vector<32x32xf32> to vector<32xf32>
    %403 = vector.shape_cast %402 : vector<32xf32> to vector<32x1xf32>
    %404 = tpu.reciprocal %403 {approx = true} : vector<32x1xf32> -> vector<32x1xf32>
    %405 = vector.broadcast %404 : vector<32x1xf32> to vector<32x32xf32>
    %406 = arith.mulf %401, %405 : vector<32x32xf32>
    %407 = arith.truncf %406 : vector<32x32xf32> to vector<32x32xbf16>
    %cst_187 = arith.constant dense<0.000000e+00> : vector<32x8xf32>
    %408 = tpu.matmul %407, %383, %cst_187 {dimension_numbers = #tpu.dot_dimension_numbers<[1], [0], [0], [1], [0, 0, 1, 1], [], []>} : vector<32x32xbf16>, vector<32x8xbf16>, vector<32x8xf32> -> vector<32x8xf32>
    %c0_188 = arith.constant 0 : index
    %c24_189 = arith.constant 24 : index
    %409 = vector.load %arg33[%c0_188, %c24_189] : memref<32x32xf32, #tpu.memory_space<vmem>>, vector<32x8xf32>
    tpu.vector_store %arg33[%c0_188, %c24_189], %408 {strides = array<i32>} : memref<32x32xf32, #tpu.memory_space<vmem>>, vector<32x8xf32>,
    %c0_190 = arith.constant 0 : index
    %c0_191 = arith.constant 0 : index
    %410 = vector.load %arg33[%c0_190, %c0_191] : memref<32x32xf32, #tpu.memory_space<vmem>>, vector<32x32xf32>
    %411 = arith.truncf %410 : vector<32x32xf32> to vector<32x32xbf16>
    %c0_192 = arith.constant 0 : index
    %c0_193 = arith.constant 0 : index
    %412 = vector.load %arg22[%c0_192, %c0_193] : memref<32x32xbf16, #tpu.memory_space<vmem>>, vector<32x32xbf16>
    %cst_194 = arith.constant dense<0.000000e+00> : vector<32x32xf32>
    %413 = tpu.matmul %411, %412, %cst_194 {dimension_numbers = #tpu.dot_dimension_numbers<[1], [0], [0], [1], [0, 0, 1, 1], [], []>} : vector<32x32xbf16>, vector<32x32xbf16>, vector<32x32xf32> -> vector<32x32xf32>
    %414 = arith.addf %253, %413 : vector<32x32xf32>
    %c0_195 = arith.constant 0 : index
    %c0_196 = arith.constant 0 : index
    %415 = vector.load %arg23[%c0_195, %c0_196] : memref<1x32xf32, #tpu.memory_space<vmem>>, vector<1x32xf32>
    %416 = vector.broadcast %415 : vector<1x32xf32> to vector<32x32xf32>
    %417 = arith.addf %414, %416 : vector<32x32xf32>
    %c0_197 = arith.constant 0 : index
    %c0_198 = arith.constant 0 : index
    %418 = vector.load %arg24[%c0_197, %c0_198] : memref<1x32xf32, #tpu.memory_space<vmem>>, vector<1x32xf32>
    %c0_199 = arith.constant 0 : index
    %c0_200 = arith.constant 0 : index
    %419 = vector.load %arg25[%c0_199, %c0_200] : memref<1x32xf32, #tpu.memory_space<vmem>>, vector<1x32xf32>
    %cst_201 = arith.constant dense<0.000000e+00> : vector<32xf32>
    %420 = vector.multi_reduction <add>, %417, %cst_201 [1] : vector<32x32xf32> to vector<32xf32>
    %421 = vector.shape_cast %420 : vector<32xf32> to vector<32x1xf32>
    %cst_202 = arith.constant 3.200000e+01 : f32
    %422 = vector.broadcast %cst_202 : f32 to vector<32x1xf32>
    %423 = arith.divf %421, %422 : vector<32x1xf32>
    %424 = vector.broadcast %423 : vector<32x1xf32> to vector<32x32xf32>
    %425 = arith.subf %417, %424 : vector<32x32xf32>
    %426 = arith.mulf %425, %425 : vector<32x32xf32>
    %cst_203 = arith.constant dense<0.000000e+00> : vector<32xf32>
    %427 = vector.multi_reduction <add>, %426, %cst_203 [1] : vector<32x32xf32> to vector<32xf32>
    %428 = vector.shape_cast %427 : vector<32xf32> to vector<32x1xf32>
    %cst_204 = arith.constant 3.200000e+01 : f32
    %429 = vector.broadcast %cst_204 : f32 to vector<32x1xf32>
    %430 = arith.divf %428, %429 : vector<32x1xf32>
    %cst_205 = arith.constant 9.99999974E-6 : f32
    %431 = vector.broadcast %cst_205 : f32 to vector<32x1xf32>
    %432 = arith.addf %430, %431 : vector<32x1xf32>
    %433 = math.rsqrt %432 : vector<32x1xf32>
    %434 = vector.broadcast %433 : vector<32x1xf32> to vector<32x32xf32>
    %435 = arith.mulf %425, %434 : vector<32x32xf32>
    %436 = vector.broadcast %418 : vector<1x32xf32> to vector<32x32xf32>
    %437 = arith.mulf %435, %436 : vector<32x32xf32>
    %438 = vector.broadcast %419 : vector<1x32xf32> to vector<32x32xf32>
    %439 = arith.addf %437, %438 : vector<32x32xf32>
    %440 = arith.truncf %439 : vector<32x32xf32> to vector<32x32xbf16>
    %c0_206 = arith.constant 0 : index
    %c0_207 = arith.constant 0 : index
    %441 = vector.load %arg26[%c0_206, %c0_207] : memref<32x128xbf16, #tpu.memory_space<vmem>>, vector<32x128xbf16>
    %cst_208 = arith.constant dense<0.000000e+00> : vector<32x128xf32>
    %442 = tpu.matmul %440, %441, %cst_208 {dimension_numbers = #tpu.dot_dimension_numbers<[1], [0], [0], [1], [0, 0, 1, 1], [], []>} : vector<32x32xbf16>, vector<32x128xbf16>, vector<32x128xf32> -> vector<32x128xf32>
    %c0_209 = arith.constant 0 : index
    %c0_210 = arith.constant 0 : index
    %443 = vector.load %arg27[%c0_209, %c0_210] : memref<1x128xf32, #tpu.memory_space<vmem>>, vector<1x128xf32>
    %444 = vector.broadcast %443 : vector<1x128xf32> to vector<32x128xf32>
    %445 = arith.addf %442, %444 : vector<32x128xf32>
    %cst_211 = arith.constant 5.000000e-01 : f32
    %446 = vector.broadcast %cst_211 : f32 to vector<32x128xf32>
    %447 = arith.mulf %446, %445 : vector<32x128xf32>
    %cst_212 = arith.constant 4.471500e-02 : f32
    %448 = vector.broadcast %cst_212 : f32 to vector<32x128xf32>
    %449 = arith.mulf %448, %445 : vector<32x128xf32>
    %450 = arith.mulf %449, %445 : vector<32x128xf32>
    %451 = arith.mulf %450, %445 : vector<32x128xf32>
    %452 = arith.addf %445, %451 : vector<32x128xf32>
    %cst_213 = arith.constant 0.797884583 : f32
    %453 = vector.broadcast %cst_213 : f32 to vector<32x128xf32>
    %454 = arith.mulf %453, %452 : vector<32x128xf32>
    %455 = math.tanh %454 : vector<32x128xf32>
    %cst_214 = arith.constant 1.000000e+00 : f32
    %456 = vector.broadcast %cst_214 : f32 to vector<32x128xf32>
    %457 = arith.addf %456, %455 : vector<32x128xf32>
    %458 = arith.mulf %447, %457 : vector<32x128xf32>
    %459 = arith.truncf %458 : vector<32x128xf32> to vector<32x128xbf16>
    %c0_215 = arith.constant 0 : index
    %c0_216 = arith.constant 0 : index
    %460 = vector.load %arg28[%c0_215, %c0_216] : memref<128x32xbf16, #tpu.memory_space<vmem>>, vector<128x32xbf16>
    %cst_217 = arith.constant dense<0.000000e+00> : vector<32x32xf32>
    %461 = tpu.matmul %459, %460, %cst_217 {dimension_numbers = #tpu.dot_dimension_numbers<[1], [0], [0], [1], [0, 0, 1, 1], [], []>} : vector<32x128xbf16>, vector<128x32xbf16>, vector<32x32xf32> -> vector<32x32xf32>
    %462 = arith.addf %417, %461 : vector<32x32xf32>
    %c0_218 = arith.constant 0 : index
    %c0_219 = arith.constant 0 : index
    %463 = vector.load %arg29[%c0_218, %c0_219] : memref<1x32xf32, #tpu.memory_space<vmem>>, vector<1x32xf32>
    %464 = vector.broadcast %463 : vector<1x32xf32> to vector<32x32xf32>
    %465 = arith.addf %462, %464 : vector<32x32xf32>
    %c0_220 = arith.constant 0 : index
    %c0_221 = arith.constant 0 : index
    %466 = vector.load %arg3[%c0_220, %c0_221] : memref<1x32xf32, #tpu.memory_space<vmem>>, vector<1x32xf32>
    %c0_222 = arith.constant 0 : index
    %c0_223 = arith.constant 0 : index
    %467 = vector.load %arg4[%c0_222, %c0_223] : memref<1x32xf32, #tpu.memory_space<vmem>>, vector<1x32xf32>
    %cst_224 = arith.constant dense<0.000000e+00> : vector<32xf32>
    %468 = vector.multi_reduction <add>, %465, %cst_224 [1] : vector<32x32xf32> to vector<32xf32>
    %469 = vector.shape_cast %468 : vector<32xf32> to vector<32x1xf32>
    %cst_225 = arith.constant 3.200000e+01 : f32
    %470 = vector.broadcast %cst_225 : f32 to vector<32x1xf32>
    %471 = arith.divf %469, %470 : vector<32x1xf32>
    %472 = vector.broadcast %471 : vector<32x1xf32> to vector<32x32xf32>
    %473 = arith.subf %465, %472 : vector<32x32xf32>
    %474 = arith.mulf %473, %473 : vector<32x32xf32>
    %cst_226 = arith.constant dense<0.000000e+00> : vector<32xf32>
    %475 = vector.multi_reduction <add>, %474, %cst_226 [1] : vector<32x32xf32> to vector<32xf32>
    %476 = vector.shape_cast %475 : vector<32xf32> to vector<32x1xf32>
    %cst_227 = arith.constant 3.200000e+01 : f32
    %477 = vector.broadcast %cst_227 : f32 to vector<32x1xf32>
    %478 = arith.divf %476, %477 : vector<32x1xf32>
    %cst_228 = arith.constant 9.99999974E-6 : f32
    %479 = vector.broadcast %cst_228 : f32 to vector<32x1xf32>
    %480 = arith.addf %478, %479 : vector<32x1xf32>
    %481 = math.rsqrt %480 : vector<32x1xf32>
    %482 = vector.broadcast %481 : vector<32x1xf32> to vector<32x32xf32>
    %483 = arith.mulf %473, %482 : vector<32x32xf32>
    %484 = vector.broadcast %466 : vector<1x32xf32> to vector<32x32xf32>
    %485 = arith.mulf %483, %484 : vector<32x32xf32>
    %486 = vector.broadcast %467 : vector<1x32xf32> to vector<32x32xf32>
    %487 = arith.addf %485, %486 : vector<32x32xf32>
    %488 = arith.truncf %487 : vector<32x32xf32> to vector<32x32xbf16>
    %c0_229 = arith.constant 0 : index
    %c0_230 = arith.constant 0 : index
    %489 = vector.load %arg5[%c0_229, %c0_230] : memref<32x128xbf16, #tpu.memory_space<vmem>>, vector<32x128xbf16>
    %cst_231 = arith.constant dense<0.000000e+00> : vector<32x128xf32>
    %490 = tpu.matmul %488, %489, %cst_231 {dimension_numbers = #tpu.dot_dimension_numbers<[1], [0], [0], [1], [0, 0, 1, 1], [], []>} : vector<32x32xbf16>, vector<32x128xbf16>, vector<32x128xf32> -> vector<32x128xf32>
    %c0_232 = arith.constant 0 : index
    %c0_233 = arith.constant 0 : index
    %491 = vector.load %arg30[%c0_232, %c0_233] : memref<32x128xf32, #tpu.memory_space<vmem>>, vector<32x128xf32>
    tpu.vector_store %arg30[%c0_232, %c0_233], %490 {strides = array<i32>} : memref<32x128xf32, #tpu.memory_space<vmem>>, vector<32x128xf32>,
    return
  }
}

</mosaic_0001>

<llo_original>
// kernel: modified_decoder_forward.3
$region0: #{modified_decoder_forward.3}
  #allocation0 [shape = 'u32[]', space=smem, size = 0x4, offset = 0x4, fixed_abs, tag = 'smem constant byte address 0x4 - core index']
  #allocation1 [shape = 'u32[72,128]{1,0:T(1,128)}', space=vmem, size = 0x9000, scoped, tag = 'internal scratch']
  #allocation2 [shape = 'f32[32,32]{1,0:T(8,128)}', space=vmem, size = 0x4000, scoped, tag = 'scratch operand']
  %s0 = inlined_call_operand.smem [shape: u32[33], index: -1, kind: input, shape index: {}]
  %s1 = sld [smem:[%s0]]
  %s2 = scalar_lea.smem %s0, 1
  %s3 = sld [smem:[%s2]]
  %s4 = scalar_lea.smem %s0, 2
  %s5 = sld [smem:[%s4]]
  %s6 = scalar_lea.smem %s0, 3
  %s7 = sld [smem:[%s6]]
  %s8 = scalar_lea.smem %s0, 4
  %s9 = sld [smem:[%s8]]
  %s10 = scalar_lea.smem %s0, 5
  %s11 = sld [smem:[%s10]]
  %s12 = scalar_lea.smem %s0, 6
  %s13 = sld [smem:[%s12]]
  %s14 = scalar_lea.smem %s0, 7
  %s15 = sld [smem:[%s14]]
  %s16 = scalar_lea.smem %s0, 8
  %s17 = sld [smem:[%s16]]
  %s18 = scalar_lea.smem %s0, 9
  %s19 = sld [smem:[%s18]]
  %s20 = scalar_lea.smem %s0, 10
  %s21 = sld [smem:[%s20]]
  %s22 = scalar_lea.smem %s0, 11
  %s23 = sld [smem:[%s22]]
  %s24 = scalar_lea.smem %s0, 12
  %s25 = sld [smem:[%s24]]
  %s26 = scalar_lea.smem %s0, 13
  %s27 = sld [smem:[%s26]]
  %s28 = scalar_lea.smem %s0, 14
  %s29 = sld [smem:[%s28]]
  %s30 = scalar_lea.smem %s0, 15
  %s31 = sld [smem:[%s30]]
  %s32 = scalar_lea.smem %s0, 16
  %s33 = sld [smem:[%s32]]
  %s34 = scalar_lea.smem %s0, 17
  %s35 = sld [smem:[%s34]]
  %s36 = scalar_lea.smem %s0, 18
  %s37 = sld [smem:[%s36]]
  %s38 = scalar_lea.smem %s0, 19
  %s39 = sld [smem:[%s38]]
  %s40 = scalar_lea.smem %s0, 20
  %s41 = sld [smem:[%s40]]
  %s42 = scalar_lea.smem %s0, 21
  %s43 = sld [smem:[%s42]]
  %s44 = scalar_lea.smem %s0, 22
  %s45 = sld [smem:[%s44]]
  %s46 = scalar_lea.smem %s0, 23
  %s47 = sld [smem:[%s46]]
  %s48 = scalar_lea.smem %s0, 24
  %s49 = sld [smem:[%s48]]
  %s50 = scalar_lea.smem %s0, 25
  %s51 = sld [smem:[%s50]]
  %s52 = scalar_lea.smem %s0, 26
  %s53 = sld [smem:[%s52]]
  %s54 = scalar_lea.smem %s0, 27
  %s55 = sld [smem:[%s54]]
  %s56 = scalar_lea.smem %s0, 28
  %s57 = sld [smem:[%s56]]
  %s58 = scalar_lea.smem %s0, 29
  %s59 = sld [smem:[%s58]]
  %s60 = scalar_lea.smem %s0, 30
  %s61 = sld [smem:[%s60]]
  %s62 = scalar_lea.smem %s0, 31
  %s63 = sld [smem:[%s62]]
  %s64 = scalar_lea.smem %s0, 32
  %s65 = sld [smem:[%s64]]
  %66 = xla_tuple %s61, %s63, %s65
  %s67 = sld [smem:[#allocation0]]
  $region146: #{modified_decoder_forward.3} parent=0
    _
  %s69 = ssub.s32 1, %s67
  %s70 = scalar_select 0, %s69, %s67
  $region1: #{modified_decoder_forward.3} parent=0
    #allocation3 [shape = 'u8[16384]{0}', space=vmem, size = 0x4000, scoped, tag = 'output window, operand 0, single buffered']
    #allocation4 [shape = 's32[1]{0}', space=sflag, size = 0x4, scoped, tag = 'scoped memory for modified_decoder_forward.3']
    #allocation5 [shape = 'u8[65536]{0}', space=vmem, size = 0x10000, scoped, tag = 'output window, operand 1, single buffered']
    #allocation6 [shape = 's32[1]{0}', space=sflag, size = 0x4, scoped, tag = 'scoped memory for modified_decoder_forward.3']
    #allocation7 [shape = 'u8[65536]{0}', space=vmem, size = 0x10000, scoped, tag = 'output window, operand 2, single buffered']
    %71 = vsyncpa [#allocation4], 0
    %72 = vsyncpa [#allocation6], 0
    // Predicated region
    $region2: #{modified_decoder_forward.3} parent=1 // pred_check
      _
    $region3: #{modified_decoder_forward.3} parent=1 // pred_check_branch
      %74 = sbr.rel (0) target = $region5
    $region4: #{modified_decoder_forward.3} parent=1 // pred_region
      _
    $region5: #{modified_decoder_forward.3} parent=1 // pred_fallthru
      _
    // Predicated region
    $region6: #{modified_decoder_forward.3} parent=1 // pred_check
      _
    $region7: #{modified_decoder_forward.3} parent=1 // pred_check_branch
      %76 = sbr.rel (0) target = $region9
    $region8: #{modified_decoder_forward.3} parent=1 // pred_region
      _
    $region9: #{modified_decoder_forward.3} parent=1 // pred_fallthru
      _
    // Predicated region
    $region10: #{modified_decoder_forward.3} parent=1 // pred_check
      _
    $region11: #{modified_decoder_forward.3} parent=1 // pred_check_branch
      %78 = sbr.rel (0) target = $region13
    $region12: #{modified_decoder_forward.3} parent=1 // pred_region
      _
    $region13: #{modified_decoder_forward.3} parent=1 // pred_fallthru
      _
    // Predicated region
    $region14: #{modified_decoder_forward.3} parent=1 // pred_check
      _
    $region15: #{modified_decoder_forward.3} parent=1 // pred_check_branch
      %80 = sbr.rel (0) target = $region17
    $region16: #{modified_decoder_forward.3} parent=1 // pred_region
      _
    $region17: #{modified_decoder_forward.3} parent=1 // pred_fallthru
      _
    // Predicated region
    $region18: #{modified_decoder_forward.3} parent=1 // pred_check
      _
    $region19: #{modified_decoder_forward.3} parent=1 // pred_check_branch
      %82 = sbr.rel (0) target = $region21
    $region20: #{modified_decoder_forward.3} parent=1 // pred_region
      _
    $region21: #{modified_decoder_forward.3} parent=1 // pred_fallthru
      _
    // Predicated region
    $region22: #{modified_decoder_forward.3} parent=1 // pred_check
      _
    $region23: #{modified_decoder_forward.3} parent=1 // pred_check_branch
      %84 = sbr.rel (0) target = $region25
    $region24: #{modified_decoder_forward.3} parent=1 // pred_region
      _
    $region25: #{modified_decoder_forward.3} parent=1 // pred_fallthru
      _
    // Predicated region
    $region26: #{modified_decoder_forward.3} parent=1 // pred_check
      _
    $region27: #{modified_decoder_forward.3} parent=1 // pred_check_branch
      %86 = sbr.rel (0) target = $region29
    $region28: #{modified_decoder_forward.3} parent=1 // pred_region
      _
    $region29: #{modified_decoder_forward.3} parent=1 // pred_fallthru
      _
    // Predicated region
    $region30: #{modified_decoder_forward.3} parent=1 // pred_check
      _
    $region31: #{modified_decoder_forward.3} parent=1 // pred_check_branch
      %88 = sbr.rel (0) target = $region33
    $region32: #{modified_decoder_forward.3} parent=1 // pred_region
      _
    $region33: #{modified_decoder_forward.3} parent=1 // pred_fallthru
      _
    // Predicated region
    $region34: #{modified_decoder_forward.3} parent=1 // pred_check
      _
    $region35: #{modified_decoder_forward.3} parent=1 // pred_check_branch
      %90 = sbr.rel (0) target = $region37
    $region36: #{modified_decoder_forward.3} parent=1 // pred_region
      _
    $region37: #{modified_decoder_forward.3} parent=1 // pred_fallthru
      _
    // Predicated region
    $region38: #{modified_decoder_forward.3} parent=1 // pred_check
      _
    $region39: #{modified_decoder_forward.3} parent=1 // pred_check_branch
      %92 = sbr.rel (0) target = $region41
    $region40: #{modified_decoder_forward.3} parent=1 // pred_region
      _
    $region41: #{modified_decoder_forward.3} parent=1 // pred_fallthru
      _
    // Predicated region
    $region42: #{modified_decoder_forward.3} parent=1 // pred_check
      _
    $region43: #{modified_decoder_forward.3} parent=1 // pred_check_branch
      %94 = sbr.rel (0) target = $region45
    $region44: #{modified_decoder_forward.3} parent=1 // pred_region
      _
    $region45: #{modified_decoder_forward.3} parent=1 // pred_fallthru
      _
    // Predicated region
    $region46: #{modified_decoder_forward.3} parent=1 // pred_check
      _
    $region47: #{modified_decoder_forward.3} parent=1 // pred_check_branch
      %96 = sbr.rel (0) target = $region49
    $region48: #{modified_decoder_forward.3} parent=1 // pred_region
      _
    $region49: #{modified_decoder_forward.3} parent=1 // pred_fallthru
      _
    // Predicated region
    $region50: #{modified_decoder_forward.3} parent=1 // pred_check
      _
    $region51: #{modified_decoder_forward.3} parent=1 // pred_check_branch
      %98 = sbr.rel (0) target = $region53
    $region52: #{modified_decoder_forward.3} parent=1 // pred_region
      _
    $region53: #{modified_decoder_forward.3} parent=1 // pred_fallthru
      _
    // Predicated region
    $region54: #{modified_decoder_forward.3} parent=1 // pred_check
      _
    $region55: #{modified_decoder_forward.3} parent=1 // pred_check_branch
      %100 = sbr.rel (0) target = $region57
    $region56: #{modified_decoder_forward.3} parent=1 // pred_region
      _
    $region57: #{modified_decoder_forward.3} parent=1 // pred_fallthru
      _
    // Predicated region
    $region58: #{modified_decoder_forward.3} parent=1 // pred_check
      _
    $region59: #{modified_decoder_forward.3} parent=1 // pred_check_branch
      %102 = sbr.rel (0) target = $region61
    $region60: #{modified_decoder_forward.3} parent=1 // pred_region
      _
    $region61: #{modified_decoder_forward.3} parent=1 // pred_fallthru
      _
    // Predicated region
    $region62: #{modified_decoder_forward.3} parent=1 // pred_check
      _
    $region63: #{modified_decoder_forward.3} parent=1 // pred_check_branch
      %104 = sbr.rel (0) target = $region65
    $region64: #{modified_decoder_forward.3} parent=1 // pred_region
      _
    $region65: #{modified_decoder_forward.3} parent=1 // pred_fallthru
      _
    // Predicated region
    $region66: #{modified_decoder_forward.3} parent=1 // pred_check
      _
    $region67: #{modified_decoder_forward.3} parent=1 // pred_check_branch
      %106 = sbr.rel (0) target = $region69
    $region68: #{modified_decoder_forward.3} parent=1 // pred_region
      _
    $region69: #{modified_decoder_forward.3} parent=1 // pred_fallthru
      _
    // Predicated region
    $region70: #{modified_decoder_forward.3} parent=1 // pred_check
      _
    $region71: #{modified_decoder_forward.3} parent=1 // pred_check_branch
      %108 = sbr.rel (0) target = $region73
    $region72: #{modified_decoder_forward.3} parent=1 // pred_region
      _
    $region73: #{modified_decoder_forward.3} parent=1 // pred_fallthru
      _
    // Predicated region
    $region74: #{modified_decoder_forward.3} parent=1 // pred_check
      _
    $region75: #{modified_decoder_forward.3} parent=1 // pred_check_branch
      %110 = sbr.rel (0) target = $region77
    $region76: #{modified_decoder_forward.3} parent=1 // pred_region
      _
    $region77: #{modified_decoder_forward.3} parent=1 // pred_fallthru
      _
    // Predicated region
    $region78: #{modified_decoder_forward.3} parent=1 // pred_check
      _
    $region79: #{modified_decoder_forward.3} parent=1 // pred_check_branch
      %112 = sbr.rel (0) target = $region81
    $region80: #{modified_decoder_forward.3} parent=1 // pred_region
      _
    $region81: #{modified_decoder_forward.3} parent=1 // pred_fallthru
      _
    // Predicated region
    $region82: #{modified_decoder_forward.3} parent=1 // pred_check
      _
    $region83: #{modified_decoder_forward.3} parent=1 // pred_check_branch
      %114 = sbr.rel (0) target = $region85
    $region84: #{modified_decoder_forward.3} parent=1 // pred_region
      _
    $region85: #{modified_decoder_forward.3} parent=1 // pred_fallthru
      _
    // Predicated region
    $region86: #{modified_decoder_forward.3} parent=1 // pred_check
      _
    $region87: #{modified_decoder_forward.3} parent=1 // pred_check_branch
      %116 = sbr.rel (0) target = $region89
    $region88: #{modified_decoder_forward.3} parent=1 // pred_region
      _
    $region89: #{modified_decoder_forward.3} parent=1 // pred_fallthru
      _
    // Predicated region
    $region90: #{modified_decoder_forward.3} parent=1 // pred_check
      _
    $region91: #{modified_decoder_forward.3} parent=1 // pred_check_branch
      %118 = sbr.rel (0) target = $region93
    $region92: #{modified_decoder_forward.3} parent=1 // pred_region
      _
    $region93: #{modified_decoder_forward.3} parent=1 // pred_fallthru
      _
    // Predicated region
    $region94: #{modified_decoder_forward.3} parent=1 // pred_check
      _
    $region95: #{modified_decoder_forward.3} parent=1 // pred_check_branch
      %120 = sbr.rel (0) target = $region97
    $region96: #{modified_decoder_forward.3} parent=1 // pred_region
      _
    $region97: #{modified_decoder_forward.3} parent=1 // pred_fallthru
      _
    // Predicated region
    $region98: #{modified_decoder_forward.3} parent=1 // pred_check
      _
    $region99: #{modified_decoder_forward.3} parent=1 // pred_check_branch
      %122 = sbr.rel (0) target = $region101
    $region100: #{modified_decoder_forward.3} parent=1 // pred_region
      _
    $region101: #{modified_decoder_forward.3} parent=1 // pred_fallthru
      _
    // Predicated region
    $region102: #{modified_decoder_forward.3} parent=1 // pred_check
      _
    $region103: #{modified_decoder_forward.3} parent=1 // pred_check_branch
      %124 = sbr.rel (0) target = $region105
    $region104: #{modified_decoder_forward.3} parent=1 // pred_region
      _
    $region105: #{modified_decoder_forward.3} parent=1 // pred_fallthru
      _
    // Predicated region
    $region106: #{modified_decoder_forward.3} parent=1 // pred_check
      _
    $region107: #{modified_decoder_forward.3} parent=1 // pred_check_branch
      %126 = sbr.rel (0) target = $region109
    $region108: #{modified_decoder_forward.3} parent=1 // pred_region
      _
    $region109: #{modified_decoder_forward.3} parent=1 // pred_fallthru
      _
    // Predicated region
    $region110: #{modified_decoder_forward.3} parent=1 // pred_check
      _
    $region111: #{modified_decoder_forward.3} parent=1 // pred_check_branch
      %128 = sbr.rel (0) target = $region113
    $region112: #{modified_decoder_forward.3} parent=1 // pred_region
      _
    $region113: #{modified_decoder_forward.3} parent=1 // pred_fallthru
      _
    // Predicated region
    $region114: #{modified_decoder_forward.3} parent=1 // pred_check
      _
    $region115: #{modified_decoder_forward.3} parent=1 // pred_check_branch
      %130 = sbr.rel (0) target = $region117
    $region116: #{modified_decoder_forward.3} parent=1 // pred_region
      _
    $region117: #{modified_decoder_forward.3} parent=1 // pred_fallthru
      _
    // Predicated region
    $region118: #{modified_decoder_forward.3} parent=1 // pred_check
      _
    $region119: #{modified_decoder_forward.3} parent=1 // pred_check_branch
      %132 = sbr.rel (0) target = $region121
    $region120: #{modified_decoder_forward.3} parent=1 // pred_region
      _
    $region121: #{modified_decoder_forward.3} parent=1 // pred_fallthru
      _
    %v134 = vld [vmem:[%s1] sm:$0xff]
    %v135 = vld [vmem:[%s1 + $0x8] sm:$0xff]
    %v136 = vld [vmem:[%s3] sm:$0xff]
    %v137 = vld [vmem:[%s3 + $0x8] sm:$0xff]
    %v138 = vld [vmem:[%s5] sm:$0xff]
    %v139 = vld [vmem:[%s5 + $0x8] sm:$0xff]
    %v140 = vadd.f32 %v134, %v138
    %v141 = vadd.f32 %v136, %v139
    %v142 = vadd.f32 %v135, %v138
    %v143 = vadd.f32 %v137, %v139
    %v144 = vlaneseq
    %v145 = vshrl.u32 %v144, 7
    %v146 = vadd.s32 %v145, 8
    %v147 = vadd.s32 %v145, 16
    %v148 = vadd.s32 %v145, 24
    %v149 = vlaneseq
    %v150 = vand.u32 %v149, 127
    %vm151 = vcmp.lt.s32.totalorder %v145, 0
    %vm152 = vcmp.lt.s32.totalorder %v146, 0
    %vm153 = vcmp.lt.s32.totalorder %v147, 0
    %vm154 = vcmp.lt.s32.totalorder %v148, 0
    %vm155 = vcmp.ge.s32.totalorder %v145, 0
    %vm156 = vcmp.ge.s32.totalorder %v146, 0
    %vm157 = vcmp.ge.s32.totalorder %v147, 0
    %vm158 = vcmp.ge.s32.totalorder %v148, 0
    %vm159 = vcmp.lt.s32.totalorder %v145, 16
    %vm160 = vcmp.lt.s32.totalorder %v146, 16
    %vm161 = vcmp.lt.s32.totalorder %v147, 16
    %vm162 = vcmp.lt.s32.totalorder %v148, 16
    %vm163 = vmand %vm155, %vm159
    %vm164 = vmand %vm156, %vm160
    %vm165 = vmand %vm157, %vm161
    %vm166 = vmand %vm158, %vm162
    %vm167 = vcmp.ge.s32.totalorder %v150, 0
    %vm168 = vcmp.lt.s32.totalorder %v150, 16
    %vm169 = vmand %vm167, %vm168
    %vm170 = vmand %vm163, %vm169
    %vm171 = vmand %vm164, %vm169
    %vm172 = vmand %vm165, %vm169
    %vm173 = vmand %vm166, %vm169
    %vm174 = vmor %vm151, %vm170
    %vm175 = vmor %vm152, %vm171
    %vm176 = vmor %vm153, %vm172
    %vm177 = vmor %vm154, %vm173
    %vm178 = vcmp.ge.s32.totalorder %v145, 16
    %vm179 = vcmp.ge.s32.totalorder %v146, 16
    %vm180 = vcmp.ge.s32.totalorder %v147, 16
    %vm181 = vcmp.ge.s32.totalorder %v148, 16
    %vm182 = vcmp.lt.s32.totalorder %v145, 32
    %vm183 = vcmp.lt.s32.totalorder %v146, 32
    %vm184 = vcmp.lt.s32.totalorder %v147, 32
    %vm185 = vcmp.lt.s32.totalorder %v148, 32
    %vm186 = vmand %vm178, %vm182
    %vm187 = vmand %vm179, %vm183
    %vm188 = vmand %vm180, %vm184
    %vm189 = vmand %vm181, %vm185
    %vm190 = vcmp.ge.s32.totalorder %v150, 16
    %vm191 = vcmp.lt.s32.totalorder %v150, 32
    %vm192 = vmand %vm190, %vm191
    %vm193 = vmand %vm186, %vm192
    %vm194 = vmand %vm187, %vm192
    %vm195 = vmand %vm188, %vm192
    %vm196 = vmand %vm189, %vm192
    %vm197 = vmor %vm174, %vm193
    %vm198 = vmor %vm175, %vm194
    %vm199 = vmor %vm176, %vm195
    %vm200 = vmor %vm177, %vm196
    %vm201 = vcmp.le.s32.totalorder %v150, %v145
    %vm202 = vcmp.le.s32.totalorder %v150, %v146
    %vm203 = vcmp.le.s32.totalorder %v150, %v147
    %vm204 = vcmp.le.s32.totalorder %v150, %v148
    %vm205 = vmand %vm197, %vm201
    %vm206 = vmand %vm198, %vm202
    %vm207 = vmand %vm199, %vm203
    %vm208 = vmand %vm200, %vm204
    %v209 = vld [vmem:[%s13] sm:$0x1]
    %v210 = vld [vmem:[%s15] sm:$0x1]
    %vm211 = vcmask 261120
    %v212 = vsel %vm211, %v140, 0.0
    %213 = vadd.xlane.f32.xlu0 %v212
    %v214 = vpop.xlane.xlu0 %213
    %v215 = vsel %vm211, %v141, 0.0
    %216 = vadd.xlane.f32.xlu0 %v215
    %v217 = vpop.xlane.xlu0 %216
    %v218 = vsel %vm211, %v142, 0.0
    %219 = vadd.xlane.f32.xlu0 %v218
    %v220 = vpop.xlane.xlu0 %219
    %v221 = vsel %vm211, %v143, 0.0
    %222 = vadd.xlane.f32.xlu0 %v221
    %v223 = vpop.xlane.xlu0 %222
    %v224 = vrcp.pop 32.0
    %v225 = vmul.f32 32.0, %v224
    %v226 = vsub.f32 1.0, %v225
    %v227 = vmul.f32 %v224, %v226
    %v228 = vadd.f32 %v224, %v227
    %vm229 = vweird.f32 %v224
    %v230 = vsel %vm229, %v224, %v228
    %v231 = vmul.f32 %v214, %v230
    %v232 = vmul.f32 %v217, %v230
    %v233 = vmul.f32 %v220, %v230
    %v234 = vmul.f32 %v223, %v230
    %v235 = vsub.f32 %v140, %v231
    %v236 = vsub.f32 %v141, %v232
    %v237 = vsub.f32 %v142, %v233
    %v238 = vsub.f32 %v143, %v234
    %v239 = vmul.f32 %v235, %v235
    %v240 = vmul.f32 %v236, %v236
    %v241 = vmul.f32 %v237, %v237
    %v242 = vmul.f32 %v238, %v238
    %v243 = vsel %vm211, %v239, 0.0
    %244 = vadd.xlane.f32.xlu0 %v243
    %v245 = vpop.xlane.xlu0 %244
    %v246 = vsel %vm211, %v240, 0.0
    %247 = vadd.xlane.f32.xlu0 %v246
    %v248 = vpop.xlane.xlu0 %247
    %v249 = vsel %vm211, %v241, 0.0
    %250 = vadd.xlane.f32.xlu0 %v249
    %v251 = vpop.xlane.xlu0 %250
    %v252 = vsel %vm211, %v242, 0.0
    %253 = vadd.xlane.f32.xlu0 %v252
    %v254 = vpop.xlane.xlu0 %253
    %v255 = vmul.f32 %v245, %v230
    %v256 = vmul.f32 %v248, %v230
    %v257 = vmul.f32 %v251, %v230
    %v258 = vmul.f32 %v254, %v230
    %v259 = vadd.f32 %v255, 1e-05
    %v260 = vadd.f32 %v256, 1e-05
    %v261 = vadd.f32 %v257, 1e-05
    %v262 = vadd.f32 %v258, 1e-05
    %v263 = vrsqrt.pop %v259
    %v264 = vmul.f32 %v263, %v259
    %v265 = vmul.f32 %v264, %v263
    %v266 = vmul.f32 0.5, %v265
    %v267 = vsub.f32 1.5, %v266
    %v268 = vmul.f32 %v263, %v267
    %vm269 = vweird.f32 %v259
    %vm270 = vweird.f32 %v263
    %vm271 = vmor %vm269, %vm270
    %v272 = vsel %vm271, %v263, %v268
    %v273 = vrsqrt.pop %v260
    %v274 = vmul.f32 %v273, %v260
    %v275 = vmul.f32 %v274, %v273
    %v276 = vmul.f32 0.5, %v275
    %v277 = vsub.f32 1.5, %v276
    %v278 = vmul.f32 %v273, %v277
    %vm279 = vweird.f32 %v260
    %vm280 = vweird.f32 %v273
    %vm281 = vmor %vm279, %vm280
    %v282 = vsel %vm281, %v273, %v278
    %v283 = vrsqrt.pop %v261
    %v284 = vmul.f32 %v283, %v261
    %v285 = vmul.f32 %v284, %v283
    %v286 = vmul.f32 0.5, %v285
    %v287 = vsub.f32 1.5, %v286
    %v288 = vmul.f32 %v283, %v287
    %vm289 = vweird.f32 %v261
    %vm290 = vweird.f32 %v283
    %vm291 = vmor %vm289, %vm290
    %v292 = vsel %vm291, %v283, %v288
    %v293 = vrsqrt.pop %v262
    %v294 = vmul.f32 %v293, %v262
    %v295 = vmul.f32 %v294, %v293
    %v296 = vmul.f32 0.5, %v295
    %v297 = vsub.f32 1.5, %v296
    %v298 = vmul.f32 %v293, %v297
    %vm299 = vweird.f32 %v262
    %vm300 = vweird.f32 %v293
    %vm301 = vmor %vm299, %vm300
    %v302 = vsel %vm301, %v293, %v298
    %v303 = vmul.f32 %v235, %v272
    %v304 = vmul.f32 %v236, %v282
    %v305 = vmul.f32 %v237, %v292
    %v306 = vmul.f32 %v238, %v302
    %v308 = vperm.slane %v209, 0
    %v310 = vmul.f32 %v303, %v308
    %v311 = vmul.f32 %v304, %v308
    %v312 = vmul.f32 %v305, %v308
    %v313 = vmul.f32 %v306, %v308
    %v315 = vperm.slane %v210, 0
    %v317 = vadd.f32 %v310, %v315
    %v318 = vadd.f32 %v311, %v315
    %v319 = vadd.f32 %v312, %v315
    %v320 = vadd.f32 %v313, %v315
    %v321 = vpack.c.bf16 %v318, %v317
    %v322 = vpack.c.bf16 %v320, %v319
    %v323 = vld [vmem:[%s17] sm:$0xf]
    %v324 = vld [vmem:[%s17 + $0x4] sm:$0xf]
    %v325 = vld [vmem:[%s17 + $0x8] sm:$0xf]
    %v326 = vld [vmem:[%s17 + $0xc] sm:$0xf]
    %v327 = vld [vmem:[%s19] sm:$0x1]
    %v329 = vperm.slane %v327, 0
    %v335 = vunpack.c.l.b16 %v323
    %v336 = vunpack.c.l.b16 %v324
    %v337 = vunpack.c.l.b16 %v325
    %v338 = vunpack.c.l.b16 %v326
    %v339 = vpack.c.b16 %v336, %v335
    %v340 = vpack.c.b16 %v338, %v337
    %v344 = vsel %vm211, %v321, 0
    %v347 = vsel %vm211, %v322, 0
    %349 = vmatpush.bf16.msra.mxu0 0
    %350 = vmatpush.bf16.msra.mxu0 0
    %351 = vmatpush.bf16.msra.mxu0 0
    %352 = vmatpush.bf16.msra.mxu0 0
    %353 = vmatpush.bf16.msra.mxu0 0
    %354 = vmatpush.bf16.msra.mxu0 0
    %355 = vmatpush.bf16.msra.mxu0 %v340
    %356 = vmatpush.bf16.msra.mxu0 %v339
    %357 = vmatmul.bf16.gmra.mxu0 %v344
    %v358 = vpop.f32.mrf.mxu0
    %v359 = vadd.f32 %v329, %v358
    %v360 = vpop.f32.mrf.mxu0
    %v361 = vadd.f32 %v329, %v360
    %362 = vmatmul.bf16.gmra.mxu0 %v347
    %v363 = vpop.f32.mrf.mxu0
    %v364 = vadd.f32 %v329, %v363
    %v365 = vpop.f32.mrf.mxu0
    %v366 = vadd.f32 %v329, %v365
    %367 = vdwg.mxu0
    %v368 = vpack.c.bf16 %v361, %v359
    %v369 = vpack.c.bf16 %v366, %v364
    %372 = vrot.lane.b32.xlu0 %v368, 96
    %v373 = vpop.permute.xlu0 %372
    %374 = vrot.lane.b32.xlu0 %v369, 96
    %v375 = vpop.permute.xlu0 %374
    %vm376 = vcmask 64512
    %v378 = vsel %vm376, %v368, 0
    %v381 = vsel %vm376, %v369, 0
    %v384 = vsel %vm376, %v373, 0
    %v387 = vsel %vm376, %v375, 0
    %389 = vmatpush.bf16.xpose.msra.mxu0 0
    %390 = vmatpush.bf16.xpose.msra.mxu0 0
    %391 = vmatpush.bf16.xpose.msra.mxu0 0
    %392 = vmatpush.bf16.xpose.msra.mxu0 0
    %393 = vmatpush.bf16.xpose.msra.mxu0 0
    %394 = vmatpush.bf16.xpose.msra.mxu0 0
    %395 = vmatpush.bf16.xpose.msra.mxu0 %v387
    %396 = vmatpush.bf16.xpose.msra.mxu0 %v384
    %397 = vmatmul.bf16.gmra.mxu0 %v378
    %v398 = vpop.f32.mrf.mxu0
    %v399 = vadd.f32 0.0, %v398
    %v400 = vpop.f32.mrf.mxu0
    %v401 = vadd.f32 0.0, %v400
    %402 = vmatmul.bf16.gmra.mxu0 %v381
    %v403 = vpop.f32.mrf.mxu0
    %v404 = vadd.f32 0.0, %v403
    %v405 = vpop.f32.mrf.mxu0
    %v406 = vadd.f32 0.0, %v405
    %407 = vdwg.mxu0
    %v408 = vmul.f32 %v399, 0.35355338
    %v409 = vmul.f32 %v401, 0.35355338
    %v410 = vmul.f32 %v404, 0.35355338
    %v411 = vmul.f32 %v406, 0.35355338
    %vm412 = vcmask 130048
    %413 = vst.msk [vmem:[#allocation5] sm:$0xff] %vm412, %v408
    %414 = vst.msk [vmem:[#allocation5 + $0x8] sm:$0xff] %vm412, %v409
    %417 = vrot.lane.b32.xlu0 %v410, 112
    %v418 = vpop.permute.xlu0 %417
    %419 = vrot.lane.b32.xlu0 %v411, 112
    %v420 = vpop.permute.xlu0 %419
    %s423 = scalar_lea.vmem [#allocation5], 64
    %424 = vst.msk [vmem:[%s423] sm:$0xff] %vm412, %v418
    %425 = vst.msk [vmem:[%s423 + $0x8] sm:$0xff] %vm412, %v420
    %v426 = vsel %vm205, %v408, -1e+30
    %v427 = vsel %vm206, %v409, -1e+30
    %v428 = vsel %vm207, %v410, -1e+30
    %v429 = vsel %vm208, %v411, -1e+30
    %v430 = vsel %vm211, %v426, -inf
    %431 = vmax.xlane.f32.xlu0 %v430
    %v432 = vpop.xlane.xlu0 %431
    %v433 = vsel %vm211, %v427, -inf
    %434 = vmax.xlane.f32.xlu0 %v433
    %v435 = vpop.xlane.xlu0 %434
    %v436 = vsel %vm211, %v428, -inf
    %437 = vmax.xlane.f32.xlu0 %v436
    %v438 = vpop.xlane.xlu0 %437
    %v439 = vsel %vm211, %v429, -inf
    %440 = vmax.xlane.f32.xlu0 %v439
    %v441 = vpop.xlane.xlu0 %440
    %v442 = vsub.f32 %v426, %v432
    %v443 = vsub.f32 %v427, %v435
    %v444 = vsub.f32 %v428, %v438
    %v445 = vsub.f32 %v429, %v441
    %v446 = vmul.f32 %v442, 1.442695
    %v447 = vpow.pop %v446
    %v448 = vmul.f32 %v443, 1.442695
    %v449 = vpow.pop %v448
    %v450 = vmul.f32 %v444, 1.442695
    %v451 = vpow.pop %v450
    %v452 = vmul.f32 %v445, 1.442695
    %v453 = vpow.pop %v452
    %v454 = vsel %vm211, %v447, 0.0
    %455 = vadd.xlane.f32.xlu0 %v454
    %v456 = vpop.xlane.xlu0 %455
    %v457 = vsel %vm211, %v449, 0.0
    %458 = vadd.xlane.f32.xlu0 %v457
    %v459 = vpop.xlane.xlu0 %458
    %v460 = vsel %vm211, %v451, 0.0
    %461 = vadd.xlane.f32.xlu0 %v460
    %v462 = vpop.xlane.xlu0 %461
    %v463 = vsel %vm211, %v453, 0.0
    %464 = vadd.xlane.f32.xlu0 %v463
    %v465 = vpop.xlane.xlu0 %464
    %v466 = vrcp.pop %v456
    %v467 = vrcp.pop %v459
    %v468 = vrcp.pop %v462
    %v469 = vrcp.pop %v465
    %v470 = vmul.f32 %v447, %v466
    %v471 = vmul.f32 %v449, %v467
    %v472 = vmul.f32 %v451, %v468
    %v473 = vmul.f32 %v453, %v469
    %v474 = vpack.c.bf16 %v471, %v470
    %v475 = vpack.c.bf16 %v473, %v472
    %476 = vrot.lane.b32.xlu0 %v368, 64
    %v477 = vpop.permute.xlu0 %476
    %478 = vrot.lane.b32.xlu0 %v369, 64
    %v479 = vpop.permute.xlu0 %478
    %v483 = vsel %vm211, %v474, 0
    %v486 = vsel %vm211, %v475, 0
    %488 = vmatpush.bf16.msra.mxu0 0
    %489 = vmatpush.bf16.msra.mxu0 0
    %490 = vmatpush.bf16.msra.mxu0 0
    %491 = vmatpush.bf16.msra.mxu0 0
    %492 = vmatpush.bf16.msra.mxu0 0
    %493 = vmatpush.bf16.msra.mxu0 0
    %494 = vmatpush.bf16.msra.mxu0 %v479
    %495 = vmatpush.bf16.msra.mxu0 %v477
    %496 = vmatmul.bf16.gmra.mxu0 %v483
    %v497 = vpop.f32.mrf.mxu0
    %v498 = vadd.f32 0.0, %v497
    %v499 = vpop.f32.mrf.mxu0
    %v500 = vadd.f32 0.0, %v499
    %501 = vmatmul.bf16.gmra.mxu0 %v486
    %v502 = vpop.f32.mrf.mxu0
    %v503 = vadd.f32 0.0, %v502
    %v504 = vpop.f32.mrf.mxu0
    %v505 = vadd.f32 0.0, %v504
    %506 = vdwg.mxu0
    %507 = vst.msk [vmem:[#allocation2] sm:$0xff] %vm376, %v498
    %508 = vst.msk [vmem:[#allocation2 + $0x8] sm:$0xff] %vm376, %v500
    %509 = vst.msk [vmem:[#allocation2 + $0x10] sm:$0xff] %vm376, %v503
    %510 = vst.msk [vmem:[#allocation2 + $0x18] sm:$0xff] %vm376, %v505
    %511 = vrot.lane.b32.xlu0 %v368, 120
    %v512 = vpop.permute.xlu0 %511
    %513 = vrot.lane.b32.xlu0 %v369, 120
    %v514 = vpop.permute.xlu0 %513
    %515 = vrot.lane.b32.xlu0 %v368, 88
    %v516 = vpop.permute.xlu0 %515
    %517 = vrot.lane.b32.xlu0 %v369, 88
    %v518 = vpop.permute.xlu0 %517
    %v520 = vsel %vm376, %v512, 0
    %v523 = vsel %vm376, %v514, 0
    %v526 = vsel %vm376, %v516, 0
    %v529 = vsel %vm376, %v518, 0
    %531 = vmatpush.bf16.xpose.msra.mxu0 0
    %532 = vmatpush.bf16.xpose.msra.mxu0 0
    %533 = vmatpush.bf16.xpose.msra.mxu0 0
    %534 = vmatpush.bf16.xpose.msra.mxu0 0
    %535 = vmatpush.bf16.xpose.msra.mxu0 0
    %536 = vmatpush.bf16.xpose.msra.mxu0 0
    %537 = vmatpush.bf16.xpose.msra.mxu0 %v529
    %538 = vmatpush.bf16.xpose.msra.mxu0 %v526
    %539 = vmatmul.bf16.gmra.mxu0 %v520
    %v540 = vpop.f32.mrf.mxu0
    %v541 = vadd.f32 0.0, %v540
    %v542 = vpop.f32.mrf.mxu0
    %v543 = vadd.f32 0.0, %v542
    %544 = vmatmul.bf16.gmra.mxu0 %v523
    %v545 = vpop.f32.mrf.mxu0
    %v546 = vadd.f32 0.0, %v545
    %v547 = vpop.f32.mrf.mxu0
    %v548 = vadd.f32 0.0, %v547
    %549 = vdwg.mxu0
    %v550 = vmul.f32 %v541, 0.35355338
    %v551 = vmul.f32 %v543, 0.35355338
    %v552 = vmul.f32 %v546, 0.35355338
    %v553 = vmul.f32 %v548, 0.35355338
    %s554 = scalar_lea.vmem [#allocation5], 16
    %555 = vst.msk [vmem:[%s554] sm:$0xff] %vm412, %v550
    %556 = vst.msk [vmem:[%s554 + $0x8] sm:$0xff] %vm412, %v551
    %559 = vrot.lane.b32.xlu0 %v552, 112
    %v560 = vpop.permute.xlu0 %559
    %561 = vrot.lane.b32.xlu0 %v553, 112
    %v562 = vpop.permute.xlu0 %561
    %s565 = scalar_lea.vmem [#allocation5], 80
    %566 = vst.msk [vmem:[%s565] sm:$0xff] %vm412, %v560
    %567 = vst.msk [vmem:[%s565 + $0x8] sm:$0xff] %vm412, %v562
    %v568 = vsel %vm205, %v550, -1e+30
    %v569 = vsel %vm206, %v551, -1e+30
    %v570 = vsel %vm207, %v552, -1e+30
    %v571 = vsel %vm208, %v553, -1e+30
    %v572 = vsel %vm211, %v568, -inf
    %573 = vmax.xlane.f32.xlu0 %v572
    %v574 = vpop.xlane.xlu0 %573
    %v575 = vsel %vm211, %v569, -inf
    %576 = vmax.xlane.f32.xlu0 %v575
    %v577 = vpop.xlane.xlu0 %576
    %v578 = vsel %vm211, %v570, -inf
    %579 = vmax.xlane.f32.xlu0 %v578
    %v580 = vpop.xlane.xlu0 %579
    %v581 = vsel %vm211, %v571, -inf
    %582 = vmax.xlane.f32.xlu0 %v581
    %v583 = vpop.xlane.xlu0 %582
    %v584 = vsub.f32 %v568, %v574
    %v585 = vsub.f32 %v569, %v577
    %v586 = vsub.f32 %v570, %v580
    %v587 = vsub.f32 %v571, %v583
    %v588 = vmul.f32 %v584, 1.442695
    %v589 = vpow.pop %v588
    %v590 = vmul.f32 %v585, 1.442695
    %v591 = vpow.pop %v590
    %v592 = vmul.f32 %v586, 1.442695
    %v593 = vpow.pop %v592
    %v594 = vmul.f32 %v587, 1.442695
    %v595 = vpow.pop %v594
    %v596 = vsel %vm211, %v589, 0.0
    %597 = vadd.xlane.f32.xlu0 %v596
    %v598 = vpop.xlane.xlu0 %597
    %v599 = vsel %vm211, %v591, 0.0
    %600 = vadd.xlane.f32.xlu0 %v599
    %v601 = vpop.xlane.xlu0 %600
    %v602 = vsel %vm211, %v593, 0.0
    %603 = vadd.xlane.f32.xlu0 %v602
    %v604 = vpop.xlane.xlu0 %603
    %v605 = vsel %vm211, %v595, 0.0
    %606 = vadd.xlane.f32.xlu0 %v605
    %v607 = vpop.xlane.xlu0 %606
    %v608 = vrcp.pop %v598
    %v609 = vrcp.pop %v601
    %v610 = vrcp.pop %v604
    %v611 = vrcp.pop %v607
    %v612 = vmul.f32 %v589, %v608
    %v613 = vmul.f32 %v591, %v609
    %v614 = vmul.f32 %v593, %v610
    %v615 = vmul.f32 %v595, %v611
    %v616 = vpack.c.bf16 %v613, %v612
    %v617 = vpack.c.bf16 %v615, %v614
    %618 = vrot.lane.b32.xlu0 %v368, 56
    %v619 = vpop.permute.xlu0 %618
    %620 = vrot.lane.b32.xlu0 %v369, 56
    %v621 = vpop.permute.xlu0 %620
    %v625 = vsel %vm211, %v616, 0
    %v628 = vsel %vm211, %v617, 0
    %630 = vmatpush.bf16.msra.mxu0 0
    %631 = vmatpush.bf16.msra.mxu0 0
    %632 = vmatpush.bf16.msra.mxu0 0
    %633 = vmatpush.bf16.msra.mxu0 0
    %634 = vmatpush.bf16.msra.mxu0 0
    %635 = vmatpush.bf16.msra.mxu0 0
    %636 = vmatpush.bf16.msra.mxu0 %v621
    %637 = vmatpush.bf16.msra.mxu0 %v619
    %638 = vmatmul.bf16.gmra.mxu0 %v625
    %v639 = vpop.f32.mrf.mxu0
    %v640 = vadd.f32 0.0, %v639
    %v641 = vpop.f32.mrf.mxu0
    %v642 = vadd.f32 0.0, %v641
    %643 = vmatmul.bf16.gmra.mxu0 %v628
    %v644 = vpop.f32.mrf.mxu0
    %v645 = vadd.f32 0.0, %v644
    %v646 = vpop.f32.mrf.mxu0
    %v647 = vadd.f32 0.0, %v646
    %648 = vdwg.mxu0
    %653 = vrot.lane.b32.xlu0 %v640, 8
    %v654 = vpop.permute.xlu0 %653
    %655 = vrot.lane.b32.xlu0 %v642, 8
    %v656 = vpop.permute.xlu0 %655
    %657 = vrot.lane.b32.xlu0 %v645, 8
    %v658 = vpop.permute.xlu0 %657
    %659 = vrot.lane.b32.xlu0 %v647, 8
    %v660 = vpop.permute.xlu0 %659
    %vm665 = vcmask 130112
    %666 = vst.msk [vmem:[#allocation2] sm:$0xff] %vm665, %v654
    %667 = vst.msk [vmem:[#allocation2 + $0x8] sm:$0xff] %vm665, %v656
    %668 = vst.msk [vmem:[#allocation2 + $0x10] sm:$0xff] %vm665, %v658
    %669 = vst.msk [vmem:[#allocation2 + $0x18] sm:$0xff] %vm665, %v660
    %670 = vrot.lane.b32.xlu0 %v368, 112
    %v671 = vpop.permute.xlu0 %670
    %672 = vrot.lane.b32.xlu0 %v369, 112
    %v673 = vpop.permute.xlu0 %672
    %674 = vrot.lane.b32.xlu0 %v368, 80
    %v675 = vpop.permute.xlu0 %674
    %676 = vrot.lane.b32.xlu0 %v369, 80
    %v677 = vpop.permute.xlu0 %676
    %v679 = vsel %vm376, %v671, 0
    %v682 = vsel %vm376, %v673, 0
    %v685 = vsel %vm376, %v675, 0
    %v688 = vsel %vm376, %v677, 0
    %690 = vmatpush.bf16.xpose.msra.mxu0 0
    %691 = vmatpush.bf16.xpose.msra.mxu0 0
    %692 = vmatpush.bf16.xpose.msra.mxu0 0
    %693 = vmatpush.bf16.xpose.msra.mxu0 0
    %694 = vmatpush.bf16.xpose.msra.mxu0 0
    %695 = vmatpush.bf16.xpose.msra.mxu0 0
    %696 = vmatpush.bf16.xpose.msra.mxu0 %v688
    %697 = vmatpush.bf16.xpose.msra.mxu0 %v685
    %698 = vmatmul.bf16.gmra.mxu0 %v679
    %v699 = vpop.f32.mrf.mxu0
    %v700 = vadd.f32 0.0, %v699
    %v701 = vpop.f32.mrf.mxu0
    %v702 = vadd.f32 0.0, %v701
    %703 = vmatmul.bf16.gmra.mxu0 %v682
    %v704 = vpop.f32.mrf.mxu0
    %v705 = vadd.f32 0.0, %v704
    %v706 = vpop.f32.mrf.mxu0
    %v707 = vadd.f32 0.0, %v706
    %708 = vdwg.mxu0
    %v709 = vmul.f32 %v700, 0.35355338
    %v710 = vmul.f32 %v702, 0.35355338
    %v711 = vmul.f32 %v705, 0.35355338
    %v712 = vmul.f32 %v707, 0.35355338
    %s713 = scalar_lea.vmem [#allocation5], 32
    %714 = vst.msk [vmem:[%s713] sm:$0xff] %vm412, %v709
    %715 = vst.msk [vmem:[%s713 + $0x8] sm:$0xff] %vm412, %v710
    %718 = vrot.lane.b32.xlu0 %v711, 112
    %v719 = vpop.permute.xlu0 %718
    %720 = vrot.lane.b32.xlu0 %v712, 112
    %v721 = vpop.permute.xlu0 %720
    %s724 = scalar_lea.vmem [#allocation5], 96
    %725 = vst.msk [vmem:[%s724] sm:$0xff] %vm412, %v719
    %726 = vst.msk [vmem:[%s724 + $0x8] sm:$0xff] %vm412, %v721
    %v727 = vsel %vm205, %v709, -1e+30
    %v728 = vsel %vm206, %v710, -1e+30
    %v729 = vsel %vm207, %v711, -1e+30
    %v730 = vsel %vm208, %v712, -1e+30
    %v731 = vsel %vm211, %v727, -inf
    %732 = vmax.xlane.f32.xlu0 %v731
    %v733 = vpop.xlane.xlu0 %732
    %v734 = vsel %vm211, %v728, -inf
    %735 = vmax.xlane.f32.xlu0 %v734
    %v736 = vpop.xlane.xlu0 %735
    %v737 = vsel %vm211, %v729, -inf
    %738 = vmax.xlane.f32.xlu0 %v737
    %v739 = vpop.xlane.xlu0 %738
    %v740 = vsel %vm211, %v730, -inf
    %741 = vmax.xlane.f32.xlu0 %v740
    %v742 = vpop.xlane.xlu0 %741
    %v743 = vsub.f32 %v727, %v733
    %v744 = vsub.f32 %v728, %v736
    %v745 = vsub.f32 %v729, %v739
    %v746 = vsub.f32 %v730, %v742
    %v747 = vmul.f32 %v743, 1.442695
    %v748 = vpow.pop %v747
    %v749 = vmul.f32 %v744, 1.442695
    %v750 = vpow.pop %v749
    %v751 = vmul.f32 %v745, 1.442695
    %v752 = vpow.pop %v751
    %v753 = vmul.f32 %v746, 1.442695
    %v754 = vpow.pop %v753
    %v755 = vsel %vm211, %v748, 0.0
    %756 = vadd.xlane.f32.xlu0 %v755
    %v757 = vpop.xlane.xlu0 %756
    %v758 = vsel %vm211, %v750, 0.0
    %759 = vadd.xlane.f32.xlu0 %v758
    %v760 = vpop.xlane.xlu0 %759
    %v761 = vsel %vm211, %v752, 0.0
    %762 = vadd.xlane.f32.xlu0 %v761
    %v763 = vpop.xlane.xlu0 %762
    %v764 = vsel %vm211, %v754, 0.0
    %765 = vadd.xlane.f32.xlu0 %v764
    %v766 = vpop.xlane.xlu0 %765
    %v767 = vrcp.pop %v757
    %v768 = vrcp.pop %v760
    %v769 = vrcp.pop %v763
    %v770 = vrcp.pop %v766
    %v771 = vmul.f32 %v748, %v767
    %v772 = vmul.f32 %v750, %v768
    %v773 = vmul.f32 %v752, %v769
    %v774 = vmul.f32 %v754, %v770
    %v775 = vpack.c.bf16 %v772, %v771
    %v776 = vpack.c.bf16 %v774, %v773
    %777 = vrot.lane.b32.xlu0 %v368, 48
    %v778 = vpop.permute.xlu0 %777
    %779 = vrot.lane.b32.xlu0 %v369, 48
    %v780 = vpop.permute.xlu0 %779
    %v784 = vsel %vm211, %v775, 0
    %v787 = vsel %vm211, %v776, 0
    %789 = vmatpush.bf16.msra.mxu0 0
    %790 = vmatpush.bf16.msra.mxu0 0
    %791 = vmatpush.bf16.msra.mxu0 0
    %792 = vmatpush.bf16.msra.mxu0 0
    %793 = vmatpush.bf16.msra.mxu0 0
    %794 = vmatpush.bf16.msra.mxu0 0
    %795 = vmatpush.bf16.msra.mxu0 %v780
    %796 = vmatpush.bf16.msra.mxu0 %v778
    %797 = vmatmul.bf16.gmra.mxu0 %v784
    %v798 = vpop.f32.mrf.mxu0
    %v799 = vadd.f32 0.0, %v798
    %v800 = vpop.f32.mrf.mxu0
    %v801 = vadd.f32 0.0, %v800
    %802 = vmatmul.bf16.gmra.mxu0 %v787
    %v803 = vpop.f32.mrf.mxu0
    %v804 = vadd.f32 0.0, %v803
    %v805 = vpop.f32.mrf.mxu0
    %v806 = vadd.f32 0.0, %v805
    %807 = vdwg.mxu0
    %812 = vrot.lane.b32.xlu0 %v799, 16
    %v813 = vpop.permute.xlu0 %812
    %814 = vrot.lane.b32.xlu0 %v801, 16
    %v815 = vpop.permute.xlu0 %814
    %816 = vrot.lane.b32.xlu0 %v804, 16
    %v817 = vpop.permute.xlu0 %816
    %818 = vrot.lane.b32.xlu0 %v806, 16
    %v819 = vpop.permute.xlu0 %818
    %vm824 = vcmask 195712
    %825 = vst.msk [vmem:[#allocation2] sm:$0xff] %vm824, %v813
    %826 = vst.msk [vmem:[#allocation2 + $0x8] sm:$0xff] %vm824, %v815
    %827 = vst.msk [vmem:[#allocation2 + $0x10] sm:$0xff] %vm824, %v817
    %828 = vst.msk [vmem:[#allocation2 + $0x18] sm:$0xff] %vm824, %v819
    %829 = vrot.lane.b32.xlu0 %v368, 104
    %v830 = vpop.permute.xlu0 %829
    %831 = vrot.lane.b32.xlu0 %v369, 104
    %v832 = vpop.permute.xlu0 %831
    %833 = vrot.lane.b32.xlu0 %v368, 72
    %v834 = vpop.permute.xlu0 %833
    %835 = vrot.lane.b32.xlu0 %v369, 72
    %v836 = vpop.permute.xlu0 %835
    %v838 = vsel %vm376, %v830, 0
    %v841 = vsel %vm376, %v832, 0
    %v844 = vsel %vm376, %v834, 0
    %v847 = vsel %vm376, %v836, 0
    %849 = vmatpush.bf16.xpose.msra.mxu0 0
    %850 = vmatpush.bf16.xpose.msra.mxu0 0
    %851 = vmatpush.bf16.xpose.msra.mxu0 0
    %852 = vmatpush.bf16.xpose.msra.mxu0 0
    %853 = vmatpush.bf16.xpose.msra.mxu0 0
    %854 = vmatpush.bf16.xpose.msra.mxu0 0
    %855 = vmatpush.bf16.xpose.msra.mxu0 %v847
    %856 = vmatpush.bf16.xpose.msra.mxu0 %v844
    %857 = vmatmul.bf16.gmra.mxu0 %v838
    %v858 = vpop.f32.mrf.mxu0
    %v859 = vadd.f32 0.0, %v858
    %v860 = vpop.f32.mrf.mxu0
    %v861 = vadd.f32 0.0, %v860
    %862 = vmatmul.bf16.gmra.mxu0 %v841
    %v863 = vpop.f32.mrf.mxu0
    %v864 = vadd.f32 0.0, %v863
    %v865 = vpop.f32.mrf.mxu0
    %v866 = vadd.f32 0.0, %v865
    %867 = vdwg.mxu0
    %v868 = vmul.f32 %v859, 0.35355338
    %v869 = vmul.f32 %v861, 0.35355338
    %v870 = vmul.f32 %v864, 0.35355338
    %v871 = vmul.f32 %v866, 0.35355338
    %s872 = scalar_lea.vmem [#allocation5], 48
    %873 = vst.msk [vmem:[%s872] sm:$0xff] %vm412, %v868
    %874 = vst.msk [vmem:[%s872 + $0x8] sm:$0xff] %vm412, %v869
    %877 = vrot.lane.b32.xlu0 %v870, 112
    %v878 = vpop.permute.xlu0 %877
    %879 = vrot.lane.b32.xlu0 %v871, 112
    %v880 = vpop.permute.xlu0 %879
    %s883 = scalar_lea.vmem [#allocation5], 112
    %884 = vst.msk [vmem:[%s883] sm:$0xff] %vm412, %v878
    %885 = vst.msk [vmem:[%s883 + $0x8] sm:$0xff] %vm412, %v880
    %v886 = vsel %vm205, %v868, -1e+30
    %v887 = vsel %vm206, %v869, -1e+30
    %v888 = vsel %vm207, %v870, -1e+30
    %v889 = vsel %vm208, %v871, -1e+30
    %v890 = vsel %vm211, %v886, -inf
    %891 = vmax.xlane.f32.xlu0 %v890
    %v892 = vpop.xlane.xlu0 %891
    %v893 = vsel %vm211, %v887, -inf
    %894 = vmax.xlane.f32.xlu0 %v893
    %v895 = vpop.xlane.xlu0 %894
    %v896 = vsel %vm211, %v888, -inf
    %897 = vmax.xlane.f32.xlu0 %v896
    %v898 = vpop.xlane.xlu0 %897
    %v899 = vsel %vm211, %v889, -inf
    %900 = vmax.xlane.f32.xlu0 %v899
    %v901 = vpop.xlane.xlu0 %900
    %v902 = vsub.f32 %v886, %v892
    %v903 = vsub.f32 %v887, %v895
    %v904 = vsub.f32 %v888, %v898
    %v905 = vsub.f32 %v889, %v901
    %v906 = vmul.f32 %v902, 1.442695
    %v907 = vpow.pop %v906
    %v908 = vmul.f32 %v903, 1.442695
    %v909 = vpow.pop %v908
    %v910 = vmul.f32 %v904, 1.442695
    %v911 = vpow.pop %v910
    %v912 = vmul.f32 %v905, 1.442695
    %v913 = vpow.pop %v912
    %v914 = vsel %vm211, %v907, 0.0
    %915 = vadd.xlane.f32.xlu0 %v914
    %v916 = vpop.xlane.xlu0 %915
    %v917 = vsel %vm211, %v909, 0.0
    %918 = vadd.xlane.f32.xlu0 %v917
    %v919 = vpop.xlane.xlu0 %918
    %v920 = vsel %vm211, %v911, 0.0
    %921 = vadd.xlane.f32.xlu0 %v920
    %v922 = vpop.xlane.xlu0 %921
    %v923 = vsel %vm211, %v913, 0.0
    %924 = vadd.xlane.f32.xlu0 %v923
    %v925 = vpop.xlane.xlu0 %924
    %v926 = vrcp.pop %v916
    %v927 = vrcp.pop %v919
    %v928 = vrcp.pop %v922
    %v929 = vrcp.pop %v925
    %v930 = vmul.f32 %v907, %v926
    %v931 = vmul.f32 %v909, %v927
    %v932 = vmul.f32 %v911, %v928
    %v933 = vmul.f32 %v913, %v929
    %v934 = vpack.c.bf16 %v931, %v930
    %v935 = vpack.c.bf16 %v933, %v932
    %936 = vrot.lane.b32.xlu0 %v368, 40
    %v937 = vpop.permute.xlu0 %936
    %938 = vrot.lane.b32.xlu0 %v369, 40
    %v939 = vpop.permute.xlu0 %938
    %v943 = vsel %vm211, %v934, 0
    %v946 = vsel %vm211, %v935, 0
    %948 = vmatpush.bf16.msra.mxu0 0
    %949 = vmatpush.bf16.msra.mxu0 0
    %950 = vmatpush.bf16.msra.mxu0 0
    %951 = vmatpush.bf16.msra.mxu0 0
    %952 = vmatpush.bf16.msra.mxu0 0
    %953 = vmatpush.bf16.msra.mxu0 0
    %954 = vmatpush.bf16.msra.mxu0 %v939
    %955 = vmatpush.bf16.msra.mxu0 %v937
    %956 = vmatmul.bf16.gmra.mxu0 %v943
    %v957 = vpop.f32.mrf.mxu0
    %v958 = vadd.f32 0.0, %v957
    %v959 = vpop.f32.mrf.mxu0
    %v960 = vadd.f32 0.0, %v959
    %961 = vmatmul.bf16.gmra.mxu0 %v946
    %v962 = vpop.f32.mrf.mxu0
    %v963 = vadd.f32 0.0, %v962
    %v964 = vpop.f32.mrf.mxu0
    %v965 = vadd.f32 0.0, %v964
    %966 = vdwg.mxu0
    %971 = vrot.lane.b32.xlu0 %v958, 24
    %v972 = vpop.permute.xlu0 %971
    %973 = vrot.lane.b32.xlu0 %v960, 24
    %v974 = vpop.permute.xlu0 %973
    %975 = vrot.lane.b32.xlu0 %v963, 24
    %v976 = vpop.permute.xlu0 %975
    %977 = vrot.lane.b32.xlu0 %v965, 24
    %v978 = vpop.permute.xlu0 %977
    %vm983 = vcmask 261312
    %984 = vst.msk [vmem:[#allocation2] sm:$0xff] %vm983, %v972
    %985 = vst.msk [vmem:[#allocation2 + $0x8] sm:$0xff] %vm983, %v974
    %986 = vst.msk [vmem:[#allocation2 + $0x10] sm:$0xff] %vm983, %v976
    %987 = vst.msk [vmem:[#allocation2 + $0x18] sm:$0xff] %vm983, %v978
    %v988 = vld [vmem:[#allocation2] sm:$0xff]
    %v989 = vld [vmem:[#allocation2 + $0x8] sm:$0xff]
    %v990 = vld [vmem:[#allocation2 + $0x10] sm:$0xff]
    %v991 = vld [vmem:[#allocation2 + $0x18] sm:$0xff]
    %v992 = vpack.c.bf16 %v989, %v988
    %v993 = vpack.c.bf16 %v991, %v990
    %v994 = vld [vmem:[%s21] sm:$0xf]
    %v995 = vld [vmem:[%s21 + $0x4] sm:$0xf]
    %v996 = vld [vmem:[%s21 + $0x8] sm:$0xf]
    %v997 = vld [vmem:[%s21 + $0xc] sm:$0xf]
    %v1002 = vunpack.c.l.b16 %v994
    %v1003 = vunpack.c.l.b16 %v995
    %v1004 = vunpack.c.l.b16 %v996
    %v1005 = vunpack.c.l.b16 %v997
    %v1006 = vpack.c.b16 %v1003, %v1002
    %v1007 = vpack.c.b16 %v1005, %v1004
    %v1011 = vsel %vm211, %v992, 0
    %v1014 = vsel %vm211, %v993, 0
    %1016 = vmatpush.bf16.msra.mxu0 0
    %1017 = vmatpush.bf16.msra.mxu0 0
    %1018 = vmatpush.bf16.msra.mxu0 0
    %1019 = vmatpush.bf16.msra.mxu0 0
    %1020 = vmatpush.bf16.msra.mxu0 0
    %1021 = vmatpush.bf16.msra.mxu0 0
    %1022 = vmatpush.bf16.msra.mxu0 %v1007
    %1023 = vmatpush.bf16.msra.mxu0 %v1006
    %1024 = vmatmul.bf16.gmra.mxu0 %v1011
    %v1025 = vpop.f32.mrf.mxu0
    %v1026 = vadd.f32 0.0, %v1025
    %v1027 = vpop.f32.mrf.mxu0
    %v1028 = vadd.f32 0.0, %v1027
    %1029 = vmatmul.bf16.gmra.mxu0 %v1014
    %v1030 = vpop.f32.mrf.mxu0
    %v1031 = vadd.f32 0.0, %v1030
    %v1032 = vpop.f32.mrf.mxu0
    %v1033 = vadd.f32 0.0, %v1032
    %1034 = vdwg.mxu0
    %v1035 = vadd.f32 %v140, %v1026
    %v1036 = vadd.f32 %v141, %v1028
    %v1037 = vadd.f32 %v142, %v1031
    %v1038 = vadd.f32 %v143, %v1033
    %v1039 = vld [vmem:[%s23] sm:$0x1]
    %v1041 = vperm.slane %v1039, 0
    %v1043 = vadd.f32 %v1035, %v1041
    %v1044 = vadd.f32 %v1036, %v1041
    %v1045 = vadd.f32 %v1037, %v1041
    %v1046 = vadd.f32 %v1038, %v1041
    %v1047 = vld [vmem:[%s25] sm:$0x1]
    %v1048 = vld [vmem:[%s27] sm:$0x1]
    %v1049 = vsel %vm211, %v1043, 0.0
    %1050 = vadd.xlane.f32.xlu0 %v1049
    %v1051 = vpop.xlane.xlu0 %1050
    %v1052 = vsel %vm211, %v1044, 0.0
    %1053 = vadd.xlane.f32.xlu0 %v1052
    %v1054 = vpop.xlane.xlu0 %1053
    %v1055 = vsel %vm211, %v1045, 0.0
    %1056 = vadd.xlane.f32.xlu0 %v1055
    %v1057 = vpop.xlane.xlu0 %1056
    %v1058 = vsel %vm211, %v1046, 0.0
    %1059 = vadd.xlane.f32.xlu0 %v1058
    %v1060 = vpop.xlane.xlu0 %1059
    %v1061 = vmul.f32 %v1051, %v230
    %v1062 = vmul.f32 %v1054, %v230
    %v1063 = vmul.f32 %v1057, %v230
    %v1064 = vmul.f32 %v1060, %v230
    %v1065 = vsub.f32 %v1043, %v1061
    %v1066 = vsub.f32 %v1044, %v1062
    %v1067 = vsub.f32 %v1045, %v1063
    %v1068 = vsub.f32 %v1046, %v1064
    %v1069 = vmul.f32 %v1065, %v1065
    %v1070 = vmul.f32 %v1066, %v1066
    %v1071 = vmul.f32 %v1067, %v1067
    %v1072 = vmul.f32 %v1068, %v1068
    %v1073 = vsel %vm211, %v1069, 0.0
    %1074 = vadd.xlane.f32.xlu0 %v1073
    %v1075 = vpop.xlane.xlu0 %1074
    %v1076 = vsel %vm211, %v1070, 0.0
    %1077 = vadd.xlane.f32.xlu0 %v1076
    %v1078 = vpop.xlane.xlu0 %1077
    %v1079 = vsel %vm211, %v1071, 0.0
    %1080 = vadd.xlane.f32.xlu0 %v1079
    %v1081 = vpop.xlane.xlu0 %1080
    %v1082 = vsel %vm211, %v1072, 0.0
    %1083 = vadd.xlane.f32.xlu0 %v1082
    %v1084 = vpop.xlane.xlu0 %1083
    %v1085 = vmul.f32 %v1075, %v230
    %v1086 = vmul.f32 %v1078, %v230
    %v1087 = vmul.f32 %v1081, %v230
    %v1088 = vmul.f32 %v1084, %v230
    %v1089 = vadd.f32 %v1085, 1e-05
    %v1090 = vadd.f32 %v1086, 1e-05
    %v1091 = vadd.f32 %v1087, 1e-05
    %v1092 = vadd.f32 %v1088, 1e-05
    %v1093 = vrsqrt.pop %v1089
    %v1094 = vmul.f32 %v1093, %v1089
    %v1095 = vmul.f32 %v1094, %v1093
    %v1096 = vmul.f32 0.5, %v1095
    %v1097 = vsub.f32 1.5, %v1096
    %v1098 = vmul.f32 %v1093, %v1097
    %vm1099 = vweird.f32 %v1089
    %vm1100 = vweird.f32 %v1093
    %vm1101 = vmor %vm1099, %vm1100
    %v1102 = vsel %vm1101, %v1093, %v1098
    %v1103 = vrsqrt.pop %v1090
    %v1104 = vmul.f32 %v1103, %v1090
    %v1105 = vmul.f32 %v1104, %v1103
    %v1106 = vmul.f32 0.5, %v1105
    %v1107 = vsub.f32 1.5, %v1106
    %v1108 = vmul.f32 %v1103, %v1107
    %vm1109 = vweird.f32 %v1090
    %vm1110 = vweird.f32 %v1103
    %vm1111 = vmor %vm1109, %vm1110
    %v1112 = vsel %vm1111, %v1103, %v1108
    %v1113 = vrsqrt.pop %v1091
    %v1114 = vmul.f32 %v1113, %v1091
    %v1115 = vmul.f32 %v1114, %v1113
    %v1116 = vmul.f32 0.5, %v1115
    %v1117 = vsub.f32 1.5, %v1116
    %v1118 = vmul.f32 %v1113, %v1117
    %vm1119 = vweird.f32 %v1091
    %vm1120 = vweird.f32 %v1113
    %vm1121 = vmor %vm1119, %vm1120
    %v1122 = vsel %vm1121, %v1113, %v1118
    %v1123 = vrsqrt.pop %v1092
    %v1124 = vmul.f32 %v1123, %v1092
    %v1125 = vmul.f32 %v1124, %v1123
    %v1126 = vmul.f32 0.5, %v1125
    %v1127 = vsub.f32 1.5, %v1126
    %v1128 = vmul.f32 %v1123, %v1127
    %vm1129 = vweird.f32 %v1092
    %vm1130 = vweird.f32 %v1123
    %vm1131 = vmor %vm1129, %vm1130
    %v1132 = vsel %vm1131, %v1123, %v1128
    %v1133 = vmul.f32 %v1065, %v1102
    %v1134 = vmul.f32 %v1066, %v1112
    %v1135 = vmul.f32 %v1067, %v1122
    %v1136 = vmul.f32 %v1068, %v1132
    %v1138 = vperm.slane %v1047, 0
    %v1140 = vmul.f32 %v1133, %v1138
    %v1141 = vmul.f32 %v1134, %v1138
    %v1142 = vmul.f32 %v1135, %v1138
    %v1143 = vmul.f32 %v1136, %v1138
    %v1145 = vperm.slane %v1048, 0
    %v1147 = vadd.f32 %v1140, %v1145
    %v1148 = vadd.f32 %v1141, %v1145
    %v1149 = vadd.f32 %v1142, %v1145
    %v1150 = vadd.f32 %v1143, %v1145
    %v1151 = vpack.c.bf16 %v1148, %v1147
    %v1152 = vpack.c.bf16 %v1150, %v1149
    %v1153 = vld [vmem:[%s29] sm:$0xf]
    %v1154 = vld [vmem:[%s29 + $0x4] sm:$0xf]
    %v1155 = vld [vmem:[%s29 + $0x8] sm:$0xf]
    %v1156 = vld [vmem:[%s29 + $0xc] sm:$0xf]
    %v1157 = vld [vmem:[%s31] sm:$0x1]
    %v1159 = vperm.slane %v1157, 0
    %v1165 = vunpack.c.l.b16 %v1153
    %v1166 = vunpack.c.l.b16 %v1154
    %v1167 = vunpack.c.l.b16 %v1155
    %v1168 = vunpack.c.l.b16 %v1156
    %v1169 = vpack.c.b16 %v1166, %v1165
    %v1170 = vpack.c.b16 %v1168, %v1167
    %v1174 = vsel %vm211, %v1151, 0
    %v1177 = vsel %vm211, %v1152, 0
    %1179 = vmatpush.bf16.msra.mxu0 0
    %1180 = vmatpush.bf16.msra.mxu0 0
    %1181 = vmatpush.bf16.msra.mxu0 0
    %1182 = vmatpush.bf16.msra.mxu0 0
    %1183 = vmatpush.bf16.msra.mxu0 0
    %1184 = vmatpush.bf16.msra.mxu0 0
    %1185 = vmatpush.bf16.msra.mxu0 %v1170
    %1186 = vmatpush.bf16.msra.mxu0 %v1169
    %1187 = vmatmul.bf16.gmra.mxu0 %v1174
    %v1188 = vpop.f32.mrf.mxu0
    %v1189 = vadd.f32 %v1159, %v1188
    %v1190 = vpop.f32.mrf.mxu0
    %v1191 = vadd.f32 %v1159, %v1190
    %1192 = vmatmul.bf16.gmra.mxu0 %v1177
    %v1193 = vpop.f32.mrf.mxu0
    %v1194 = vadd.f32 %v1159, %v1193
    %v1195 = vpop.f32.mrf.mxu0
    %v1196 = vadd.f32 %v1159, %v1195
    %1197 = vdwg.mxu0
    %v1198 = vmul.f32 %v1189, 0.5
    %v1199 = vmul.f32 %v1191, 0.5
    %v1200 = vmul.f32 %v1194, 0.5
    %v1201 = vmul.f32 %v1196, 0.5
    %v1202 = vmul.f32 %v1189, 0.044715
    %v1203 = vmul.f32 %v1191, 0.044715
    %v1204 = vmul.f32 %v1194, 0.044715
    %v1205 = vmul.f32 %v1196, 0.044715
    %v1206 = vmul.f32 %v1202, %v1189
    %v1207 = vmul.f32 %v1203, %v1191
    %v1208 = vmul.f32 %v1204, %v1194
    %v1209 = vmul.f32 %v1205, %v1196
    %v1210 = vmul.f32 %v1206, %v1189
    %v1211 = vmul.f32 %v1207, %v1191
    %v1212 = vmul.f32 %v1208, %v1194
    %v1213 = vmul.f32 %v1209, %v1196
    %v1214 = vadd.f32 %v1189, %v1210
    %v1215 = vadd.f32 %v1191, %v1211
    %v1216 = vadd.f32 %v1194, %v1212
    %v1217 = vadd.f32 %v1196, %v1213
    %v1218 = vmul.f32 %v1214, 0.7978846
    %v1219 = vmul.f32 %v1215, 0.7978846
    %v1220 = vmul.f32 %v1216, 0.7978846
    %v1221 = vmul.f32 %v1217, 0.7978846
    %v1222 = vtanh.pop %v1218
    %v1223 = vtanh.pop %v1219
    %v1224 = vtanh.pop %v1220
    %v1225 = vtanh.pop %v1221
    %v1226 = vadd.f32 %v1222, 1.0
    %v1227 = vadd.f32 %v1223, 1.0
    %v1228 = vadd.f32 %v1224, 1.0
    %v1229 = vadd.f32 %v1225, 1.0
    %v1230 = vmul.f32 %v1198, %v1226
    %v1231 = vmul.f32 %v1199, %v1227
    %v1232 = vmul.f32 %v1200, %v1228
    %v1233 = vmul.f32 %v1201, %v1229
    %v1234 = vpack.c.bf16 %v1231, %v1230
    %v1235 = vpack.c.bf16 %v1233, %v1232
    %v1236 = vld [vmem:[%s33] sm:$0xf]
    %v1237 = vld [vmem:[%s33 + $0x4] sm:$0xf]
    %v1238 = vld [vmem:[%s33 + $0x8] sm:$0xf]
    %v1239 = vld [vmem:[%s33 + $0xc] sm:$0xf]
    %v1240 = vld [vmem:[%s33 + $0x10] sm:$0xf]
    %v1241 = vld [vmem:[%s33 + $0x14] sm:$0xf]
    %v1242 = vld [vmem:[%s33 + $0x18] sm:$0xf]
    %v1243 = vld [vmem:[%s33 + $0x1c] sm:$0xf]
    %v1244 = vld [vmem:[%s33 + $0x20] sm:$0xf]
    %v1245 = vld [vmem:[%s33 + $0x24] sm:$0xf]
    %v1246 = vld [vmem:[%s33 + $0x28] sm:$0xf]
    %v1247 = vld [vmem:[%s33 + $0x2c] sm:$0xf]
    %v1248 = vld [vmem:[%s33 + $0x30] sm:$0xf]
    %v1249 = vld [vmem:[%s33 + $0x34] sm:$0xf]
    %v1250 = vld [vmem:[%s33 + $0x38] sm:$0xf]
    %v1251 = vld [vmem:[%s33 + $0x3c] sm:$0xf]
    %v1268 = vunpack.c.l.b16 %v1236
    %v1269 = vunpack.c.l.b16 %v1237
    %v1270 = vunpack.c.l.b16 %v1238
    %v1271 = vunpack.c.l.b16 %v1239
    %v1272 = vunpack.c.l.b16 %v1240
    %v1273 = vunpack.c.l.b16 %v1241
    %v1274 = vunpack.c.l.b16 %v1242
    %v1275 = vunpack.c.l.b16 %v1243
    %v1276 = vunpack.c.l.b16 %v1244
    %v1277 = vunpack.c.l.b16 %v1245
    %v1278 = vunpack.c.l.b16 %v1246
    %v1279 = vunpack.c.l.b16 %v1247
    %v1280 = vunpack.c.l.b16 %v1248
    %v1281 = vunpack.c.l.b16 %v1249
    %v1282 = vunpack.c.l.b16 %v1250
    %v1283 = vunpack.c.l.b16 %v1251
    %v1284 = vpack.c.b16 %v1269, %v1268
    %v1285 = vpack.c.b16 %v1271, %v1270
    %v1286 = vpack.c.b16 %v1273, %v1272
    %v1287 = vpack.c.b16 %v1275, %v1274
    %v1288 = vpack.c.b16 %v1277, %v1276
    %v1289 = vpack.c.b16 %v1279, %v1278
    %v1290 = vpack.c.b16 %v1281, %v1280
    %v1291 = vpack.c.b16 %v1283, %v1282
    %1300 = vmatpush.bf16.msra.mxu0 %v1291
    %1301 = vmatpush.bf16.msra.mxu0 %v1290
    %1302 = vmatpush.bf16.msra.mxu0 %v1289
    %1303 = vmatpush.bf16.msra.mxu0 %v1288
    %1304 = vmatpush.bf16.msra.mxu0 %v1287
    %1305 = vmatpush.bf16.msra.mxu0 %v1286
    %1306 = vmatpush.bf16.msra.mxu0 %v1285
    %1307 = vmatpush.bf16.msra.mxu0 %v1284
    %1308 = vmatmul.bf16.gmra.mxu0 %v1234
    %v1309 = vpop.f32.mrf.mxu0
    %v1310 = vadd.f32 0.0, %v1309
    %v1311 = vpop.f32.mrf.mxu0
    %v1312 = vadd.f32 0.0, %v1311
    %1313 = vmatmul.bf16.gmra.mxu0 %v1235
    %v1314 = vpop.f32.mrf.mxu0
    %v1315 = vadd.f32 0.0, %v1314
    %v1316 = vpop.f32.mrf.mxu0
    %v1317 = vadd.f32 0.0, %v1316
    %1318 = vdwg.mxu0
    %v1319 = vadd.f32 %v1043, %v1310
    %v1320 = vadd.f32 %v1044, %v1312
    %v1321 = vadd.f32 %v1045, %v1315
    %v1322 = vadd.f32 %v1046, %v1317
    %v1323 = vld [vmem:[%s35] sm:$0x1]
    %v1325 = vperm.slane %v1323, 0
    %v1327 = vadd.f32 %v1319, %v1325
    %v1328 = vadd.f32 %v1320, %v1325
    %v1329 = vadd.f32 %v1321, %v1325
    %v1330 = vadd.f32 %v1322, %v1325
    %v1331 = vld [vmem:[%s37] sm:$0x1]
    %v1332 = vld [vmem:[%s39] sm:$0x1]
    %v1333 = vsel %vm211, %v1327, 0.0
    %1334 = vadd.xlane.f32.xlu0 %v1333
    %v1335 = vpop.xlane.xlu0 %1334
    %v1336 = vsel %vm211, %v1328, 0.0
    %1337 = vadd.xlane.f32.xlu0 %v1336
    %v1338 = vpop.xlane.xlu0 %1337
    %v1339 = vsel %vm211, %v1329, 0.0
    %1340 = vadd.xlane.f32.xlu0 %v1339
    %v1341 = vpop.xlane.xlu0 %1340
    %v1342 = vsel %vm211, %v1330, 0.0
    %1343 = vadd.xlane.f32.xlu0 %v1342
    %v1344 = vpop.xlane.xlu0 %1343
    %v1345 = vmul.f32 %v1335, %v230
    %v1346 = vmul.f32 %v1338, %v230
    %v1347 = vmul.f32 %v1341, %v230
    %v1348 = vmul.f32 %v1344, %v230
    %v1349 = vsub.f32 %v1327, %v1345
    %v1350 = vsub.f32 %v1328, %v1346
    %v1351 = vsub.f32 %v1329, %v1347
    %v1352 = vsub.f32 %v1330, %v1348
    %v1353 = vmul.f32 %v1349, %v1349
    %v1354 = vmul.f32 %v1350, %v1350
    %v1355 = vmul.f32 %v1351, %v1351
    %v1356 = vmul.f32 %v1352, %v1352
    %v1357 = vsel %vm211, %v1353, 0.0
    %1358 = vadd.xlane.f32.xlu0 %v1357
    %v1359 = vpop.xlane.xlu0 %1358
    %v1360 = vsel %vm211, %v1354, 0.0
    %1361 = vadd.xlane.f32.xlu0 %v1360
    %v1362 = vpop.xlane.xlu0 %1361
    %v1363 = vsel %vm211, %v1355, 0.0
    %1364 = vadd.xlane.f32.xlu0 %v1363
    %v1365 = vpop.xlane.xlu0 %1364
    %v1366 = vsel %vm211, %v1356, 0.0
    %1367 = vadd.xlane.f32.xlu0 %v1366
    %v1368 = vpop.xlane.xlu0 %1367
    %v1369 = vmul.f32 %v1359, %v230
    %v1370 = vmul.f32 %v1362, %v230
    %v1371 = vmul.f32 %v1365, %v230
    %v1372 = vmul.f32 %v1368, %v230
    %v1373 = vadd.f32 %v1369, 1e-05
    %v1374 = vadd.f32 %v1370, 1e-05
    %v1375 = vadd.f32 %v1371, 1e-05
    %v1376 = vadd.f32 %v1372, 1e-05
    %v1377 = vrsqrt.pop %v1373
    %v1378 = vmul.f32 %v1377, %v1373
    %v1379 = vmul.f32 %v1378, %v1377
    %v1380 = vmul.f32 0.5, %v1379
    %v1381 = vsub.f32 1.5, %v1380
    %v1382 = vmul.f32 %v1377, %v1381
    %vm1383 = vweird.f32 %v1373
    %vm1384 = vweird.f32 %v1377
    %vm1385 = vmor %vm1383, %vm1384
    %v1386 = vsel %vm1385, %v1377, %v1382
    %v1387 = vrsqrt.pop %v1374
    %v1388 = vmul.f32 %v1387, %v1374
    %v1389 = vmul.f32 %v1388, %v1387
    %v1390 = vmul.f32 0.5, %v1389
    %v1391 = vsub.f32 1.5, %v1390
    %v1392 = vmul.f32 %v1387, %v1391
    %vm1393 = vweird.f32 %v1374
    %vm1394 = vweird.f32 %v1387
    %vm1395 = vmor %vm1393, %vm1394
    %v1396 = vsel %vm1395, %v1387, %v1392
    %v1397 = vrsqrt.pop %v1375
    %v1398 = vmul.f32 %v1397, %v1375
    %v1399 = vmul.f32 %v1398, %v1397
    %v1400 = vmul.f32 0.5, %v1399
    %v1401 = vsub.f32 1.5, %v1400
    %v1402 = vmul.f32 %v1397, %v1401
    %vm1403 = vweird.f32 %v1375
    %vm1404 = vweird.f32 %v1397
    %vm1405 = vmor %vm1403, %vm1404
    %v1406 = vsel %vm1405, %v1397, %v1402
    %v1407 = vrsqrt.pop %v1376
    %v1408 = vmul.f32 %v1407, %v1376
    %v1409 = vmul.f32 %v1408, %v1407
    %v1410 = vmul.f32 0.5, %v1409
    %v1411 = vsub.f32 1.5, %v1410
    %v1412 = vmul.f32 %v1407, %v1411
    %vm1413 = vweird.f32 %v1376
    %vm1414 = vweird.f32 %v1407
    %vm1415 = vmor %vm1413, %vm1414
    %v1416 = vsel %vm1415, %v1407, %v1412
    %v1417 = vmul.f32 %v1349, %v1386
    %v1418 = vmul.f32 %v1350, %v1396
    %v1419 = vmul.f32 %v1351, %v1406
    %v1420 = vmul.f32 %v1352, %v1416
    %v1422 = vperm.slane %v1331, 0
    %v1424 = vmul.f32 %v1417, %v1422
    %v1425 = vmul.f32 %v1418, %v1422
    %v1426 = vmul.f32 %v1419, %v1422
    %v1427 = vmul.f32 %v1420, %v1422
    %v1429 = vperm.slane %v1332, 0
    %v1431 = vadd.f32 %v1424, %v1429
    %v1432 = vadd.f32 %v1425, %v1429
    %v1433 = vadd.f32 %v1426, %v1429
    %v1434 = vadd.f32 %v1427, %v1429
    %v1435 = vpack.c.bf16 %v1432, %v1431
    %v1436 = vpack.c.bf16 %v1434, %v1433
    %v1437 = vld [vmem:[%s41] sm:$0xf]
    %v1438 = vld [vmem:[%s41 + $0x4] sm:$0xf]
    %v1439 = vld [vmem:[%s41 + $0x8] sm:$0xf]
    %v1440 = vld [vmem:[%s41 + $0xc] sm:$0xf]
    %v1441 = vld [vmem:[%s43] sm:$0x1]
    %v1443 = vperm.slane %v1441, 0
    %v1449 = vunpack.c.l.b16 %v1437
    %v1450 = vunpack.c.l.b16 %v1438
    %v1451 = vunpack.c.l.b16 %v1439
    %v1452 = vunpack.c.l.b16 %v1440
    %v1453 = vpack.c.b16 %v1450, %v1449
    %v1454 = vpack.c.b16 %v1452, %v1451
    %v1458 = vsel %vm211, %v1435, 0
    %v1461 = vsel %vm211, %v1436, 0
    %1463 = vmatpush.bf16.msra.mxu0 0
    %1464 = vmatpush.bf16.msra.mxu0 0
    %1465 = vmatpush.bf16.msra.mxu0 0
    %1466 = vmatpush.bf16.msra.mxu0 0
    %1467 = vmatpush.bf16.msra.mxu0 0
    %1468 = vmatpush.bf16.msra.mxu0 0
    %1469 = vmatpush.bf16.msra.mxu0 %v1454
    %1470 = vmatpush.bf16.msra.mxu0 %v1453
    %1471 = vmatmul.bf16.gmra.mxu0 %v1458
    %v1472 = vpop.f32.mrf.mxu0
    %v1473 = vadd.f32 %v1443, %v1472
    %v1474 = vpop.f32.mrf.mxu0
    %v1475 = vadd.f32 %v1443, %v1474
    %1476 = vmatmul.bf16.gmra.mxu0 %v1461
    %v1477 = vpop.f32.mrf.mxu0
    %v1478 = vadd.f32 %v1443, %v1477
    %v1479 = vpop.f32.mrf.mxu0
    %v1480 = vadd.f32 %v1443, %v1479
    %1481 = vdwg.mxu0
    %v1482 = vpack.c.bf16 %v1475, %v1473
    %v1483 = vpack.c.bf16 %v1480, %v1478
    %1486 = vrot.lane.b32.xlu0 %v1482, 96
    %v1487 = vpop.permute.xlu0 %1486
    %1488 = vrot.lane.b32.xlu0 %v1483, 96
    %v1489 = vpop.permute.xlu0 %1488
    %v1491 = vsel %vm376, %v1482, 0
    %v1494 = vsel %vm376, %v1483, 0
    %v1497 = vsel %vm376, %v1487, 0
    %v1500 = vsel %vm376, %v1489, 0
    %1502 = vmatpush.bf16.xpose.msra.mxu0 0
    %1503 = vmatpush.bf16.xpose.msra.mxu0 0
    %1504 = vmatpush.bf16.xpose.msra.mxu0 0
    %1505 = vmatpush.bf16.xpose.msra.mxu0 0
    %1506 = vmatpush.bf16.xpose.msra.mxu0 0
    %1507 = vmatpush.bf16.xpose.msra.mxu0 0
    %1508 = vmatpush.bf16.xpose.msra.mxu0 %v1500
    %1509 = vmatpush.bf16.xpose.msra.mxu0 %v1497
    %1510 = vmatmul.bf16.gmra.mxu0 %v1491
    %v1511 = vpop.f32.mrf.mxu0
    %v1512 = vadd.f32 0.0, %v1511
    %v1513 = vpop.f32.mrf.mxu0
    %v1514 = vadd.f32 0.0, %v1513
    %1515 = vmatmul.bf16.gmra.mxu0 %v1494
    %v1516 = vpop.f32.mrf.mxu0
    %v1517 = vadd.f32 0.0, %v1516
    %v1518 = vpop.f32.mrf.mxu0
    %v1519 = vadd.f32 0.0, %v1518
    %1520 = vdwg.mxu0
    %v1521 = vmul.f32 %v1512, 0.35355338
    %v1522 = vmul.f32 %v1514, 0.35355338
    %v1523 = vmul.f32 %v1517, 0.35355338
    %v1524 = vmul.f32 %v1519, 0.35355338
    %1525 = vst.msk [vmem:[#allocation7] sm:$0xff] %vm412, %v1521
    %1526 = vst.msk [vmem:[#allocation7 + $0x8] sm:$0xff] %vm412, %v1522
    %1529 = vrot.lane.b32.xlu0 %v1523, 112
    %v1530 = vpop.permute.xlu0 %1529
    %1531 = vrot.lane.b32.xlu0 %v1524, 112
    %v1532 = vpop.permute.xlu0 %1531
    %s1535 = scalar_lea.vmem [#allocation7], 64
    %1536 = vst.msk [vmem:[%s1535] sm:$0xff] %vm412, %v1530
    %1537 = vst.msk [vmem:[%s1535 + $0x8] sm:$0xff] %vm412, %v1532
    %v1538 = vsel %vm205, %v1521, -1e+30
    %v1539 = vsel %vm206, %v1522, -1e+30
    %v1540 = vsel %vm207, %v1523, -1e+30
    %v1541 = vsel %vm208, %v1524, -1e+30
    %v1542 = vsel %vm211, %v1538, -inf
    %1543 = vmax.xlane.f32.xlu0 %v1542
    %v1544 = vpop.xlane.xlu0 %1543
    %v1545 = vsel %vm211, %v1539, -inf
    %1546 = vmax.xlane.f32.xlu0 %v1545
    %v1547 = vpop.xlane.xlu0 %1546
    %v1548 = vsel %vm211, %v1540, -inf
    %1549 = vmax.xlane.f32.xlu0 %v1548
    %v1550 = vpop.xlane.xlu0 %1549
    %v1551 = vsel %vm211, %v1541, -inf
    %1552 = vmax.xlane.f32.xlu0 %v1551
    %v1553 = vpop.xlane.xlu0 %1552
    %v1554 = vsub.f32 %v1538, %v1544
    %v1555 = vsub.f32 %v1539, %v1547
    %v1556 = vsub.f32 %v1540, %v1550
    %v1557 = vsub.f32 %v1541, %v1553
    %v1558 = vmul.f32 %v1554, 1.442695
    %v1559 = vpow.pop %v1558
    %v1560 = vmul.f32 %v1555, 1.442695
    %v1561 = vpow.pop %v1560
    %v1562 = vmul.f32 %v1556, 1.442695
    %v1563 = vpow.pop %v1562
    %v1564 = vmul.f32 %v1557, 1.442695
    %v1565 = vpow.pop %v1564
    %v1566 = vsel %vm211, %v1559, 0.0
    %1567 = vadd.xlane.f32.xlu0 %v1566
    %v1568 = vpop.xlane.xlu0 %1567
    %v1569 = vsel %vm211, %v1561, 0.0
    %1570 = vadd.xlane.f32.xlu0 %v1569
    %v1571 = vpop.xlane.xlu0 %1570
    %v1572 = vsel %vm211, %v1563, 0.0
    %1573 = vadd.xlane.f32.xlu0 %v1572
    %v1574 = vpop.xlane.xlu0 %1573
    %v1575 = vsel %vm211, %v1565, 0.0
    %1576 = vadd.xlane.f32.xlu0 %v1575
    %v1577 = vpop.xlane.xlu0 %1576
    %v1578 = vrcp.pop %v1568
    %v1579 = vrcp.pop %v1571
    %v1580 = vrcp.pop %v1574
    %v1581 = vrcp.pop %v1577
    %v1582 = vmul.f32 %v1559, %v1578
    %v1583 = vmul.f32 %v1561, %v1579
    %v1584 = vmul.f32 %v1563, %v1580
    %v1585 = vmul.f32 %v1565, %v1581
    %v1586 = vpack.c.bf16 %v1583, %v1582
    %v1587 = vpack.c.bf16 %v1585, %v1584
    %1588 = vrot.lane.b32.xlu0 %v1482, 64
    %v1589 = vpop.permute.xlu0 %1588
    %1590 = vrot.lane.b32.xlu0 %v1483, 64
    %v1591 = vpop.permute.xlu0 %1590
    %v1595 = vsel %vm211, %v1586, 0
    %v1598 = vsel %vm211, %v1587, 0
    %1600 = vmatpush.bf16.msra.mxu0 0
    %1601 = vmatpush.bf16.msra.mxu0 0
    %1602 = vmatpush.bf16.msra.mxu0 0
    %1603 = vmatpush.bf16.msra.mxu0 0
    %1604 = vmatpush.bf16.msra.mxu0 0
    %1605 = vmatpush.bf16.msra.mxu0 0
    %1606 = vmatpush.bf16.msra.mxu0 %v1591
    %1607 = vmatpush.bf16.msra.mxu0 %v1589
    %1608 = vmatmul.bf16.gmra.mxu0 %v1595
    %v1609 = vpop.f32.mrf.mxu0
    %v1610 = vadd.f32 0.0, %v1609
    %v1611 = vpop.f32.mrf.mxu0
    %v1612 = vadd.f32 0.0, %v1611
    %1613 = vmatmul.bf16.gmra.mxu0 %v1598
    %v1614 = vpop.f32.mrf.mxu0
    %v1615 = vadd.f32 0.0, %v1614
    %v1616 = vpop.f32.mrf.mxu0
    %v1617 = vadd.f32 0.0, %v1616
    %1618 = vdwg.mxu0
    %1619 = vst.msk [vmem:[#allocation2] sm:$0xff] %vm376, %v1610
    %1620 = vst.msk [vmem:[#allocation2 + $0x8] sm:$0xff] %vm376, %v1612
    %1621 = vst.msk [vmem:[#allocation2 + $0x10] sm:$0xff] %vm376, %v1615
    %1622 = vst.msk [vmem:[#allocation2 + $0x18] sm:$0xff] %vm376, %v1617
    %1623 = vrot.lane.b32.xlu0 %v1482, 120
    %v1624 = vpop.permute.xlu0 %1623
    %1625 = vrot.lane.b32.xlu0 %v1483, 120
    %v1626 = vpop.permute.xlu0 %1625
    %1627 = vrot.lane.b32.xlu0 %v1482, 88
    %v1628 = vpop.permute.xlu0 %1627
    %1629 = vrot.lane.b32.xlu0 %v1483, 88
    %v1630 = vpop.permute.xlu0 %1629
    %v1632 = vsel %vm376, %v1624, 0
    %v1635 = vsel %vm376, %v1626, 0
    %v1638 = vsel %vm376, %v1628, 0
    %v1641 = vsel %vm376, %v1630, 0
    %1643 = vmatpush.bf16.xpose.msra.mxu0 0
    %1644 = vmatpush.bf16.xpose.msra.mxu0 0
    %1645 = vmatpush.bf16.xpose.msra.mxu0 0
    %1646 = vmatpush.bf16.xpose.msra.mxu0 0
    %1647 = vmatpush.bf16.xpose.msra.mxu0 0
    %1648 = vmatpush.bf16.xpose.msra.mxu0 0
    %1649 = vmatpush.bf16.xpose.msra.mxu0 %v1641
    %1650 = vmatpush.bf16.xpose.msra.mxu0 %v1638
    %1651 = vmatmul.bf16.gmra.mxu0 %v1632
    %v1652 = vpop.f32.mrf.mxu0
    %v1653 = vadd.f32 0.0, %v1652
    %v1654 = vpop.f32.mrf.mxu0
    %v1655 = vadd.f32 0.0, %v1654
    %1656 = vmatmul.bf16.gmra.mxu0 %v1635
    %v1657 = vpop.f32.mrf.mxu0
    %v1658 = vadd.f32 0.0, %v1657
    %v1659 = vpop.f32.mrf.mxu0
    %v1660 = vadd.f32 0.0, %v1659
    %1661 = vdwg.mxu0
    %v1662 = vmul.f32 %v1653, 0.35355338
    %v1663 = vmul.f32 %v1655, 0.35355338
    %v1664 = vmul.f32 %v1658, 0.35355338
    %v1665 = vmul.f32 %v1660, 0.35355338
    %s1666 = scalar_lea.vmem [#allocation7], 16
    %1667 = vst.msk [vmem:[%s1666] sm:$0xff] %vm412, %v1662
    %1668 = vst.msk [vmem:[%s1666 + $0x8] sm:$0xff] %vm412, %v1663
    %1671 = vrot.lane.b32.xlu0 %v1664, 112
    %v1672 = vpop.permute.xlu0 %1671
    %1673 = vrot.lane.b32.xlu0 %v1665, 112
    %v1674 = vpop.permute.xlu0 %1673
    %s1677 = scalar_lea.vmem [#allocation7], 80
    %1678 = vst.msk [vmem:[%s1677] sm:$0xff] %vm412, %v1672
    %1679 = vst.msk [vmem:[%s1677 + $0x8] sm:$0xff] %vm412, %v1674
    %v1680 = vsel %vm205, %v1662, -1e+30
    %v1681 = vsel %vm206, %v1663, -1e+30
    %v1682 = vsel %vm207, %v1664, -1e+30
    %v1683 = vsel %vm208, %v1665, -1e+30
    %v1684 = vsel %vm211, %v1680, -inf
    %1685 = vmax.xlane.f32.xlu0 %v1684
    %v1686 = vpop.xlane.xlu0 %1685
    %v1687 = vsel %vm211, %v1681, -inf
    %1688 = vmax.xlane.f32.xlu0 %v1687
    %v1689 = vpop.xlane.xlu0 %1688
    %v1690 = vsel %vm211, %v1682, -inf
    %1691 = vmax.xlane.f32.xlu0 %v1690
    %v1692 = vpop.xlane.xlu0 %1691
    %v1693 = vsel %vm211, %v1683, -inf
    %1694 = vmax.xlane.f32.xlu0 %v1693
    %v1695 = vpop.xlane.xlu0 %1694
    %v1696 = vsub.f32 %v1680, %v1686
    %v1697 = vsub.f32 %v1681, %v1689
    %v1698 = vsub.f32 %v1682, %v1692
    %v1699 = vsub.f32 %v1683, %v1695
    %v1700 = vmul.f32 %v1696, 1.442695
    %v1701 = vpow.pop %v1700
    %v1702 = vmul.f32 %v1697, 1.442695
    %v1703 = vpow.pop %v1702
    %v1704 = vmul.f32 %v1698, 1.442695
    %v1705 = vpow.pop %v1704
    %v1706 = vmul.f32 %v1699, 1.442695
    %v1707 = vpow.pop %v1706
    %v1708 = vsel %vm211, %v1701, 0.0
    %1709 = vadd.xlane.f32.xlu0 %v1708
    %v1710 = vpop.xlane.xlu0 %1709
    %v1711 = vsel %vm211, %v1703, 0.0
    %1712 = vadd.xlane.f32.xlu0 %v1711
    %v1713 = vpop.xlane.xlu0 %1712
    %v1714 = vsel %vm211, %v1705, 0.0
    %1715 = vadd.xlane.f32.xlu0 %v1714
    %v1716 = vpop.xlane.xlu0 %1715
    %v1717 = vsel %vm211, %v1707, 0.0
    %1718 = vadd.xlane.f32.xlu0 %v1717
    %v1719 = vpop.xlane.xlu0 %1718
    %v1720 = vrcp.pop %v1710
    %v1721 = vrcp.pop %v1713
    %v1722 = vrcp.pop %v1716
    %v1723 = vrcp.pop %v1719
    %v1724 = vmul.f32 %v1701, %v1720
    %v1725 = vmul.f32 %v1703, %v1721
    %v1726 = vmul.f32 %v1705, %v1722
    %v1727 = vmul.f32 %v1707, %v1723
    %v1728 = vpack.c.bf16 %v1725, %v1724
    %v1729 = vpack.c.bf16 %v1727, %v1726
    %1730 = vrot.lane.b32.xlu0 %v1482, 56
    %v1731 = vpop.permute.xlu0 %1730
    %1732 = vrot.lane.b32.xlu0 %v1483, 56
    %v1733 = vpop.permute.xlu0 %1732
    %v1737 = vsel %vm211, %v1728, 0
    %v1740 = vsel %vm211, %v1729, 0
    %1742 = vmatpush.bf16.msra.mxu0 0
    %1743 = vmatpush.bf16.msra.mxu0 0
    %1744 = vmatpush.bf16.msra.mxu0 0
    %1745 = vmatpush.bf16.msra.mxu0 0
    %1746 = vmatpush.bf16.msra.mxu0 0
    %1747 = vmatpush.bf16.msra.mxu0 0
    %1748 = vmatpush.bf16.msra.mxu0 %v1733
    %1749 = vmatpush.bf16.msra.mxu0 %v1731
    %1750 = vmatmul.bf16.gmra.mxu0 %v1737
    %v1751 = vpop.f32.mrf.mxu0
    %v1752 = vadd.f32 0.0, %v1751
    %v1753 = vpop.f32.mrf.mxu0
    %v1754 = vadd.f32 0.0, %v1753
    %1755 = vmatmul.bf16.gmra.mxu0 %v1740
    %v1756 = vpop.f32.mrf.mxu0
    %v1757 = vadd.f32 0.0, %v1756
    %v1758 = vpop.f32.mrf.mxu0
    %v1759 = vadd.f32 0.0, %v1758
    %1760 = vdwg.mxu0
    %1765 = vrot.lane.b32.xlu0 %v1752, 8
    %v1766 = vpop.permute.xlu0 %1765
    %1767 = vrot.lane.b32.xlu0 %v1754, 8
    %v1768 = vpop.permute.xlu0 %1767
    %1769 = vrot.lane.b32.xlu0 %v1757, 8
    %v1770 = vpop.permute.xlu0 %1769
    %1771 = vrot.lane.b32.xlu0 %v1759, 8
    %v1772 = vpop.permute.xlu0 %1771
    %1777 = vst.msk [vmem:[#allocation2] sm:$0xff] %vm665, %v1766
    %1778 = vst.msk [vmem:[#allocation2 + $0x8] sm:$0xff] %vm665, %v1768
    %1779 = vst.msk [vmem:[#allocation2 + $0x10] sm:$0xff] %vm665, %v1770
    %1780 = vst.msk [vmem:[#allocation2 + $0x18] sm:$0xff] %vm665, %v1772
    %1781 = vrot.lane.b32.xlu0 %v1482, 112
    %v1782 = vpop.permute.xlu0 %1781
    %1783 = vrot.lane.b32.xlu0 %v1483, 112
    %v1784 = vpop.permute.xlu0 %1783
    %1785 = vrot.lane.b32.xlu0 %v1482, 80
    %v1786 = vpop.permute.xlu0 %1785
    %1787 = vrot.lane.b32.xlu0 %v1483, 80
    %v1788 = vpop.permute.xlu0 %1787
    %v1790 = vsel %vm376, %v1782, 0
    %v1793 = vsel %vm376, %v1784, 0
    %v1796 = vsel %vm376, %v1786, 0
    %v1799 = vsel %vm376, %v1788, 0
    %1801 = vmatpush.bf16.xpose.msra.mxu0 0
    %1802 = vmatpush.bf16.xpose.msra.mxu0 0
    %1803 = vmatpush.bf16.xpose.msra.mxu0 0
    %1804 = vmatpush.bf16.xpose.msra.mxu0 0
    %1805 = vmatpush.bf16.xpose.msra.mxu0 0
    %1806 = vmatpush.bf16.xpose.msra.mxu0 0
    %1807 = vmatpush.bf16.xpose.msra.mxu0 %v1799
    %1808 = vmatpush.bf16.xpose.msra.mxu0 %v1796
    %1809 = vmatmul.bf16.gmra.mxu0 %v1790
    %v1810 = vpop.f32.mrf.mxu0
    %v1811 = vadd.f32 0.0, %v1810
    %v1812 = vpop.f32.mrf.mxu0
    %v1813 = vadd.f32 0.0, %v1812
    %1814 = vmatmul.bf16.gmra.mxu0 %v1793
    %v1815 = vpop.f32.mrf.mxu0
    %v1816 = vadd.f32 0.0, %v1815
    %v1817 = vpop.f32.mrf.mxu0
    %v1818 = vadd.f32 0.0, %v1817
    %1819 = vdwg.mxu0
    %v1820 = vmul.f32 %v1811, 0.35355338
    %v1821 = vmul.f32 %v1813, 0.35355338
    %v1822 = vmul.f32 %v1816, 0.35355338
    %v1823 = vmul.f32 %v1818, 0.35355338
    %s1824 = scalar_lea.vmem [#allocation7], 32
    %1825 = vst.msk [vmem:[%s1824] sm:$0xff] %vm412, %v1820
    %1826 = vst.msk [vmem:[%s1824 + $0x8] sm:$0xff] %vm412, %v1821
    %1829 = vrot.lane.b32.xlu0 %v1822, 112
    %v1830 = vpop.permute.xlu0 %1829
    %1831 = vrot.lane.b32.xlu0 %v1823, 112
    %v1832 = vpop.permute.xlu0 %1831
    %s1835 = scalar_lea.vmem [#allocation7], 96
    %1836 = vst.msk [vmem:[%s1835] sm:$0xff] %vm412, %v1830
    %1837 = vst.msk [vmem:[%s1835 + $0x8] sm:$0xff] %vm412, %v1832
    %v1838 = vsel %vm205, %v1820, -1e+30
    %v1839 = vsel %vm206, %v1821, -1e+30
    %v1840 = vsel %vm207, %v1822, -1e+30
    %v1841 = vsel %vm208, %v1823, -1e+30
    %v1842 = vsel %vm211, %v1838, -inf
    %1843 = vmax.xlane.f32.xlu0 %v1842
    %v1844 = vpop.xlane.xlu0 %1843
    %v1845 = vsel %vm211, %v1839, -inf
    %1846 = vmax.xlane.f32.xlu0 %v1845
    %v1847 = vpop.xlane.xlu0 %1846
    %v1848 = vsel %vm211, %v1840, -inf
    %1849 = vmax.xlane.f32.xlu0 %v1848
    %v1850 = vpop.xlane.xlu0 %1849
    %v1851 = vsel %vm211, %v1841, -inf
    %1852 = vmax.xlane.f32.xlu0 %v1851
    %v1853 = vpop.xlane.xlu0 %1852
    %v1854 = vsub.f32 %v1838, %v1844
    %v1855 = vsub.f32 %v1839, %v1847
    %v1856 = vsub.f32 %v1840, %v1850
    %v1857 = vsub.f32 %v1841, %v1853
    %v1858 = vmul.f32 %v1854, 1.442695
    %v1859 = vpow.pop %v1858
    %v1860 = vmul.f32 %v1855, 1.442695
    %v1861 = vpow.pop %v1860
    %v1862 = vmul.f32 %v1856, 1.442695
    %v1863 = vpow.pop %v1862
    %v1864 = vmul.f32 %v1857, 1.442695
    %v1865 = vpow.pop %v1864
    %v1866 = vsel %vm211, %v1859, 0.0
    %1867 = vadd.xlane.f32.xlu0 %v1866
    %v1868 = vpop.xlane.xlu0 %1867
    %v1869 = vsel %vm211, %v1861, 0.0
    %1870 = vadd.xlane.f32.xlu0 %v1869
    %v1871 = vpop.xlane.xlu0 %1870
    %v1872 = vsel %vm211, %v1863, 0.0
    %1873 = vadd.xlane.f32.xlu0 %v1872
    %v1874 = vpop.xlane.xlu0 %1873
    %v1875 = vsel %vm211, %v1865, 0.0
    %1876 = vadd.xlane.f32.xlu0 %v1875
    %v1877 = vpop.xlane.xlu0 %1876
    %v1878 = vrcp.pop %v1868
    %v1879 = vrcp.pop %v1871
    %v1880 = vrcp.pop %v1874
    %v1881 = vrcp.pop %v1877
    %v1882 = vmul.f32 %v1859, %v1878
    %v1883 = vmul.f32 %v1861, %v1879
    %v1884 = vmul.f32 %v1863, %v1880
    %v1885 = vmul.f32 %v1865, %v1881
    %v1886 = vpack.c.bf16 %v1883, %v1882
    %v1887 = vpack.c.bf16 %v1885, %v1884
    %1888 = vrot.lane.b32.xlu0 %v1482, 48
    %v1889 = vpop.permute.xlu0 %1888
    %1890 = vrot.lane.b32.xlu0 %v1483, 48
    %v1891 = vpop.permute.xlu0 %1890
    %v1895 = vsel %vm211, %v1886, 0
    %v1898 = vsel %vm211, %v1887, 0
    %1900 = vmatpush.bf16.msra.mxu0 0
    %1901 = vmatpush.bf16.msra.mxu0 0
    %1902 = vmatpush.bf16.msra.mxu0 0
    %1903 = vmatpush.bf16.msra.mxu0 0
    %1904 = vmatpush.bf16.msra.mxu0 0
    %1905 = vmatpush.bf16.msra.mxu0 0
    %1906 = vmatpush.bf16.msra.mxu0 %v1891
    %1907 = vmatpush.bf16.msra.mxu0 %v1889
    %1908 = vmatmul.bf16.gmra.mxu0 %v1895
    %v1909 = vpop.f32.mrf.mxu0
    %v1910 = vadd.f32 0.0, %v1909
    %v1911 = vpop.f32.mrf.mxu0
    %v1912 = vadd.f32 0.0, %v1911
    %1913 = vmatmul.bf16.gmra.mxu0 %v1898
    %v1914 = vpop.f32.mrf.mxu0
    %v1915 = vadd.f32 0.0, %v1914
    %v1916 = vpop.f32.mrf.mxu0
    %v1917 = vadd.f32 0.0, %v1916
    %1918 = vdwg.mxu0
    %1923 = vrot.lane.b32.xlu0 %v1910, 16
    %v1924 = vpop.permute.xlu0 %1923
    %1925 = vrot.lane.b32.xlu0 %v1912, 16
    %v1926 = vpop.permute.xlu0 %1925
    %1927 = vrot.lane.b32.xlu0 %v1915, 16
    %v1928 = vpop.permute.xlu0 %1927
    %1929 = vrot.lane.b32.xlu0 %v1917, 16
    %v1930 = vpop.permute.xlu0 %1929
    %1935 = vst.msk [vmem:[#allocation2] sm:$0xff] %vm824, %v1924
    %1936 = vst.msk [vmem:[#allocation2 + $0x8] sm:$0xff] %vm824, %v1926
    %1937 = vst.msk [vmem:[#allocation2 + $0x10] sm:$0xff] %vm824, %v1928
    %1938 = vst.msk [vmem:[#allocation2 + $0x18] sm:$0xff] %vm824, %v1930
    %1939 = vrot.lane.b32.xlu0 %v1482, 104
    %v1940 = vpop.permute.xlu0 %1939
    %1941 = vrot.lane.b32.xlu0 %v1483, 104
    %v1942 = vpop.permute.xlu0 %1941
    %1943 = vrot.lane.b32.xlu0 %v1482, 72
    %v1944 = vpop.permute.xlu0 %1943
    %1945 = vrot.lane.b32.xlu0 %v1483, 72
    %v1946 = vpop.permute.xlu0 %1945
    %v1948 = vsel %vm376, %v1940, 0
    %v1951 = vsel %vm376, %v1942, 0
    %v1954 = vsel %vm376, %v1944, 0
    %v1957 = vsel %vm376, %v1946, 0
    %1959 = vmatpush.bf16.xpose.msra.mxu0 0
    %1960 = vmatpush.bf16.xpose.msra.mxu0 0
    %1961 = vmatpush.bf16.xpose.msra.mxu0 0
    %1962 = vmatpush.bf16.xpose.msra.mxu0 0
    %1963 = vmatpush.bf16.xpose.msra.mxu0 0
    %1964 = vmatpush.bf16.xpose.msra.mxu0 0
    %1965 = vmatpush.bf16.xpose.msra.mxu0 %v1957
    %1966 = vmatpush.bf16.xpose.msra.mxu0 %v1954
    %1967 = vmatmul.bf16.gmra.mxu0 %v1948
    %v1968 = vpop.f32.mrf.mxu0
    %v1969 = vadd.f32 0.0, %v1968
    %v1970 = vpop.f32.mrf.mxu0
    %v1971 = vadd.f32 0.0, %v1970
    %1972 = vmatmul.bf16.gmra.mxu0 %v1951
    %v1973 = vpop.f32.mrf.mxu0
    %v1974 = vadd.f32 0.0, %v1973
    %v1975 = vpop.f32.mrf.mxu0
    %v1976 = vadd.f32 0.0, %v1975
    %1977 = vdwg.mxu0
    %v1978 = vmul.f32 %v1969, 0.35355338
    %v1979 = vmul.f32 %v1971, 0.35355338
    %v1980 = vmul.f32 %v1974, 0.35355338
    %v1981 = vmul.f32 %v1976, 0.35355338
    %s1982 = scalar_lea.vmem [#allocation7], 48
    %1983 = vst.msk [vmem:[%s1982] sm:$0xff] %vm412, %v1978
    %1984 = vst.msk [vmem:[%s1982 + $0x8] sm:$0xff] %vm412, %v1979
    %1987 = vrot.lane.b32.xlu0 %v1980, 112
    %v1988 = vpop.permute.xlu0 %1987
    %1989 = vrot.lane.b32.xlu0 %v1981, 112
    %v1990 = vpop.permute.xlu0 %1989
    %s1993 = scalar_lea.vmem [#allocation7], 112
    %1994 = vst.msk [vmem:[%s1993] sm:$0xff] %vm412, %v1988
    %1995 = vst.msk [vmem:[%s1993 + $0x8] sm:$0xff] %vm412, %v1990
    %v1996 = vsel %vm205, %v1978, -1e+30
    %v1997 = vsel %vm206, %v1979, -1e+30
    %v1998 = vsel %vm207, %v1980, -1e+30
    %v1999 = vsel %vm208, %v1981, -1e+30
    %v2000 = vsel %vm211, %v1996, -inf
    %2001 = vmax.xlane.f32.xlu0 %v2000
    %v2002 = vpop.xlane.xlu0 %2001
    %v2003 = vsel %vm211, %v1997, -inf
    %2004 = vmax.xlane.f32.xlu0 %v2003
    %v2005 = vpop.xlane.xlu0 %2004
    %v2006 = vsel %vm211, %v1998, -inf
    %2007 = vmax.xlane.f32.xlu0 %v2006
    %v2008 = vpop.xlane.xlu0 %2007
    %v2009 = vsel %vm211, %v1999, -inf
    %2010 = vmax.xlane.f32.xlu0 %v2009
    %v2011 = vpop.xlane.xlu0 %2010
    %v2012 = vsub.f32 %v1996, %v2002
    %v2013 = vsub.f32 %v1997, %v2005
    %v2014 = vsub.f32 %v1998, %v2008
    %v2015 = vsub.f32 %v1999, %v2011
    %v2016 = vmul.f32 %v2012, 1.442695
    %v2017 = vpow.pop %v2016
    %v2018 = vmul.f32 %v2013, 1.442695
    %v2019 = vpow.pop %v2018
    %v2020 = vmul.f32 %v2014, 1.442695
    %v2021 = vpow.pop %v2020
    %v2022 = vmul.f32 %v2015, 1.442695
    %v2023 = vpow.pop %v2022
    %v2024 = vsel %vm211, %v2017, 0.0
    %2025 = vadd.xlane.f32.xlu0 %v2024
    %v2026 = vpop.xlane.xlu0 %2025
    %v2027 = vsel %vm211, %v2019, 0.0
    %2028 = vadd.xlane.f32.xlu0 %v2027
    %v2029 = vpop.xlane.xlu0 %2028
    %v2030 = vsel %vm211, %v2021, 0.0
    %2031 = vadd.xlane.f32.xlu0 %v2030
    %v2032 = vpop.xlane.xlu0 %2031
    %v2033 = vsel %vm211, %v2023, 0.0
    %2034 = vadd.xlane.f32.xlu0 %v2033
    %v2035 = vpop.xlane.xlu0 %2034
    %v2036 = vrcp.pop %v2026
    %v2037 = vrcp.pop %v2029
    %v2038 = vrcp.pop %v2032
    %v2039 = vrcp.pop %v2035
    %v2040 = vmul.f32 %v2017, %v2036
    %v2041 = vmul.f32 %v2019, %v2037
    %v2042 = vmul.f32 %v2021, %v2038
    %v2043 = vmul.f32 %v2023, %v2039
    %v2044 = vpack.c.bf16 %v2041, %v2040
    %v2045 = vpack.c.bf16 %v2043, %v2042
    %2046 = vrot.lane.b32.xlu0 %v1482, 40
    %v2047 = vpop.permute.xlu0 %2046
    %2048 = vrot.lane.b32.xlu0 %v1483, 40
    %v2049 = vpop.permute.xlu0 %2048
    %v2053 = vsel %vm211, %v2044, 0
    %v2056 = vsel %vm211, %v2045, 0
    %2058 = vmatpush.bf16.msra.mxu0 0
    %2059 = vmatpush.bf16.msra.mxu0 0
    %2060 = vmatpush.bf16.msra.mxu0 0
    %2061 = vmatpush.bf16.msra.mxu0 0
    %2062 = vmatpush.bf16.msra.mxu0 0
    %2063 = vmatpush.bf16.msra.mxu0 0
    %2064 = vmatpush.bf16.msra.mxu0 %v2049
    %2065 = vmatpush.bf16.msra.mxu0 %v2047
    %2066 = vmatmul.bf16.gmra.mxu0 %v2053
    %v2067 = vpop.f32.mrf.mxu0
    %v2068 = vadd.f32 0.0, %v2067
    %v2069 = vpop.f32.mrf.mxu0
    %v2070 = vadd.f32 0.0, %v2069
    %2071 = vmatmul.bf16.gmra.mxu0 %v2056
    %v2072 = vpop.f32.mrf.mxu0
    %v2073 = vadd.f32 0.0, %v2072
    %v2074 = vpop.f32.mrf.mxu0
    %v2075 = vadd.f32 0.0, %v2074
    %2076 = vdwg.mxu0
    %2081 = vrot.lane.b32.xlu0 %v2068, 24
    %v2082 = vpop.permute.xlu0 %2081
    %2083 = vrot.lane.b32.xlu0 %v2070, 24
    %v2084 = vpop.permute.xlu0 %2083
    %2085 = vrot.lane.b32.xlu0 %v2073, 24
    %v2086 = vpop.permute.xlu0 %2085
    %2087 = vrot.lane.b32.xlu0 %v2075, 24
    %v2088 = vpop.permute.xlu0 %2087
    %2093 = vst.msk [vmem:[#allocation2] sm:$0xff] %vm983, %v2082
    %2094 = vst.msk [vmem:[#allocation2 + $0x8] sm:$0xff] %vm983, %v2084
    %2095 = vst.msk [vmem:[#allocation2 + $0x10] sm:$0xff] %vm983, %v2086
    %2096 = vst.msk [vmem:[#allocation2 + $0x18] sm:$0xff] %vm983, %v2088
    %v2097 = vld [vmem:[#allocation2] sm:$0xff]
    %v2098 = vld [vmem:[#allocation2 + $0x8] sm:$0xff]
    %v2099 = vld [vmem:[#allocation2 + $0x10] sm:$0xff]
    %v2100 = vld [vmem:[#allocation2 + $0x18] sm:$0xff]
    %v2101 = vpack.c.bf16 %v2098, %v2097
    %v2102 = vpack.c.bf16 %v2100, %v2099
    %v2103 = vld [vmem:[%s45] sm:$0xf]
    %v2104 = vld [vmem:[%s45 + $0x4] sm:$0xf]
    %v2105 = vld [vmem:[%s45 + $0x8] sm:$0xf]
    %v2106 = vld [vmem:[%s45 + $0xc] sm:$0xf]
    %v2111 = vunpack.c.l.b16 %v2103
    %v2112 = vunpack.c.l.b16 %v2104
    %v2113 = vunpack.c.l.b16 %v2105
    %v2114 = vunpack.c.l.b16 %v2106
    %v2115 = vpack.c.b16 %v2112, %v2111
    %v2116 = vpack.c.b16 %v2114, %v2113
    %v2120 = vsel %vm211, %v2101, 0
    %v2123 = vsel %vm211, %v2102, 0
    %2125 = vmatpush.bf16.msra.mxu0 0
    %2126 = vmatpush.bf16.msra.mxu0 0
    %2127 = vmatpush.bf16.msra.mxu0 0
    %2128 = vmatpush.bf16.msra.mxu0 0
    %2129 = vmatpush.bf16.msra.mxu0 0
    %2130 = vmatpush.bf16.msra.mxu0 0
    %2131 = vmatpush.bf16.msra.mxu0 %v2116
    %2132 = vmatpush.bf16.msra.mxu0 %v2115
    %2133 = vmatmul.bf16.gmra.mxu0 %v2120
    %v2134 = vpop.f32.mrf.mxu0
    %v2135 = vadd.f32 0.0, %v2134
    %v2136 = vpop.f32.mrf.mxu0
    %v2137 = vadd.f32 0.0, %v2136
    %2138 = vmatmul.bf16.gmra.mxu0 %v2123
    %v2139 = vpop.f32.mrf.mxu0
    %v2140 = vadd.f32 0.0, %v2139
    %v2141 = vpop.f32.mrf.mxu0
    %v2142 = vadd.f32 0.0, %v2141
    %2143 = vdwg.mxu0
    %v2144 = vadd.f32 %v1327, %v2135
    %v2145 = vadd.f32 %v1328, %v2137
    %v2146 = vadd.f32 %v1329, %v2140
    %v2147 = vadd.f32 %v1330, %v2142
    %v2148 = vld [vmem:[%s47] sm:$0x1]
    %v2150 = vperm.slane %v2148, 0
    %v2152 = vadd.f32 %v2144, %v2150
    %v2153 = vadd.f32 %v2145, %v2150
    %v2154 = vadd.f32 %v2146, %v2150
    %v2155 = vadd.f32 %v2147, %v2150
    %v2156 = vld [vmem:[%s49] sm:$0x1]
    %v2157 = vld [vmem:[%s51] sm:$0x1]
    %v2158 = vsel %vm211, %v2152, 0.0
    %2159 = vadd.xlane.f32.xlu0 %v2158
    %v2160 = vpop.xlane.xlu0 %2159
    %v2161 = vsel %vm211, %v2153, 0.0
    %2162 = vadd.xlane.f32.xlu0 %v2161
    %v2163 = vpop.xlane.xlu0 %2162
    %v2164 = vsel %vm211, %v2154, 0.0
    %2165 = vadd.xlane.f32.xlu0 %v2164
    %v2166 = vpop.xlane.xlu0 %2165
    %v2167 = vsel %vm211, %v2155, 0.0
    %2168 = vadd.xlane.f32.xlu0 %v2167
    %v2169 = vpop.xlane.xlu0 %2168
    %v2170 = vmul.f32 %v2160, %v230
    %v2171 = vmul.f32 %v2163, %v230
    %v2172 = vmul.f32 %v2166, %v230
    %v2173 = vmul.f32 %v2169, %v230
    %v2174 = vsub.f32 %v2152, %v2170
    %v2175 = vsub.f32 %v2153, %v2171
    %v2176 = vsub.f32 %v2154, %v2172
    %v2177 = vsub.f32 %v2155, %v2173
    %v2178 = vmul.f32 %v2174, %v2174
    %v2179 = vmul.f32 %v2175, %v2175
    %v2180 = vmul.f32 %v2176, %v2176
    %v2181 = vmul.f32 %v2177, %v2177
    %v2182 = vsel %vm211, %v2178, 0.0
    %2183 = vadd.xlane.f32.xlu0 %v2182
    %v2184 = vpop.xlane.xlu0 %2183
    %v2185 = vsel %vm211, %v2179, 0.0
    %2186 = vadd.xlane.f32.xlu0 %v2185
    %v2187 = vpop.xlane.xlu0 %2186
    %v2188 = vsel %vm211, %v2180, 0.0
    %2189 = vadd.xlane.f32.xlu0 %v2188
    %v2190 = vpop.xlane.xlu0 %2189
    %v2191 = vsel %vm211, %v2181, 0.0
    %2192 = vadd.xlane.f32.xlu0 %v2191
    %v2193 = vpop.xlane.xlu0 %2192
    %v2194 = vmul.f32 %v2184, %v230
    %v2195 = vmul.f32 %v2187, %v230
    %v2196 = vmul.f32 %v2190, %v230
    %v2197 = vmul.f32 %v2193, %v230
    %v2198 = vadd.f32 %v2194, 1e-05
    %v2199 = vadd.f32 %v2195, 1e-05
    %v2200 = vadd.f32 %v2196, 1e-05
    %v2201 = vadd.f32 %v2197, 1e-05
    %v2202 = vrsqrt.pop %v2198
    %v2203 = vmul.f32 %v2202, %v2198
    %v2204 = vmul.f32 %v2203, %v2202
    %v2205 = vmul.f32 0.5, %v2204
    %v2206 = vsub.f32 1.5, %v2205
    %v2207 = vmul.f32 %v2202, %v2206
    %vm2208 = vweird.f32 %v2198
    %vm2209 = vweird.f32 %v2202
    %vm2210 = vmor %vm2208, %vm2209
    %v2211 = vsel %vm2210, %v2202, %v2207
    %v2212 = vrsqrt.pop %v2199
    %v2213 = vmul.f32 %v2212, %v2199
    %v2214 = vmul.f32 %v2213, %v2212
    %v2215 = vmul.f32 0.5, %v2214
    %v2216 = vsub.f32 1.5, %v2215
    %v2217 = vmul.f32 %v2212, %v2216
    %vm2218 = vweird.f32 %v2199
    %vm2219 = vweird.f32 %v2212
    %vm2220 = vmor %vm2218, %vm2219
    %v2221 = vsel %vm2220, %v2212, %v2217
    %v2222 = vrsqrt.pop %v2200
    %v2223 = vmul.f32 %v2222, %v2200
    %v2224 = vmul.f32 %v2223, %v2222
    %v2225 = vmul.f32 0.5, %v2224
    %v2226 = vsub.f32 1.5, %v2225
    %v2227 = vmul.f32 %v2222, %v2226
    %vm2228 = vweird.f32 %v2200
    %vm2229 = vweird.f32 %v2222
    %vm2230 = vmor %vm2228, %vm2229
    %v2231 = vsel %vm2230, %v2222, %v2227
    %v2232 = vrsqrt.pop %v2201
    %v2233 = vmul.f32 %v2232, %v2201
    %v2234 = vmul.f32 %v2233, %v2232
    %v2235 = vmul.f32 0.5, %v2234
    %v2236 = vsub.f32 1.5, %v2235
    %v2237 = vmul.f32 %v2232, %v2236
    %vm2238 = vweird.f32 %v2201
    %vm2239 = vweird.f32 %v2232
    %vm2240 = vmor %vm2238, %vm2239
    %v2241 = vsel %vm2240, %v2232, %v2237
    %v2242 = vmul.f32 %v2174, %v2211
    %v2243 = vmul.f32 %v2175, %v2221
    %v2244 = vmul.f32 %v2176, %v2231
    %v2245 = vmul.f32 %v2177, %v2241
    %v2247 = vperm.slane %v2156, 0
    %v2249 = vmul.f32 %v2242, %v2247
    %v2250 = vmul.f32 %v2243, %v2247
    %v2251 = vmul.f32 %v2244, %v2247
    %v2252 = vmul.f32 %v2245, %v2247
    %v2254 = vperm.slane %v2157, 0
    %v2256 = vadd.f32 %v2249, %v2254
    %v2257 = vadd.f32 %v2250, %v2254
    %v2258 = vadd.f32 %v2251, %v2254
    %v2259 = vadd.f32 %v2252, %v2254
    %v2260 = vpack.c.bf16 %v2257, %v2256
    %v2261 = vpack.c.bf16 %v2259, %v2258
    %v2262 = vld [vmem:[%s53] sm:$0xf]
    %v2263 = vld [vmem:[%s53 + $0x4] sm:$0xf]
    %v2264 = vld [vmem:[%s53 + $0x8] sm:$0xf]
    %v2265 = vld [vmem:[%s53 + $0xc] sm:$0xf]
    %v2266 = vld [vmem:[%s55] sm:$0x1]
    %v2268 = vperm.slane %v2266, 0
    %v2274 = vunpack.c.l.b16 %v2262
    %v2275 = vunpack.c.l.b16 %v2263
    %v2276 = vunpack.c.l.b16 %v2264
    %v2277 = vunpack.c.l.b16 %v2265
    %v2278 = vpack.c.b16 %v2275, %v2274
    %v2279 = vpack.c.b16 %v2277, %v2276
    %v2283 = vsel %vm211, %v2260, 0
    %v2286 = vsel %vm211, %v2261, 0
    %2288 = vmatpush.bf16.msra.mxu0 0
    %2289 = vmatpush.bf16.msra.mxu0 0
    %2290 = vmatpush.bf16.msra.mxu0 0
    %2291 = vmatpush.bf16.msra.mxu0 0
    %2292 = vmatpush.bf16.msra.mxu0 0
    %2293 = vmatpush.bf16.msra.mxu0 0
    %2294 = vmatpush.bf16.msra.mxu0 %v2279
    %2295 = vmatpush.bf16.msra.mxu0 %v2278
    %2296 = vmatmul.bf16.gmra.mxu0 %v2283
    %v2297 = vpop.f32.mrf.mxu0
    %v2298 = vadd.f32 %v2268, %v2297
    %v2299 = vpop.f32.mrf.mxu0
    %v2300 = vadd.f32 %v2268, %v2299
    %2301 = vmatmul.bf16.gmra.mxu0 %v2286
    %v2302 = vpop.f32.mrf.mxu0
    %v2303 = vadd.f32 %v2268, %v2302
    %v2304 = vpop.f32.mrf.mxu0
    %v2305 = vadd.f32 %v2268, %v2304
    %2306 = vdwg.mxu0
    %v2307 = vmul.f32 %v2298, 0.5
    %v2308 = vmul.f32 %v2300, 0.5
    %v2309 = vmul.f32 %v2303, 0.5
    %v2310 = vmul.f32 %v2305, 0.5
    %v2311 = vmul.f32 %v2298, 0.044715
    %v2312 = vmul.f32 %v2300, 0.044715
    %v2313 = vmul.f32 %v2303, 0.044715
    %v2314 = vmul.f32 %v2305, 0.044715
    %v2315 = vmul.f32 %v2311, %v2298
    %v2316 = vmul.f32 %v2312, %v2300
    %v2317 = vmul.f32 %v2313, %v2303
    %v2318 = vmul.f32 %v2314, %v2305
    %v2319 = vmul.f32 %v2315, %v2298
    %v2320 = vmul.f32 %v2316, %v2300
    %v2321 = vmul.f32 %v2317, %v2303
    %v2322 = vmul.f32 %v2318, %v2305
    %v2323 = vadd.f32 %v2298, %v2319
    %v2324 = vadd.f32 %v2300, %v2320
    %v2325 = vadd.f32 %v2303, %v2321
    %v2326 = vadd.f32 %v2305, %v2322
    %v2327 = vmul.f32 %v2323, 0.7978846
    %v2328 = vmul.f32 %v2324, 0.7978846
    %v2329 = vmul.f32 %v2325, 0.7978846
    %v2330 = vmul.f32 %v2326, 0.7978846
    %v2331 = vtanh.pop %v2327
    %v2332 = vtanh.pop %v2328
    %v2333 = vtanh.pop %v2329
    %v2334 = vtanh.pop %v2330
    %v2335 = vadd.f32 %v2331, 1.0
    %v2336 = vadd.f32 %v2332, 1.0
    %v2337 = vadd.f32 %v2333, 1.0
    %v2338 = vadd.f32 %v2334, 1.0
    %v2339 = vmul.f32 %v2307, %v2335
    %v2340 = vmul.f32 %v2308, %v2336
    %v2341 = vmul.f32 %v2309, %v2337
    %v2342 = vmul.f32 %v2310, %v2338
    %v2343 = vpack.c.bf16 %v2340, %v2339
    %v2344 = vpack.c.bf16 %v2342, %v2341
    %v2345 = vld [vmem:[%s57] sm:$0xf]
    %v2346 = vld [vmem:[%s57 + $0x4] sm:$0xf]
    %v2347 = vld [vmem:[%s57 + $0x8] sm:$0xf]
    %v2348 = vld [vmem:[%s57 + $0xc] sm:$0xf]
    %v2349 = vld [vmem:[%s57 + $0x10] sm:$0xf]
    %v2350 = vld [vmem:[%s57 + $0x14] sm:$0xf]
    %v2351 = vld [vmem:[%s57 + $0x18] sm:$0xf]
    %v2352 = vld [vmem:[%s57 + $0x1c] sm:$0xf]
    %v2353 = vld [vmem:[%s57 + $0x20] sm:$0xf]
    %v2354 = vld [vmem:[%s57 + $0x24] sm:$0xf]
    %v2355 = vld [vmem:[%s57 + $0x28] sm:$0xf]
    %v2356 = vld [vmem:[%s57 + $0x2c] sm:$0xf]
    %v2357 = vld [vmem:[%s57 + $0x30] sm:$0xf]
    %v2358 = vld [vmem:[%s57 + $0x34] sm:$0xf]
    %v2359 = vld [vmem:[%s57 + $0x38] sm:$0xf]
    %v2360 = vld [vmem:[%s57 + $0x3c] sm:$0xf]
    %v2377 = vunpack.c.l.b16 %v2345
    %v2378 = vunpack.c.l.b16 %v2346
    %v2379 = vunpack.c.l.b16 %v2347
    %v2380 = vunpack.c.l.b16 %v2348
    %v2381 = vunpack.c.l.b16 %v2349
    %v2382 = vunpack.c.l.b16 %v2350
    %v2383 = vunpack.c.l.b16 %v2351
    %v2384 = vunpack.c.l.b16 %v2352
    %v2385 = vunpack.c.l.b16 %v2353
    %v2386 = vunpack.c.l.b16 %v2354
    %v2387 = vunpack.c.l.b16 %v2355
    %v2388 = vunpack.c.l.b16 %v2356
    %v2389 = vunpack.c.l.b16 %v2357
    %v2390 = vunpack.c.l.b16 %v2358
    %v2391 = vunpack.c.l.b16 %v2359
    %v2392 = vunpack.c.l.b16 %v2360
    %v2393 = vpack.c.b16 %v2378, %v2377
    %v2394 = vpack.c.b16 %v2380, %v2379
    %v2395 = vpack.c.b16 %v2382, %v2381
    %v2396 = vpack.c.b16 %v2384, %v2383
    %v2397 = vpack.c.b16 %v2386, %v2385
    %v2398 = vpack.c.b16 %v2388, %v2387
    %v2399 = vpack.c.b16 %v2390, %v2389
    %v2400 = vpack.c.b16 %v2392, %v2391
    %2409 = vmatpush.bf16.msra.mxu0 %v2400
    %2410 = vmatpush.bf16.msra.mxu0 %v2399
    %2411 = vmatpush.bf16.msra.mxu0 %v2398
    %2412 = vmatpush.bf16.msra.mxu0 %v2397
    %2413 = vmatpush.bf16.msra.mxu0 %v2396
    %2414 = vmatpush.bf16.msra.mxu0 %v2395
    %2415 = vmatpush.bf16.msra.mxu0 %v2394
    %2416 = vmatpush.bf16.msra.mxu0 %v2393
    %2417 = vmatmul.bf16.gmra.mxu0 %v2343
    %v2418 = vpop.f32.mrf.mxu0
    %v2419 = vadd.f32 0.0, %v2418
    %v2420 = vpop.f32.mrf.mxu0
    %v2421 = vadd.f32 0.0, %v2420
    %2422 = vmatmul.bf16.gmra.mxu0 %v2344
    %v2423 = vpop.f32.mrf.mxu0
    %v2424 = vadd.f32 0.0, %v2423
    %v2425 = vpop.f32.mrf.mxu0
    %v2426 = vadd.f32 0.0, %v2425
    %2427 = vdwg.mxu0
    %v2428 = vadd.f32 %v2152, %v2419
    %v2429 = vadd.f32 %v2153, %v2421
    %v2430 = vadd.f32 %v2154, %v2424
    %v2431 = vadd.f32 %v2155, %v2426
    %v2432 = vld [vmem:[%s59] sm:$0x1]
    %v2434 = vperm.slane %v2432, 0
    %v2436 = vadd.f32 %v2428, %v2434
    %v2437 = vadd.f32 %v2429, %v2434
    %v2438 = vadd.f32 %v2430, %v2434
    %v2439 = vadd.f32 %v2431, %v2434
    %v2440 = vld [vmem:[%s7] sm:$0x1]
    %v2441 = vld [vmem:[%s9] sm:$0x1]
    %v2442 = vsel %vm211, %v2436, 0.0
    %2443 = vadd.xlane.f32.xlu0 %v2442
    %v2444 = vpop.xlane.xlu0 %2443
    %v2445 = vsel %vm211, %v2437, 0.0
    %2446 = vadd.xlane.f32.xlu0 %v2445
    %v2447 = vpop.xlane.xlu0 %2446
    %v2448 = vsel %vm211, %v2438, 0.0
    %2449 = vadd.xlane.f32.xlu0 %v2448
    %v2450 = vpop.xlane.xlu0 %2449
    %v2451 = vsel %vm211, %v2439, 0.0
    %2452 = vadd.xlane.f32.xlu0 %v2451
    %v2453 = vpop.xlane.xlu0 %2452
    %v2454 = vmul.f32 %v2444, %v230
    %v2455 = vmul.f32 %v2447, %v230
    %v2456 = vmul.f32 %v2450, %v230
    %v2457 = vmul.f32 %v2453, %v230
    %v2458 = vsub.f32 %v2436, %v2454
    %v2459 = vsub.f32 %v2437, %v2455
    %v2460 = vsub.f32 %v2438, %v2456
    %v2461 = vsub.f32 %v2439, %v2457
    %v2462 = vmul.f32 %v2458, %v2458
    %v2463 = vmul.f32 %v2459, %v2459
    %v2464 = vmul.f32 %v2460, %v2460
    %v2465 = vmul.f32 %v2461, %v2461
    %v2466 = vsel %vm211, %v2462, 0.0
    %2467 = vadd.xlane.f32.xlu0 %v2466
    %v2468 = vpop.xlane.xlu0 %2467
    %v2469 = vsel %vm211, %v2463, 0.0
    %2470 = vadd.xlane.f32.xlu0 %v2469
    %v2471 = vpop.xlane.xlu0 %2470
    %v2472 = vsel %vm211, %v2464, 0.0
    %2473 = vadd.xlane.f32.xlu0 %v2472
    %v2474 = vpop.xlane.xlu0 %2473
    %v2475 = vsel %vm211, %v2465, 0.0
    %2476 = vadd.xlane.f32.xlu0 %v2475
    %v2477 = vpop.xlane.xlu0 %2476
    %v2478 = vmul.f32 %v2468, %v230
    %v2479 = vmul.f32 %v2471, %v230
    %v2480 = vmul.f32 %v2474, %v230
    %v2481 = vmul.f32 %v2477, %v230
    %v2482 = vadd.f32 %v2478, 1e-05
    %v2483 = vadd.f32 %v2479, 1e-05
    %v2484 = vadd.f32 %v2480, 1e-05
    %v2485 = vadd.f32 %v2481, 1e-05
    %v2486 = vrsqrt.pop %v2482
    %v2487 = vmul.f32 %v2486, %v2482
    %v2488 = vmul.f32 %v2487, %v2486
    %v2489 = vmul.f32 0.5, %v2488
    %v2490 = vsub.f32 1.5, %v2489
    %v2491 = vmul.f32 %v2486, %v2490
    %vm2492 = vweird.f32 %v2482
    %vm2493 = vweird.f32 %v2486
    %vm2494 = vmor %vm2492, %vm2493
    %v2495 = vsel %vm2494, %v2486, %v2491
    %v2496 = vrsqrt.pop %v2483
    %v2497 = vmul.f32 %v2496, %v2483
    %v2498 = vmul.f32 %v2497, %v2496
    %v2499 = vmul.f32 0.5, %v2498
    %v2500 = vsub.f32 1.5, %v2499
    %v2501 = vmul.f32 %v2496, %v2500
    %vm2502 = vweird.f32 %v2483
    %vm2503 = vweird.f32 %v2496
    %vm2504 = vmor %vm2502, %vm2503
    %v2505 = vsel %vm2504, %v2496, %v2501
    %v2506 = vrsqrt.pop %v2484
    %v2507 = vmul.f32 %v2506, %v2484
    %v2508 = vmul.f32 %v2507, %v2506
    %v2509 = vmul.f32 0.5, %v2508
    %v2510 = vsub.f32 1.5, %v2509
    %v2511 = vmul.f32 %v2506, %v2510
    %vm2512 = vweird.f32 %v2484
    %vm2513 = vweird.f32 %v2506
    %vm2514 = vmor %vm2512, %vm2513
    %v2515 = vsel %vm2514, %v2506, %v2511
    %v2516 = vrsqrt.pop %v2485
    %v2517 = vmul.f32 %v2516, %v2485
    %v2518 = vmul.f32 %v2517, %v2516
    %v2519 = vmul.f32 0.5, %v2518
    %v2520 = vsub.f32 1.5, %v2519
    %v2521 = vmul.f32 %v2516, %v2520
    %vm2522 = vweird.f32 %v2485
    %vm2523 = vweird.f32 %v2516
    %vm2524 = vmor %vm2522, %vm2523
    %v2525 = vsel %vm2524, %v2516, %v2521
    %v2526 = vmul.f32 %v2458, %v2495
    %v2527 = vmul.f32 %v2459, %v2505
    %v2528 = vmul.f32 %v2460, %v2515
    %v2529 = vmul.f32 %v2461, %v2525
    %v2531 = vperm.slane %v2440, 0
    %v2533 = vmul.f32 %v2526, %v2531
    %v2534 = vmul.f32 %v2527, %v2531
    %v2535 = vmul.f32 %v2528, %v2531
    %v2536 = vmul.f32 %v2529, %v2531
    %v2538 = vperm.slane %v2441, 0
    %v2540 = vadd.f32 %v2533, %v2538
    %v2541 = vadd.f32 %v2534, %v2538
    %v2542 = vadd.f32 %v2535, %v2538
    %v2543 = vadd.f32 %v2536, %v2538
    %v2544 = vpack.c.bf16 %v2541, %v2540
    %v2545 = vpack.c.bf16 %v2543, %v2542
    %v2546 = vld [vmem:[%s11] sm:$0xf]
    %v2547 = vld [vmem:[%s11 + $0x4] sm:$0xf]
    %v2548 = vld [vmem:[%s11 + $0x8] sm:$0xf]
    %v2549 = vld [vmem:[%s11 + $0xc] sm:$0xf]
    %v2554 = vunpack.c.l.b16 %v2546
    %v2555 = vunpack.c.l.b16 %v2547
    %v2556 = vunpack.c.l.b16 %v2548
    %v2557 = vunpack.c.l.b16 %v2549
    %v2558 = vpack.c.b16 %v2555, %v2554
    %v2559 = vpack.c.b16 %v2557, %v2556
    %v2563 = vsel %vm211, %v2544, 0
    %v2566 = vsel %vm211, %v2545, 0
    %2568 = vmatpush.bf16.msra.mxu0 0
    %2569 = vmatpush.bf16.msra.mxu0 0
    %2570 = vmatpush.bf16.msra.mxu0 0
    %2571 = vmatpush.bf16.msra.mxu0 0
    %2572 = vmatpush.bf16.msra.mxu0 0
    %2573 = vmatpush.bf16.msra.mxu0 0
    %2574 = vmatpush.bf16.msra.mxu0 %v2559
    %2575 = vmatpush.bf16.msra.mxu0 %v2558
    %2576 = vmatmul.bf16.gmra.mxu0 %v2563
    %v2577 = vpop.f32.mrf.mxu0
    %v2578 = vadd.f32 0.0, %v2577
    %v2579 = vpop.f32.mrf.mxu0
    %v2580 = vadd.f32 0.0, %v2579
    %2581 = vmatmul.bf16.gmra.mxu0 %v2566
    %v2582 = vpop.f32.mrf.mxu0
    %v2583 = vadd.f32 0.0, %v2582
    %v2584 = vpop.f32.mrf.mxu0
    %v2585 = vadd.f32 0.0, %v2584
    %2586 = vdwg.mxu0
    %2587 = vst [vmem:[#allocation3] sm:$0xff] %v2578
    %2588 = vst [vmem:[#allocation3 + $0x8] sm:$0xff] %v2580
    %2589 = vst [vmem:[#allocation3 + $0x10] sm:$0xff] %v2583
    %2590 = vst [vmem:[#allocation3 + $0x18] sm:$0xff] %v2585
    // Predicated region
    $region122: #{modified_decoder_forward.3} parent=1 // pred_check
      _
    $region123: #{modified_decoder_forward.3} parent=1 // pred_check_branch
      %2592 = sbr.rel (0) target = $region125
    $region124: #{modified_decoder_forward.3} parent=1 // pred_region
      %2594 = vsyncadd [#allocation4], 0
      %s2595 = sshll.u32 [#allocation3], 4
      %s2596 = int_to_ptr.vmem [resolvable:$true] %s2595
      %s2597 = sshll.u32 %s61, 4
      %s2598 = int_to_ptr.hbm [resolvable:$true] %s2597
      %2603 = dma.vmem_to_hbm [thread:$0]  %s2596, 512, %s2598, [#allocation4], 128, 128, 8
    $region125: #{modified_decoder_forward.3} parent=1 // pred_fallthru
      _
    // Predicated region
    $region126: #{modified_decoder_forward.3} parent=1 // pred_check
      _
    $region127: #{modified_decoder_forward.3} parent=1 // pred_check_branch
      %2605 = sbr.rel (0) target = $region129
    $region128: #{modified_decoder_forward.3} parent=1 // pred_region
      %2607 = vsyncadd [#allocation6], 0
      %s2608 = sshll.u32 [#allocation5], 4
      %s2609 = int_to_ptr.vmem [resolvable:$true] %s2608
      %s2610 = sshll.u32 %s63, 4
      %s2611 = int_to_ptr.hbm [resolvable:$true] %s2610
      %2616 = dma.vmem_to_hbm [thread:$0]  %s2609, 2048, %s2611, [#allocation6], 128, 128, 8
    $region129: #{modified_decoder_forward.3} parent=1 // pred_fallthru
      _
    // Predicated region
    $region130: #{modified_decoder_forward.3} parent=1 // pred_check
      _
    $region131: #{modified_decoder_forward.3} parent=1 // pred_check_branch
      %2618 = sbr.rel (0) target = $region133
    $region132: #{modified_decoder_forward.3} parent=1 // pred_region
      %2620 = vsyncadd [#allocation6], 0
      %s2621 = sshll.u32 [#allocation7], 4
      %s2622 = int_to_ptr.vmem [resolvable:$true] %s2621
      %s2623 = sshll.u32 %s65, 4
      %s2624 = int_to_ptr.hbm [resolvable:$true] %s2623
      %2629 = dma.vmem_to_hbm [thread:$0]  %s2622, 2048, %s2624, [#allocation6], 128, 128, 8
    $region133: #{modified_decoder_forward.3} parent=1 // pred_fallthru
      _
    // Predicated region
    $region134: #{modified_decoder_forward.3} parent=1 // pred_check
      _
    $region135: #{modified_decoder_forward.3} parent=1 // pred_check_branch
      %2631 = sbr.rel (0) target = $region137
    $region136: #{modified_decoder_forward.3} parent=1 // pred_region
      %2633 = dma.done [#allocation4], 512
    $region137: #{modified_decoder_forward.3} parent=1 // pred_fallthru
      _
    // Predicated region
    $region138: #{modified_decoder_forward.3} parent=1 // pred_check
      _
    $region139: #{modified_decoder_forward.3} parent=1 // pred_check_branch
      %2635 = sbr.rel (0) target = $region141
    $region140: #{modified_decoder_forward.3} parent=1 // pred_region
      %2637 = dma.done [#allocation6], 2048
    $region141: #{modified_decoder_forward.3} parent=1 // pred_fallthru
      _
    // Predicated region
    $region142: #{modified_decoder_forward.3} parent=1 // pred_check
      _
    $region143: #{modified_decoder_forward.3} parent=1 // pred_check_branch
      %2639 = sbr.rel (0) target = $region145
    $region144: #{modified_decoder_forward.3} parent=1 // pred_region
      %2641 = dma.done [#allocation6], 2048
    $region145: #{modified_decoder_forward.3} parent=1 // pred_fallthru
      _
    %2642 = vsyncpa [#allocation4], 1
    %2643 = vsyncpa [#allocation6], 1

// kernel: modified_decoder_forward.2
$region0: #{modified_decoder_forward.2}
  #allocation0 [shape = 'u32[]', space=smem, size = 0x4, offset = 0x4, fixed_abs, tag = 'smem constant byte address 0x4 - core index']
  #allocation1 [shape = 'u32[72,128]{1,0:T(1,128)}', space=vmem, size = 0x9000, scoped, tag = 'internal scratch']
  %s0 = inlined_call_operand.vmem [shape: bf16[16,1408], index: 0, kind: input, shape index: {}]
  %s1 = inlined_call_operand.vmem [shape: bf16[1408,1088], index: 1, kind: input, shape index: {}]
  %s2 = inlined_call_operand.vmem [shape: f32[1,1088], index: 2, kind: input, shape index: {}]
  %s3 = inlined_call_operand.vmem [shape: bf16[1088,32], index: 3, kind: input, shape index: {}]
  %s4 = inlined_call_operand.vmem [shape: f32[1,32], index: 4, kind: input, shape index: {}]
  %s5 = inlined_call_operand.vmem [shape: f32[1,32], index: 5, kind: input, shape index: {}]
  %s6 = inlined_call_operand.vmem [shape: f32[1,32], index: 6, kind: input, shape index: {}]
  %s7 = inlined_call_operand.vmem [shape: f32[16,32], index: 7, kind: output, shape index: {}]
  %s8 = sld [smem:[#allocation0]]
  $region38: #{modified_decoder_forward.2} parent=0
    _
  %s10 = ssub.s32 1, %s8
  %s11 = scalar_select 0, %s10, %s8
  // Predicated region
  $region2: #{modified_decoder_forward.2} parent=0 // pred_check
    _
  $region3: #{modified_decoder_forward.2} parent=0 // pred_check_branch
    %13 = sbr.rel (0) target = $region5
  $region4: #{modified_decoder_forward.2} parent=0 // pred_region
    _
  $region5: #{modified_decoder_forward.2} parent=0 // pred_fallthru
    _
  // Predicated region
  $region6: #{modified_decoder_forward.2} parent=0 // pred_check
    _
  $region7: #{modified_decoder_forward.2} parent=0 // pred_check_branch
    %15 = sbr.rel (0) target = $region9
  $region8: #{modified_decoder_forward.2} parent=0 // pred_region
    _
  $region9: #{modified_decoder_forward.2} parent=0 // pred_fallthru
    _
  // Predicated region
  $region10: #{modified_decoder_forward.2} parent=0 // pred_check
    _
  $region11: #{modified_decoder_forward.2} parent=0 // pred_check_branch
    %17 = sbr.rel (0) target = $region13
  $region12: #{modified_decoder_forward.2} parent=0 // pred_region
    _
  $region13: #{modified_decoder_forward.2} parent=0 // pred_fallthru
    _
  // Predicated region
  $region14: #{modified_decoder_forward.2} parent=0 // pred_check
    _
  $region15: #{modified_decoder_forward.2} parent=0 // pred_check_branch
    %19 = sbr.rel (0) target = $region17
  $region16: #{modified_decoder_forward.2} parent=0 // pred_region
    _
  $region17: #{modified_decoder_forward.2} parent=0 // pred_fallthru
    _
  // Predicated region
  $region18: #{modified_decoder_forward.2} parent=0 // pred_check
    _
  $region19: #{modified_decoder_forward.2} parent=0 // pred_check_branch
    %21 = sbr.rel (0) target = $region21
  $region20: #{modified_decoder_forward.2} parent=0 // pred_region
    _
  $region21: #{modified_decoder_forward.2} parent=0 // pred_fallthru
    _
  // Predicated region
  $region22: #{modified_decoder_forward.2} parent=0 // pred_check
    _
  $region23: #{modified_decoder_forward.2} parent=0 // pred_check_branch
    %23 = sbr.rel (0) target = $region25
  $region24: #{modified_decoder_forward.2} parent=0 // pred_region
    _
  $region25: #{modified_decoder_forward.2} parent=0 // pred_fallthru
    _
  // Predicated region
  $region26: #{modified_decoder_forward.2} parent=0 // pred_check
    _
  $region27: #{modified_decoder_forward.2} parent=0 // pred_check_branch
    %25 = sbr.rel (0) target = $region29
  $region28: #{modified_decoder_forward.2} parent=0 // pred_region
    _
  $region29: #{modified_decoder_forward.2} parent=0 // pred_fallthru
    _
  %v27 = vld [vmem:[%s0] sm:$0xff]
  %v28 = vld [vmem:[%s0 + $0x8] sm:$0xff]
  %v29 = vld [vmem:[%s0 + $0x10] sm:$0xff]
  %v30 = vld [vmem:[%s0 + $0x18] sm:$0xff]
  %v31 = vld [vmem:[%s0 + $0x20] sm:$0xff]
  %v32 = vld [vmem:[%s0 + $0x28] sm:$0xf]
  %v33 = vld [vmem:[%s0 + $0x2c] sm:$0xff]
  %v34 = vld [vmem:[%s0 + $0x34] sm:$0xff]
  %v35 = vld [vmem:[%s0 + $0x3c] sm:$0xff]
  %v36 = vld [vmem:[%s0 + $0x44] sm:$0xff]
  %v37 = vld [vmem:[%s0 + $0x4c] sm:$0xff]
  %v38 = vld [vmem:[%s0 + $0x54] sm:$0xf]
  %v39 = vld [vmem:[%s1] sm:$0xff]
  %v40 = vld [vmem:[%s1 + $0x8] sm:$0xff]
  %v41 = vld [vmem:[%s1 + $0x10] sm:$0xff]
  %v42 = vld [vmem:[%s1 + $0x18] sm:$0xff]
  %v43 = vld [vmem:[%s1 + $0x20] sm:$0xf]
  %v44 = vld [vmem:[%s1 + $0x24] sm:$0xff]
  %v45 = vld [vmem:[%s1 + $0x2c] sm:$0xff]
  %v46 = vld [vmem:[%s1 + $0x34] sm:$0xff]
  %v47 = vld [vmem:[%s1 + $0x3c] sm:$0xff]
  %v48 = vld [vmem:[%s1 + $0x44] sm:$0xf]
  %v49 = vld [vmem:[%s1 + $0x48] sm:$0xff]
  %v50 = vld [vmem:[%s1 + $0x50] sm:$0xff]
  %v51 = vld [vmem:[%s1 + $0x58] sm:$0xff]
  %v52 = vld [vmem:[%s1 + $0x60] sm:$0xff]
  %v53 = vld [vmem:[%s1 + $0x68] sm:$0xf]
  %v54 = vld [vmem:[%s1 + $0x6c] sm:$0xff]
  %v55 = vld [vmem:[%s1 + $0x74] sm:$0xff]
  %v56 = vld [vmem:[%s1 + $0x7c] sm:$0xff]
  %v57 = vld [vmem:[%s1 + $0x84] sm:$0xff]
  %v58 = vld [vmem:[%s1 + $0x8c] sm:$0xf]
  %v59 = vld [vmem:[%s1 + $0x90] sm:$0xff]
  %v60 = vld [vmem:[%s1 + $0x98] sm:$0xff]
  %v61 = vld [vmem:[%s1 + $0xa0] sm:$0xff]
  %v62 = vld [vmem:[%s1 + $0xa8] sm:$0xff]
  %v63 = vld [vmem:[%s1 + $0xb0] sm:$0xf]
  %v64 = vld [vmem:[%s1 + $0xb4] sm:$0xff]
  %v65 = vld [vmem:[%s1 + $0xbc] sm:$0xff]
  %v66 = vld [vmem:[%s1 + $0xc4] sm:$0xff]
  %v67 = vld [vmem:[%s1 + $0xcc] sm:$0xff]
  %v68 = vld [vmem:[%s1 + $0xd4] sm:$0xf]
  %v69 = vld [vmem:[%s1 + $0xd8] sm:$0xff]
  %v70 = vld [vmem:[%s1 + $0xe0] sm:$0xff]
  %v71 = vld [vmem:[%s1 + $0xe8] sm:$0xff]
  %v72 = vld [vmem:[%s1 + $0xf0] sm:$0xff]
  %v73 = vld [vmem:[%s1 + $0xf8] sm:$0xf]
  %v74 = vld [vmem:[%s1 + $0xfc] sm:$0xff]
  %v75 = vld [vmem:[%s1 + $0x104] sm:$0xff]
  %v76 = vld [vmem:[%s1 + $0x10c] sm:$0xff]
  %v77 = vld [vmem:[%s1 + $0x114] sm:$0xff]
  %v78 = vld [vmem:[%s1 + $0x11c] sm:$0xf]
  %v79 = vld [vmem:[%s1 + $0x120] sm:$0xff]
  %v80 = vld [vmem:[%s1 + $0x128] sm:$0xff]
  %v81 = vld [vmem:[%s1 + $0x130] sm:$0xff]
  %v82 = vld [vmem:[%s1 + $0x138] sm:$0xff]
  %v83 = vld [vmem:[%s1 + $0x140] sm:$0xf]
  %v84 = vld [vmem:[%s1 + $0x144] sm:$0xff]
  %v85 = vld [vmem:[%s1 + $0x14c] sm:$0xff]
  %v86 = vld [vmem:[%s1 + $0x154] sm:$0xff]
  %v87 = vld [vmem:[%s1 + $0x15c] sm:$0xff]
  %v88 = vld [vmem:[%s1 + $0x164] sm:$0xf]
  %v89 = vld [vmem:[%s1 + $0x168] sm:$0xff]
  %v90 = vld [vmem:[%s1 + $0x170] sm:$0xff]
  %v91 = vld [vmem:[%s1 + $0x178] sm:$0xff]
  %v92 = vld [vmem:[%s1 + $0x180] sm:$0xff]
  %v93 = vld [vmem:[%s1 + $0x188] sm:$0xf]
  %v94 = vld [vmem:[%s1 + $0x18c] sm:$0xff]
  %v95 = vld [vmem:[%s1 + $0x194] sm:$0xff]
  %v96 = vld [vmem:[%s1 + $0x19c] sm:$0xff]
  %v97 = vld [vmem:[%s1 + $0x1a4] sm:$0xff]
  %v98 = vld [vmem:[%s1 + $0x1ac] sm:$0xf]
  %v99 = vld [vmem:[%s1 + $0x1b0] sm:$0xff]
  %v100 = vld [vmem:[%s1 + $0x1b8] sm:$0xff]
  %v101 = vld [vmem:[%s1 + $0x1c0] sm:$0xff]
  %v102 = vld [vmem:[%s1 + $0x1c8] sm:$0xff]
  %v103 = vld [vmem:[%s1 + $0x1d0] sm:$0xf]
  %v104 = vld [vmem:[%s1 + $0x1d4] sm:$0xff]
  %v105 = vld [vmem:[%s1 + $0x1dc] sm:$0xff]
  %v106 = vld [vmem:[%s1 + $0x1e4] sm:$0xff]
  %v107 = vld [vmem:[%s1 + $0x1ec] sm:$0xff]
  %v108 = vld [vmem:[%s1 + $0x1f4] sm:$0xf]
  %v109 = vld [vmem:[%s1 + $0x1f8] sm:$0xff]
  %v110 = vld [vmem:[%s1 + $0x200] sm:$0xff]
  %v111 = vld [vmem:[%s1 + $0x208] sm:$0xff]
  %v112 = vld [vmem:[%s1 + $0x210] sm:$0xff]
  %v113 = vld [vmem:[%s1 + $0x218] sm:$0xf]
  %v114 = vld [vmem:[%s1 + $0x21c] sm:$0xff]
  %v115 = vld [vmem:[%s1 + $0x224] sm:$0xff]
  %v116 = vld [vmem:[%s1 + $0x22c] sm:$0xff]
  %v117 = vld [vmem:[%s1 + $0x234] sm:$0xff]
  %v118 = vld [vmem:[%s1 + $0x23c] sm:$0xf]
  %v119 = vld [vmem:[%s1 + $0x240] sm:$0xff]
  %v120 = vld [vmem:[%s1 + $0x248] sm:$0xff]
  %v121 = vld [vmem:[%s1 + $0x250] sm:$0xff]
  %v122 = vld [vmem:[%s1 + $0x258] sm:$0xff]
  %v123 = vld [vmem:[%s1 + $0x260] sm:$0xf]
  %v124 = vld [vmem:[%s1 + $0x264] sm:$0xff]
  %v125 = vld [vmem:[%s1 + $0x26c] sm:$0xff]
  %v126 = vld [vmem:[%s1 + $0x274] sm:$0xff]
  %v127 = vld [vmem:[%s1 + $0x27c] sm:$0xff]
  %v128 = vld [vmem:[%s1 + $0x284] sm:$0xf]
  %v129 = vld [vmem:[%s1 + $0x288] sm:$0xff]
  %v130 = vld [vmem:[%s1 + $0x290] sm:$0xff]
  %v131 = vld [vmem:[%s1 + $0x298] sm:$0xff]
  %v132 = vld [vmem:[%s1 + $0x2a0] sm:$0xff]
  %v133 = vld [vmem:[%s1 + $0x2a8] sm:$0xf]
  %v134 = vld [vmem:[%s1 + $0x2ac] sm:$0xff]
  %v135 = vld [vmem:[%s1 + $0x2b4] sm:$0xff]
  %v136 = vld [vmem:[%s1 + $0x2bc] sm:$0xff]
  %v137 = vld [vmem:[%s1 + $0x2c4] sm:$0xff]
  %v138 = vld [vmem:[%s1 + $0x2cc] sm:$0xf]
  %v139 = vld [vmem:[%s1 + $0x2d0] sm:$0xff]
  %v140 = vld [vmem:[%s1 + $0x2d8] sm:$0xff]
  %v141 = vld [vmem:[%s1 + $0x2e0] sm:$0xff]
  %v142 = vld [vmem:[%s1 + $0x2e8] sm:$0xff]
  %v143 = vld [vmem:[%s1 + $0x2f0] sm:$0xf]
  %v144 = vld [vmem:[%s1 + $0x2f4] sm:$0xff]
  %v145 = vld [vmem:[%s1 + $0x2fc] sm:$0xff]
  %v146 = vld [vmem:[%s1 + $0x304] sm:$0xff]
  %v147 = vld [vmem:[%s1 + $0x30c] sm:$0xff]
  %v148 = vld [vmem:[%s1 + $0x314] sm:$0xf]
  %v149 = vld [vmem:[%s1 + $0x318] sm:$0xff]
  %v150 = vld [vmem:[%s1 + $0x320] sm:$0xff]
  %v151 = vld [vmem:[%s1 + $0x328] sm:$0xff]
  %v152 = vld [vmem:[%s1 + $0x330] sm:$0xff]
  %v153 = vld [vmem:[%s1 + $0x338] sm:$0xf]
  %v154 = vld [vmem:[%s1 + $0x33c] sm:$0xff]
  %v155 = vld [vmem:[%s1 + $0x344] sm:$0xff]
  %v156 = vld [vmem:[%s1 + $0x34c] sm:$0xff]
  %v157 = vld [vmem:[%s1 + $0x354] sm:$0xff]
  %v158 = vld [vmem:[%s1 + $0x35c] sm:$0xf]
  %v159 = vld [vmem:[%s1 + $0x360] sm:$0xff]
  %v160 = vld [vmem:[%s1 + $0x368] sm:$0xff]
  %v161 = vld [vmem:[%s1 + $0x370] sm:$0xff]
  %v162 = vld [vmem:[%s1 + $0x378] sm:$0xff]
  %v163 = vld [vmem:[%s1 + $0x380] sm:$0xf]
  %v164 = vld [vmem:[%s1 + $0x384] sm:$0xff]
  %v165 = vld [vmem:[%s1 + $0x38c] sm:$0xff]
  %v166 = vld [vmem:[%s1 + $0x394] sm:$0xff]
  %v167 = vld [vmem:[%s1 + $0x39c] sm:$0xff]
  %v168 = vld [vmem:[%s1 + $0x3a4] sm:$0xf]
  %v169 = vld [vmem:[%s1 + $0x3a8] sm:$0xff]
  %v170 = vld [vmem:[%s1 + $0x3b0] sm:$0xff]
  %v171 = vld [vmem:[%s1 + $0x3b8] sm:$0xff]
  %v172 = vld [vmem:[%s1 + $0x3c0] sm:$0xff]
  %v173 = vld [vmem:[%s1 + $0x3c8] sm:$0xf]
  %v174 = vld [vmem:[%s1 + $0x3cc] sm:$0xff]
  %v175 = vld [vmem:[%s1 + $0x3d4] sm:$0xff]
  %v176 = vld [vmem:[%s1 + $0x3dc] sm:$0xff]
  %v177 = vld [vmem:[%s1 + $0x3e4] sm:$0xff]
  %v178 = vld [vmem:[%s1 + $0x3ec] sm:$0xf]
  %v179 = vld [vmem:[%s1 + $0x3f0] sm:$0xff]
  %v180 = vld [vmem:[%s1 + $0x3f8] sm:$0xff]
  %v181 = vld [vmem:[%s1 + $0x400] sm:$0xff]
  %v182 = vld [vmem:[%s1 + $0x408] sm:$0xff]
  %v183 = vld [vmem:[%s1 + $0x410] sm:$0xf]
  %v184 = vld [vmem:[%s1 + $0x414] sm:$0xff]
  %v185 = vld [vmem:[%s1 + $0x41c] sm:$0xff]
  %v186 = vld [vmem:[%s1 + $0x424] sm:$0xff]
  %v187 = vld [vmem:[%s1 + $0x42c] sm:$0xff]
  %v188 = vld [vmem:[%s1 + $0x434] sm:$0xf]
  %v189 = vld [vmem:[%s1 + $0x438] sm:$0xff]
  %v190 = vld [vmem:[%s1 + $0x440] sm:$0xff]
  %v191 = vld [vmem:[%s1 + $0x448] sm:$0xff]
  %v192 = vld [vmem:[%s1 + $0x450] sm:$0xff]
  %v193 = vld [vmem:[%s1 + $0x458] sm:$0xf]
  %v194 = vld [vmem:[%s1 + $0x45c] sm:$0xff]
  %v195 = vld [vmem:[%s1 + $0x464] sm:$0xff]
  %v196 = vld [vmem:[%s1 + $0x46c] sm:$0xff]
  %v197 = vld [vmem:[%s1 + $0x474] sm:$0xff]
  %v198 = vld [vmem:[%s1 + $0x47c] sm:$0xf]
  %v199 = vld [vmem:[%s1 + $0x480] sm:$0xff]
  %v200 = vld [vmem:[%s1 + $0x488] sm:$0xff]
  %v201 = vld [vmem:[%s1 + $0x490] sm:$0xff]
  %v202 = vld [vmem:[%s1 + $0x498] sm:$0xff]
  %v203 = vld [vmem:[%s1 + $0x4a0] sm:$0xf]
  %v204 = vld [vmem:[%s1 + $0x4a4] sm:$0xff]
  %v205 = vld [vmem:[%s1 + $0x4ac] sm:$0xff]
  %v206 = vld [vmem:[%s1 + $0x4b4] sm:$0xff]
  %v207 = vld [vmem:[%s1 + $0x4bc] sm:$0xff]
  %v208 = vld [vmem:[%s1 + $0x4c4] sm:$0xf]
  %v209 = vld [vmem:[%s1 + $0x4c8] sm:$0xff]
  %v210 = vld [vmem:[%s1 + $0x4d0] sm:$0xff]
  %v211 = vld [vmem:[%s1 + $0x4d8] sm:$0xff]
  %v212 = vld [vmem:[%s1 + $0x4e0] sm:$0xff]
  %v213 = vld [vmem:[%s1 + $0x4e8] sm:$0xf]
  %v214 = vld [vmem:[%s1 + $0x4ec] sm:$0xff]
  %v215 = vld [vmem:[%s1 + $0x4f4] sm:$0xff]
  %v216 = vld [vmem:[%s1 + $0x4fc] sm:$0xff]
  %v217 = vld [vmem:[%s1 + $0x504] sm:$0xff]
  %v218 = vld [vmem:[%s1 + $0x50c] sm:$0xf]
  %v219 = vld [vmem:[%s1 + $0x510] sm:$0xff]
  %v220 = vld [vmem:[%s1 + $0x518] sm:$0xff]
  %v221 = vld [vmem:[%s1 + $0x520] sm:$0xff]
  %v222 = vld [vmem:[%s1 + $0x528] sm:$0xff]
  %v223 = vld [vmem:[%s1 + $0x530] sm:$0xf]
  %v224 = vld [vmem:[%s1 + $0x534] sm:$0xff]
  %v225 = vld [vmem:[%s1 + $0x53c] sm:$0xff]
  %v226 = vld [vmem:[%s1 + $0x544] sm:$0xff]
  %v227 = vld [vmem:[%s1 + $0x54c] sm:$0xff]
  %v228 = vld [vmem:[%s1 + $0x554] sm:$0xf]
  %v229 = vld [vmem:[%s1 + $0x558] sm:$0xff]
  %v230 = vld [vmem:[%s1 + $0x560] sm:$0xff]
  %v231 = vld [vmem:[%s1 + $0x568] sm:$0xff]
  %v232 = vld [vmem:[%s1 + $0x570] sm:$0xff]
  %v233 = vld [vmem:[%s1 + $0x578] sm:$0xf]
  %v234 = vld [vmem:[%s1 + $0x57c] sm:$0xff]
  %v235 = vld [vmem:[%s1 + $0x584] sm:$0xff]
  %v236 = vld [vmem:[%s1 + $0x58c] sm:$0xff]
  %v237 = vld [vmem:[%s1 + $0x594] sm:$0xff]
  %v238 = vld [vmem:[%s1 + $0x59c] sm:$0xf]
  %v239 = vld [vmem:[%s1 + $0x5a0] sm:$0xff]
  %v240 = vld [vmem:[%s1 + $0x5a8] sm:$0xff]
  %v241 = vld [vmem:[%s1 + $0x5b0] sm:$0xff]
  %v242 = vld [vmem:[%s1 + $0x5b8] sm:$0xff]
  %v243 = vld [vmem:[%s1 + $0x5c0] sm:$0xf]
  %v244 = vld [vmem:[%s1 + $0x5c4] sm:$0xff]
  %v245 = vld [vmem:[%s1 + $0x5cc] sm:$0xff]
  %v246 = vld [vmem:[%s1 + $0x5d4] sm:$0xff]
  %v247 = vld [vmem:[%s1 + $0x5dc] sm:$0xff]
  %v248 = vld [vmem:[%s1 + $0x5e4] sm:$0xf]
  %v249 = vld [vmem:[%s1 + $0x5e8] sm:$0xff]
  %v250 = vld [vmem:[%s1 + $0x5f0] sm:$0xff]
  %v251 = vld [vmem:[%s1 + $0x5f8] sm:$0xff]
  %v252 = vld [vmem:[%s1 + $0x600] sm:$0xff]
  %v253 = vld [vmem:[%s1 + $0x608] sm:$0xf]
  %v254 = vld [vmem:[%s1 + $0x60c] sm:$0xff]
  %v255 = vld [vmem:[%s1 + $0x614] sm:$0xff]
  %v256 = vld [vmem:[%s1 + $0x61c] sm:$0xff]
  %v257 = vld [vmem:[%s1 + $0x624] sm:$0xff]
  %v258 = vld [vmem:[%s1 + $0x62c] sm:$0xf]
  %v259 = vld [vmem:[%s1 + $0x630] sm:$0xff]
  %v260 = vld [vmem:[%s1 + $0x638] sm:$0xff]
  %v261 = vld [vmem:[%s1 + $0x640] sm:$0xff]
  %v262 = vld [vmem:[%s1 + $0x648] sm:$0xff]
  %v263 = vld [vmem:[%s1 + $0x650] sm:$0xf]
  %v264 = vld [vmem:[%s1 + $0x654] sm:$0xff]
  %v265 = vld [vmem:[%s1 + $0x65c] sm:$0xff]
  %v266 = vld [vmem:[%s1 + $0x664] sm:$0xff]
  %v267 = vld [vmem:[%s1 + $0x66c] sm:$0xff]
  %v268 = vld [vmem:[%s1 + $0x674] sm:$0xf]
  %v269 = vld [vmem:[%s1 + $0x678] sm:$0xff]
  %v270 = vld [vmem:[%s1 + $0x680] sm:$0xff]
  %v271 = vld [vmem:[%s1 + $0x688] sm:$0xff]
  %v272 = vld [vmem:[%s1 + $0x690] sm:$0xff]
  %v273 = vld [vmem:[%s1 + $0x698] sm:$0xf]
  %v274 = vld [vmem:[%s1 + $0x69c] sm:$0xff]
  %v275 = vld [vmem:[%s1 + $0x6a4] sm:$0xff]
  %v276 = vld [vmem:[%s1 + $0x6ac] sm:$0xff]
  %v277 = vld [vmem:[%s1 + $0x6b4] sm:$0xff]
  %v278 = vld [vmem:[%s1 + $0x6bc] sm:$0xf]
  %v279 = vld [vmem:[%s1 + $0x6c0] sm:$0xff]
  %v280 = vld [vmem:[%s1 + $0x6c8] sm:$0xff]
  %v281 = vld [vmem:[%s1 + $0x6d0] sm:$0xff]
  %v282 = vld [vmem:[%s1 + $0x6d8] sm:$0xff]
  %v283 = vld [vmem:[%s1 + $0x6e0] sm:$0xf]
  %v284 = vld [vmem:[%s1 + $0x6e4] sm:$0xff]
  %v285 = vld [vmem:[%s1 + $0x6ec] sm:$0xff]
  %v286 = vld [vmem:[%s1 + $0x6f4] sm:$0xff]
  %v287 = vld [vmem:[%s1 + $0x6fc] sm:$0xff]
  %v288 = vld [vmem:[%s1 + $0x704] sm:$0xf]
  %v289 = vld [vmem:[%s1 + $0x708] sm:$0xff]
  %v290 = vld [vmem:[%s1 + $0x710] sm:$0xff]
  %v291 = vld [vmem:[%s1 + $0x718] sm:$0xff]
  %v292 = vld [vmem:[%s1 + $0x720] sm:$0xff]
  %v293 = vld [vmem:[%s1 + $0x728] sm:$0xf]
  %v294 = vld [vmem:[%s1 + $0x72c] sm:$0xff]
  %v295 = vld [vmem:[%s1 + $0x734] sm:$0xff]
  %v296 = vld [vmem:[%s1 + $0x73c] sm:$0xff]
  %v297 = vld [vmem:[%s1 + $0x744] sm:$0xff]
  %v298 = vld [vmem:[%s1 + $0x74c] sm:$0xf]
  %v299 = vld [vmem:[%s1 + $0x750] sm:$0xff]
  %v300 = vld [vmem:[%s1 + $0x758] sm:$0xff]
  %v301 = vld [vmem:[%s1 + $0x760] sm:$0xff]
  %v302 = vld [vmem:[%s1 + $0x768] sm:$0xff]
  %v303 = vld [vmem:[%s1 + $0x770] sm:$0xf]
  %v304 = vld [vmem:[%s1 + $0x774] sm:$0xff]
  %v305 = vld [vmem:[%s1 + $0x77c] sm:$0xff]
  %v306 = vld [vmem:[%s1 + $0x784] sm:$0xff]
  %v307 = vld [vmem:[%s1 + $0x78c] sm:$0xff]
  %v308 = vld [vmem:[%s1 + $0x794] sm:$0xf]
  %v309 = vld [vmem:[%s1 + $0x798] sm:$0xff]
  %v310 = vld [vmem:[%s1 + $0x7a0] sm:$0xff]
  %v311 = vld [vmem:[%s1 + $0x7a8] sm:$0xff]
  %v312 = vld [vmem:[%s1 + $0x7b0] sm:$0xff]
  %v313 = vld [vmem:[%s1 + $0x7b8] sm:$0xf]
  %v314 = vld [vmem:[%s1 + $0x7bc] sm:$0xff]
  %v315 = vld [vmem:[%s1 + $0x7c4] sm:$0xff]
  %v316 = vld [vmem:[%s1 + $0x7cc] sm:$0xff]
  %v317 = vld [vmem:[%s1 + $0x7d4] sm:$0xff]
  %v318 = vld [vmem:[%s1 + $0x7dc] sm:$0xf]
  %v319 = vld [vmem:[%s1 + $0x7e0] sm:$0xff]
  %v320 = vld [vmem:[%s1 + $0x7e8] sm:$0xff]
  %v321 = vld [vmem:[%s1 + $0x7f0] sm:$0xff]
  %v322 = vld [vmem:[%s1 + $0x7f8] sm:$0xff]
  %v323 = vld [vmem:[%s1 + $0x800] sm:$0xf]
  %v324 = vld [vmem:[%s1 + $0x804] sm:$0xff]
  %v325 = vld [vmem:[%s1 + $0x80c] sm:$0xff]
  %v326 = vld [vmem:[%s1 + $0x814] sm:$0xff]
  %v327 = vld [vmem:[%s1 + $0x81c] sm:$0xff]
  %v328 = vld [vmem:[%s1 + $0x824] sm:$0xf]
  %v329 = vld [vmem:[%s1 + $0x828] sm:$0xff]
  %v330 = vld [vmem:[%s1 + $0x830] sm:$0xff]
  %v331 = vld [vmem:[%s1 + $0x838] sm:$0xff]
  %v332 = vld [vmem:[%s1 + $0x840] sm:$0xff]
  %v333 = vld [vmem:[%s1 + $0x848] sm:$0xf]
  %v334 = vld [vmem:[%s1 + $0x84c] sm:$0xff]
  %v335 = vld [vmem:[%s1 + $0x854] sm:$0xff]
  %v336 = vld [vmem:[%s1 + $0x85c] sm:$0xff]
  %v337 = vld [vmem:[%s1 + $0x864] sm:$0xff]
  %v338 = vld [vmem:[%s1 + $0x86c] sm:$0xf]
  %v339 = vld [vmem:[%s1 + $0x870] sm:$0xff]
  %v340 = vld [vmem:[%s1 + $0x878] sm:$0xff]
  %v341 = vld [vmem:[%s1 + $0x880] sm:$0xff]
  %v342 = vld [vmem:[%s1 + $0x888] sm:$0xff]
  %v343 = vld [vmem:[%s1 + $0x890] sm:$0xf]
  %v344 = vld [vmem:[%s1 + $0x894] sm:$0xff]
  %v345 = vld [vmem:[%s1 + $0x89c] sm:$0xff]
  %v346 = vld [vmem:[%s1 + $0x8a4] sm:$0xff]
  %v347 = vld [vmem:[%s1 + $0x8ac] sm:$0xff]
  %v348 = vld [vmem:[%s1 + $0x8b4] sm:$0xf]
  %v349 = vld [vmem:[%s1 + $0x8b8] sm:$0xff]
  %v350 = vld [vmem:[%s1 + $0x8c0] sm:$0xff]
  %v351 = vld [vmem:[%s1 + $0x8c8] sm:$0xff]
  %v352 = vld [vmem:[%s1 + $0x8d0] sm:$0xff]
  %v353 = vld [vmem:[%s1 + $0x8d8] sm:$0xf]
  %v354 = vld [vmem:[%s1 + $0x8dc] sm:$0xff]
  %v355 = vld [vmem:[%s1 + $0x8e4] sm:$0xff]
  %v356 = vld [vmem:[%s1 + $0x8ec] sm:$0xff]
  %v357 = vld [vmem:[%s1 + $0x8f4] sm:$0xff]
  %v358 = vld [vmem:[%s1 + $0x8fc] sm:$0xf]
  %v359 = vld [vmem:[%s1 + $0x900] sm:$0xff]
  %v360 = vld [vmem:[%s1 + $0x908] sm:$0xff]
  %v361 = vld [vmem:[%s1 + $0x910] sm:$0xff]
  %v362 = vld [vmem:[%s1 + $0x918] sm:$0xff]
  %v363 = vld [vmem:[%s1 + $0x920] sm:$0xf]
  %v364 = vld [vmem:[%s1 + $0x924] sm:$0xff]
  %v365 = vld [vmem:[%s1 + $0x92c] sm:$0xff]
  %v366 = vld [vmem:[%s1 + $0x934] sm:$0xff]
  %v367 = vld [vmem:[%s1 + $0x93c] sm:$0xff]
  %v368 = vld [vmem:[%s1 + $0x944] sm:$0xf]
  %v369 = vld [vmem:[%s1 + $0x948] sm:$0xff]
  %v370 = vld [vmem:[%s1 + $0x950] sm:$0xff]
  %v371 = vld [vmem:[%s1 + $0x958] sm:$0xff]
  %v372 = vld [vmem:[%s1 + $0x960] sm:$0xff]
  %v373 = vld [vmem:[%s1 + $0x968] sm:$0xf]
  %v374 = vld [vmem:[%s1 + $0x96c] sm:$0xff]
  %v375 = vld [vmem:[%s1 + $0x974] sm:$0xff]
  %v376 = vld [vmem:[%s1 + $0x97c] sm:$0xff]
  %v377 = vld [vmem:[%s1 + $0x984] sm:$0xff]
  %v378 = vld [vmem:[%s1 + $0x98c] sm:$0xf]
  %v379 = vld [vmem:[%s1 + $0x990] sm:$0xff]
  %v380 = vld [vmem:[%s1 + $0x998] sm:$0xff]
  %v381 = vld [vmem:[%s1 + $0x9a0] sm:$0xff]
  %v382 = vld [vmem:[%s1 + $0x9a8] sm:$0xff]
  %v383 = vld [vmem:[%s1 + $0x9b0] sm:$0xf]
  %v384 = vld [vmem:[%s1 + $0x9b4] sm:$0xff]
  %v385 = vld [vmem:[%s1 + $0x9bc] sm:$0xff]
  %v386 = vld [vmem:[%s1 + $0x9c4] sm:$0xff]
  %v387 = vld [vmem:[%s1 + $0x9cc] sm:$0xff]
  %v388 = vld [vmem:[%s1 + $0x9d4] sm:$0xf]
  %v389 = vld [vmem:[%s1 + $0x9d8] sm:$0xff]
  %v390 = vld [vmem:[%s1 + $0x9e0] sm:$0xff]
  %v391 = vld [vmem:[%s1 + $0x9e8] sm:$0xff]
  %v392 = vld [vmem:[%s1 + $0x9f0] sm:$0xff]
  %v393 = vld [vmem:[%s1 + $0x9f8] sm:$0xf]
  %v394 = vld [vmem:[%s1 + $0x9fc] sm:$0xff]
  %v395 = vld [vmem:[%s1 + $0xa04] sm:$0xff]
  %v396 = vld [vmem:[%s1 + $0xa0c] sm:$0xff]
  %v397 = vld [vmem:[%s1 + $0xa14] sm:$0xff]
  %v398 = vld [vmem:[%s1 + $0xa1c] sm:$0xf]
  %v399 = vld [vmem:[%s1 + $0xa20] sm:$0xff]
  %v400 = vld [vmem:[%s1 + $0xa28] sm:$0xff]
  %v401 = vld [vmem:[%s1 + $0xa30] sm:$0xff]
  %v402 = vld [vmem:[%s1 + $0xa38] sm:$0xff]
  %v403 = vld [vmem:[%s1 + $0xa40] sm:$0xf]
  %v404 = vld [vmem:[%s1 + $0xa44] sm:$0xff]
  %v405 = vld [vmem:[%s1 + $0xa4c] sm:$0xff]
  %v406 = vld [vmem:[%s1 + $0xa54] sm:$0xff]
  %v407 = vld [vmem:[%s1 + $0xa5c] sm:$0xff]
  %v408 = vld [vmem:[%s1 + $0xa64] sm:$0xf]
  %v409 = vld [vmem:[%s1 + $0xa68] sm:$0xff]
  %v410 = vld [vmem:[%s1 + $0xa70] sm:$0xff]
  %v411 = vld [vmem:[%s1 + $0xa78] sm:$0xff]
  %v412 = vld [vmem:[%s1 + $0xa80] sm:$0xff]
  %v413 = vld [vmem:[%s1 + $0xa88] sm:$0xf]
  %v414 = vld [vmem:[%s1 + $0xa8c] sm:$0xff]
  %v415 = vld [vmem:[%s1 + $0xa94] sm:$0xff]
  %v416 = vld [vmem:[%s1 + $0xa9c] sm:$0xff]
  %v417 = vld [vmem:[%s1 + $0xaa4] sm:$0xff]
  %v418 = vld [vmem:[%s1 + $0xaac] sm:$0xf]
  %v419 = vld [vmem:[%s1 + $0xab0] sm:$0xff]
  %v420 = vld [vmem:[%s1 + $0xab8] sm:$0xff]
  %v421 = vld [vmem:[%s1 + $0xac0] sm:$0xff]
  %v422 = vld [vmem:[%s1 + $0xac8] sm:$0xff]
  %v423 = vld [vmem:[%s1 + $0xad0] sm:$0xf]
  %v424 = vld [vmem:[%s1 + $0xad4] sm:$0xff]
  %v425 = vld [vmem:[%s1 + $0xadc] sm:$0xff]
  %v426 = vld [vmem:[%s1 + $0xae4] sm:$0xff]
  %v427 = vld [vmem:[%s1 + $0xaec] sm:$0xff]
  %v428 = vld [vmem:[%s1 + $0xaf4] sm:$0xf]
  %v429 = vld [vmem:[%s1 + $0xaf8] sm:$0xff]
  %v430 = vld [vmem:[%s1 + $0xb00] sm:$0xff]
  %v431 = vld [vmem:[%s1 + $0xb08] sm:$0xff]
  %v432 = vld [vmem:[%s1 + $0xb10] sm:$0xff]
  %v433 = vld [vmem:[%s1 + $0xb18] sm:$0xf]
  %v434 = vld [vmem:[%s1 + $0xb1c] sm:$0xff]
  %v435 = vld [vmem:[%s1 + $0xb24] sm:$0xff]
  %v436 = vld [vmem:[%s1 + $0xb2c] sm:$0xff]
  %v437 = vld [vmem:[%s1 + $0xb34] sm:$0xff]
  %v438 = vld [vmem:[%s1 + $0xb3c] sm:$0xf]
  %v439 = vld [vmem:[%s1 + $0xb40] sm:$0xff]
  %v440 = vld [vmem:[%s1 + $0xb48] sm:$0xff]
  %v441 = vld [vmem:[%s1 + $0xb50] sm:$0xff]
  %v442 = vld [vmem:[%s1 + $0xb58] sm:$0xff]
  %v443 = vld [vmem:[%s1 + $0xb60] sm:$0xf]
  %v444 = vld [vmem:[%s1 + $0xb64] sm:$0xff]
  %v445 = vld [vmem:[%s1 + $0xb6c] sm:$0xff]
  %v446 = vld [vmem:[%s1 + $0xb74] sm:$0xff]
  %v447 = vld [vmem:[%s1 + $0xb7c] sm:$0xff]
  %v448 = vld [vmem:[%s1 + $0xb84] sm:$0xf]
  %v449 = vld [vmem:[%s1 + $0xb88] sm:$0xff]
  %v450 = vld [vmem:[%s1 + $0xb90] sm:$0xff]
  %v451 = vld [vmem:[%s1 + $0xb98] sm:$0xff]
  %v452 = vld [vmem:[%s1 + $0xba0] sm:$0xff]
  %v453 = vld [vmem:[%s1 + $0xba8] sm:$0xf]
  %v454 = vld [vmem:[%s1 + $0xbac] sm:$0xff]
  %v455 = vld [vmem:[%s1 + $0xbb4] sm:$0xff]
  %v456 = vld [vmem:[%s1 + $0xbbc] sm:$0xff]
  %v457 = vld [vmem:[%s1 + $0xbc4] sm:$0xff]
  %v458 = vld [vmem:[%s1 + $0xbcc] sm:$0xf]
  %v459 = vld [vmem:[%s1 + $0xbd0] sm:$0xff]
  %v460 = vld [vmem:[%s1 + $0xbd8] sm:$0xff]
  %v461 = vld [vmem:[%s1 + $0xbe0] sm:$0xff]
  %v462 = vld [vmem:[%s1 + $0xbe8] sm:$0xff]
  %v463 = vld [vmem:[%s1 + $0xbf0] sm:$0xf]
  %v464 = vld [vmem:[%s1 + $0xbf4] sm:$0xff]
  %v465 = vld [vmem:[%s1 + $0xbfc] sm:$0xff]
  %v466 = vld [vmem:[%s1 + $0xc04] sm:$0xff]
  %v467 = vld [vmem:[%s1 + $0xc0c] sm:$0xff]
  %v468 = vld [vmem:[%s1 + $0xc14] sm:$0xf]
  %v469 = vld [vmem:[%s1 + $0xc18] sm:$0xff]
  %v470 = vld [vmem:[%s1 + $0xc20] sm:$0xff]
  %v471 = vld [vmem:[%s1 + $0xc28] sm:$0xff]
  %v472 = vld [vmem:[%s1 + $0xc30] sm:$0xff]
  %v473 = vld [vmem:[%s1 + $0xc38] sm:$0xf]
  %v474 = vld [vmem:[%s1 + $0xc3c] sm:$0xff]
  %v475 = vld [vmem:[%s1 + $0xc44] sm:$0xff]
  %v476 = vld [vmem:[%s1 + $0xc4c] sm:$0xff]
  %v477 = vld [vmem:[%s1 + $0xc54] sm:$0xff]
  %v478 = vld [vmem:[%s1 + $0xc5c] sm:$0xf]
  %v479 = vld [vmem:[%s1 + $0xc60] sm:$0xff]
  %v480 = vld [vmem:[%s1 + $0xc68] sm:$0xff]
  %v481 = vld [vmem:[%s1 + $0xc70] sm:$0xff]
  %v482 = vld [vmem:[%s1 + $0xc78] sm:$0xff]
  %v483 = vld [vmem:[%s1 + $0xc80] sm:$0xf]
  %v484 = vld [vmem:[%s1 + $0xc84] sm:$0xff]
  %v485 = vld [vmem:[%s1 + $0xc8c] sm:$0xff]
  %v486 = vld [vmem:[%s1 + $0xc94] sm:$0xff]
  %v487 = vld [vmem:[%s1 + $0xc9c] sm:$0xff]
  %v488 = vld [vmem:[%s1 + $0xca4] sm:$0xf]
  %v489 = vld [vmem:[%s1 + $0xca8] sm:$0xff]
  %v490 = vld [vmem:[%s1 + $0xcb0] sm:$0xff]
  %v491 = vld [vmem:[%s1 + $0xcb8] sm:$0xff]
  %v492 = vld [vmem:[%s1 + $0xcc0] sm:$0xff]
  %v493 = vld [vmem:[%s1 + $0xcc8] sm:$0xf]
  %v494 = vld [vmem:[%s1 + $0xccc] sm:$0xff]
  %v495 = vld [vmem:[%s1 + $0xcd4] sm:$0xff]
  %v496 = vld [vmem:[%s1 + $0xcdc] sm:$0xff]
  %v497 = vld [vmem:[%s1 + $0xce4] sm:$0xff]
  %v498 = vld [vmem:[%s1 + $0xcec] sm:$0xf]
  %v499 = vld [vmem:[%s1 + $0xcf0] sm:$0xff]
  %v500 = vld [vmem:[%s1 + $0xcf8] sm:$0xff]
  %v501 = vld [vmem:[%s1 + $0xd00] sm:$0xff]
  %v502 = vld [vmem:[%s1 + $0xd08] sm:$0xff]
  %v503 = vld [vmem:[%s1 + $0xd10] sm:$0xf]
  %v504 = vld [vmem:[%s1 + $0xd14] sm:$0xff]
  %v505 = vld [vmem:[%s1 + $0xd1c] sm:$0xff]
  %v506 = vld [vmem:[%s1 + $0xd24] sm:$0xff]
  %v507 = vld [vmem:[%s1 + $0xd2c] sm:$0xff]
  %v508 = vld [vmem:[%s1 + $0xd34] sm:$0xf]
  %v509 = vld [vmem:[%s1 + $0xd38] sm:$0xff]
  %v510 = vld [vmem:[%s1 + $0xd40] sm:$0xff]
  %v511 = vld [vmem:[%s1 + $0xd48] sm:$0xff]
  %v512 = vld [vmem:[%s1 + $0xd50] sm:$0xff]
  %v513 = vld [vmem:[%s1 + $0xd58] sm:$0xf]
  %v514 = vld [vmem:[%s1 + $0xd5c] sm:$0xff]
  %v515 = vld [vmem:[%s1 + $0xd64] sm:$0xff]
  %v516 = vld [vmem:[%s1 + $0xd6c] sm:$0xff]
  %v517 = vld [vmem:[%s1 + $0xd74] sm:$0xff]
  %v518 = vld [vmem:[%s1 + $0xd7c] sm:$0xf]
  %v519 = vld [vmem:[%s1 + $0xd80] sm:$0xff]
  %v520 = vld [vmem:[%s1 + $0xd88] sm:$0xff]
  %v521 = vld [vmem:[%s1 + $0xd90] sm:$0xff]
  %v522 = vld [vmem:[%s1 + $0xd98] sm:$0xff]
  %v523 = vld [vmem:[%s1 + $0xda0] sm:$0xf]
  %v524 = vld [vmem:[%s1 + $0xda4] sm:$0xff]
  %v525 = vld [vmem:[%s1 + $0xdac] sm:$0xff]
  %v526 = vld [vmem:[%s1 + $0xdb4] sm:$0xff]
  %v527 = vld [vmem:[%s1 + $0xdbc] sm:$0xff]
  %v528 = vld [vmem:[%s1 + $0xdc4] sm:$0xf]
  %v529 = vld [vmem:[%s1 + $0xdc8] sm:$0xff]
  %v530 = vld [vmem:[%s1 + $0xdd0] sm:$0xff]
  %v531 = vld [vmem:[%s1 + $0xdd8] sm:$0xff]
  %v532 = vld [vmem:[%s1 + $0xde0] sm:$0xff]
  %v533 = vld [vmem:[%s1 + $0xde8] sm:$0xf]
  %v534 = vld [vmem:[%s1 + $0xdec] sm:$0xff]
  %v535 = vld [vmem:[%s1 + $0xdf4] sm:$0xff]
  %v536 = vld [vmem:[%s1 + $0xdfc] sm:$0xff]
  %v537 = vld [vmem:[%s1 + $0xe04] sm:$0xff]
  %v538 = vld [vmem:[%s1 + $0xe0c] sm:$0xf]
  %v539 = vld [vmem:[%s1 + $0xe10] sm:$0xff]
  %v540 = vld [vmem:[%s1 + $0xe18] sm:$0xff]
  %v541 = vld [vmem:[%s1 + $0xe20] sm:$0xff]
  %v542 = vld [vmem:[%s1 + $0xe28] sm:$0xff]
  %v543 = vld [vmem:[%s1 + $0xe30] sm:$0xf]
  %v544 = vld [vmem:[%s1 + $0xe34] sm:$0xff]
  %v545 = vld [vmem:[%s1 + $0xe3c] sm:$0xff]
  %v546 = vld [vmem:[%s1 + $0xe44] sm:$0xff]
  %v547 = vld [vmem:[%s1 + $0xe4c] sm:$0xff]
  %v548 = vld [vmem:[%s1 + $0xe54] sm:$0xf]
  %v549 = vld [vmem:[%s1 + $0xe58] sm:$0xff]
  %v550 = vld [vmem:[%s1 + $0xe60] sm:$0xff]
  %v551 = vld [vmem:[%s1 + $0xe68] sm:$0xff]
  %v552 = vld [vmem:[%s1 + $0xe70] sm:$0xff]
  %v553 = vld [vmem:[%s1 + $0xe78] sm:$0xf]
  %v554 = vld [vmem:[%s1 + $0xe7c] sm:$0xff]
  %v555 = vld [vmem:[%s1 + $0xe84] sm:$0xff]
  %v556 = vld [vmem:[%s1 + $0xe8c] sm:$0xff]
  %v557 = vld [vmem:[%s1 + $0xe94] sm:$0xff]
  %v558 = vld [vmem:[%s1 + $0xe9c] sm:$0xf]
  %v559 = vld [vmem:[%s1 + $0xea0] sm:$0xff]
  %v560 = vld [vmem:[%s1 + $0xea8] sm:$0xff]
  %v561 = vld [vmem:[%s1 + $0xeb0] sm:$0xff]
  %v562 = vld [vmem:[%s1 + $0xeb8] sm:$0xff]
  %v563 = vld [vmem:[%s1 + $0xec0] sm:$0xf]
  %v564 = vld [vmem:[%s1 + $0xec4] sm:$0xff]
  %v565 = vld [vmem:[%s1 + $0xecc] sm:$0xff]
  %v566 = vld [vmem:[%s1 + $0xed4] sm:$0xff]
  %v567 = vld [vmem:[%s1 + $0xedc] sm:$0xff]
  %v568 = vld [vmem:[%s1 + $0xee4] sm:$0xf]
  %v569 = vld [vmem:[%s1 + $0xee8] sm:$0xff]
  %v570 = vld [vmem:[%s1 + $0xef0] sm:$0xff]
  %v571 = vld [vmem:[%s1 + $0xef8] sm:$0xff]
  %v572 = vld [vmem:[%s1 + $0xf00] sm:$0xff]
  %v573 = vld [vmem:[%s1 + $0xf08] sm:$0xf]
  %v574 = vld [vmem:[%s1 + $0xf0c] sm:$0xff]
  %v575 = vld [vmem:[%s1 + $0xf14] sm:$0xff]
  %v576 = vld [vmem:[%s1 + $0xf1c] sm:$0xff]
  %v577 = vld [vmem:[%s1 + $0xf24] sm:$0xff]
  %v578 = vld [vmem:[%s1 + $0xf2c] sm:$0xf]
  %v579 = vld [vmem:[%s1 + $0xf30] sm:$0xff]
  %v580 = vld [vmem:[%s1 + $0xf38] sm:$0xff]
  %v581 = vld [vmem:[%s1 + $0xf40] sm:$0xff]
  %v582 = vld [vmem:[%s1 + $0xf48] sm:$0xff]
  %v583 = vld [vmem:[%s1 + $0xf50] sm:$0xf]
  %v584 = vld [vmem:[%s1 + $0xf54] sm:$0xff]
  %v585 = vld [vmem:[%s1 + $0xf5c] sm:$0xff]
  %v586 = vld [vmem:[%s1 + $0xf64] sm:$0xff]
  %v587 = vld [vmem:[%s1 + $0xf6c] sm:$0xff]
  %v588 = vld [vmem:[%s1 + $0xf74] sm:$0xf]
  %v589 = vld [vmem:[%s1 + $0xf78] sm:$0xff]
  %v590 = vld [vmem:[%s1 + $0xf80] sm:$0xff]
  %v591 = vld [vmem:[%s1 + $0xf88] sm:$0xff]
  %v592 = vld [vmem:[%s1 + $0xf90] sm:$0xff]
  %v593 = vld [vmem:[%s1 + $0xf98] sm:$0xf]
  %v594 = vld [vmem:[%s1 + $0xf9c] sm:$0xff]
  %v595 = vld [vmem:[%s1 + $0xfa4] sm:$0xff]
  %v596 = vld [vmem:[%s1 + $0xfac] sm:$0xff]
  %v597 = vld [vmem:[%s1 + $0xfb4] sm:$0xff]
  %v598 = vld [vmem:[%s1 + $0xfbc] sm:$0xf]
  %v599 = vld [vmem:[%s1 + $0xfc0] sm:$0xff]
  %v600 = vld [vmem:[%s1 + $0xfc8] sm:$0xff]
  %v601 = vld [vmem:[%s1 + $0xfd0] sm:$0xff]
  %v602 = vld [vmem:[%s1 + $0xfd8] sm:$0xff]
  %v603 = vld [vmem:[%s1 + $0xfe0] sm:$0xf]
  %v604 = vld [vmem:[%s1 + $0xfe4] sm:$0xff]
  %v605 = vld [vmem:[%s1 + $0xfec] sm:$0xff]
  %v606 = vld [vmem:[%s1 + $0xff4] sm:$0xff]
  %v607 = vld [vmem:[%s1 + $0xffc] sm:$0xff]
  %v608 = vld [vmem:[%s1 + $0x1004] sm:$0xf]
  %v609 = vld [vmem:[%s1 + $0x1008] sm:$0xff]
  %v610 = vld [vmem:[%s1 + $0x1010] sm:$0xff]
  %v611 = vld [vmem:[%s1 + $0x1018] sm:$0xff]
  %v612 = vld [vmem:[%s1 + $0x1020] sm:$0xff]
  %v613 = vld [vmem:[%s1 + $0x1028] sm:$0xf]
  %v614 = vld [vmem:[%s1 + $0x102c] sm:$0xff]
  %v615 = vld [vmem:[%s1 + $0x1034] sm:$0xff]
  %v616 = vld [vmem:[%s1 + $0x103c] sm:$0xff]
  %v617 = vld [vmem:[%s1 + $0x1044] sm:$0xff]
  %v618 = vld [vmem:[%s1 + $0x104c] sm:$0xf]
  %v619 = vld [vmem:[%s1 + $0x1050] sm:$0xff]
  %v620 = vld [vmem:[%s1 + $0x1058] sm:$0xff]
  %v621 = vld [vmem:[%s1 + $0x1060] sm:$0xff]
  %v622 = vld [vmem:[%s1 + $0x1068] sm:$0xff]
  %v623 = vld [vmem:[%s1 + $0x1070] sm:$0xf]
  %v624 = vld [vmem:[%s1 + $0x1074] sm:$0xff]
  %v625 = vld [vmem:[%s1 + $0x107c] sm:$0xff]
  %v626 = vld [vmem:[%s1 + $0x1084] sm:$0xff]
  %v627 = vld [vmem:[%s1 + $0x108c] sm:$0xff]
  %v628 = vld [vmem:[%s1 + $0x1094] sm:$0xf]
  %v629 = vld [vmem:[%s1 + $0x1098] sm:$0xff]
  %v630 = vld [vmem:[%s1 + $0x10a0] sm:$0xff]
  %v631 = vld [vmem:[%s1 + $0x10a8] sm:$0xff]
  %v632 = vld [vmem:[%s1 + $0x10b0] sm:$0xff]
  %v633 = vld [vmem:[%s1 + $0x10b8] sm:$0xf]
  %v634 = vld [vmem:[%s1 + $0x10bc] sm:$0xff]
  %v635 = vld [vmem:[%s1 + $0x10c4] sm:$0xff]
  %v636 = vld [vmem:[%s1 + $0x10cc] sm:$0xff]
  %v637 = vld [vmem:[%s1 + $0x10d4] sm:$0xff]
  %v638 = vld [vmem:[%s1 + $0x10dc] sm:$0xf]
  %v639 = vld [vmem:[%s1 + $0x10e0] sm:$0xff]
  %v640 = vld [vmem:[%s1 + $0x10e8] sm:$0xff]
  %v641 = vld [vmem:[%s1 + $0x10f0] sm:$0xff]
  %v642 = vld [vmem:[%s1 + $0x10f8] sm:$0xff]
  %v643 = vld [vmem:[%s1 + $0x1100] sm:$0xf]
  %v644 = vld [vmem:[%s1 + $0x1104] sm:$0xff]
  %v645 = vld [vmem:[%s1 + $0x110c] sm:$0xff]
  %v646 = vld [vmem:[%s1 + $0x1114] sm:$0xff]
  %v647 = vld [vmem:[%s1 + $0x111c] sm:$0xff]
  %v648 = vld [vmem:[%s1 + $0x1124] sm:$0xf]
  %v649 = vld [vmem:[%s1 + $0x1128] sm:$0xff]
  %v650 = vld [vmem:[%s1 + $0x1130] sm:$0xff]
  %v651 = vld [vmem:[%s1 + $0x1138] sm:$0xff]
  %v652 = vld [vmem:[%s1 + $0x1140] sm:$0xff]
  %v653 = vld [vmem:[%s1 + $0x1148] sm:$0xf]
  %v654 = vld [vmem:[%s1 + $0x114c] sm:$0xff]
  %v655 = vld [vmem:[%s1 + $0x1154] sm:$0xff]
  %v656 = vld [vmem:[%s1 + $0x115c] sm:$0xff]
  %v657 = vld [vmem:[%s1 + $0x1164] sm:$0xff]
  %v658 = vld [vmem:[%s1 + $0x116c] sm:$0xf]
  %v659 = vld [vmem:[%s1 + $0x1170] sm:$0xff]
  %v660 = vld [vmem:[%s1 + $0x1178] sm:$0xff]
  %v661 = vld [vmem:[%s1 + $0x1180] sm:$0xff]
  %v662 = vld [vmem:[%s1 + $0x1188] sm:$0xff]
  %v663 = vld [vmem:[%s1 + $0x1190] sm:$0xf]
  %v664 = vld [vmem:[%s1 + $0x1194] sm:$0xff]
  %v665 = vld [vmem:[%s1 + $0x119c] sm:$0xff]
  %v666 = vld [vmem:[%s1 + $0x11a4] sm:$0xff]
  %v667 = vld [vmem:[%s1 + $0x11ac] sm:$0xff]
  %v668 = vld [vmem:[%s1 + $0x11b4] sm:$0xf]
  %v669 = vld [vmem:[%s1 + $0x11b8] sm:$0xff]
  %v670 = vld [vmem:[%s1 + $0x11c0] sm:$0xff]
  %v671 = vld [vmem:[%s1 + $0x11c8] sm:$0xff]
  %v672 = vld [vmem:[%s1 + $0x11d0] sm:$0xff]
  %v673 = vld [vmem:[%s1 + $0x11d8] sm:$0xf]
  %v674 = vld [vmem:[%s1 + $0x11dc] sm:$0xff]
  %v675 = vld [vmem:[%s1 + $0x11e4] sm:$0xff]
  %v676 = vld [vmem:[%s1 + $0x11ec] sm:$0xff]
  %v677 = vld [vmem:[%s1 + $0x11f4] sm:$0xff]
  %v678 = vld [vmem:[%s1 + $0x11fc] sm:$0xf]
  %v679 = vld [vmem:[%s1 + $0x1200] sm:$0xff]
  %v680 = vld [vmem:[%s1 + $0x1208] sm:$0xff]
  %v681 = vld [vmem:[%s1 + $0x1210] sm:$0xff]
  %v682 = vld [vmem:[%s1 + $0x1218] sm:$0xff]
  %v683 = vld [vmem:[%s1 + $0x1220] sm:$0xf]
  %v684 = vld [vmem:[%s1 + $0x1224] sm:$0xff]
  %v685 = vld [vmem:[%s1 + $0x122c] sm:$0xff]
  %v686 = vld [vmem:[%s1 + $0x1234] sm:$0xff]
  %v687 = vld [vmem:[%s1 + $0x123c] sm:$0xff]
  %v688 = vld [vmem:[%s1 + $0x1244] sm:$0xf]
  %v689 = vld [vmem:[%s1 + $0x1248] sm:$0xff]
  %v690 = vld [vmem:[%s1 + $0x1250] sm:$0xff]
  %v691 = vld [vmem:[%s1 + $0x1258] sm:$0xff]
  %v692 = vld [vmem:[%s1 + $0x1260] sm:$0xff]
  %v693 = vld [vmem:[%s1 + $0x1268] sm:$0xf]
  %v694 = vld [vmem:[%s1 + $0x126c] sm:$0xff]
  %v695 = vld [vmem:[%s1 + $0x1274] sm:$0xff]
  %v696 = vld [vmem:[%s1 + $0x127c] sm:$0xff]
  %v697 = vld [vmem:[%s1 + $0x1284] sm:$0xff]
  %v698 = vld [vmem:[%s1 + $0x128c] sm:$0xf]
  %v699 = vld [vmem:[%s1 + $0x1290] sm:$0xff]
  %v700 = vld [vmem:[%s1 + $0x1298] sm:$0xff]
  %v701 = vld [vmem:[%s1 + $0x12a0] sm:$0xff]
  %v702 = vld [vmem:[%s1 + $0x12a8] sm:$0xff]
  %v703 = vld [vmem:[%s1 + $0x12b0] sm:$0xf]
  %v704 = vld [vmem:[%s1 + $0x12b4] sm:$0xff]
  %v705 = vld [vmem:[%s1 + $0x12bc] sm:$0xff]
  %v706 = vld [vmem:[%s1 + $0x12c4] sm:$0xff]
  %v707 = vld [vmem:[%s1 + $0x12cc] sm:$0xff]
  %v708 = vld [vmem:[%s1 + $0x12d4] sm:$0xf]
  %v709 = vld [vmem:[%s1 + $0x12d8] sm:$0xff]
  %v710 = vld [vmem:[%s1 + $0x12e0] sm:$0xff]
  %v711 = vld [vmem:[%s1 + $0x12e8] sm:$0xff]
  %v712 = vld [vmem:[%s1 + $0x12f0] sm:$0xff]
  %v713 = vld [vmem:[%s1 + $0x12f8] sm:$0xf]
  %v714 = vld [vmem:[%s1 + $0x12fc] sm:$0xff]
  %v715 = vld [vmem:[%s1 + $0x1304] sm:$0xff]
  %v716 = vld [vmem:[%s1 + $0x130c] sm:$0xff]
  %v717 = vld [vmem:[%s1 + $0x1314] sm:$0xff]
  %v718 = vld [vmem:[%s1 + $0x131c] sm:$0xf]
  %v719 = vld [vmem:[%s1 + $0x1320] sm:$0xff]
  %v720 = vld [vmem:[%s1 + $0x1328] sm:$0xff]
  %v721 = vld [vmem:[%s1 + $0x1330] sm:$0xff]
  %v722 = vld [vmem:[%s1 + $0x1338] sm:$0xff]
  %v723 = vld [vmem:[%s1 + $0x1340] sm:$0xf]
  %v724 = vld [vmem:[%s1 + $0x1344] sm:$0xff]
  %v725 = vld [vmem:[%s1 + $0x134c] sm:$0xff]
  %v726 = vld [vmem:[%s1 + $0x1354] sm:$0xff]
  %v727 = vld [vmem:[%s1 + $0x135c] sm:$0xff]
  %v728 = vld [vmem:[%s1 + $0x1364] sm:$0xf]
  %v729 = vld [vmem:[%s1 + $0x1368] sm:$0xff]
  %v730 = vld [vmem:[%s1 + $0x1370] sm:$0xff]
  %v731 = vld [vmem:[%s1 + $0x1378] sm:$0xff]
  %v732 = vld [vmem:[%s1 + $0x1380] sm:$0xff]
  %v733 = vld [vmem:[%s1 + $0x1388] sm:$0xf]
  %v734 = vld [vmem:[%s1 + $0x138c] sm:$0xff]
  %v735 = vld [vmem:[%s1 + $0x1394] sm:$0xff]
  %v736 = vld [vmem:[%s1 + $0x139c] sm:$0xff]
  %v737 = vld [vmem:[%s1 + $0x13a4] sm:$0xff]
  %v738 = vld [vmem:[%s1 + $0x13ac] sm:$0xf]
  %v739 = vld [vmem:[%s1 + $0x13b0] sm:$0xff]
  %v740 = vld [vmem:[%s1 + $0x13b8] sm:$0xff]
  %v741 = vld [vmem:[%s1 + $0x13c0] sm:$0xff]
  %v742 = vld [vmem:[%s1 + $0x13c8] sm:$0xff]
  %v743 = vld [vmem:[%s1 + $0x13d0] sm:$0xf]
  %v744 = vld [vmem:[%s1 + $0x13d4] sm:$0xff]
  %v745 = vld [vmem:[%s1 + $0x13dc] sm:$0xff]
  %v746 = vld [vmem:[%s1 + $0x13e4] sm:$0xff]
  %v747 = vld [vmem:[%s1 + $0x13ec] sm:$0xff]
  %v748 = vld [vmem:[%s1 + $0x13f4] sm:$0xf]
  %v749 = vld [vmem:[%s1 + $0x13f8] sm:$0xff]
  %v750 = vld [vmem:[%s1 + $0x1400] sm:$0xff]
  %v751 = vld [vmem:[%s1 + $0x1408] sm:$0xff]
  %v752 = vld [vmem:[%s1 + $0x1410] sm:$0xff]
  %v753 = vld [vmem:[%s1 + $0x1418] sm:$0xf]
  %v754 = vld [vmem:[%s1 + $0x141c] sm:$0xff]
  %v755 = vld [vmem:[%s1 + $0x1424] sm:$0xff]
  %v756 = vld [vmem:[%s1 + $0x142c] sm:$0xff]
  %v757 = vld [vmem:[%s1 + $0x1434] sm:$0xff]
  %v758 = vld [vmem:[%s1 + $0x143c] sm:$0xf]
  %v759 = vld [vmem:[%s1 + $0x1440] sm:$0xff]
  %v760 = vld [vmem:[%s1 + $0x1448] sm:$0xff]
  %v761 = vld [vmem:[%s1 + $0x1450] sm:$0xff]
  %v762 = vld [vmem:[%s1 + $0x1458] sm:$0xff]
  %v763 = vld [vmem:[%s1 + $0x1460] sm:$0xf]
  %v764 = vld [vmem:[%s1 + $0x1464] sm:$0xff]
  %v765 = vld [vmem:[%s1 + $0x146c] sm:$0xff]
  %v766 = vld [vmem:[%s1 + $0x1474] sm:$0xff]
  %v767 = vld [vmem:[%s1 + $0x147c] sm:$0xff]
  %v768 = vld [vmem:[%s1 + $0x1484] sm:$0xf]
  %v769 = vld [vmem:[%s1 + $0x1488] sm:$0xff]
  %v770 = vld [vmem:[%s1 + $0x1490] sm:$0xff]
  %v771 = vld [vmem:[%s1 + $0x1498] sm:$0xff]
  %v772 = vld [vmem:[%s1 + $0x14a0] sm:$0xff]
  %v773 = vld [vmem:[%s1 + $0x14a8] sm:$0xf]
  %v774 = vld [vmem:[%s1 + $0x14ac] sm:$0xff]
  %v775 = vld [vmem:[%s1 + $0x14b4] sm:$0xff]
  %v776 = vld [vmem:[%s1 + $0x14bc] sm:$0xff]
  %v777 = vld [vmem:[%s1 + $0x14c4] sm:$0xff]
  %v778 = vld [vmem:[%s1 + $0x14cc] sm:$0xf]
  %v779 = vld [vmem:[%s1 + $0x14d0] sm:$0xff]
  %v780 = vld [vmem:[%s1 + $0x14d8] sm:$0xff]
  %v781 = vld [vmem:[%s1 + $0x14e0] sm:$0xff]
  %v782 = vld [vmem:[%s1 + $0x14e8] sm:$0xff]
  %v783 = vld [vmem:[%s1 + $0x14f0] sm:$0xf]
  %v784 = vld [vmem:[%s1 + $0x14f4] sm:$0xff]
  %v785 = vld [vmem:[%s1 + $0x14fc] sm:$0xff]
  %v786 = vld [vmem:[%s1 + $0x1504] sm:$0xff]
  %v787 = vld [vmem:[%s1 + $0x150c] sm:$0xff]
  %v788 = vld [vmem:[%s1 + $0x1514] sm:$0xf]
  %v789 = vld [vmem:[%s1 + $0x1518] sm:$0xff]
  %v790 = vld [vmem:[%s1 + $0x1520] sm:$0xff]
  %v791 = vld [vmem:[%s1 + $0x1528] sm:$0xff]
  %v792 = vld [vmem:[%s1 + $0x1530] sm:$0xff]
  %v793 = vld [vmem:[%s1 + $0x1538] sm:$0xf]
  %v794 = vld [vmem:[%s1 + $0x153c] sm:$0xff]
  %v795 = vld [vmem:[%s1 + $0x1544] sm:$0xff]
  %v796 = vld [vmem:[%s1 + $0x154c] sm:$0xff]
  %v797 = vld [vmem:[%s1 + $0x1554] sm:$0xff]
  %v798 = vld [vmem:[%s1 + $0x155c] sm:$0xf]
  %v799 = vld [vmem:[%s1 + $0x1560] sm:$0xff]
  %v800 = vld [vmem:[%s1 + $0x1568] sm:$0xff]
  %v801 = vld [vmem:[%s1 + $0x1570] sm:$0xff]
  %v802 = vld [vmem:[%s1 + $0x1578] sm:$0xff]
  %v803 = vld [vmem:[%s1 + $0x1580] sm:$0xf]
  %v804 = vld [vmem:[%s1 + $0x1584] sm:$0xff]
  %v805 = vld [vmem:[%s1 + $0x158c] sm:$0xff]
  %v806 = vld [vmem:[%s1 + $0x1594] sm:$0xff]
  %v807 = vld [vmem:[%s1 + $0x159c] sm:$0xff]
  %v808 = vld [vmem:[%s1 + $0x15a4] sm:$0xf]
  %v809 = vld [vmem:[%s1 + $0x15a8] sm:$0xff]
  %v810 = vld [vmem:[%s1 + $0x15b0] sm:$0xff]
  %v811 = vld [vmem:[%s1 + $0x15b8] sm:$0xff]
  %v812 = vld [vmem:[%s1 + $0x15c0] sm:$0xff]
  %v813 = vld [vmem:[%s1 + $0x15c8] sm:$0xf]
  %v814 = vld [vmem:[%s1 + $0x15cc] sm:$0xff]
  %v815 = vld [vmem:[%s1 + $0x15d4] sm:$0xff]
  %v816 = vld [vmem:[%s1 + $0x15dc] sm:$0xff]
  %v817 = vld [vmem:[%s1 + $0x15e4] sm:$0xff]
  %v818 = vld [vmem:[%s1 + $0x15ec] sm:$0xf]
  %v819 = vld [vmem:[%s1 + $0x15f0] sm:$0xff]
  %v820 = vld [vmem:[%s1 + $0x15f8] sm:$0xff]
  %v821 = vld [vmem:[%s1 + $0x1600] sm:$0xff]
  %v822 = vld [vmem:[%s1 + $0x1608] sm:$0xff]
  %v823 = vld [vmem:[%s1 + $0x1610] sm:$0xf]
  %v824 = vld [vmem:[%s1 + $0x1614] sm:$0xff]
  %v825 = vld [vmem:[%s1 + $0x161c] sm:$0xff]
  %v826 = vld [vmem:[%s1 + $0x1624] sm:$0xff]
  %v827 = vld [vmem:[%s1 + $0x162c] sm:$0xff]
  %v828 = vld [vmem:[%s1 + $0x1634] sm:$0xf]
  %v829 = vld [vmem:[%s1 + $0x1638] sm:$0xff]
  %v830 = vld [vmem:[%s1 + $0x1640] sm:$0xff]
  %v831 = vld [vmem:[%s1 + $0x1648] sm:$0xff]
  %v832 = vld [vmem:[%s1 + $0x1650] sm:$0xff]
  %v833 = vld [vmem:[%s1 + $0x1658] sm:$0xf]
  %v834 = vld [vmem:[%s1 + $0x165c] sm:$0xff]
  %v835 = vld [vmem:[%s1 + $0x1664] sm:$0xff]
  %v836 = vld [vmem:[%s1 + $0x166c] sm:$0xff]
  %v837 = vld [vmem:[%s1 + $0x1674] sm:$0xff]
  %v838 = vld [vmem:[%s1 + $0x167c] sm:$0xf]
  %v839 = vld [vmem:[%s1 + $0x1680] sm:$0xff]
  %v840 = vld [vmem:[%s1 + $0x1688] sm:$0xff]
  %v841 = vld [vmem:[%s1 + $0x1690] sm:$0xff]
  %v842 = vld [vmem:[%s1 + $0x1698] sm:$0xff]
  %v843 = vld [vmem:[%s1 + $0x16a0] sm:$0xf]
  %v844 = vld [vmem:[%s1 + $0x16a4] sm:$0xff]
  %v845 = vld [vmem:[%s1 + $0x16ac] sm:$0xff]
  %v846 = vld [vmem:[%s1 + $0x16b4] sm:$0xff]
  %v847 = vld [vmem:[%s1 + $0x16bc] sm:$0xff]
  %v848 = vld [vmem:[%s1 + $0x16c4] sm:$0xf]
  %v849 = vld [vmem:[%s1 + $0x16c8] sm:$0xff]
  %v850 = vld [vmem:[%s1 + $0x16d0] sm:$0xff]
  %v851 = vld [vmem:[%s1 + $0x16d8] sm:$0xff]
  %v852 = vld [vmem:[%s1 + $0x16e0] sm:$0xff]
  %v853 = vld [vmem:[%s1 + $0x16e8] sm:$0xf]
  %v854 = vld [vmem:[%s1 + $0x16ec] sm:$0xff]
  %v855 = vld [vmem:[%s1 + $0x16f4] sm:$0xff]
  %v856 = vld [vmem:[%s1 + $0x16fc] sm:$0xff]
  %v857 = vld [vmem:[%s1 + $0x1704] sm:$0xff]
  %v858 = vld [vmem:[%s1 + $0x170c] sm:$0xf]
  %v859 = vld [vmem:[%s1 + $0x1710] sm:$0xff]
  %v860 = vld [vmem:[%s1 + $0x1718] sm:$0xff]
  %v861 = vld [vmem:[%s1 + $0x1720] sm:$0xff]
  %v862 = vld [vmem:[%s1 + $0x1728] sm:$0xff]
  %v863 = vld [vmem:[%s1 + $0x1730] sm:$0xf]
  %v864 = vld [vmem:[%s1 + $0x1734] sm:$0xff]
  %v865 = vld [vmem:[%s1 + $0x173c] sm:$0xff]
  %v866 = vld [vmem:[%s1 + $0x1744] sm:$0xff]
  %v867 = vld [vmem:[%s1 + $0x174c] sm:$0xff]
  %v868 = vld [vmem:[%s1 + $0x1754] sm:$0xf]
  %v869 = vld [vmem:[%s1 + $0x1758] sm:$0xff]
  %v870 = vld [vmem:[%s1 + $0x1760] sm:$0xff]
  %v871 = vld [vmem:[%s1 + $0x1768] sm:$0xff]
  %v872 = vld [vmem:[%s1 + $0x1770] sm:$0xff]
  %v873 = vld [vmem:[%s1 + $0x1778] sm:$0xf]
  %v874 = vld [vmem:[%s1 + $0x177c] sm:$0xff]
  %v875 = vld [vmem:[%s1 + $0x1784] sm:$0xff]
  %v876 = vld [vmem:[%s1 + $0x178c] sm:$0xff]
  %v877 = vld [vmem:[%s1 + $0x1794] sm:$0xff]
  %v878 = vld [vmem:[%s1 + $0x179c] sm:$0xf]
  %v879 = vld [vmem:[%s1 + $0x17a0] sm:$0xff]
  %v880 = vld [vmem:[%s1 + $0x17a8] sm:$0xff]
  %v881 = vld [vmem:[%s1 + $0x17b0] sm:$0xff]
  %v882 = vld [vmem:[%s1 + $0x17b8] sm:$0xff]
  %v883 = vld [vmem:[%s1 + $0x17c0] sm:$0xf]
  %v884 = vld [vmem:[%s1 + $0x17c4] sm:$0xff]
  %v885 = vld [vmem:[%s1 + $0x17cc] sm:$0xff]
  %v886 = vld [vmem:[%s1 + $0x17d4] sm:$0xff]
  %v887 = vld [vmem:[%s1 + $0x17dc] sm:$0xff]
  %v888 = vld [vmem:[%s1 + $0x17e4] sm:$0xf]
  %v889 = vld [vmem:[%s1 + $0x17e8] sm:$0xff]
  %v890 = vld [vmem:[%s1 + $0x17f0] sm:$0xff]
  %v891 = vld [vmem:[%s1 + $0x17f8] sm:$0xff]
  %v892 = vld [vmem:[%s1 + $0x1800] sm:$0xff]
  %v893 = vld [vmem:[%s1 + $0x1808] sm:$0xf]
  %v894 = vld [vmem:[%s1 + $0x180c] sm:$0xff]
  %v895 = vld [vmem:[%s1 + $0x1814] sm:$0xff]
  %v896 = vld [vmem:[%s1 + $0x181c] sm:$0xff]
  %v897 = vld [vmem:[%s1 + $0x1824] sm:$0xff]
  %v898 = vld [vmem:[%s1 + $0x182c] sm:$0xf]
  %v899 = vld [vmem:[%s1 + $0x1830] sm:$0xff]
  %v900 = vld [vmem:[%s1 + $0x1838] sm:$0xff]
  %v901 = vld [vmem:[%s1 + $0x1840] sm:$0xff]
  %v902 = vld [vmem:[%s1 + $0x1848] sm:$0xff]
  %v903 = vld [vmem:[%s1 + $0x1850] sm:$0xf]
  %v904 = vld [vmem:[%s1 + $0x1854] sm:$0xff]
  %v905 = vld [vmem:[%s1 + $0x185c] sm:$0xff]
  %v906 = vld [vmem:[%s1 + $0x1864] sm:$0xff]
  %v907 = vld [vmem:[%s1 + $0x186c] sm:$0xff]
  %v908 = vld [vmem:[%s1 + $0x1874] sm:$0xf]
  %v909 = vld [vmem:[%s1 + $0x1878] sm:$0xff]
  %v910 = vld [vmem:[%s1 + $0x1880] sm:$0xff]
  %v911 = vld [vmem:[%s1 + $0x1888] sm:$0xff]
  %v912 = vld [vmem:[%s1 + $0x1890] sm:$0xff]
  %v913 = vld [vmem:[%s1 + $0x1898] sm:$0xf]
  %v914 = vld [vmem:[%s1 + $0x189c] sm:$0xff]
  %v915 = vld [vmem:[%s1 + $0x18a4] sm:$0xff]
  %v916 = vld [vmem:[%s1 + $0x18ac] sm:$0xff]
  %v917 = vld [vmem:[%s1 + $0x18b4] sm:$0xff]
  %v918 = vld [vmem:[%s1 + $0x18bc] sm:$0xf]
  %v919 = vld [vmem:[%s2] sm:$0xff]
  %v920 = vld [vmem:[%s2 + $0x8] sm:$0x1]
  %v923 = vperm.slane %v919, 0
  %v924 = vperm.slane %v919, 1
  %v925 = vperm.slane %v919, 2
  %v926 = vperm.slane %v919, 3
  %v927 = vperm.slane %v919, 4
  %v928 = vperm.slane %v919, 5
  %v929 = vperm.slane %v919, 6
  %v930 = vperm.slane %v919, 7
  %v931 = vperm.slane %v920, 0
  %v953 = vunpack.c.l.b16 %v27
  %v954 = vunpack.c.h.b16 %v27
  %v955 = vunpack.c.l.b16 %v28
  %v956 = vunpack.c.h.b16 %v28
  %v957 = vunpack.c.l.b16 %v29
  %v958 = vunpack.c.h.b16 %v29
  %v959 = vunpack.c.l.b16 %v30
  %v960 = vunpack.c.h.b16 %v30
  %v961 = vunpack.c.l.b16 %v31
  %v962 = vunpack.c.h.b16 %v31
  %v963 = vunpack.c.l.b16 %v32
  %v964 = vunpack.c.l.b16 %v33
  %v965 = vunpack.c.h.b16 %v33
  %v966 = vunpack.c.l.b16 %v34
  %v967 = vunpack.c.h.b16 %v34
  %v968 = vunpack.c.l.b16 %v35
  %v969 = vunpack.c.h.b16 %v35
  %v970 = vunpack.c.l.b16 %v36
  %v971 = vunpack.c.h.b16 %v36
  %v972 = vunpack.c.l.b16 %v37
  %v973 = vunpack.c.h.b16 %v37
  %v974 = vunpack.c.l.b16 %v38
  %v975 = vpack.c.b16 %v964, %v953
  %v976 = vpack.c.b16 %v965, %v954
  %v977 = vpack.c.b16 %v966, %v955
  %v978 = vpack.c.b16 %v967, %v956
  %v979 = vpack.c.b16 %v968, %v957
  %v980 = vpack.c.b16 %v969, %v958
  %v981 = vpack.c.b16 %v970, %v959
  %v982 = vpack.c.b16 %v971, %v960
  %v983 = vpack.c.b16 %v972, %v961
  %v984 = vpack.c.b16 %v973, %v962
  %v985 = vpack.c.b16 %v974, %v963
  %v1877 = vunpack.c.l.b16 %v39
  %v1878 = vunpack.c.h.b16 %v39
  %v1879 = vunpack.c.l.b16 %v40
  %v1880 = vunpack.c.h.b16 %v40
  %v1881 = vunpack.c.l.b16 %v41
  %v1882 = vunpack.c.h.b16 %v41
  %v1883 = vunpack.c.l.b16 %v42
  %v1884 = vunpack.c.h.b16 %v42
  %v1885 = vunpack.c.l.b16 %v43
  %v1886 = vunpack.c.l.b16 %v44
  %v1887 = vunpack.c.h.b16 %v44
  %v1888 = vunpack.c.l.b16 %v45
  %v1889 = vunpack.c.h.b16 %v45
  %v1890 = vunpack.c.l.b16 %v46
  %v1891 = vunpack.c.h.b16 %v46
  %v1892 = vunpack.c.l.b16 %v47
  %v1893 = vunpack.c.h.b16 %v47
  %v1894 = vunpack.c.l.b16 %v48
  %v1895 = vunpack.c.l.b16 %v49
  %v1896 = vunpack.c.h.b16 %v49
  %v1897 = vunpack.c.l.b16 %v50
  %v1898 = vunpack.c.h.b16 %v50
  %v1899 = vunpack.c.l.b16 %v51
  %v1900 = vunpack.c.h.b16 %v51
  %v1901 = vunpack.c.l.b16 %v52
  %v1902 = vunpack.c.h.b16 %v52
  %v1903 = vunpack.c.l.b16 %v53
  %v1904 = vunpack.c.l.b16 %v54
  %v1905 = vunpack.c.h.b16 %v54
  %v1906 = vunpack.c.l.b16 %v55
  %v1907 = vunpack.c.h.b16 %v55
  %v1908 = vunpack.c.l.b16 %v56
  %v1909 = vunpack.c.h.b16 %v56
  %v1910 = vunpack.c.l.b16 %v57
  %v1911 = vunpack.c.h.b16 %v57
  %v1912 = vunpack.c.l.b16 %v58
  %v1913 = vunpack.c.l.b16 %v59
  %v1914 = vunpack.c.h.b16 %v59
  %v1915 = vunpack.c.l.b16 %v60
  %v1916 = vunpack.c.h.b16 %v60
  %v1917 = vunpack.c.l.b16 %v61
  %v1918 = vunpack.c.h.b16 %v61
  %v1919 = vunpack.c.l.b16 %v62
  %v1920 = vunpack.c.h.b16 %v62
  %v1921 = vunpack.c.l.b16 %v63
  %v1922 = vunpack.c.l.b16 %v64
  %v1923 = vunpack.c.h.b16 %v64
  %v1924 = vunpack.c.l.b16 %v65
  %v1925 = vunpack.c.h.b16 %v65
  %v1926 = vunpack.c.l.b16 %v66
  %v1927 = vunpack.c.h.b16 %v66
  %v1928 = vunpack.c.l.b16 %v67
  %v1929 = vunpack.c.h.b16 %v67
  %v1930 = vunpack.c.l.b16 %v68
  %v1931 = vunpack.c.l.b16 %v69
  %v1932 = vunpack.c.h.b16 %v69
  %v1933 = vunpack.c.l.b16 %v70
  %v1934 = vunpack.c.h.b16 %v70
  %v1935 = vunpack.c.l.b16 %v71
  %v1936 = vunpack.c.h.b16 %v71
  %v1937 = vunpack.c.l.b16 %v72
  %v1938 = vunpack.c.h.b16 %v72
  %v1939 = vunpack.c.l.b16 %v73
  %v1940 = vunpack.c.l.b16 %v74
  %v1941 = vunpack.c.h.b16 %v74
  %v1942 = vunpack.c.l.b16 %v75
  %v1943 = vunpack.c.h.b16 %v75
  %v1944 = vunpack.c.l.b16 %v76
  %v1945 = vunpack.c.h.b16 %v76
  %v1946 = vunpack.c.l.b16 %v77
  %v1947 = vunpack.c.h.b16 %v77
  %v1948 = vunpack.c.l.b16 %v78
  %v1949 = vunpack.c.l.b16 %v79
  %v1950 = vunpack.c.h.b16 %v79
  %v1951 = vunpack.c.l.b16 %v80
  %v1952 = vunpack.c.h.b16 %v80
  %v1953 = vunpack.c.l.b16 %v81
  %v1954 = vunpack.c.h.b16 %v81
  %v1955 = vunpack.c.l.b16 %v82
  %v1956 = vunpack.c.h.b16 %v82
  %v1957 = vunpack.c.l.b16 %v83
  %v1958 = vunpack.c.l.b16 %v84
  %v1959 = vunpack.c.h.b16 %v84
  %v1960 = vunpack.c.l.b16 %v85
  %v1961 = vunpack.c.h.b16 %v85
  %v1962 = vunpack.c.l.b16 %v86
  %v1963 = vunpack.c.h.b16 %v86
  %v1964 = vunpack.c.l.b16 %v87
  %v1965 = vunpack.c.h.b16 %v87
  %v1966 = vunpack.c.l.b16 %v88
  %v1967 = vunpack.c.l.b16 %v89
  %v1968 = vunpack.c.h.b16 %v89
  %v1969 = vunpack.c.l.b16 %v90
  %v1970 = vunpack.c.h.b16 %v90
  %v1971 = vunpack.c.l.b16 %v91
  %v1972 = vunpack.c.h.b16 %v91
  %v1973 = vunpack.c.l.b16 %v92
  %v1974 = vunpack.c.h.b16 %v92
  %v1975 = vunpack.c.l.b16 %v93
  %v1976 = vunpack.c.l.b16 %v94
  %v1977 = vunpack.c.h.b16 %v94
  %v1978 = vunpack.c.l.b16 %v95
  %v1979 = vunpack.c.h.b16 %v95
  %v1980 = vunpack.c.l.b16 %v96
  %v1981 = vunpack.c.h.b16 %v96
  %v1982 = vunpack.c.l.b16 %v97
  %v1983 = vunpack.c.h.b16 %v97
  %v1984 = vunpack.c.l.b16 %v98
  %v1985 = vunpack.c.l.b16 %v99
  %v1986 = vunpack.c.h.b16 %v99
  %v1987 = vunpack.c.l.b16 %v100
  %v1988 = vunpack.c.h.b16 %v100
  %v1989 = vunpack.c.l.b16 %v101
  %v1990 = vunpack.c.h.b16 %v101
  %v1991 = vunpack.c.l.b16 %v102
  %v1992 = vunpack.c.h.b16 %v102
  %v1993 = vunpack.c.l.b16 %v103
  %v1994 = vunpack.c.l.b16 %v104
  %v1995 = vunpack.c.h.b16 %v104
  %v1996 = vunpack.c.l.b16 %v105
  %v1997 = vunpack.c.h.b16 %v105
  %v1998 = vunpack.c.l.b16 %v106
  %v1999 = vunpack.c.h.b16 %v106
  %v2000 = vunpack.c.l.b16 %v107
  %v2001 = vunpack.c.h.b16 %v107
  %v2002 = vunpack.c.l.b16 %v108
  %v2003 = vunpack.c.l.b16 %v109
  %v2004 = vunpack.c.h.b16 %v109
  %v2005 = vunpack.c.l.b16 %v110
  %v2006 = vunpack.c.h.b16 %v110
  %v2007 = vunpack.c.l.b16 %v111
  %v2008 = vunpack.c.h.b16 %v111
  %v2009 = vunpack.c.l.b16 %v112
  %v2010 = vunpack.c.h.b16 %v112
  %v2011 = vunpack.c.l.b16 %v113
  %v2012 = vunpack.c.l.b16 %v114
  %v2013 = vunpack.c.h.b16 %v114
  %v2014 = vunpack.c.l.b16 %v115
  %v2015 = vunpack.c.h.b16 %v115
  %v2016 = vunpack.c.l.b16 %v116
  %v2017 = vunpack.c.h.b16 %v116
  %v2018 = vunpack.c.l.b16 %v117
  %v2019 = vunpack.c.h.b16 %v117
  %v2020 = vunpack.c.l.b16 %v118
  %v2021 = vunpack.c.l.b16 %v119
  %v2022 = vunpack.c.h.b16 %v119
  %v2023 = vunpack.c.l.b16 %v120
  %v2024 = vunpack.c.h.b16 %v120
  %v2025 = vunpack.c.l.b16 %v121
  %v2026 = vunpack.c.h.b16 %v121
  %v2027 = vunpack.c.l.b16 %v122
  %v2028 = vunpack.c.h.b16 %v122
  %v2029 = vunpack.c.l.b16 %v123
  %v2030 = vunpack.c.l.b16 %v124
  %v2031 = vunpack.c.h.b16 %v124
  %v2032 = vunpack.c.l.b16 %v125
  %v2033 = vunpack.c.h.b16 %v125
  %v2034 = vunpack.c.l.b16 %v126
  %v2035 = vunpack.c.h.b16 %v126
  %v2036 = vunpack.c.l.b16 %v127
  %v2037 = vunpack.c.h.b16 %v127
  %v2038 = vunpack.c.l.b16 %v128
  %v2039 = vunpack.c.l.b16 %v129
  %v2040 = vunpack.c.h.b16 %v129
  %v2041 = vunpack.c.l.b16 %v130
  %v2042 = vunpack.c.h.b16 %v130
  %v2043 = vunpack.c.l.b16 %v131
  %v2044 = vunpack.c.h.b16 %v131
  %v2045 = vunpack.c.l.b16 %v132
  %v2046 = vunpack.c.h.b16 %v132
  %v2047 = vunpack.c.l.b16 %v133
  %v2048 = vunpack.c.l.b16 %v134
  %v2049 = vunpack.c.h.b16 %v134
  %v2050 = vunpack.c.l.b16 %v135
  %v2051 = vunpack.c.h.b16 %v135
  %v2052 = vunpack.c.l.b16 %v136
  %v2053 = vunpack.c.h.b16 %v136
  %v2054 = vunpack.c.l.b16 %v137
  %v2055 = vunpack.c.h.b16 %v137
  %v2056 = vunpack.c.l.b16 %v138
  %v2057 = vunpack.c.l.b16 %v139
  %v2058 = vunpack.c.h.b16 %v139
  %v2059 = vunpack.c.l.b16 %v140
  %v2060 = vunpack.c.h.b16 %v140
  %v2061 = vunpack.c.l.b16 %v141
  %v2062 = vunpack.c.h.b16 %v141
  %v2063 = vunpack.c.l.b16 %v142
  %v2064 = vunpack.c.h.b16 %v142
  %v2065 = vunpack.c.l.b16 %v143
  %v2066 = vunpack.c.l.b16 %v144
  %v2067 = vunpack.c.h.b16 %v144
  %v2068 = vunpack.c.l.b16 %v145
  %v2069 = vunpack.c.h.b16 %v145
  %v2070 = vunpack.c.l.b16 %v146
  %v2071 = vunpack.c.h.b16 %v146
  %v2072 = vunpack.c.l.b16 %v147
  %v2073 = vunpack.c.h.b16 %v147
  %v2074 = vunpack.c.l.b16 %v148
  %v2075 = vunpack.c.l.b16 %v149
  %v2076 = vunpack.c.h.b16 %v149
  %v2077 = vunpack.c.l.b16 %v150
  %v2078 = vunpack.c.h.b16 %v150
  %v2079 = vunpack.c.l.b16 %v151
  %v2080 = vunpack.c.h.b16 %v151
  %v2081 = vunpack.c.l.b16 %v152
  %v2082 = vunpack.c.h.b16 %v152
  %v2083 = vunpack.c.l.b16 %v153
  %v2084 = vunpack.c.l.b16 %v154
  %v2085 = vunpack.c.h.b16 %v154
  %v2086 = vunpack.c.l.b16 %v155
  %v2087 = vunpack.c.h.b16 %v155
  %v2088 = vunpack.c.l.b16 %v156
  %v2089 = vunpack.c.h.b16 %v156
  %v2090 = vunpack.c.l.b16 %v157
  %v2091 = vunpack.c.h.b16 %v157
  %v2092 = vunpack.c.l.b16 %v158
  %v2093 = vunpack.c.l.b16 %v159
  %v2094 = vunpack.c.h.b16 %v159
  %v2095 = vunpack.c.l.b16 %v160
  %v2096 = vunpack.c.h.b16 %v160
  %v2097 = vunpack.c.l.b16 %v161
  %v2098 = vunpack.c.h.b16 %v161
  %v2099 = vunpack.c.l.b16 %v162
  %v2100 = vunpack.c.h.b16 %v162
  %v2101 = vunpack.c.l.b16 %v163
  %v2102 = vunpack.c.l.b16 %v164
  %v2103 = vunpack.c.h.b16 %v164
  %v2104 = vunpack.c.l.b16 %v165
  %v2105 = vunpack.c.h.b16 %v165
  %v2106 = vunpack.c.l.b16 %v166
  %v2107 = vunpack.c.h.b16 %v166
  %v2108 = vunpack.c.l.b16 %v167
  %v2109 = vunpack.c.h.b16 %v167
  %v2110 = vunpack.c.l.b16 %v168
  %v2111 = vunpack.c.l.b16 %v169
  %v2112 = vunpack.c.h.b16 %v169
  %v2113 = vunpack.c.l.b16 %v170
  %v2114 = vunpack.c.h.b16 %v170
  %v2115 = vunpack.c.l.b16 %v171
  %v2116 = vunpack.c.h.b16 %v171
  %v2117 = vunpack.c.l.b16 %v172
  %v2118 = vunpack.c.h.b16 %v172
  %v2119 = vunpack.c.l.b16 %v173
  %v2120 = vunpack.c.l.b16 %v174
  %v2121 = vunpack.c.h.b16 %v174
  %v2122 = vunpack.c.l.b16 %v175
  %v2123 = vunpack.c.h.b16 %v175
  %v2124 = vunpack.c.l.b16 %v176
  %v2125 = vunpack.c.h.b16 %v176
  %v2126 = vunpack.c.l.b16 %v177
  %v2127 = vunpack.c.h.b16 %v177
  %v2128 = vunpack.c.l.b16 %v178
  %v2129 = vunpack.c.l.b16 %v179
  %v2130 = vunpack.c.h.b16 %v179
  %v2131 = vunpack.c.l.b16 %v180
  %v2132 = vunpack.c.h.b16 %v180
  %v2133 = vunpack.c.l.b16 %v181
  %v2134 = vunpack.c.h.b16 %v181
  %v2135 = vunpack.c.l.b16 %v182
  %v2136 = vunpack.c.h.b16 %v182
  %v2137 = vunpack.c.l.b16 %v183
  %v2138 = vunpack.c.l.b16 %v184
  %v2139 = vunpack.c.h.b16 %v184
  %v2140 = vunpack.c.l.b16 %v185
  %v2141 = vunpack.c.h.b16 %v185
  %v2142 = vunpack.c.l.b16 %v186
  %v2143 = vunpack.c.h.b16 %v186
  %v2144 = vunpack.c.l.b16 %v187
  %v2145 = vunpack.c.h.b16 %v187
  %v2146 = vunpack.c.l.b16 %v188
  %v2147 = vunpack.c.l.b16 %v189
  %v2148 = vunpack.c.h.b16 %v189
  %v2149 = vunpack.c.l.b16 %v190
  %v2150 = vunpack.c.h.b16 %v190
  %v2151 = vunpack.c.l.b16 %v191
  %v2152 = vunpack.c.h.b16 %v191
  %v2153 = vunpack.c.l.b16 %v192
  %v2154 = vunpack.c.h.b16 %v192
  %v2155 = vunpack.c.l.b16 %v193
  %v2156 = vunpack.c.l.b16 %v194
  %v2157 = vunpack.c.h.b16 %v194
  %v2158 = vunpack.c.l.b16 %v195
  %v2159 = vunpack.c.h.b16 %v195
  %v2160 = vunpack.c.l.b16 %v196
  %v2161 = vunpack.c.h.b16 %v196
  %v2162 = vunpack.c.l.b16 %v197
  %v2163 = vunpack.c.h.b16 %v197
  %v2164 = vunpack.c.l.b16 %v198
  %v2165 = vunpack.c.l.b16 %v199
  %v2166 = vunpack.c.h.b16 %v199
  %v2167 = vunpack.c.l.b16 %v200
  %v2168 = vunpack.c.h.b16 %v200
  %v2169 = vunpack.c.l.b16 %v201
  %v2170 = vunpack.c.h.b16 %v201
  %v2171 = vunpack.c.l.b16 %v202
  %v2172 = vunpack.c.h.b16 %v202
  %v2173 = vunpack.c.l.b16 %v203
  %v2174 = vunpack.c.l.b16 %v204
  %v2175 = vunpack.c.h.b16 %v204
  %v2176 = vunpack.c.l.b16 %v205
  %v2177 = vunpack.c.h.b16 %v205
  %v2178 = vunpack.c.l.b16 %v206
  %v2179 = vunpack.c.h.b16 %v206
  %v2180 = vunpack.c.l.b16 %v207
  %v2181 = vunpack.c.h.b16 %v207
  %v2182 = vunpack.c.l.b16 %v208
  %v2183 = vunpack.c.l.b16 %v209
  %v2184 = vunpack.c.h.b16 %v209
  %v2185 = vunpack.c.l.b16 %v210
  %v2186 = vunpack.c.h.b16 %v210
  %v2187 = vunpack.c.l.b16 %v211
  %v2188 = vunpack.c.h.b16 %v211
  %v2189 = vunpack.c.l.b16 %v212
  %v2190 = vunpack.c.h.b16 %v212
  %v2191 = vunpack.c.l.b16 %v213
  %v2192 = vunpack.c.l.b16 %v214
  %v2193 = vunpack.c.h.b16 %v214
  %v2194 = vunpack.c.l.b16 %v215
  %v2195 = vunpack.c.h.b16 %v215
  %v2196 = vunpack.c.l.b16 %v216
  %v2197 = vunpack.c.h.b16 %v216
  %v2198 = vunpack.c.l.b16 %v217
  %v2199 = vunpack.c.h.b16 %v217
  %v2200 = vunpack.c.l.b16 %v218
  %v2201 = vunpack.c.l.b16 %v219
  %v2202 = vunpack.c.h.b16 %v219
  %v2203 = vunpack.c.l.b16 %v220
  %v2204 = vunpack.c.h.b16 %v220
  %v2205 = vunpack.c.l.b16 %v221
  %v2206 = vunpack.c.h.b16 %v221
  %v2207 = vunpack.c.l.b16 %v222
  %v2208 = vunpack.c.h.b16 %v222
  %v2209 = vunpack.c.l.b16 %v223
  %v2210 = vunpack.c.l.b16 %v224
  %v2211 = vunpack.c.h.b16 %v224
  %v2212 = vunpack.c.l.b16 %v225
  %v2213 = vunpack.c.h.b16 %v225
  %v2214 = vunpack.c.l.b16 %v226
  %v2215 = vunpack.c.h.b16 %v226
  %v2216 = vunpack.c.l.b16 %v227
  %v2217 = vunpack.c.h.b16 %v227
  %v2218 = vunpack.c.l.b16 %v228
  %v2219 = vunpack.c.l.b16 %v229
  %v2220 = vunpack.c.h.b16 %v229
  %v2221 = vunpack.c.l.b16 %v230
  %v2222 = vunpack.c.h.b16 %v230
  %v2223 = vunpack.c.l.b16 %v231
  %v2224 = vunpack.c.h.b16 %v231
  %v2225 = vunpack.c.l.b16 %v232
  %v2226 = vunpack.c.h.b16 %v232
  %v2227 = vunpack.c.l.b16 %v233
  %v2228 = vunpack.c.l.b16 %v234
  %v2229 = vunpack.c.h.b16 %v234
  %v2230 = vunpack.c.l.b16 %v235
  %v2231 = vunpack.c.h.b16 %v235
  %v2232 = vunpack.c.l.b16 %v236
  %v2233 = vunpack.c.h.b16 %v236
  %v2234 = vunpack.c.l.b16 %v237
  %v2235 = vunpack.c.h.b16 %v237
  %v2236 = vunpack.c.l.b16 %v238
  %v2237 = vunpack.c.l.b16 %v239
  %v2238 = vunpack.c.h.b16 %v239
  %v2239 = vunpack.c.l.b16 %v240
  %v2240 = vunpack.c.h.b16 %v240
  %v2241 = vunpack.c.l.b16 %v241
  %v2242 = vunpack.c.h.b16 %v241
  %v2243 = vunpack.c.l.b16 %v242
  %v2244 = vunpack.c.h.b16 %v242
  %v2245 = vunpack.c.l.b16 %v243
  %v2246 = vunpack.c.l.b16 %v244
  %v2247 = vunpack.c.h.b16 %v244
  %v2248 = vunpack.c.l.b16 %v245
  %v2249 = vunpack.c.h.b16 %v245
  %v2250 = vunpack.c.l.b16 %v246
  %v2251 = vunpack.c.h.b16 %v246
  %v2252 = vunpack.c.l.b16 %v247
  %v2253 = vunpack.c.h.b16 %v247
  %v2254 = vunpack.c.l.b16 %v248
  %v2255 = vunpack.c.l.b16 %v249
  %v2256 = vunpack.c.h.b16 %v249
  %v2257 = vunpack.c.l.b16 %v250
  %v2258 = vunpack.c.h.b16 %v250
  %v2259 = vunpack.c.l.b16 %v251
  %v2260 = vunpack.c.h.b16 %v251
  %v2261 = vunpack.c.l.b16 %v252
  %v2262 = vunpack.c.h.b16 %v252
  %v2263 = vunpack.c.l.b16 %v253
  %v2264 = vunpack.c.l.b16 %v254
  %v2265 = vunpack.c.h.b16 %v254
  %v2266 = vunpack.c.l.b16 %v255
  %v2267 = vunpack.c.h.b16 %v255
  %v2268 = vunpack.c.l.b16 %v256
  %v2269 = vunpack.c.h.b16 %v256
  %v2270 = vunpack.c.l.b16 %v257
  %v2271 = vunpack.c.h.b16 %v257
  %v2272 = vunpack.c.l.b16 %v258
  %v2273 = vunpack.c.l.b16 %v259
  %v2274 = vunpack.c.h.b16 %v259
  %v2275 = vunpack.c.l.b16 %v260
  %v2276 = vunpack.c.h.b16 %v260
  %v2277 = vunpack.c.l.b16 %v261
  %v2278 = vunpack.c.h.b16 %v261
  %v2279 = vunpack.c.l.b16 %v262
  %v2280 = vunpack.c.h.b16 %v262
  %v2281 = vunpack.c.l.b16 %v263
  %v2282 = vunpack.c.l.b16 %v264
  %v2283 = vunpack.c.h.b16 %v264
  %v2284 = vunpack.c.l.b16 %v265
  %v2285 = vunpack.c.h.b16 %v265
  %v2286 = vunpack.c.l.b16 %v266
  %v2287 = vunpack.c.h.b16 %v266
  %v2288 = vunpack.c.l.b16 %v267
  %v2289 = vunpack.c.h.b16 %v267
  %v2290 = vunpack.c.l.b16 %v268
  %v2291 = vunpack.c.l.b16 %v269
  %v2292 = vunpack.c.h.b16 %v269
  %v2293 = vunpack.c.l.b16 %v270
  %v2294 = vunpack.c.h.b16 %v270
  %v2295 = vunpack.c.l.b16 %v271
  %v2296 = vunpack.c.h.b16 %v271
  %v2297 = vunpack.c.l.b16 %v272
  %v2298 = vunpack.c.h.b16 %v272
  %v2299 = vunpack.c.l.b16 %v273
  %v2300 = vunpack.c.l.b16 %v274
  %v2301 = vunpack.c.h.b16 %v274
  %v2302 = vunpack.c.l.b16 %v275
  %v2303 = vunpack.c.h.b16 %v275
  %v2304 = vunpack.c.l.b16 %v276
  %v2305 = vunpack.c.h.b16 %v276
  %v2306 = vunpack.c.l.b16 %v277
  %v2307 = vunpack.c.h.b16 %v277
  %v2308 = vunpack.c.l.b16 %v278
  %v2309 = vunpack.c.l.b16 %v279
  %v2310 = vunpack.c.h.b16 %v279
  %v2311 = vunpack.c.l.b16 %v280
  %v2312 = vunpack.c.h.b16 %v280
  %v2313 = vunpack.c.l.b16 %v281
  %v2314 = vunpack.c.h.b16 %v281
  %v2315 = vunpack.c.l.b16 %v282
  %v2316 = vunpack.c.h.b16 %v282
  %v2317 = vunpack.c.l.b16 %v283
  %v2318 = vunpack.c.l.b16 %v284
  %v2319 = vunpack.c.h.b16 %v284
  %v2320 = vunpack.c.l.b16 %v285
  %v2321 = vunpack.c.h.b16 %v285
  %v2322 = vunpack.c.l.b16 %v286
  %v2323 = vunpack.c.h.b16 %v286
  %v2324 = vunpack.c.l.b16 %v287
  %v2325 = vunpack.c.h.b16 %v287
  %v2326 = vunpack.c.l.b16 %v288
  %v2327 = vunpack.c.l.b16 %v289
  %v2328 = vunpack.c.h.b16 %v289
  %v2329 = vunpack.c.l.b16 %v290
  %v2330 = vunpack.c.h.b16 %v290
  %v2331 = vunpack.c.l.b16 %v291
  %v2332 = vunpack.c.h.b16 %v291
  %v2333 = vunpack.c.l.b16 %v292
  %v2334 = vunpack.c.h.b16 %v292
  %v2335 = vunpack.c.l.b16 %v293
  %v2336 = vunpack.c.l.b16 %v294
  %v2337 = vunpack.c.h.b16 %v294
  %v2338 = vunpack.c.l.b16 %v295
  %v2339 = vunpack.c.h.b16 %v295
  %v2340 = vunpack.c.l.b16 %v296
  %v2341 = vunpack.c.h.b16 %v296
  %v2342 = vunpack.c.l.b16 %v297
  %v2343 = vunpack.c.h.b16 %v297
  %v2344 = vunpack.c.l.b16 %v298
  %v2345 = vunpack.c.l.b16 %v299
  %v2346 = vunpack.c.h.b16 %v299
  %v2347 = vunpack.c.l.b16 %v300
  %v2348 = vunpack.c.h.b16 %v300
  %v2349 = vunpack.c.l.b16 %v301
  %v2350 = vunpack.c.h.b16 %v301
  %v2351 = vunpack.c.l.b16 %v302
  %v2352 = vunpack.c.h.b16 %v302
  %v2353 = vunpack.c.l.b16 %v303
  %v2354 = vunpack.c.l.b16 %v304
  %v2355 = vunpack.c.h.b16 %v304
  %v2356 = vunpack.c.l.b16 %v305
  %v2357 = vunpack.c.h.b16 %v305
  %v2358 = vunpack.c.l.b16 %v306
  %v2359 = vunpack.c.h.b16 %v306
  %v2360 = vunpack.c.l.b16 %v307
  %v2361 = vunpack.c.h.b16 %v307
  %v2362 = vunpack.c.l.b16 %v308
  %v2363 = vunpack.c.l.b16 %v309
  %v2364 = vunpack.c.h.b16 %v309
  %v2365 = vunpack.c.l.b16 %v310
  %v2366 = vunpack.c.h.b16 %v310
  %v2367 = vunpack.c.l.b16 %v311
  %v2368 = vunpack.c.h.b16 %v311
  %v2369 = vunpack.c.l.b16 %v312
  %v2370 = vunpack.c.h.b16 %v312
  %v2371 = vunpack.c.l.b16 %v313
  %v2372 = vunpack.c.l.b16 %v314
  %v2373 = vunpack.c.h.b16 %v314
  %v2374 = vunpack.c.l.b16 %v315
  %v2375 = vunpack.c.h.b16 %v315
  %v2376 = vunpack.c.l.b16 %v316
  %v2377 = vunpack.c.h.b16 %v316
  %v2378 = vunpack.c.l.b16 %v317
  %v2379 = vunpack.c.h.b16 %v317
  %v2380 = vunpack.c.l.b16 %v318
  %v2381 = vunpack.c.l.b16 %v319
  %v2382 = vunpack.c.h.b16 %v319
  %v2383 = vunpack.c.l.b16 %v320
  %v2384 = vunpack.c.h.b16 %v320
  %v2385 = vunpack.c.l.b16 %v321
  %v2386 = vunpack.c.h.b16 %v321
  %v2387 = vunpack.c.l.b16 %v322
  %v2388 = vunpack.c.h.b16 %v322
  %v2389 = vunpack.c.l.b16 %v323
  %v2390 = vunpack.c.l.b16 %v324
  %v2391 = vunpack.c.h.b16 %v324
  %v2392 = vunpack.c.l.b16 %v325
  %v2393 = vunpack.c.h.b16 %v325
  %v2394 = vunpack.c.l.b16 %v326
  %v2395 = vunpack.c.h.b16 %v326
  %v2396 = vunpack.c.l.b16 %v327
  %v2397 = vunpack.c.h.b16 %v327
  %v2398 = vunpack.c.l.b16 %v328
  %v2399 = vunpack.c.l.b16 %v329
  %v2400 = vunpack.c.h.b16 %v329
  %v2401 = vunpack.c.l.b16 %v330
  %v2402 = vunpack.c.h.b16 %v330
  %v2403 = vunpack.c.l.b16 %v331
  %v2404 = vunpack.c.h.b16 %v331
  %v2405 = vunpack.c.l.b16 %v332
  %v2406 = vunpack.c.h.b16 %v332
  %v2407 = vunpack.c.l.b16 %v333
  %v2408 = vunpack.c.l.b16 %v334
  %v2409 = vunpack.c.h.b16 %v334
  %v2410 = vunpack.c.l.b16 %v335
  %v2411 = vunpack.c.h.b16 %v335
  %v2412 = vunpack.c.l.b16 %v336
  %v2413 = vunpack.c.h.b16 %v336
  %v2414 = vunpack.c.l.b16 %v337
  %v2415 = vunpack.c.h.b16 %v337
  %v2416 = vunpack.c.l.b16 %v338
  %v2417 = vunpack.c.l.b16 %v339
  %v2418 = vunpack.c.h.b16 %v339
  %v2419 = vunpack.c.l.b16 %v340
  %v2420 = vunpack.c.h.b16 %v340
  %v2421 = vunpack.c.l.b16 %v341
  %v2422 = vunpack.c.h.b16 %v341
  %v2423 = vunpack.c.l.b16 %v342
  %v2424 = vunpack.c.h.b16 %v342
  %v2425 = vunpack.c.l.b16 %v343
  %v2426 = vunpack.c.l.b16 %v344
  %v2427 = vunpack.c.h.b16 %v344
  %v2428 = vunpack.c.l.b16 %v345
  %v2429 = vunpack.c.h.b16 %v345
  %v2430 = vunpack.c.l.b16 %v346
  %v2431 = vunpack.c.h.b16 %v346
  %v2432 = vunpack.c.l.b16 %v347
  %v2433 = vunpack.c.h.b16 %v347
  %v2434 = vunpack.c.l.b16 %v348
  %v2435 = vunpack.c.l.b16 %v349
  %v2436 = vunpack.c.h.b16 %v349
  %v2437 = vunpack.c.l.b16 %v350
  %v2438 = vunpack.c.h.b16 %v350
  %v2439 = vunpack.c.l.b16 %v351
  %v2440 = vunpack.c.h.b16 %v351
  %v2441 = vunpack.c.l.b16 %v352
  %v2442 = vunpack.c.h.b16 %v352
  %v2443 = vunpack.c.l.b16 %v353
  %v2444 = vunpack.c.l.b16 %v354
  %v2445 = vunpack.c.h.b16 %v354
  %v2446 = vunpack.c.l.b16 %v355
  %v2447 = vunpack.c.h.b16 %v355
  %v2448 = vunpack.c.l.b16 %v356
  %v2449 = vunpack.c.h.b16 %v356
  %v2450 = vunpack.c.l.b16 %v357
  %v2451 = vunpack.c.h.b16 %v357
  %v2452 = vunpack.c.l.b16 %v358
  %v2453 = vunpack.c.l.b16 %v359
  %v2454 = vunpack.c.h.b16 %v359
  %v2455 = vunpack.c.l.b16 %v360
  %v2456 = vunpack.c.h.b16 %v360
  %v2457 = vunpack.c.l.b16 %v361
  %v2458 = vunpack.c.h.b16 %v361
  %v2459 = vunpack.c.l.b16 %v362
  %v2460 = vunpack.c.h.b16 %v362
  %v2461 = vunpack.c.l.b16 %v363
  %v2462 = vunpack.c.l.b16 %v364
  %v2463 = vunpack.c.h.b16 %v364
  %v2464 = vunpack.c.l.b16 %v365
  %v2465 = vunpack.c.h.b16 %v365
  %v2466 = vunpack.c.l.b16 %v366
  %v2467 = vunpack.c.h.b16 %v366
  %v2468 = vunpack.c.l.b16 %v367
  %v2469 = vunpack.c.h.b16 %v367
  %v2470 = vunpack.c.l.b16 %v368
  %v2471 = vunpack.c.l.b16 %v369
  %v2472 = vunpack.c.h.b16 %v369
  %v2473 = vunpack.c.l.b16 %v370
  %v2474 = vunpack.c.h.b16 %v370
  %v2475 = vunpack.c.l.b16 %v371
  %v2476 = vunpack.c.h.b16 %v371
  %v2477 = vunpack.c.l.b16 %v372
  %v2478 = vunpack.c.h.b16 %v372
  %v2479 = vunpack.c.l.b16 %v373
  %v2480 = vunpack.c.l.b16 %v374
  %v2481 = vunpack.c.h.b16 %v374
  %v2482 = vunpack.c.l.b16 %v375
  %v2483 = vunpack.c.h.b16 %v375
  %v2484 = vunpack.c.l.b16 %v376
  %v2485 = vunpack.c.h.b16 %v376
  %v2486 = vunpack.c.l.b16 %v377
  %v2487 = vunpack.c.h.b16 %v377
  %v2488 = vunpack.c.l.b16 %v378
  %v2489 = vunpack.c.l.b16 %v379
  %v2490 = vunpack.c.h.b16 %v379
  %v2491 = vunpack.c.l.b16 %v380
  %v2492 = vunpack.c.h.b16 %v380
  %v2493 = vunpack.c.l.b16 %v381
  %v2494 = vunpack.c.h.b16 %v381
  %v2495 = vunpack.c.l.b16 %v382
  %v2496 = vunpack.c.h.b16 %v382
  %v2497 = vunpack.c.l.b16 %v383
  %v2498 = vunpack.c.l.b16 %v384
  %v2499 = vunpack.c.h.b16 %v384
  %v2500 = vunpack.c.l.b16 %v385
  %v2501 = vunpack.c.h.b16 %v385
  %v2502 = vunpack.c.l.b16 %v386
  %v2503 = vunpack.c.h.b16 %v386
  %v2504 = vunpack.c.l.b16 %v387
  %v2505 = vunpack.c.h.b16 %v387
  %v2506 = vunpack.c.l.b16 %v388
  %v2507 = vunpack.c.l.b16 %v389
  %v2508 = vunpack.c.h.b16 %v389
  %v2509 = vunpack.c.l.b16 %v390
  %v2510 = vunpack.c.h.b16 %v390
  %v2511 = vunpack.c.l.b16 %v391
  %v2512 = vunpack.c.h.b16 %v391
  %v2513 = vunpack.c.l.b16 %v392
  %v2514 = vunpack.c.h.b16 %v392
  %v2515 = vunpack.c.l.b16 %v393
  %v2516 = vunpack.c.l.b16 %v394
  %v2517 = vunpack.c.h.b16 %v394
  %v2518 = vunpack.c.l.b16 %v395
  %v2519 = vunpack.c.h.b16 %v395
  %v2520 = vunpack.c.l.b16 %v396
  %v2521 = vunpack.c.h.b16 %v396
  %v2522 = vunpack.c.l.b16 %v397
  %v2523 = vunpack.c.h.b16 %v397
  %v2524 = vunpack.c.l.b16 %v398
  %v2525 = vunpack.c.l.b16 %v399
  %v2526 = vunpack.c.h.b16 %v399
  %v2527 = vunpack.c.l.b16 %v400
  %v2528 = vunpack.c.h.b16 %v400
  %v2529 = vunpack.c.l.b16 %v401
  %v2530 = vunpack.c.h.b16 %v401
  %v2531 = vunpack.c.l.b16 %v402
  %v2532 = vunpack.c.h.b16 %v402
  %v2533 = vunpack.c.l.b16 %v403
  %v2534 = vunpack.c.l.b16 %v404
  %v2535 = vunpack.c.h.b16 %v404
  %v2536 = vunpack.c.l.b16 %v405
  %v2537 = vunpack.c.h.b16 %v405
  %v2538 = vunpack.c.l.b16 %v406
  %v2539 = vunpack.c.h.b16 %v406
  %v2540 = vunpack.c.l.b16 %v407
  %v2541 = vunpack.c.h.b16 %v407
  %v2542 = vunpack.c.l.b16 %v408
  %v2543 = vunpack.c.l.b16 %v409
  %v2544 = vunpack.c.h.b16 %v409
  %v2545 = vunpack.c.l.b16 %v410
  %v2546 = vunpack.c.h.b16 %v410
  %v2547 = vunpack.c.l.b16 %v411
  %v2548 = vunpack.c.h.b16 %v411
  %v2549 = vunpack.c.l.b16 %v412
  %v2550 = vunpack.c.h.b16 %v412
  %v2551 = vunpack.c.l.b16 %v413
  %v2552 = vunpack.c.l.b16 %v414
  %v2553 = vunpack.c.h.b16 %v414
  %v2554 = vunpack.c.l.b16 %v415
  %v2555 = vunpack.c.h.b16 %v415
  %v2556 = vunpack.c.l.b16 %v416
  %v2557 = vunpack.c.h.b16 %v416
  %v2558 = vunpack.c.l.b16 %v417
  %v2559 = vunpack.c.h.b16 %v417
  %v2560 = vunpack.c.l.b16 %v418
  %v2561 = vunpack.c.l.b16 %v419
  %v2562 = vunpack.c.h.b16 %v419
  %v2563 = vunpack.c.l.b16 %v420
  %v2564 = vunpack.c.h.b16 %v420
  %v2565 = vunpack.c.l.b16 %v421
  %v2566 = vunpack.c.h.b16 %v421
  %v2567 = vunpack.c.l.b16 %v422
  %v2568 = vunpack.c.h.b16 %v422
  %v2569 = vunpack.c.l.b16 %v423
  %v2570 = vunpack.c.l.b16 %v424
  %v2571 = vunpack.c.h.b16 %v424
  %v2572 = vunpack.c.l.b16 %v425
  %v2573 = vunpack.c.h.b16 %v425
  %v2574 = vunpack.c.l.b16 %v426
  %v2575 = vunpack.c.h.b16 %v426
  %v2576 = vunpack.c.l.b16 %v427
  %v2577 = vunpack.c.h.b16 %v427
  %v2578 = vunpack.c.l.b16 %v428
  %v2579 = vunpack.c.l.b16 %v429
  %v2580 = vunpack.c.h.b16 %v429
  %v2581 = vunpack.c.l.b16 %v430
  %v2582 = vunpack.c.h.b16 %v430
  %v2583 = vunpack.c.l.b16 %v431
  %v2584 = vunpack.c.h.b16 %v431
  %v2585 = vunpack.c.l.b16 %v432
  %v2586 = vunpack.c.h.b16 %v432
  %v2587 = vunpack.c.l.b16 %v433
  %v2588 = vunpack.c.l.b16 %v434
  %v2589 = vunpack.c.h.b16 %v434
  %v2590 = vunpack.c.l.b16 %v435
  %v2591 = vunpack.c.h.b16 %v435
  %v2592 = vunpack.c.l.b16 %v436
  %v2593 = vunpack.c.h.b16 %v436
  %v2594 = vunpack.c.l.b16 %v437
  %v2595 = vunpack.c.h.b16 %v437
  %v2596 = vunpack.c.l.b16 %v438
  %v2597 = vunpack.c.l.b16 %v439
  %v2598 = vunpack.c.h.b16 %v439
  %v2599 = vunpack.c.l.b16 %v440
  %v2600 = vunpack.c.h.b16 %v440
  %v2601 = vunpack.c.l.b16 %v441
  %v2602 = vunpack.c.h.b16 %v441
  %v2603 = vunpack.c.l.b16 %v442
  %v2604 = vunpack.c.h.b16 %v442
  %v2605 = vunpack.c.l.b16 %v443
  %v2606 = vunpack.c.l.b16 %v444
  %v2607 = vunpack.c.h.b16 %v444
  %v2608 = vunpack.c.l.b16 %v445
  %v2609 = vunpack.c.h.b16 %v445
  %v2610 = vunpack.c.l.b16 %v446
  %v2611 = vunpack.c.h.b16 %v446
  %v2612 = vunpack.c.l.b16 %v447
  %v2613 = vunpack.c.h.b16 %v447
  %v2614 = vunpack.c.l.b16 %v448
  %v2615 = vunpack.c.l.b16 %v449
  %v2616 = vunpack.c.h.b16 %v449
  %v2617 = vunpack.c.l.b16 %v450
  %v2618 = vunpack.c.h.b16 %v450
  %v2619 = vunpack.c.l.b16 %v451
  %v2620 = vunpack.c.h.b16 %v451
  %v2621 = vunpack.c.l.b16 %v452
  %v2622 = vunpack.c.h.b16 %v452
  %v2623 = vunpack.c.l.b16 %v453
  %v2624 = vunpack.c.l.b16 %v454
  %v2625 = vunpack.c.h.b16 %v454
  %v2626 = vunpack.c.l.b16 %v455
  %v2627 = vunpack.c.h.b16 %v455
  %v2628 = vunpack.c.l.b16 %v456
  %v2629 = vunpack.c.h.b16 %v456
  %v2630 = vunpack.c.l.b16 %v457
  %v2631 = vunpack.c.h.b16 %v457
  %v2632 = vunpack.c.l.b16 %v458
  %v2633 = vunpack.c.l.b16 %v459
  %v2634 = vunpack.c.h.b16 %v459
  %v2635 = vunpack.c.l.b16 %v460
  %v2636 = vunpack.c.h.b16 %v460
  %v2637 = vunpack.c.l.b16 %v461
  %v2638 = vunpack.c.h.b16 %v461
  %v2639 = vunpack.c.l.b16 %v462
  %v2640 = vunpack.c.h.b16 %v462
  %v2641 = vunpack.c.l.b16 %v463
  %v2642 = vunpack.c.l.b16 %v464
  %v2643 = vunpack.c.h.b16 %v464
  %v2644 = vunpack.c.l.b16 %v465
  %v2645 = vunpack.c.h.b16 %v465
  %v2646 = vunpack.c.l.b16 %v466
  %v2647 = vunpack.c.h.b16 %v466
  %v2648 = vunpack.c.l.b16 %v467
  %v2649 = vunpack.c.h.b16 %v467
  %v2650 = vunpack.c.l.b16 %v468
  %v2651 = vunpack.c.l.b16 %v469
  %v2652 = vunpack.c.h.b16 %v469
  %v2653 = vunpack.c.l.b16 %v470
  %v2654 = vunpack.c.h.b16 %v470
  %v2655 = vunpack.c.l.b16 %v471
  %v2656 = vunpack.c.h.b16 %v471
  %v2657 = vunpack.c.l.b16 %v472
  %v2658 = vunpack.c.h.b16 %v472
  %v2659 = vunpack.c.l.b16 %v473
  %v2660 = vunpack.c.l.b16 %v474
  %v2661 = vunpack.c.h.b16 %v474
  %v2662 = vunpack.c.l.b16 %v475
  %v2663 = vunpack.c.h.b16 %v475
  %v2664 = vunpack.c.l.b16 %v476
  %v2665 = vunpack.c.h.b16 %v476
  %v2666 = vunpack.c.l.b16 %v477
  %v2667 = vunpack.c.h.b16 %v477
  %v2668 = vunpack.c.l.b16 %v478
  %v2669 = vunpack.c.l.b16 %v479
  %v2670 = vunpack.c.h.b16 %v479
  %v2671 = vunpack.c.l.b16 %v480
  %v2672 = vunpack.c.h.b16 %v480
  %v2673 = vunpack.c.l.b16 %v481
  %v2674 = vunpack.c.h.b16 %v481
  %v2675 = vunpack.c.l.b16 %v482
  %v2676 = vunpack.c.h.b16 %v482
  %v2677 = vunpack.c.l.b16 %v483
  %v2678 = vunpack.c.l.b16 %v484
  %v2679 = vunpack.c.h.b16 %v484
  %v2680 = vunpack.c.l.b16 %v485
  %v2681 = vunpack.c.h.b16 %v485
  %v2682 = vunpack.c.l.b16 %v486
  %v2683 = vunpack.c.h.b16 %v486
  %v2684 = vunpack.c.l.b16 %v487
  %v2685 = vunpack.c.h.b16 %v487
  %v2686 = vunpack.c.l.b16 %v488
  %v2687 = vunpack.c.l.b16 %v489
  %v2688 = vunpack.c.h.b16 %v489
  %v2689 = vunpack.c.l.b16 %v490
  %v2690 = vunpack.c.h.b16 %v490
  %v2691 = vunpack.c.l.b16 %v491
  %v2692 = vunpack.c.h.b16 %v491
  %v2693 = vunpack.c.l.b16 %v492
  %v2694 = vunpack.c.h.b16 %v492
  %v2695 = vunpack.c.l.b16 %v493
  %v2696 = vunpack.c.l.b16 %v494
  %v2697 = vunpack.c.h.b16 %v494
  %v2698 = vunpack.c.l.b16 %v495
  %v2699 = vunpack.c.h.b16 %v495
  %v2700 = vunpack.c.l.b16 %v496
  %v2701 = vunpack.c.h.b16 %v496
  %v2702 = vunpack.c.l.b16 %v497
  %v2703 = vunpack.c.h.b16 %v497
  %v2704 = vunpack.c.l.b16 %v498
  %v2705 = vunpack.c.l.b16 %v499
  %v2706 = vunpack.c.h.b16 %v499
  %v2707 = vunpack.c.l.b16 %v500
  %v2708 = vunpack.c.h.b16 %v500
  %v2709 = vunpack.c.l.b16 %v501
  %v2710 = vunpack.c.h.b16 %v501
  %v2711 = vunpack.c.l.b16 %v502
  %v2712 = vunpack.c.h.b16 %v502
  %v2713 = vunpack.c.l.b16 %v503
  %v2714 = vunpack.c.l.b16 %v504
  %v2715 = vunpack.c.h.b16 %v504
  %v2716 = vunpack.c.l.b16 %v505
  %v2717 = vunpack.c.h.b16 %v505
  %v2718 = vunpack.c.l.b16 %v506
  %v2719 = vunpack.c.h.b16 %v506
  %v2720 = vunpack.c.l.b16 %v507
  %v2721 = vunpack.c.h.b16 %v507
  %v2722 = vunpack.c.l.b16 %v508
  %v2723 = vunpack.c.l.b16 %v509
  %v2724 = vunpack.c.h.b16 %v509
  %v2725 = vunpack.c.l.b16 %v510
  %v2726 = vunpack.c.h.b16 %v510
  %v2727 = vunpack.c.l.b16 %v511
  %v2728 = vunpack.c.h.b16 %v511
  %v2729 = vunpack.c.l.b16 %v512
  %v2730 = vunpack.c.h.b16 %v512
  %v2731 = vunpack.c.l.b16 %v513
  %v2732 = vunpack.c.l.b16 %v514
  %v2733 = vunpack.c.h.b16 %v514
  %v2734 = vunpack.c.l.b16 %v515
  %v2735 = vunpack.c.h.b16 %v515
  %v2736 = vunpack.c.l.b16 %v516
  %v2737 = vunpack.c.h.b16 %v516
  %v2738 = vunpack.c.l.b16 %v517
  %v2739 = vunpack.c.h.b16 %v517
  %v2740 = vunpack.c.l.b16 %v518
  %v2741 = vunpack.c.l.b16 %v519
  %v2742 = vunpack.c.h.b16 %v519
  %v2743 = vunpack.c.l.b16 %v520
  %v2744 = vunpack.c.h.b16 %v520
  %v2745 = vunpack.c.l.b16 %v521
  %v2746 = vunpack.c.h.b16 %v521
  %v2747 = vunpack.c.l.b16 %v522
  %v2748 = vunpack.c.h.b16 %v522
  %v2749 = vunpack.c.l.b16 %v523
  %v2750 = vunpack.c.l.b16 %v524
  %v2751 = vunpack.c.h.b16 %v524
  %v2752 = vunpack.c.l.b16 %v525
  %v2753 = vunpack.c.h.b16 %v525
  %v2754 = vunpack.c.l.b16 %v526
  %v2755 = vunpack.c.h.b16 %v526
  %v2756 = vunpack.c.l.b16 %v527
  %v2757 = vunpack.c.h.b16 %v527
  %v2758 = vunpack.c.l.b16 %v528
  %v2759 = vunpack.c.l.b16 %v529
  %v2760 = vunpack.c.h.b16 %v529
  %v2761 = vunpack.c.l.b16 %v530
  %v2762 = vunpack.c.h.b16 %v530
  %v2763 = vunpack.c.l.b16 %v531
  %v2764 = vunpack.c.h.b16 %v531
  %v2765 = vunpack.c.l.b16 %v532
  %v2766 = vunpack.c.h.b16 %v532
  %v2767 = vunpack.c.l.b16 %v533
  %v2768 = vunpack.c.l.b16 %v534
  %v2769 = vunpack.c.h.b16 %v534
  %v2770 = vunpack.c.l.b16 %v535
  %v2771 = vunpack.c.h.b16 %v535
  %v2772 = vunpack.c.l.b16 %v536
  %v2773 = vunpack.c.h.b16 %v536
  %v2774 = vunpack.c.l.b16 %v537
  %v2775 = vunpack.c.h.b16 %v537
  %v2776 = vunpack.c.l.b16 %v538
  %v2777 = vunpack.c.l.b16 %v539
  %v2778 = vunpack.c.h.b16 %v539
  %v2779 = vunpack.c.l.b16 %v540
  %v2780 = vunpack.c.h.b16 %v540
  %v2781 = vunpack.c.l.b16 %v541
  %v2782 = vunpack.c.h.b16 %v541
  %v2783 = vunpack.c.l.b16 %v542
  %v2784 = vunpack.c.h.b16 %v542
  %v2785 = vunpack.c.l.b16 %v543
  %v2786 = vunpack.c.l.b16 %v544
  %v2787 = vunpack.c.h.b16 %v544
  %v2788 = vunpack.c.l.b16 %v545
  %v2789 = vunpack.c.h.b16 %v545
  %v2790 = vunpack.c.l.b16 %v546
  %v2791 = vunpack.c.h.b16 %v546
  %v2792 = vunpack.c.l.b16 %v547
  %v2793 = vunpack.c.h.b16 %v547
  %v2794 = vunpack.c.l.b16 %v548
  %v2795 = vunpack.c.l.b16 %v549
  %v2796 = vunpack.c.h.b16 %v549
  %v2797 = vunpack.c.l.b16 %v550
  %v2798 = vunpack.c.h.b16 %v550
  %v2799 = vunpack.c.l.b16 %v551
  %v2800 = vunpack.c.h.b16 %v551
  %v2801 = vunpack.c.l.b16 %v552
  %v2802 = vunpack.c.h.b16 %v552
  %v2803 = vunpack.c.l.b16 %v553
  %v2804 = vunpack.c.l.b16 %v554
  %v2805 = vunpack.c.h.b16 %v554
  %v2806 = vunpack.c.l.b16 %v555
  %v2807 = vunpack.c.h.b16 %v555
  %v2808 = vunpack.c.l.b16 %v556
  %v2809 = vunpack.c.h.b16 %v556
  %v2810 = vunpack.c.l.b16 %v557
  %v2811 = vunpack.c.h.b16 %v557
  %v2812 = vunpack.c.l.b16 %v558
  %v2813 = vunpack.c.l.b16 %v559
  %v2814 = vunpack.c.h.b16 %v559
  %v2815 = vunpack.c.l.b16 %v560
  %v2816 = vunpack.c.h.b16 %v560
  %v2817 = vunpack.c.l.b16 %v561
  %v2818 = vunpack.c.h.b16 %v561
  %v2819 = vunpack.c.l.b16 %v562
  %v2820 = vunpack.c.h.b16 %v562
  %v2821 = vunpack.c.l.b16 %v563
  %v2822 = vunpack.c.l.b16 %v564
  %v2823 = vunpack.c.h.b16 %v564
  %v2824 = vunpack.c.l.b16 %v565
  %v2825 = vunpack.c.h.b16 %v565
  %v2826 = vunpack.c.l.b16 %v566
  %v2827 = vunpack.c.h.b16 %v566
  %v2828 = vunpack.c.l.b16 %v567
  %v2829 = vunpack.c.h.b16 %v567
  %v2830 = vunpack.c.l.b16 %v568
  %v2831 = vunpack.c.l.b16 %v569
  %v2832 = vunpack.c.h.b16 %v569
  %v2833 = vunpack.c.l.b16 %v570
  %v2834 = vunpack.c.h.b16 %v570
  %v2835 = vunpack.c.l.b16 %v571
  %v2836 = vunpack.c.h.b16 %v571
  %v2837 = vunpack.c.l.b16 %v572
  %v2838 = vunpack.c.h.b16 %v572
  %v2839 = vunpack.c.l.b16 %v573
  %v2840 = vunpack.c.l.b16 %v574
  %v2841 = vunpack.c.h.b16 %v574
  %v2842 = vunpack.c.l.b16 %v575
  %v2843 = vunpack.c.h.b16 %v575
  %v2844 = vunpack.c.l.b16 %v576
  %v2845 = vunpack.c.h.b16 %v576
  %v2846 = vunpack.c.l.b16 %v577
  %v2847 = vunpack.c.h.b16 %v577
  %v2848 = vunpack.c.l.b16 %v578
  %v2849 = vunpack.c.l.b16 %v579
  %v2850 = vunpack.c.h.b16 %v579
  %v2851 = vunpack.c.l.b16 %v580
  %v2852 = vunpack.c.h.b16 %v580
  %v2853 = vunpack.c.l.b16 %v581
  %v2854 = vunpack.c.h.b16 %v581
  %v2855 = vunpack.c.l.b16 %v582
  %v2856 = vunpack.c.h.b16 %v582
  %v2857 = vunpack.c.l.b16 %v583
  %v2858 = vunpack.c.l.b16 %v584
  %v2859 = vunpack.c.h.b16 %v584
  %v2860 = vunpack.c.l.b16 %v585
  %v2861 = vunpack.c.h.b16 %v585
  %v2862 = vunpack.c.l.b16 %v586
  %v2863 = vunpack.c.h.b16 %v586
  %v2864 = vunpack.c.l.b16 %v587
  %v2865 = vunpack.c.h.b16 %v587
  %v2866 = vunpack.c.l.b16 %v588
  %v2867 = vunpack.c.l.b16 %v589
  %v2868 = vunpack.c.h.b16 %v589
  %v2869 = vunpack.c.l.b16 %v590
  %v2870 = vunpack.c.h.b16 %v590
  %v2871 = vunpack.c.l.b16 %v591
  %v2872 = vunpack.c.h.b16 %v591
  %v2873 = vunpack.c.l.b16 %v592
  %v2874 = vunpack.c.h.b16 %v592
  %v2875 = vunpack.c.l.b16 %v593
  %v2876 = vunpack.c.l.b16 %v594
  %v2877 = vunpack.c.h.b16 %v594
  %v2878 = vunpack.c.l.b16 %v595
  %v2879 = vunpack.c.h.b16 %v595
  %v2880 = vunpack.c.l.b16 %v596
  %v2881 = vunpack.c.h.b16 %v596
  %v2882 = vunpack.c.l.b16 %v597
  %v2883 = vunpack.c.h.b16 %v597
  %v2884 = vunpack.c.l.b16 %v598
  %v2885 = vunpack.c.l.b16 %v599
  %v2886 = vunpack.c.h.b16 %v599
  %v2887 = vunpack.c.l.b16 %v600
  %v2888 = vunpack.c.h.b16 %v600
  %v2889 = vunpack.c.l.b16 %v601
  %v2890 = vunpack.c.h.b16 %v601
  %v2891 = vunpack.c.l.b16 %v602
  %v2892 = vunpack.c.h.b16 %v602
  %v2893 = vunpack.c.l.b16 %v603
  %v2894 = vunpack.c.l.b16 %v604
  %v2895 = vunpack.c.h.b16 %v604
  %v2896 = vunpack.c.l.b16 %v605
  %v2897 = vunpack.c.h.b16 %v605
  %v2898 = vunpack.c.l.b16 %v606
  %v2899 = vunpack.c.h.b16 %v606
  %v2900 = vunpack.c.l.b16 %v607
  %v2901 = vunpack.c.h.b16 %v607
  %v2902 = vunpack.c.l.b16 %v608
  %v2903 = vunpack.c.l.b16 %v609
  %v2904 = vunpack.c.h.b16 %v609
  %v2905 = vunpack.c.l.b16 %v610
  %v2906 = vunpack.c.h.b16 %v610
  %v2907 = vunpack.c.l.b16 %v611
  %v2908 = vunpack.c.h.b16 %v611
  %v2909 = vunpack.c.l.b16 %v612
  %v2910 = vunpack.c.h.b16 %v612
  %v2911 = vunpack.c.l.b16 %v613
  %v2912 = vunpack.c.l.b16 %v614
  %v2913 = vunpack.c.h.b16 %v614
  %v2914 = vunpack.c.l.b16 %v615
  %v2915 = vunpack.c.h.b16 %v615
  %v2916 = vunpack.c.l.b16 %v616
  %v2917 = vunpack.c.h.b16 %v616
  %v2918 = vunpack.c.l.b16 %v617
  %v2919 = vunpack.c.h.b16 %v617
  %v2920 = vunpack.c.l.b16 %v618
  %v2921 = vunpack.c.l.b16 %v619
  %v2922 = vunpack.c.h.b16 %v619
  %v2923 = vunpack.c.l.b16 %v620
  %v2924 = vunpack.c.h.b16 %v620
  %v2925 = vunpack.c.l.b16 %v621
  %v2926 = vunpack.c.h.b16 %v621
  %v2927 = vunpack.c.l.b16 %v622
  %v2928 = vunpack.c.h.b16 %v622
  %v2929 = vunpack.c.l.b16 %v623
  %v2930 = vunpack.c.l.b16 %v624
  %v2931 = vunpack.c.h.b16 %v624
  %v2932 = vunpack.c.l.b16 %v625
  %v2933 = vunpack.c.h.b16 %v625
  %v2934 = vunpack.c.l.b16 %v626
  %v2935 = vunpack.c.h.b16 %v626
  %v2936 = vunpack.c.l.b16 %v627
  %v2937 = vunpack.c.h.b16 %v627
  %v2938 = vunpack.c.l.b16 %v628
  %v2939 = vunpack.c.l.b16 %v629
  %v2940 = vunpack.c.h.b16 %v629
  %v2941 = vunpack.c.l.b16 %v630
  %v2942 = vunpack.c.h.b16 %v630
  %v2943 = vunpack.c.l.b16 %v631
  %v2944 = vunpack.c.h.b16 %v631
  %v2945 = vunpack.c.l.b16 %v632
  %v2946 = vunpack.c.h.b16 %v632
  %v2947 = vunpack.c.l.b16 %v633
  %v2948 = vunpack.c.l.b16 %v634
  %v2949 = vunpack.c.h.b16 %v634
  %v2950 = vunpack.c.l.b16 %v635
  %v2951 = vunpack.c.h.b16 %v635
  %v2952 = vunpack.c.l.b16 %v636
  %v2953 = vunpack.c.h.b16 %v636
  %v2954 = vunpack.c.l.b16 %v637
  %v2955 = vunpack.c.h.b16 %v637
  %v2956 = vunpack.c.l.b16 %v638
  %v2957 = vunpack.c.l.b16 %v639
  %v2958 = vunpack.c.h.b16 %v639
  %v2959 = vunpack.c.l.b16 %v640
  %v2960 = vunpack.c.h.b16 %v640
  %v2961 = vunpack.c.l.b16 %v641
  %v2962 = vunpack.c.h.b16 %v641
  %v2963 = vunpack.c.l.b16 %v642
  %v2964 = vunpack.c.h.b16 %v642
  %v2965 = vunpack.c.l.b16 %v643
  %v2966 = vunpack.c.l.b16 %v644
  %v2967 = vunpack.c.h.b16 %v644
  %v2968 = vunpack.c.l.b16 %v645
  %v2969 = vunpack.c.h.b16 %v645
  %v2970 = vunpack.c.l.b16 %v646
  %v2971 = vunpack.c.h.b16 %v646
  %v2972 = vunpack.c.l.b16 %v647
  %v2973 = vunpack.c.h.b16 %v647
  %v2974 = vunpack.c.l.b16 %v648
  %v2975 = vunpack.c.l.b16 %v649
  %v2976 = vunpack.c.h.b16 %v649
  %v2977 = vunpack.c.l.b16 %v650
  %v2978 = vunpack.c.h.b16 %v650
  %v2979 = vunpack.c.l.b16 %v651
  %v2980 = vunpack.c.h.b16 %v651
  %v2981 = vunpack.c.l.b16 %v652
  %v2982 = vunpack.c.h.b16 %v652
  %v2983 = vunpack.c.l.b16 %v653
  %v2984 = vunpack.c.l.b16 %v654
  %v2985 = vunpack.c.h.b16 %v654
  %v2986 = vunpack.c.l.b16 %v655
  %v2987 = vunpack.c.h.b16 %v655
  %v2988 = vunpack.c.l.b16 %v656
  %v2989 = vunpack.c.h.b16 %v656
  %v2990 = vunpack.c.l.b16 %v657
  %v2991 = vunpack.c.h.b16 %v657
  %v2992 = vunpack.c.l.b16 %v658
  %v2993 = vunpack.c.l.b16 %v659
  %v2994 = vunpack.c.h.b16 %v659
  %v2995 = vunpack.c.l.b16 %v660
  %v2996 = vunpack.c.h.b16 %v660
  %v2997 = vunpack.c.l.b16 %v661
  %v2998 = vunpack.c.h.b16 %v661
  %v2999 = vunpack.c.l.b16 %v662
  %v3000 = vunpack.c.h.b16 %v662
  %v3001 = vunpack.c.l.b16 %v663
  %v3002 = vunpack.c.l.b16 %v664
  %v3003 = vunpack.c.h.b16 %v664
  %v3004 = vunpack.c.l.b16 %v665
  %v3005 = vunpack.c.h.b16 %v665
  %v3006 = vunpack.c.l.b16 %v666
  %v3007 = vunpack.c.h.b16 %v666
  %v3008 = vunpack.c.l.b16 %v667
  %v3009 = vunpack.c.h.b16 %v667
  %v3010 = vunpack.c.l.b16 %v668
  %v3011 = vunpack.c.l.b16 %v669
  %v3012 = vunpack.c.h.b16 %v669
  %v3013 = vunpack.c.l.b16 %v670
  %v3014 = vunpack.c.h.b16 %v670
  %v3015 = vunpack.c.l.b16 %v671
  %v3016 = vunpack.c.h.b16 %v671
  %v3017 = vunpack.c.l.b16 %v672
  %v3018 = vunpack.c.h.b16 %v672
  %v3019 = vunpack.c.l.b16 %v673
  %v3020 = vunpack.c.l.b16 %v674
  %v3021 = vunpack.c.h.b16 %v674
  %v3022 = vunpack.c.l.b16 %v675
  %v3023 = vunpack.c.h.b16 %v675
  %v3024 = vunpack.c.l.b16 %v676
  %v3025 = vunpack.c.h.b16 %v676
  %v3026 = vunpack.c.l.b16 %v677
  %v3027 = vunpack.c.h.b16 %v677
  %v3028 = vunpack.c.l.b16 %v678
  %v3029 = vunpack.c.l.b16 %v679
  %v3030 = vunpack.c.h.b16 %v679
  %v3031 = vunpack.c.l.b16 %v680
  %v3032 = vunpack.c.h.b16 %v680
  %v3033 = vunpack.c.l.b16 %v681
  %v3034 = vunpack.c.h.b16 %v681
  %v3035 = vunpack.c.l.b16 %v682
  %v3036 = vunpack.c.h.b16 %v682
  %v3037 = vunpack.c.l.b16 %v683
  %v3038 = vunpack.c.l.b16 %v684
  %v3039 = vunpack.c.h.b16 %v684
  %v3040 = vunpack.c.l.b16 %v685
  %v3041 = vunpack.c.h.b16 %v685
  %v3042 = vunpack.c.l.b16 %v686
  %v3043 = vunpack.c.h.b16 %v686
  %v3044 = vunpack.c.l.b16 %v687
  %v3045 = vunpack.c.h.b16 %v687
  %v3046 = vunpack.c.l.b16 %v688
  %v3047 = vunpack.c.l.b16 %v689
  %v3048 = vunpack.c.h.b16 %v689
  %v3049 = vunpack.c.l.b16 %v690
  %v3050 = vunpack.c.h.b16 %v690
  %v3051 = vunpack.c.l.b16 %v691
  %v3052 = vunpack.c.h.b16 %v691
  %v3053 = vunpack.c.l.b16 %v692
  %v3054 = vunpack.c.h.b16 %v692
  %v3055 = vunpack.c.l.b16 %v693
  %v3056 = vunpack.c.l.b16 %v694
  %v3057 = vunpack.c.h.b16 %v694
  %v3058 = vunpack.c.l.b16 %v695
  %v3059 = vunpack.c.h.b16 %v695
  %v3060 = vunpack.c.l.b16 %v696
  %v3061 = vunpack.c.h.b16 %v696
  %v3062 = vunpack.c.l.b16 %v697
  %v3063 = vunpack.c.h.b16 %v697
  %v3064 = vunpack.c.l.b16 %v698
  %v3065 = vunpack.c.l.b16 %v699
  %v3066 = vunpack.c.h.b16 %v699
  %v3067 = vunpack.c.l.b16 %v700
  %v3068 = vunpack.c.h.b16 %v700
  %v3069 = vunpack.c.l.b16 %v701
  %v3070 = vunpack.c.h.b16 %v701
  %v3071 = vunpack.c.l.b16 %v702
  %v3072 = vunpack.c.h.b16 %v702
  %v3073 = vunpack.c.l.b16 %v703
  %v3074 = vunpack.c.l.b16 %v704
  %v3075 = vunpack.c.h.b16 %v704
  %v3076 = vunpack.c.l.b16 %v705
  %v3077 = vunpack.c.h.b16 %v705
  %v3078 = vunpack.c.l.b16 %v706
  %v3079 = vunpack.c.h.b16 %v706
  %v3080 = vunpack.c.l.b16 %v707
  %v3081 = vunpack.c.h.b16 %v707
  %v3082 = vunpack.c.l.b16 %v708
  %v3083 = vunpack.c.l.b16 %v709
  %v3084 = vunpack.c.h.b16 %v709
  %v3085 = vunpack.c.l.b16 %v710
  %v3086 = vunpack.c.h.b16 %v710
  %v3087 = vunpack.c.l.b16 %v711
  %v3088 = vunpack.c.h.b16 %v711
  %v3089 = vunpack.c.l.b16 %v712
  %v3090 = vunpack.c.h.b16 %v712
  %v3091 = vunpack.c.l.b16 %v713
  %v3092 = vunpack.c.l.b16 %v714
  %v3093 = vunpack.c.h.b16 %v714
  %v3094 = vunpack.c.l.b16 %v715
  %v3095 = vunpack.c.h.b16 %v715
  %v3096 = vunpack.c.l.b16 %v716
  %v3097 = vunpack.c.h.b16 %v716
  %v3098 = vunpack.c.l.b16 %v717
  %v3099 = vunpack.c.h.b16 %v717
  %v3100 = vunpack.c.l.b16 %v718
  %v3101 = vunpack.c.l.b16 %v719
  %v3102 = vunpack.c.h.b16 %v719
  %v3103 = vunpack.c.l.b16 %v720
  %v3104 = vunpack.c.h.b16 %v720
  %v3105 = vunpack.c.l.b16 %v721
  %v3106 = vunpack.c.h.b16 %v721
  %v3107 = vunpack.c.l.b16 %v722
  %v3108 = vunpack.c.h.b16 %v722
  %v3109 = vunpack.c.l.b16 %v723
  %v3110 = vunpack.c.l.b16 %v724
  %v3111 = vunpack.c.h.b16 %v724
  %v3112 = vunpack.c.l.b16 %v725
  %v3113 = vunpack.c.h.b16 %v725
  %v3114 = vunpack.c.l.b16 %v726
  %v3115 = vunpack.c.h.b16 %v726
  %v3116 = vunpack.c.l.b16 %v727
  %v3117 = vunpack.c.h.b16 %v727
  %v3118 = vunpack.c.l.b16 %v728
  %v3119 = vunpack.c.l.b16 %v729
  %v3120 = vunpack.c.h.b16 %v729
  %v3121 = vunpack.c.l.b16 %v730
  %v3122 = vunpack.c.h.b16 %v730
  %v3123 = vunpack.c.l.b16 %v731
  %v3124 = vunpack.c.h.b16 %v731
  %v3125 = vunpack.c.l.b16 %v732
  %v3126 = vunpack.c.h.b16 %v732
  %v3127 = vunpack.c.l.b16 %v733
  %v3128 = vunpack.c.l.b16 %v734
  %v3129 = vunpack.c.h.b16 %v734
  %v3130 = vunpack.c.l.b16 %v735
  %v3131 = vunpack.c.h.b16 %v735
  %v3132 = vunpack.c.l.b16 %v736
  %v3133 = vunpack.c.h.b16 %v736
  %v3134 = vunpack.c.l.b16 %v737
  %v3135 = vunpack.c.h.b16 %v737
  %v3136 = vunpack.c.l.b16 %v738
  %v3137 = vunpack.c.l.b16 %v739
  %v3138 = vunpack.c.h.b16 %v739
  %v3139 = vunpack.c.l.b16 %v740
  %v3140 = vunpack.c.h.b16 %v740
  %v3141 = vunpack.c.l.b16 %v741
  %v3142 = vunpack.c.h.b16 %v741
  %v3143 = vunpack.c.l.b16 %v742
  %v3144 = vunpack.c.h.b16 %v742
  %v3145 = vunpack.c.l.b16 %v743
  %v3146 = vunpack.c.l.b16 %v744
  %v3147 = vunpack.c.h.b16 %v744
  %v3148 = vunpack.c.l.b16 %v745
  %v3149 = vunpack.c.h.b16 %v745
  %v3150 = vunpack.c.l.b16 %v746
  %v3151 = vunpack.c.h.b16 %v746
  %v3152 = vunpack.c.l.b16 %v747
  %v3153 = vunpack.c.h.b16 %v747
  %v3154 = vunpack.c.l.b16 %v748
  %v3155 = vunpack.c.l.b16 %v749
  %v3156 = vunpack.c.h.b16 %v749
  %v3157 = vunpack.c.l.b16 %v750
  %v3158 = vunpack.c.h.b16 %v750
  %v3159 = vunpack.c.l.b16 %v751
  %v3160 = vunpack.c.h.b16 %v751
  %v3161 = vunpack.c.l.b16 %v752
  %v3162 = vunpack.c.h.b16 %v752
  %v3163 = vunpack.c.l.b16 %v753
  %v3164 = vunpack.c.l.b16 %v754
  %v3165 = vunpack.c.h.b16 %v754
  %v3166 = vunpack.c.l.b16 %v755
  %v3167 = vunpack.c.h.b16 %v755
  %v3168 = vunpack.c.l.b16 %v756
  %v3169 = vunpack.c.h.b16 %v756
  %v3170 = vunpack.c.l.b16 %v757
  %v3171 = vunpack.c.h.b16 %v757
  %v3172 = vunpack.c.l.b16 %v758
  %v3173 = vunpack.c.l.b16 %v759
  %v3174 = vunpack.c.h.b16 %v759
  %v3175 = vunpack.c.l.b16 %v760
  %v3176 = vunpack.c.h.b16 %v760
  %v3177 = vunpack.c.l.b16 %v761
  %v3178 = vunpack.c.h.b16 %v761
  %v3179 = vunpack.c.l.b16 %v762
  %v3180 = vunpack.c.h.b16 %v762
  %v3181 = vunpack.c.l.b16 %v763
  %v3182 = vunpack.c.l.b16 %v764
  %v3183 = vunpack.c.h.b16 %v764
  %v3184 = vunpack.c.l.b16 %v765
  %v3185 = vunpack.c.h.b16 %v765
  %v3186 = vunpack.c.l.b16 %v766
  %v3187 = vunpack.c.h.b16 %v766
  %v3188 = vunpack.c.l.b16 %v767
  %v3189 = vunpack.c.h.b16 %v767
  %v3190 = vunpack.c.l.b16 %v768
  %v3191 = vunpack.c.l.b16 %v769
  %v3192 = vunpack.c.h.b16 %v769
  %v3193 = vunpack.c.l.b16 %v770
  %v3194 = vunpack.c.h.b16 %v770
  %v3195 = vunpack.c.l.b16 %v771
  %v3196 = vunpack.c.h.b16 %v771
  %v3197 = vunpack.c.l.b16 %v772
  %v3198 = vunpack.c.h.b16 %v772
  %v3199 = vunpack.c.l.b16 %v773
  %v3200 = vunpack.c.l.b16 %v774
  %v3201 = vunpack.c.h.b16 %v774
  %v3202 = vunpack.c.l.b16 %v775
  %v3203 = vunpack.c.h.b16 %v775
  %v3204 = vunpack.c.l.b16 %v776
  %v3205 = vunpack.c.h.b16 %v776
  %v3206 = vunpack.c.l.b16 %v777
  %v3207 = vunpack.c.h.b16 %v777
  %v3208 = vunpack.c.l.b16 %v778
  %v3209 = vunpack.c.l.b16 %v779
  %v3210 = vunpack.c.h.b16 %v779
  %v3211 = vunpack.c.l.b16 %v780
  %v3212 = vunpack.c.h.b16 %v780
  %v3213 = vunpack.c.l.b16 %v781
  %v3214 = vunpack.c.h.b16 %v781
  %v3215 = vunpack.c.l.b16 %v782
  %v3216 = vunpack.c.h.b16 %v782
  %v3217 = vunpack.c.l.b16 %v783
  %v3218 = vunpack.c.l.b16 %v784
  %v3219 = vunpack.c.h.b16 %v784
  %v3220 = vunpack.c.l.b16 %v785
  %v3221 = vunpack.c.h.b16 %v785
  %v3222 = vunpack.c.l.b16 %v786
  %v3223 = vunpack.c.h.b16 %v786
  %v3224 = vunpack.c.l.b16 %v787
  %v3225 = vunpack.c.h.b16 %v787
  %v3226 = vunpack.c.l.b16 %v788
  %v3227 = vunpack.c.l.b16 %v789
  %v3228 = vunpack.c.h.b16 %v789
  %v3229 = vunpack.c.l.b16 %v790
  %v3230 = vunpack.c.h.b16 %v790
  %v3231 = vunpack.c.l.b16 %v791
  %v3232 = vunpack.c.h.b16 %v791
  %v3233 = vunpack.c.l.b16 %v792
  %v3234 = vunpack.c.h.b16 %v792
  %v3235 = vunpack.c.l.b16 %v793
  %v3236 = vunpack.c.l.b16 %v794
  %v3237 = vunpack.c.h.b16 %v794
  %v3238 = vunpack.c.l.b16 %v795
  %v3239 = vunpack.c.h.b16 %v795
  %v3240 = vunpack.c.l.b16 %v796
  %v3241 = vunpack.c.h.b16 %v796
  %v3242 = vunpack.c.l.b16 %v797
  %v3243 = vunpack.c.h.b16 %v797
  %v3244 = vunpack.c.l.b16 %v798
  %v3245 = vunpack.c.l.b16 %v799
  %v3246 = vunpack.c.h.b16 %v799
  %v3247 = vunpack.c.l.b16 %v800
  %v3248 = vunpack.c.h.b16 %v800
  %v3249 = vunpack.c.l.b16 %v801
  %v3250 = vunpack.c.h.b16 %v801
  %v3251 = vunpack.c.l.b16 %v802
  %v3252 = vunpack.c.h.b16 %v802
  %v3253 = vunpack.c.l.b16 %v803
  %v3254 = vunpack.c.l.b16 %v804
  %v3255 = vunpack.c.h.b16 %v804
  %v3256 = vunpack.c.l.b16 %v805
  %v3257 = vunpack.c.h.b16 %v805
  %v3258 = vunpack.c.l.b16 %v806
  %v3259 = vunpack.c.h.b16 %v806
  %v3260 = vunpack.c.l.b16 %v807
  %v3261 = vunpack.c.h.b16 %v807
  %v3262 = vunpack.c.l.b16 %v808
  %v3263 = vunpack.c.l.b16 %v809
  %v3264 = vunpack.c.h.b16 %v809
  %v3265 = vunpack.c.l.b16 %v810
  %v3266 = vunpack.c.h.b16 %v810
  %v3267 = vunpack.c.l.b16 %v811
  %v3268 = vunpack.c.h.b16 %v811
  %v3269 = vunpack.c.l.b16 %v812
  %v3270 = vunpack.c.h.b16 %v812
  %v3271 = vunpack.c.l.b16 %v813
  %v3272 = vunpack.c.l.b16 %v814
  %v3273 = vunpack.c.h.b16 %v814
  %v3274 = vunpack.c.l.b16 %v815
  %v3275 = vunpack.c.h.b16 %v815
  %v3276 = vunpack.c.l.b16 %v816
  %v3277 = vunpack.c.h.b16 %v816
  %v3278 = vunpack.c.l.b16 %v817
  %v3279 = vunpack.c.h.b16 %v817
  %v3280 = vunpack.c.l.b16 %v818
  %v3281 = vunpack.c.l.b16 %v819
  %v3282 = vunpack.c.h.b16 %v819
  %v3283 = vunpack.c.l.b16 %v820
  %v3284 = vunpack.c.h.b16 %v820
  %v3285 = vunpack.c.l.b16 %v821
  %v3286 = vunpack.c.h.b16 %v821
  %v3287 = vunpack.c.l.b16 %v822
  %v3288 = vunpack.c.h.b16 %v822
  %v3289 = vunpack.c.l.b16 %v823
  %v3290 = vunpack.c.l.b16 %v824
  %v3291 = vunpack.c.h.b16 %v824
  %v3292 = vunpack.c.l.b16 %v825
  %v3293 = vunpack.c.h.b16 %v825
  %v3294 = vunpack.c.l.b16 %v826
  %v3295 = vunpack.c.h.b16 %v826
  %v3296 = vunpack.c.l.b16 %v827
  %v3297 = vunpack.c.h.b16 %v827
  %v3298 = vunpack.c.l.b16 %v828
  %v3299 = vunpack.c.l.b16 %v829
  %v3300 = vunpack.c.h.b16 %v829
  %v3301 = vunpack.c.l.b16 %v830
  %v3302 = vunpack.c.h.b16 %v830
  %v3303 = vunpack.c.l.b16 %v831
  %v3304 = vunpack.c.h.b16 %v831
  %v3305 = vunpack.c.l.b16 %v832
  %v3306 = vunpack.c.h.b16 %v832
  %v3307 = vunpack.c.l.b16 %v833
  %v3308 = vunpack.c.l.b16 %v834
  %v3309 = vunpack.c.h.b16 %v834
  %v3310 = vunpack.c.l.b16 %v835
  %v3311 = vunpack.c.h.b16 %v835
  %v3312 = vunpack.c.l.b16 %v836
  %v3313 = vunpack.c.h.b16 %v836
  %v3314 = vunpack.c.l.b16 %v837
  %v3315 = vunpack.c.h.b16 %v837
  %v3316 = vunpack.c.l.b16 %v838
  %v3317 = vunpack.c.l.b16 %v839
  %v3318 = vunpack.c.h.b16 %v839
  %v3319 = vunpack.c.l.b16 %v840
  %v3320 = vunpack.c.h.b16 %v840
  %v3321 = vunpack.c.l.b16 %v841
  %v3322 = vunpack.c.h.b16 %v841
  %v3323 = vunpack.c.l.b16 %v842
  %v3324 = vunpack.c.h.b16 %v842
  %v3325 = vunpack.c.l.b16 %v843
  %v3326 = vunpack.c.l.b16 %v844
  %v3327 = vunpack.c.h.b16 %v844
  %v3328 = vunpack.c.l.b16 %v845
  %v3329 = vunpack.c.h.b16 %v845
  %v3330 = vunpack.c.l.b16 %v846
  %v3331 = vunpack.c.h.b16 %v846
  %v3332 = vunpack.c.l.b16 %v847
  %v3333 = vunpack.c.h.b16 %v847
  %v3334 = vunpack.c.l.b16 %v848
  %v3335 = vunpack.c.l.b16 %v849
  %v3336 = vunpack.c.h.b16 %v849
  %v3337 = vunpack.c.l.b16 %v850
  %v3338 = vunpack.c.h.b16 %v850
  %v3339 = vunpack.c.l.b16 %v851
  %v3340 = vunpack.c.h.b16 %v851
  %v3341 = vunpack.c.l.b16 %v852
  %v3342 = vunpack.c.h.b16 %v852
  %v3343 = vunpack.c.l.b16 %v853
  %v3344 = vunpack.c.l.b16 %v854
  %v3345 = vunpack.c.h.b16 %v854
  %v3346 = vunpack.c.l.b16 %v855
  %v3347 = vunpack.c.h.b16 %v855
  %v3348 = vunpack.c.l.b16 %v856
  %v3349 = vunpack.c.h.b16 %v856
  %v3350 = vunpack.c.l.b16 %v857
  %v3351 = vunpack.c.h.b16 %v857
  %v3352 = vunpack.c.l.b16 %v858
  %v3353 = vunpack.c.l.b16 %v859
  %v3354 = vunpack.c.h.b16 %v859
  %v3355 = vunpack.c.l.b16 %v860
  %v3356 = vunpack.c.h.b16 %v860
  %v3357 = vunpack.c.l.b16 %v861
  %v3358 = vunpack.c.h.b16 %v861
  %v3359 = vunpack.c.l.b16 %v862
  %v3360 = vunpack.c.h.b16 %v862
  %v3361 = vunpack.c.l.b16 %v863
  %v3362 = vunpack.c.l.b16 %v864
  %v3363 = vunpack.c.h.b16 %v864
  %v3364 = vunpack.c.l.b16 %v865
  %v3365 = vunpack.c.h.b16 %v865
  %v3366 = vunpack.c.l.b16 %v866
  %v3367 = vunpack.c.h.b16 %v866
  %v3368 = vunpack.c.l.b16 %v867
  %v3369 = vunpack.c.h.b16 %v867
  %v3370 = vunpack.c.l.b16 %v868
  %v3371 = vunpack.c.l.b16 %v869
  %v3372 = vunpack.c.h.b16 %v869
  %v3373 = vunpack.c.l.b16 %v870
  %v3374 = vunpack.c.h.b16 %v870
  %v3375 = vunpack.c.l.b16 %v871
  %v3376 = vunpack.c.h.b16 %v871
  %v3377 = vunpack.c.l.b16 %v872
  %v3378 = vunpack.c.h.b16 %v872
  %v3379 = vunpack.c.l.b16 %v873
  %v3380 = vunpack.c.l.b16 %v874
  %v3381 = vunpack.c.h.b16 %v874
  %v3382 = vunpack.c.l.b16 %v875
  %v3383 = vunpack.c.h.b16 %v875
  %v3384 = vunpack.c.l.b16 %v876
  %v3385 = vunpack.c.h.b16 %v876
  %v3386 = vunpack.c.l.b16 %v877
  %v3387 = vunpack.c.h.b16 %v877
  %v3388 = vunpack.c.l.b16 %v878
  %v3389 = vunpack.c.l.b16 %v879
  %v3390 = vunpack.c.h.b16 %v879
  %v3391 = vunpack.c.l.b16 %v880
  %v3392 = vunpack.c.h.b16 %v880
  %v3393 = vunpack.c.l.b16 %v881
  %v3394 = vunpack.c.h.b16 %v881
  %v3395 = vunpack.c.l.b16 %v882
  %v3396 = vunpack.c.h.b16 %v882
  %v3397 = vunpack.c.l.b16 %v883
  %v3398 = vunpack.c.l.b16 %v884
  %v3399 = vunpack.c.h.b16 %v884
  %v3400 = vunpack.c.l.b16 %v885
  %v3401 = vunpack.c.h.b16 %v885
  %v3402 = vunpack.c.l.b16 %v886
  %v3403 = vunpack.c.h.b16 %v886
  %v3404 = vunpack.c.l.b16 %v887
  %v3405 = vunpack.c.h.b16 %v887
  %v3406 = vunpack.c.l.b16 %v888
  %v3407 = vunpack.c.l.b16 %v889
  %v3408 = vunpack.c.h.b16 %v889
  %v3409 = vunpack.c.l.b16 %v890
  %v3410 = vunpack.c.h.b16 %v890
  %v3411 = vunpack.c.l.b16 %v891
  %v3412 = vunpack.c.h.b16 %v891
  %v3413 = vunpack.c.l.b16 %v892
  %v3414 = vunpack.c.h.b16 %v892
  %v3415 = vunpack.c.l.b16 %v893
  %v3416 = vunpack.c.l.b16 %v894
  %v3417 = vunpack.c.h.b16 %v894
  %v3418 = vunpack.c.l.b16 %v895
  %v3419 = vunpack.c.h.b16 %v895
  %v3420 = vunpack.c.l.b16 %v896
  %v3421 = vunpack.c.h.b16 %v896
  %v3422 = vunpack.c.l.b16 %v897
  %v3423 = vunpack.c.h.b16 %v897
  %v3424 = vunpack.c.l.b16 %v898
  %v3425 = vunpack.c.l.b16 %v899
  %v3426 = vunpack.c.h.b16 %v899
  %v3427 = vunpack.c.l.b16 %v900
  %v3428 = vunpack.c.h.b16 %v900
  %v3429 = vunpack.c.l.b16 %v901
  %v3430 = vunpack.c.h.b16 %v901
  %v3431 = vunpack.c.l.b16 %v902
  %v3432 = vunpack.c.h.b16 %v902
  %v3433 = vunpack.c.l.b16 %v903
  %v3434 = vunpack.c.l.b16 %v904
  %v3435 = vunpack.c.h.b16 %v904
  %v3436 = vunpack.c.l.b16 %v905
  %v3437 = vunpack.c.h.b16 %v905
  %v3438 = vunpack.c.l.b16 %v906
  %v3439 = vunpack.c.h.b16 %v906
  %v3440 = vunpack.c.l.b16 %v907
  %v3441 = vunpack.c.h.b16 %v907
  %v3442 = vunpack.c.l.b16 %v908
  %v3443 = vunpack.c.l.b16 %v909
  %v3444 = vunpack.c.h.b16 %v909
  %v3445 = vunpack.c.l.b16 %v910
  %v3446 = vunpack.c.h.b16 %v910
  %v3447 = vunpack.c.l.b16 %v911
  %v3448 = vunpack.c.h.b16 %v911
  %v3449 = vunpack.c.l.b16 %v912
  %v3450 = vunpack.c.h.b16 %v912
  %v3451 = vunpack.c.l.b16 %v913
  %v3452 = vunpack.c.l.b16 %v914
  %v3453 = vunpack.c.h.b16 %v914
  %v3454 = vunpack.c.l.b16 %v915
  %v3455 = vunpack.c.h.b16 %v915
  %v3456 = vunpack.c.l.b16 %v916
  %v3457 = vunpack.c.h.b16 %v916
  %v3458 = vunpack.c.l.b16 %v917
  %v3459 = vunpack.c.h.b16 %v917
  %v3460 = vunpack.c.l.b16 %v918
  %v3461 = vpack.c.b16 %v1886, %v1877
  %v3462 = vpack.c.b16 %v1887, %v1878
  %v3463 = vpack.c.b16 %v1888, %v1879
  %v3464 = vpack.c.b16 %v1889, %v1880
  %v3465 = vpack.c.b16 %v1890, %v1881
  %v3466 = vpack.c.b16 %v1891, %v1882
  %v3467 = vpack.c.b16 %v1892, %v1883
  %v3468 = vpack.c.b16 %v1893, %v1884
  %v3469 = vpack.c.b16 %v1894, %v1885
  %v3470 = vpack.c.b16 %v1904, %v1895
  %v3471 = vpack.c.b16 %v1905, %v1896
  %v3472 = vpack.c.b16 %v1906, %v1897
  %v3473 = vpack.c.b16 %v1907, %v1898
  %v3474 = vpack.c.b16 %v1908, %v1899
  %v3475 = vpack.c.b16 %v1909, %v1900
  %v3476 = vpack.c.b16 %v1910, %v1901
  %v3477 = vpack.c.b16 %v1911, %v1902
  %v3478 = vpack.c.b16 %v1912, %v1903
  %v3479 = vpack.c.b16 %v1922, %v1913
  %v3480 = vpack.c.b16 %v1923, %v1914
  %v3481 = vpack.c.b16 %v1924, %v1915
  %v3482 = vpack.c.b16 %v1925, %v1916
  %v3483 = vpack.c.b16 %v1926, %v1917
  %v3484 = vpack.c.b16 %v1927, %v1918
  %v3485 = vpack.c.b16 %v1928, %v1919
  %v3486 = vpack.c.b16 %v1929, %v1920
  %v3487 = vpack.c.b16 %v1930, %v1921
  %v3488 = vpack.c.b16 %v1940, %v1931
  %v3489 = vpack.c.b16 %v1941, %v1932
  %v3490 = vpack.c.b16 %v1942, %v1933
  %v3491 = vpack.c.b16 %v1943, %v1934
  %v3492 = vpack.c.b16 %v1944, %v1935
  %v3493 = vpack.c.b16 %v1945, %v1936
  %v3494 = vpack.c.b16 %v1946, %v1937
  %v3495 = vpack.c.b16 %v1947, %v1938
  %v3496 = vpack.c.b16 %v1948, %v1939
  %v3497 = vpack.c.b16 %v1958, %v1949
  %v3498 = vpack.c.b16 %v1959, %v1950
  %v3499 = vpack.c.b16 %v1960, %v1951
  %v3500 = vpack.c.b16 %v1961, %v1952
  %v3501 = vpack.c.b16 %v1962, %v1953
  %v3502 = vpack.c.b16 %v1963, %v1954
  %v3503 = vpack.c.b16 %v1964, %v1955
  %v3504 = vpack.c.b16 %v1965, %v1956
  %v3505 = vpack.c.b16 %v1966, %v1957
  %v3506 = vpack.c.b16 %v1976, %v1967
  %v3507 = vpack.c.b16 %v1977, %v1968
  %v3508 = vpack.c.b16 %v1978, %v1969
  %v3509 = vpack.c.b16 %v1979, %v1970
  %v3510 = vpack.c.b16 %v1980, %v1971
  %v3511 = vpack.c.b16 %v1981, %v1972
  %v3512 = vpack.c.b16 %v1982, %v1973
  %v3513 = vpack.c.b16 %v1983, %v1974
  %v3514 = vpack.c.b16 %v1984, %v1975
  %v3515 = vpack.c.b16 %v1994, %v1985
  %v3516 = vpack.c.b16 %v1995, %v1986
  %v3517 = vpack.c.b16 %v1996, %v1987
  %v3518 = vpack.c.b16 %v1997, %v1988
  %v3519 = vpack.c.b16 %v1998, %v1989
  %v3520 = vpack.c.b16 %v1999, %v1990
  %v3521 = vpack.c.b16 %v2000, %v1991
  %v3522 = vpack.c.b16 %v2001, %v1992
  %v3523 = vpack.c.b16 %v2002, %v1993
  %v3524 = vpack.c.b16 %v2012, %v2003
  %v3525 = vpack.c.b16 %v2013, %v2004
  %v3526 = vpack.c.b16 %v2014, %v2005
  %v3527 = vpack.c.b16 %v2015, %v2006
  %v3528 = vpack.c.b16 %v2016, %v2007
  %v3529 = vpack.c.b16 %v2017, %v2008
  %v3530 = vpack.c.b16 %v2018, %v2009
  %v3531 = vpack.c.b16 %v2019, %v2010
  %v3532 = vpack.c.b16 %v2020, %v2011
  %v3533 = vpack.c.b16 %v2030, %v2021
  %v3534 = vpack.c.b16 %v2031, %v2022
  %v3535 = vpack.c.b16 %v2032, %v2023
  %v3536 = vpack.c.b16 %v2033, %v2024
  %v3537 = vpack.c.b16 %v2034, %v2025
  %v3538 = vpack.c.b16 %v2035, %v2026
  %v3539 = vpack.c.b16 %v2036, %v2027
  %v3540 = vpack.c.b16 %v2037, %v2028
  %v3541 = vpack.c.b16 %v2038, %v2029
  %v3542 = vpack.c.b16 %v2048, %v2039
  %v3543 = vpack.c.b16 %v2049, %v2040
  %v3544 = vpack.c.b16 %v2050, %v2041
  %v3545 = vpack.c.b16 %v2051, %v2042
  %v3546 = vpack.c.b16 %v2052, %v2043
  %v3547 = vpack.c.b16 %v2053, %v2044
  %v3548 = vpack.c.b16 %v2054, %v2045
  %v3549 = vpack.c.b16 %v2055, %v2046
  %v3550 = vpack.c.b16 %v2056, %v2047
  %v3551 = vpack.c.b16 %v2066, %v2057
  %v3552 = vpack.c.b16 %v2067, %v2058
  %v3553 = vpack.c.b16 %v2068, %v2059
  %v3554 = vpack.c.b16 %v2069, %v2060
  %v3555 = vpack.c.b16 %v2070, %v2061
  %v3556 = vpack.c.b16 %v2071, %v2062
  %v3557 = vpack.c.b16 %v2072, %v2063
  %v3558 = vpack.c.b16 %v2073, %v2064
  %v3559 = vpack.c.b16 %v2074, %v2065
  %v3560 = vpack.c.b16 %v2084, %v2075
  %v3561 = vpack.c.b16 %v2085, %v2076
  %v3562 = vpack.c.b16 %v2086, %v2077
  %v3563 = vpack.c.b16 %v2087, %v2078
  %v3564 = vpack.c.b16 %v2088, %v2079
  %v3565 = vpack.c.b16 %v2089, %v2080
  %v3566 = vpack.c.b16 %v2090, %v2081
  %v3567 = vpack.c.b16 %v2091, %v2082
  %v3568 = vpack.c.b16 %v2092, %v2083
  %v3569 = vpack.c.b16 %v2102, %v2093
  %v3570 = vpack.c.b16 %v2103, %v2094
  %v3571 = vpack.c.b16 %v2104, %v2095
  %v3572 = vpack.c.b16 %v2105, %v2096
  %v3573 = vpack.c.b16 %v2106, %v2097
  %v3574 = vpack.c.b16 %v2107, %v2098
  %v3575 = vpack.c.b16 %v2108, %v2099
  %v3576 = vpack.c.b16 %v2109, %v2100
  %v3577 = vpack.c.b16 %v2110, %v2101
  %v3578 = vpack.c.b16 %v2120, %v2111
  %v3579 = vpack.c.b16 %v2121, %v2112
  %v3580 = vpack.c.b16 %v2122, %v2113
  %v3581 = vpack.c.b16 %v2123, %v2114
  %v3582 = vpack.c.b16 %v2124, %v2115
  %v3583 = vpack.c.b16 %v2125, %v2116
  %v3584 = vpack.c.b16 %v2126, %v2117
  %v3585 = vpack.c.b16 %v2127, %v2118
  %v3586 = vpack.c.b16 %v2128, %v2119
  %v3587 = vpack.c.b16 %v2138, %v2129
  %v3588 = vpack.c.b16 %v2139, %v2130
  %v3589 = vpack.c.b16 %v2140, %v2131
  %v3590 = vpack.c.b16 %v2141, %v2132
  %v3591 = vpack.c.b16 %v2142, %v2133
  %v3592 = vpack.c.b16 %v2143, %v2134
  %v3593 = vpack.c.b16 %v2144, %v2135
  %v3594 = vpack.c.b16 %v2145, %v2136
  %v3595 = vpack.c.b16 %v2146, %v2137
  %v3596 = vpack.c.b16 %v2156, %v2147
  %v3597 = vpack.c.b16 %v2157, %v2148
  %v3598 = vpack.c.b16 %v2158, %v2149
  %v3599 = vpack.c.b16 %v2159, %v2150
  %v3600 = vpack.c.b16 %v2160, %v2151
  %v3601 = vpack.c.b16 %v2161, %v2152
  %v3602 = vpack.c.b16 %v2162, %v2153
  %v3603 = vpack.c.b16 %v2163, %v2154
  %v3604 = vpack.c.b16 %v2164, %v2155
  %v3605 = vpack.c.b16 %v2174, %v2165
  %v3606 = vpack.c.b16 %v2175, %v2166
  %v3607 = vpack.c.b16 %v2176, %v2167
  %v3608 = vpack.c.b16 %v2177, %v2168
  %v3609 = vpack.c.b16 %v2178, %v2169
  %v3610 = vpack.c.b16 %v2179, %v2170
  %v3611 = vpack.c.b16 %v2180, %v2171
  %v3612 = vpack.c.b16 %v2181, %v2172
  %v3613 = vpack.c.b16 %v2182, %v2173
  %v3614 = vpack.c.b16 %v2192, %v2183
  %v3615 = vpack.c.b16 %v2193, %v2184
  %v3616 = vpack.c.b16 %v2194, %v2185
  %v3617 = vpack.c.b16 %v2195, %v2186
  %v3618 = vpack.c.b16 %v2196, %v2187
  %v3619 = vpack.c.b16 %v2197, %v2188
  %v3620 = vpack.c.b16 %v2198, %v2189
  %v3621 = vpack.c.b16 %v2199, %v2190
  %v3622 = vpack.c.b16 %v2200, %v2191
  %v3623 = vpack.c.b16 %v2210, %v2201
  %v3624 = vpack.c.b16 %v2211, %v2202
  %v3625 = vpack.c.b16 %v2212, %v2203
  %v3626 = vpack.c.b16 %v2213, %v2204
  %v3627 = vpack.c.b16 %v2214, %v2205
  %v3628 = vpack.c.b16 %v2215, %v2206
  %v3629 = vpack.c.b16 %v2216, %v2207
  %v3630 = vpack.c.b16 %v2217, %v2208
  %v3631 = vpack.c.b16 %v2218, %v2209
  %v3632 = vpack.c.b16 %v2228, %v2219
  %v3633 = vpack.c.b16 %v2229, %v2220
  %v3634 = vpack.c.b16 %v2230, %v2221
  %v3635 = vpack.c.b16 %v2231, %v2222
  %v3636 = vpack.c.b16 %v2232, %v2223
  %v3637 = vpack.c.b16 %v2233, %v2224
  %v3638 = vpack.c.b16 %v2234, %v2225
  %v3639 = vpack.c.b16 %v2235, %v2226
  %v3640 = vpack.c.b16 %v2236, %v2227
  %v3641 = vpack.c.b16 %v2246, %v2237
  %v3642 = vpack.c.b16 %v2247, %v2238
  %v3643 = vpack.c.b16 %v2248, %v2239
  %v3644 = vpack.c.b16 %v2249, %v2240
  %v3645 = vpack.c.b16 %v2250, %v2241
  %v3646 = vpack.c.b16 %v2251, %v2242
  %v3647 = vpack.c.b16 %v2252, %v2243
  %v3648 = vpack.c.b16 %v2253, %v2244
  %v3649 = vpack.c.b16 %v2254, %v2245
  %v3650 = vpack.c.b16 %v2264, %v2255
  %v3651 = vpack.c.b16 %v2265, %v2256
  %v3652 = vpack.c.b16 %v2266, %v2257
  %v3653 = vpack.c.b16 %v2267, %v2258
  %v3654 = vpack.c.b16 %v2268, %v2259
  %v3655 = vpack.c.b16 %v2269, %v2260
  %v3656 = vpack.c.b16 %v2270, %v2261
  %v3657 = vpack.c.b16 %v2271, %v2262
  %v3658 = vpack.c.b16 %v2272, %v2263
  %v3659 = vpack.c.b16 %v2282, %v2273
  %v3660 = vpack.c.b16 %v2283, %v2274
  %v3661 = vpack.c.b16 %v2284, %v2275
  %v3662 = vpack.c.b16 %v2285, %v2276
  %v3663 = vpack.c.b16 %v2286, %v2277
  %v3664 = vpack.c.b16 %v2287, %v2278
  %v3665 = vpack.c.b16 %v2288, %v2279
  %v3666 = vpack.c.b16 %v2289, %v2280
  %v3667 = vpack.c.b16 %v2290, %v2281
  %v3668 = vpack.c.b16 %v2300, %v2291
  %v3669 = vpack.c.b16 %v2301, %v2292
  %v3670 = vpack.c.b16 %v2302, %v2293
  %v3671 = vpack.c.b16 %v2303, %v2294
  %v3672 = vpack.c.b16 %v2304, %v2295
  %v3673 = vpack.c.b16 %v2305, %v2296
  %v3674 = vpack.c.b16 %v2306, %v2297
  %v3675 = vpack.c.b16 %v2307, %v2298
  %v3676 = vpack.c.b16 %v2308, %v2299
  %v3677 = vpack.c.b16 %v2318, %v2309
  %v3678 = vpack.c.b16 %v2319, %v2310
  %v3679 = vpack.c.b16 %v2320, %v2311
  %v3680 = vpack.c.b16 %v2321, %v2312
  %v3681 = vpack.c.b16 %v2322, %v2313
  %v3682 = vpack.c.b16 %v2323, %v2314
  %v3683 = vpack.c.b16 %v2324, %v2315
  %v3684 = vpack.c.b16 %v2325, %v2316
  %v3685 = vpack.c.b16 %v2326, %v2317
  %v3686 = vpack.c.b16 %v2336, %v2327
  %v3687 = vpack.c.b16 %v2337, %v2328
  %v3688 = vpack.c.b16 %v2338, %v2329
  %v3689 = vpack.c.b16 %v2339, %v2330
  %v3690 = vpack.c.b16 %v2340, %v2331
  %v3691 = vpack.c.b16 %v2341, %v2332
  %v3692 = vpack.c.b16 %v2342, %v2333
  %v3693 = vpack.c.b16 %v2343, %v2334
  %v3694 = vpack.c.b16 %v2344, %v2335
  %v3695 = vpack.c.b16 %v2354, %v2345
  %v3696 = vpack.c.b16 %v2355, %v2346
  %v3697 = vpack.c.b16 %v2356, %v2347
  %v3698 = vpack.c.b16 %v2357, %v2348
  %v3699 = vpack.c.b16 %v2358, %v2349
  %v3700 = vpack.c.b16 %v2359, %v2350
  %v3701 = vpack.c.b16 %v2360, %v2351
  %v3702 = vpack.c.b16 %v2361, %v2352
  %v3703 = vpack.c.b16 %v2362, %v2353
  %v3704 = vpack.c.b16 %v2372, %v2363
  %v3705 = vpack.c.b16 %v2373, %v2364
  %v3706 = vpack.c.b16 %v2374, %v2365
  %v3707 = vpack.c.b16 %v2375, %v2366
  %v3708 = vpack.c.b16 %v2376, %v2367
  %v3709 = vpack.c.b16 %v2377, %v2368
  %v3710 = vpack.c.b16 %v2378, %v2369
  %v3711 = vpack.c.b16 %v2379, %v2370
  %v3712 = vpack.c.b16 %v2380, %v2371
  %v3713 = vpack.c.b16 %v2390, %v2381
  %v3714 = vpack.c.b16 %v2391, %v2382
  %v3715 = vpack.c.b16 %v2392, %v2383
  %v3716 = vpack.c.b16 %v2393, %v2384
  %v3717 = vpack.c.b16 %v2394, %v2385
  %v3718 = vpack.c.b16 %v2395, %v2386
  %v3719 = vpack.c.b16 %v2396, %v2387
  %v3720 = vpack.c.b16 %v2397, %v2388
  %v3721 = vpack.c.b16 %v2398, %v2389
  %v3722 = vpack.c.b16 %v2408, %v2399
  %v3723 = vpack.c.b16 %v2409, %v2400
  %v3724 = vpack.c.b16 %v2410, %v2401
  %v3725 = vpack.c.b16 %v2411, %v2402
  %v3726 = vpack.c.b16 %v2412, %v2403
  %v3727 = vpack.c.b16 %v2413, %v2404
  %v3728 = vpack.c.b16 %v2414, %v2405
  %v3729 = vpack.c.b16 %v2415, %v2406
  %v3730 = vpack.c.b16 %v2416, %v2407
  %v3731 = vpack.c.b16 %v2426, %v2417
  %v3732 = vpack.c.b16 %v2427, %v2418
  %v3733 = vpack.c.b16 %v2428, %v2419
  %v3734 = vpack.c.b16 %v2429, %v2420
  %v3735 = vpack.c.b16 %v2430, %v2421
  %v3736 = vpack.c.b16 %v2431, %v2422
  %v3737 = vpack.c.b16 %v2432, %v2423
  %v3738 = vpack.c.b16 %v2433, %v2424
  %v3739 = vpack.c.b16 %v2434, %v2425
  %v3740 = vpack.c.b16 %v2444, %v2435
  %v3741 = vpack.c.b16 %v2445, %v2436
  %v3742 = vpack.c.b16 %v2446, %v2437
  %v3743 = vpack.c.b16 %v2447, %v2438
  %v3744 = vpack.c.b16 %v2448, %v2439
  %v3745 = vpack.c.b16 %v2449, %v2440
  %v3746 = vpack.c.b16 %v2450, %v2441
  %v3747 = vpack.c.b16 %v2451, %v2442
  %v3748 = vpack.c.b16 %v2452, %v2443
  %v3749 = vpack.c.b16 %v2462, %v2453
  %v3750 = vpack.c.b16 %v2463, %v2454
  %v3751 = vpack.c.b16 %v2464, %v2455
  %v3752 = vpack.c.b16 %v2465, %v2456
  %v3753 = vpack.c.b16 %v2466, %v2457
  %v3754 = vpack.c.b16 %v2467, %v2458
  %v3755 = vpack.c.b16 %v2468, %v2459
  %v3756 = vpack.c.b16 %v2469, %v2460
  %v3757 = vpack.c.b16 %v2470, %v2461
  %v3758 = vpack.c.b16 %v2480, %v2471
  %v3759 = vpack.c.b16 %v2481, %v2472
  %v3760 = vpack.c.b16 %v2482, %v2473
  %v3761 = vpack.c.b16 %v2483, %v2474
  %v3762 = vpack.c.b16 %v2484, %v2475
  %v3763 = vpack.c.b16 %v2485, %v2476
  %v3764 = vpack.c.b16 %v2486, %v2477
  %v3765 = vpack.c.b16 %v2487, %v2478
  %v3766 = vpack.c.b16 %v2488, %v2479
  %v3767 = vpack.c.b16 %v2498, %v2489
  %v3768 = vpack.c.b16 %v2499, %v2490
  %v3769 = vpack.c.b16 %v2500, %v2491
  %v3770 = vpack.c.b16 %v2501, %v2492
  %v3771 = vpack.c.b16 %v2502, %v2493
  %v3772 = vpack.c.b16 %v2503, %v2494
  %v3773 = vpack.c.b16 %v2504, %v2495
  %v3774 = vpack.c.b16 %v2505, %v2496
  %v3775 = vpack.c.b16 %v2506, %v2497
  %v3776 = vpack.c.b16 %v2516, %v2507
  %v3777 = vpack.c.b16 %v2517, %v2508
  %v3778 = vpack.c.b16 %v2518, %v2509
  %v3779 = vpack.c.b16 %v2519, %v2510
  %v3780 = vpack.c.b16 %v2520, %v2511
  %v3781 = vpack.c.b16 %v2521, %v2512
  %v3782 = vpack.c.b16 %v2522, %v2513
  %v3783 = vpack.c.b16 %v2523, %v2514
  %v3784 = vpack.c.b16 %v2524, %v2515
  %v3785 = vpack.c.b16 %v2534, %v2525
  %v3786 = vpack.c.b16 %v2535, %v2526
  %v3787 = vpack.c.b16 %v2536, %v2527
  %v3788 = vpack.c.b16 %v2537, %v2528
  %v3789 = vpack.c.b16 %v2538, %v2529
  %v3790 = vpack.c.b16 %v2539, %v2530
  %v3791 = vpack.c.b16 %v2540, %v2531
  %v3792 = vpack.c.b16 %v2541, %v2532
  %v3793 = vpack.c.b16 %v2542, %v2533
  %v3794 = vpack.c.b16 %v2552, %v2543
  %v3795 = vpack.c.b16 %v2553, %v2544
  %v3796 = vpack.c.b16 %v2554, %v2545
  %v3797 = vpack.c.b16 %v2555, %v2546
  %v3798 = vpack.c.b16 %v2556, %v2547
  %v3799 = vpack.c.b16 %v2557, %v2548
  %v3800 = vpack.c.b16 %v2558, %v2549
  %v3801 = vpack.c.b16 %v2559, %v2550
  %v3802 = vpack.c.b16 %v2560, %v2551
  %v3803 = vpack.c.b16 %v2570, %v2561
  %v3804 = vpack.c.b16 %v2571, %v2562
  %v3805 = vpack.c.b16 %v2572, %v2563
  %v3806 = vpack.c.b16 %v2573, %v2564
  %v3807 = vpack.c.b16 %v2574, %v2565
  %v3808 = vpack.c.b16 %v2575, %v2566
  %v3809 = vpack.c.b16 %v2576, %v2567
  %v3810 = vpack.c.b16 %v2577, %v2568
  %v3811 = vpack.c.b16 %v2578, %v2569
  %v3812 = vpack.c.b16 %v2588, %v2579
  %v3813 = vpack.c.b16 %v2589, %v2580
  %v3814 = vpack.c.b16 %v2590, %v2581
  %v3815 = vpack.c.b16 %v2591, %v2582
  %v3816 = vpack.c.b16 %v2592, %v2583
  %v3817 = vpack.c.b16 %v2593, %v2584
  %v3818 = vpack.c.b16 %v2594, %v2585
  %v3819 = vpack.c.b16 %v2595, %v2586
  %v3820 = vpack.c.b16 %v2596, %v2587
  %v3821 = vpack.c.b16 %v2606, %v2597
  %v3822 = vpack.c.b16 %v2607, %v2598
  %v3823 = vpack.c.b16 %v2608, %v2599
  %v3824 = vpack.c.b16 %v2609, %v2600
  %v3825 = vpack.c.b16 %v2610, %v2601
  %v3826 = vpack.c.b16 %v2611, %v2602
  %v3827 = vpack.c.b16 %v2612, %v2603
  %v3828 = vpack.c.b16 %v2613, %v2604
  %v3829 = vpack.c.b16 %v2614, %v2605
  %v3830 = vpack.c.b16 %v2624, %v2615
  %v3831 = vpack.c.b16 %v2625, %v2616
  %v3832 = vpack.c.b16 %v2626, %v2617
  %v3833 = vpack.c.b16 %v2627, %v2618
  %v3834 = vpack.c.b16 %v2628, %v2619
  %v3835 = vpack.c.b16 %v2629, %v2620
  %v3836 = vpack.c.b16 %v2630, %v2621
  %v3837 = vpack.c.b16 %v2631, %v2622
  %v3838 = vpack.c.b16 %v2632, %v2623
  %v3839 = vpack.c.b16 %v2642, %v2633
  %v3840 = vpack.c.b16 %v2643, %v2634
  %v3841 = vpack.c.b16 %v2644, %v2635
  %v3842 = vpack.c.b16 %v2645, %v2636
  %v3843 = vpack.c.b16 %v2646, %v2637
  %v3844 = vpack.c.b16 %v2647, %v2638
  %v3845 = vpack.c.b16 %v2648, %v2639
  %v3846 = vpack.c.b16 %v2649, %v2640
  %v3847 = vpack.c.b16 %v2650, %v2641
  %v3848 = vpack.c.b16 %v2660, %v2651
  %v3849 = vpack.c.b16 %v2661, %v2652
  %v3850 = vpack.c.b16 %v2662, %v2653
  %v3851 = vpack.c.b16 %v2663, %v2654
  %v3852 = vpack.c.b16 %v2664, %v2655
  %v3853 = vpack.c.b16 %v2665, %v2656
  %v3854 = vpack.c.b16 %v2666, %v2657
  %v3855 = vpack.c.b16 %v2667, %v2658
  %v3856 = vpack.c.b16 %v2668, %v2659
  %v3857 = vpack.c.b16 %v2678, %v2669
  %v3858 = vpack.c.b16 %v2679, %v2670
  %v3859 = vpack.c.b16 %v2680, %v2671
  %v3860 = vpack.c.b16 %v2681, %v2672
  %v3861 = vpack.c.b16 %v2682, %v2673
  %v3862 = vpack.c.b16 %v2683, %v2674
  %v3863 = vpack.c.b16 %v2684, %v2675
  %v3864 = vpack.c.b16 %v2685, %v2676
  %v3865 = vpack.c.b16 %v2686, %v2677
  %v3866 = vpack.c.b16 %v2696, %v2687
  %v3867 = vpack.c.b16 %v2697, %v2688
  %v3868 = vpack.c.b16 %v2698, %v2689
  %v3869 = vpack.c.b16 %v2699, %v2690
  %v3870 = vpack.c.b16 %v2700, %v2691
  %v3871 = vpack.c.b16 %v2701, %v2692
  %v3872 = vpack.c.b16 %v2702, %v2693
  %v3873 = vpack.c.b16 %v2703, %v2694
  %v3874 = vpack.c.b16 %v2704, %v2695
  %v3875 = vpack.c.b16 %v2714, %v2705
  %v3876 = vpack.c.b16 %v2715, %v2706
  %v3877 = vpack.c.b16 %v2716, %v2707
  %v3878 = vpack.c.b16 %v2717, %v2708
  %v3879 = vpack.c.b16 %v2718, %v2709
  %v3880 = vpack.c.b16 %v2719, %v2710
  %v3881 = vpack.c.b16 %v2720, %v2711
  %v3882 = vpack.c.b16 %v2721, %v2712
  %v3883 = vpack.c.b16 %v2722, %v2713
  %v3884 = vpack.c.b16 %v2732, %v2723
  %v3885 = vpack.c.b16 %v2733, %v2724
  %v3886 = vpack.c.b16 %v2734, %v2725
  %v3887 = vpack.c.b16 %v2735, %v2726
  %v3888 = vpack.c.b16 %v2736, %v2727
  %v3889 = vpack.c.b16 %v2737, %v2728
  %v3890 = vpack.c.b16 %v2738, %v2729
  %v3891 = vpack.c.b16 %v2739, %v2730
  %v3892 = vpack.c.b16 %v2740, %v2731
  %v3893 = vpack.c.b16 %v2750, %v2741
  %v3894 = vpack.c.b16 %v2751, %v2742
  %v3895 = vpack.c.b16 %v2752, %v2743
  %v3896 = vpack.c.b16 %v2753, %v2744
  %v3897 = vpack.c.b16 %v2754, %v2745
  %v3898 = vpack.c.b16 %v2755, %v2746
  %v3899 = vpack.c.b16 %v2756, %v2747
  %v3900 = vpack.c.b16 %v2757, %v2748
  %v3901 = vpack.c.b16 %v2758, %v2749
  %v3902 = vpack.c.b16 %v2768, %v2759
  %v3903 = vpack.c.b16 %v2769, %v2760
  %v3904 = vpack.c.b16 %v2770, %v2761
  %v3905 = vpack.c.b16 %v2771, %v2762
  %v3906 = vpack.c.b16 %v2772, %v2763
  %v3907 = vpack.c.b16 %v2773, %v2764
  %v3908 = vpack.c.b16 %v2774, %v2765
  %v3909 = vpack.c.b16 %v2775, %v2766
  %v3910 = vpack.c.b16 %v2776, %v2767
  %v3911 = vpack.c.b16 %v2786, %v2777
  %v3912 = vpack.c.b16 %v2787, %v2778
  %v3913 = vpack.c.b16 %v2788, %v2779
  %v3914 = vpack.c.b16 %v2789, %v2780
  %v3915 = vpack.c.b16 %v2790, %v2781
  %v3916 = vpack.c.b16 %v2791, %v2782
  %v3917 = vpack.c.b16 %v2792, %v2783
  %v3918 = vpack.c.b16 %v2793, %v2784
  %v3919 = vpack.c.b16 %v2794, %v2785
  %v3920 = vpack.c.b16 %v2804, %v2795
  %v3921 = vpack.c.b16 %v2805, %v2796
  %v3922 = vpack.c.b16 %v2806, %v2797
  %v3923 = vpack.c.b16 %v2807, %v2798
  %v3924 = vpack.c.b16 %v2808, %v2799
  %v3925 = vpack.c.b16 %v2809, %v2800
  %v3926 = vpack.c.b16 %v2810, %v2801
  %v3927 = vpack.c.b16 %v2811, %v2802
  %v3928 = vpack.c.b16 %v2812, %v2803
  %v3929 = vpack.c.b16 %v2822, %v2813
  %v3930 = vpack.c.b16 %v2823, %v2814
  %v3931 = vpack.c.b16 %v2824, %v2815
  %v3932 = vpack.c.b16 %v2825, %v2816
  %v3933 = vpack.c.b16 %v2826, %v2817
  %v3934 = vpack.c.b16 %v2827, %v2818
  %v3935 = vpack.c.b16 %v2828, %v2819
  %v3936 = vpack.c.b16 %v2829, %v2820
  %v3937 = vpack.c.b16 %v2830, %v2821
  %v3938 = vpack.c.b16 %v2840, %v2831
  %v3939 = vpack.c.b16 %v2841, %v2832
  %v3940 = vpack.c.b16 %v2842, %v2833
  %v3941 = vpack.c.b16 %v2843, %v2834
  %v3942 = vpack.c.b16 %v2844, %v2835
  %v3943 = vpack.c.b16 %v2845, %v2836
  %v3944 = vpack.c.b16 %v2846, %v2837
  %v3945 = vpack.c.b16 %v2847, %v2838
  %v3946 = vpack.c.b16 %v2848, %v2839
  %v3947 = vpack.c.b16 %v2858, %v2849
  %v3948 = vpack.c.b16 %v2859, %v2850
  %v3949 = vpack.c.b16 %v2860, %v2851
  %v3950 = vpack.c.b16 %v2861, %v2852
  %v3951 = vpack.c.b16 %v2862, %v2853
  %v3952 = vpack.c.b16 %v2863, %v2854
  %v3953 = vpack.c.b16 %v2864, %v2855
  %v3954 = vpack.c.b16 %v2865, %v2856
  %v3955 = vpack.c.b16 %v2866, %v2857
  %v3956 = vpack.c.b16 %v2876, %v2867
  %v3957 = vpack.c.b16 %v2877, %v2868
  %v3958 = vpack.c.b16 %v2878, %v2869
  %v3959 = vpack.c.b16 %v2879, %v2870
  %v3960 = vpack.c.b16 %v2880, %v2871
  %v3961 = vpack.c.b16 %v2881, %v2872
  %v3962 = vpack.c.b16 %v2882, %v2873
  %v3963 = vpack.c.b16 %v2883, %v2874
  %v3964 = vpack.c.b16 %v2884, %v2875
  %v3965 = vpack.c.b16 %v2894, %v2885
  %v3966 = vpack.c.b16 %v2895, %v2886
  %v3967 = vpack.c.b16 %v2896, %v2887
  %v3968 = vpack.c.b16 %v2897, %v2888
  %v3969 = vpack.c.b16 %v2898, %v2889
  %v3970 = vpack.c.b16 %v2899, %v2890
  %v3971 = vpack.c.b16 %v2900, %v2891
  %v3972 = vpack.c.b16 %v2901, %v2892
  %v3973 = vpack.c.b16 %v2902, %v2893
  %v3974 = vpack.c.b16 %v2912, %v2903
  %v3975 = vpack.c.b16 %v2913, %v2904
  %v3976 = vpack.c.b16 %v2914, %v2905
  %v3977 = vpack.c.b16 %v2915, %v2906
  %v3978 = vpack.c.b16 %v2916, %v2907
  %v3979 = vpack.c.b16 %v2917, %v2908
  %v3980 = vpack.c.b16 %v2918, %v2909
  %v3981 = vpack.c.b16 %v2919, %v2910
  %v3982 = vpack.c.b16 %v2920, %v2911
  %v3983 = vpack.c.b16 %v2930, %v2921
  %v3984 = vpack.c.b16 %v2931, %v2922
  %v3985 = vpack.c.b16 %v2932, %v2923
  %v3986 = vpack.c.b16 %v2933, %v2924
  %v3987 = vpack.c.b16 %v2934, %v2925
  %v3988 = vpack.c.b16 %v2935, %v2926
  %v3989 = vpack.c.b16 %v2936, %v2927
  %v3990 = vpack.c.b16 %v2937, %v2928
  %v3991 = vpack.c.b16 %v2938, %v2929
  %v3992 = vpack.c.b16 %v2948, %v2939
  %v3993 = vpack.c.b16 %v2949, %v2940
  %v3994 = vpack.c.b16 %v2950, %v2941
  %v3995 = vpack.c.b16 %v2951, %v2942
  %v3996 = vpack.c.b16 %v2952, %v2943
  %v3997 = vpack.c.b16 %v2953, %v2944
  %v3998 = vpack.c.b16 %v2954, %v2945
  %v3999 = vpack.c.b16 %v2955, %v2946
  %v4000 = vpack.c.b16 %v2956, %v2947
  %v4001 = vpack.c.b16 %v2966, %v2957
  %v4002 = vpack.c.b16 %v2967, %v2958
  %v4003 = vpack.c.b16 %v2968, %v2959
  %v4004 = vpack.c.b16 %v2969, %v2960
  %v4005 = vpack.c.b16 %v2970, %v2961
  %v4006 = vpack.c.b16 %v2971, %v2962
  %v4007 = vpack.c.b16 %v2972, %v2963
  %v4008 = vpack.c.b16 %v2973, %v2964
  %v4009 = vpack.c.b16 %v2974, %v2965
  %v4010 = vpack.c.b16 %v2984, %v2975
  %v4011 = vpack.c.b16 %v2985, %v2976
  %v4012 = vpack.c.b16 %v2986, %v2977
  %v4013 = vpack.c.b16 %v2987, %v2978
  %v4014 = vpack.c.b16 %v2988, %v2979
  %v4015 = vpack.c.b16 %v2989, %v2980
  %v4016 = vpack.c.b16 %v2990, %v2981
  %v4017 = vpack.c.b16 %v2991, %v2982
  %v4018 = vpack.c.b16 %v2992, %v2983
  %v4019 = vpack.c.b16 %v3002, %v2993
  %v4020 = vpack.c.b16 %v3003, %v2994
  %v4021 = vpack.c.b16 %v3004, %v2995
  %v4022 = vpack.c.b16 %v3005, %v2996
  %v4023 = vpack.c.b16 %v3006, %v2997
  %v4024 = vpack.c.b16 %v3007, %v2998
  %v4025 = vpack.c.b16 %v3008, %v2999
  %v4026 = vpack.c.b16 %v3009, %v3000
  %v4027 = vpack.c.b16 %v3010, %v3001
  %v4028 = vpack.c.b16 %v3020, %v3011
  %v4029 = vpack.c.b16 %v3021, %v3012
  %v4030 = vpack.c.b16 %v3022, %v3013
  %v4031 = vpack.c.b16 %v3023, %v3014
  %v4032 = vpack.c.b16 %v3024, %v3015
  %v4033 = vpack.c.b16 %v3025, %v3016
  %v4034 = vpack.c.b16 %v3026, %v3017
  %v4035 = vpack.c.b16 %v3027, %v3018
  %v4036 = vpack.c.b16 %v3028, %v3019
  %v4037 = vpack.c.b16 %v3038, %v3029
  %v4038 = vpack.c.b16 %v3039, %v3030
  %v4039 = vpack.c.b16 %v3040, %v3031
  %v4040 = vpack.c.b16 %v3041, %v3032
  %v4041 = vpack.c.b16 %v3042, %v3033
  %v4042 = vpack.c.b16 %v3043, %v3034
  %v4043 = vpack.c.b16 %v3044, %v3035
  %v4044 = vpack.c.b16 %v3045, %v3036
  %v4045 = vpack.c.b16 %v3046, %v3037
  %v4046 = vpack.c.b16 %v3056, %v3047
  %v4047 = vpack.c.b16 %v3057, %v3048
  %v4048 = vpack.c.b16 %v3058, %v3049
  %v4049 = vpack.c.b16 %v3059, %v3050
  %v4050 = vpack.c.b16 %v3060, %v3051
  %v4051 = vpack.c.b16 %v3061, %v3052
  %v4052 = vpack.c.b16 %v3062, %v3053
  %v4053 = vpack.c.b16 %v3063, %v3054
  %v4054 = vpack.c.b16 %v3064, %v3055
  %v4055 = vpack.c.b16 %v3074, %v3065
  %v4056 = vpack.c.b16 %v3075, %v3066
  %v4057 = vpack.c.b16 %v3076, %v3067
  %v4058 = vpack.c.b16 %v3077, %v3068
  %v4059 = vpack.c.b16 %v3078, %v3069
  %v4060 = vpack.c.b16 %v3079, %v3070
  %v4061 = vpack.c.b16 %v3080, %v3071
  %v4062 = vpack.c.b16 %v3081, %v3072
  %v4063 = vpack.c.b16 %v3082, %v3073
  %v4064 = vpack.c.b16 %v3092, %v3083
  %v4065 = vpack.c.b16 %v3093, %v3084
  %v4066 = vpack.c.b16 %v3094, %v3085
  %v4067 = vpack.c.b16 %v3095, %v3086
  %v4068 = vpack.c.b16 %v3096, %v3087
  %v4069 = vpack.c.b16 %v3097, %v3088
  %v4070 = vpack.c.b16 %v3098, %v3089
  %v4071 = vpack.c.b16 %v3099, %v3090
  %v4072 = vpack.c.b16 %v3100, %v3091
  %v4073 = vpack.c.b16 %v3110, %v3101
  %v4074 = vpack.c.b16 %v3111, %v3102
  %v4075 = vpack.c.b16 %v3112, %v3103
  %v4076 = vpack.c.b16 %v3113, %v3104
  %v4077 = vpack.c.b16 %v3114, %v3105
  %v4078 = vpack.c.b16 %v3115, %v3106
  %v4079 = vpack.c.b16 %v3116, %v3107
  %v4080 = vpack.c.b16 %v3117, %v3108
  %v4081 = vpack.c.b16 %v3118, %v3109
  %v4082 = vpack.c.b16 %v3128, %v3119
  %v4083 = vpack.c.b16 %v3129, %v3120
  %v4084 = vpack.c.b16 %v3130, %v3121
  %v4085 = vpack.c.b16 %v3131, %v3122
  %v4086 = vpack.c.b16 %v3132, %v3123
  %v4087 = vpack.c.b16 %v3133, %v3124
  %v4088 = vpack.c.b16 %v3134, %v3125
  %v4089 = vpack.c.b16 %v3135, %v3126
  %v4090 = vpack.c.b16 %v3136, %v3127
  %v4091 = vpack.c.b16 %v3146, %v3137
  %v4092 = vpack.c.b16 %v3147, %v3138
  %v4093 = vpack.c.b16 %v3148, %v3139
  %v4094 = vpack.c.b16 %v3149, %v3140
  %v4095 = vpack.c.b16 %v3150, %v3141
  %v4096 = vpack.c.b16 %v3151, %v3142
  %v4097 = vpack.c.b16 %v3152, %v3143
  %v4098 = vpack.c.b16 %v3153, %v3144
  %v4099 = vpack.c.b16 %v3154, %v3145
  %v4100 = vpack.c.b16 %v3164, %v3155
  %v4101 = vpack.c.b16 %v3165, %v3156
  %v4102 = vpack.c.b16 %v3166, %v3157
  %v4103 = vpack.c.b16 %v3167, %v3158
  %v4104 = vpack.c.b16 %v3168, %v3159
  %v4105 = vpack.c.b16 %v3169, %v3160
  %v4106 = vpack.c.b16 %v3170, %v3161
  %v4107 = vpack.c.b16 %v3171, %v3162
  %v4108 = vpack.c.b16 %v3172, %v3163
  %v4109 = vpack.c.b16 %v3182, %v3173
  %v4110 = vpack.c.b16 %v3183, %v3174
  %v4111 = vpack.c.b16 %v3184, %v3175
  %v4112 = vpack.c.b16 %v3185, %v3176
  %v4113 = vpack.c.b16 %v3186, %v3177
  %v4114 = vpack.c.b16 %v3187, %v3178
  %v4115 = vpack.c.b16 %v3188, %v3179
  %v4116 = vpack.c.b16 %v3189, %v3180
  %v4117 = vpack.c.b16 %v3190, %v3181
  %v4118 = vpack.c.b16 %v3200, %v3191
  %v4119 = vpack.c.b16 %v3201, %v3192
  %v4120 = vpack.c.b16 %v3202, %v3193
  %v4121 = vpack.c.b16 %v3203, %v3194
  %v4122 = vpack.c.b16 %v3204, %v3195
  %v4123 = vpack.c.b16 %v3205, %v3196
  %v4124 = vpack.c.b16 %v3206, %v3197
  %v4125 = vpack.c.b16 %v3207, %v3198
  %v4126 = vpack.c.b16 %v3208, %v3199
  %v4127 = vpack.c.b16 %v3218, %v3209
  %v4128 = vpack.c.b16 %v3219, %v3210
  %v4129 = vpack.c.b16 %v3220, %v3211
  %v4130 = vpack.c.b16 %v3221, %v3212
  %v4131 = vpack.c.b16 %v3222, %v3213
  %v4132 = vpack.c.b16 %v3223, %v3214
  %v4133 = vpack.c.b16 %v3224, %v3215
  %v4134 = vpack.c.b16 %v3225, %v3216
  %v4135 = vpack.c.b16 %v3226, %v3217
  %v4136 = vpack.c.b16 %v3236, %v3227
  %v4137 = vpack.c.b16 %v3237, %v3228
  %v4138 = vpack.c.b16 %v3238, %v3229
  %v4139 = vpack.c.b16 %v3239, %v3230
  %v4140 = vpack.c.b16 %v3240, %v3231
  %v4141 = vpack.c.b16 %v3241, %v3232
  %v4142 = vpack.c.b16 %v3242, %v3233
  %v4143 = vpack.c.b16 %v3243, %v3234
  %v4144 = vpack.c.b16 %v3244, %v3235
  %v4145 = vpack.c.b16 %v3254, %v3245
  %v4146 = vpack.c.b16 %v3255, %v3246
  %v4147 = vpack.c.b16 %v3256, %v3247
  %v4148 = vpack.c.b16 %v3257, %v3248
  %v4149 = vpack.c.b16 %v3258, %v3249
  %v4150 = vpack.c.b16 %v3259, %v3250
  %v4151 = vpack.c.b16 %v3260, %v3251
  %v4152 = vpack.c.b16 %v3261, %v3252
  %v4153 = vpack.c.b16 %v3262, %v3253
  %v4154 = vpack.c.b16 %v3272, %v3263
  %v4155 = vpack.c.b16 %v3273, %v3264
  %v4156 = vpack.c.b16 %v3274, %v3265
  %v4157 = vpack.c.b16 %v3275, %v3266
  %v4158 = vpack.c.b16 %v3276, %v3267
  %v4159 = vpack.c.b16 %v3277, %v3268
  %v4160 = vpack.c.b16 %v3278, %v3269
  %v4161 = vpack.c.b16 %v3279, %v3270
  %v4162 = vpack.c.b16 %v3280, %v3271
  %v4163 = vpack.c.b16 %v3290, %v3281
  %v4164 = vpack.c.b16 %v3291, %v3282
  %v4165 = vpack.c.b16 %v3292, %v3283
  %v4166 = vpack.c.b16 %v3293, %v3284
  %v4167 = vpack.c.b16 %v3294, %v3285
  %v4168 = vpack.c.b16 %v3295, %v3286
  %v4169 = vpack.c.b16 %v3296, %v3287
  %v4170 = vpack.c.b16 %v3297, %v3288
  %v4171 = vpack.c.b16 %v3298, %v3289
  %v4172 = vpack.c.b16 %v3308, %v3299
  %v4173 = vpack.c.b16 %v3309, %v3300
  %v4174 = vpack.c.b16 %v3310, %v3301
  %v4175 = vpack.c.b16 %v3311, %v3302
  %v4176 = vpack.c.b16 %v3312, %v3303
  %v4177 = vpack.c.b16 %v3313, %v3304
  %v4178 = vpack.c.b16 %v3314, %v3305
  %v4179 = vpack.c.b16 %v3315, %v3306
  %v4180 = vpack.c.b16 %v3316, %v3307
  %v4181 = vpack.c.b16 %v3326, %v3317
  %v4182 = vpack.c.b16 %v3327, %v3318
  %v4183 = vpack.c.b16 %v3328, %v3319
  %v4184 = vpack.c.b16 %v3329, %v3320
  %v4185 = vpack.c.b16 %v3330, %v3321
  %v4186 = vpack.c.b16 %v3331, %v3322
  %v4187 = vpack.c.b16 %v3332, %v3323
  %v4188 = vpack.c.b16 %v3333, %v3324
  %v4189 = vpack.c.b16 %v3334, %v3325
  %v4190 = vpack.c.b16 %v3344, %v3335
  %v4191 = vpack.c.b16 %v3345, %v3336
  %v4192 = vpack.c.b16 %v3346, %v3337
  %v4193 = vpack.c.b16 %v3347, %v3338
  %v4194 = vpack.c.b16 %v3348, %v3339
  %v4195 = vpack.c.b16 %v3349, %v3340
  %v4196 = vpack.c.b16 %v3350, %v3341
  %v4197 = vpack.c.b16 %v3351, %v3342
  %v4198 = vpack.c.b16 %v3352, %v3343
  %v4199 = vpack.c.b16 %v3362, %v3353
  %v4200 = vpack.c.b16 %v3363, %v3354
  %v4201 = vpack.c.b16 %v3364, %v3355
  %v4202 = vpack.c.b16 %v3365, %v3356
  %v4203 = vpack.c.b16 %v3366, %v3357
  %v4204 = vpack.c.b16 %v3367, %v3358
  %v4205 = vpack.c.b16 %v3368, %v3359
  %v4206 = vpack.c.b16 %v3369, %v3360
  %v4207 = vpack.c.b16 %v3370, %v3361
  %v4208 = vpack.c.b16 %v3380, %v3371
  %v4209 = vpack.c.b16 %v3381, %v3372
  %v4210 = vpack.c.b16 %v3382, %v3373
  %v4211 = vpack.c.b16 %v3383, %v3374
  %v4212 = vpack.c.b16 %v3384, %v3375
  %v4213 = vpack.c.b16 %v3385, %v3376
  %v4214 = vpack.c.b16 %v3386, %v3377
  %v4215 = vpack.c.b16 %v3387, %v3378
  %v4216 = vpack.c.b16 %v3388, %v3379
  %v4217 = vpack.c.b16 %v3398, %v3389
  %v4218 = vpack.c.b16 %v3399, %v3390
  %v4219 = vpack.c.b16 %v3400, %v3391
  %v4220 = vpack.c.b16 %v3401, %v3392
  %v4221 = vpack.c.b16 %v3402, %v3393
  %v4222 = vpack.c.b16 %v3403, %v3394
  %v4223 = vpack.c.b16 %v3404, %v3395
  %v4224 = vpack.c.b16 %v3405, %v3396
  %v4225 = vpack.c.b16 %v3406, %v3397
  %v4226 = vpack.c.b16 %v3416, %v3407
  %v4227 = vpack.c.b16 %v3417, %v3408
  %v4228 = vpack.c.b16 %v3418, %v3409
  %v4229 = vpack.c.b16 %v3419, %v3410
  %v4230 = vpack.c.b16 %v3420, %v3411
  %v4231 = vpack.c.b16 %v3421, %v3412
  %v4232 = vpack.c.b16 %v3422, %v3413
  %v4233 = vpack.c.b16 %v3423, %v3414
  %v4234 = vpack.c.b16 %v3424, %v3415
  %v4235 = vpack.c.b16 %v3434, %v3425
  %v4236 = vpack.c.b16 %v3435, %v3426
  %v4237 = vpack.c.b16 %v3436, %v3427
  %v4238 = vpack.c.b16 %v3437, %v3428
  %v4239 = vpack.c.b16 %v3438, %v3429
  %v4240 = vpack.c.b16 %v3439, %v3430
  %v4241 = vpack.c.b16 %v3440, %v3431
  %v4242 = vpack.c.b16 %v3441, %v3432
  %v4243 = vpack.c.b16 %v3442, %v3433
  %v4244 = vpack.c.b16 %v3452, %v3443
  %v4245 = vpack.c.b16 %v3453, %v3444
  %v4246 = vpack.c.b16 %v3454, %v3445
  %v4247 = vpack.c.b16 %v3455, %v3446
  %v4248 = vpack.c.b16 %v3456, %v3447
  %v4249 = vpack.c.b16 %v3457, %v3448
  %v4250 = vpack.c.b16 %v3458, %v3449
  %v4251 = vpack.c.b16 %v3459, %v3450
  %v4252 = vpack.c.b16 %v3460, %v3451
  %5045 = vmatpush.bf16.msra.mxu0 %v3524
  %5046 = vmatpush.bf16.msra.mxu0 %v3515
  %5047 = vmatpush.bf16.msra.mxu0 %v3506
  %5048 = vmatpush.bf16.msra.mxu0 %v3497
  %5049 = vmatpush.bf16.msra.mxu0 %v3488
  %5050 = vmatpush.bf16.msra.mxu0 %v3479
  %5051 = vmatpush.bf16.msra.mxu0 %v3470
  %5052 = vmatpush.bf16.msra.mxu0 %v3461
  %5053 = vmatmul.bf16.gmra.mxu0 %v975
  %v5054 = vpop.f32.mrf.mxu0
  %v5055 = vadd.f32 %v923, %v5054
  %v5056 = vpop.f32.mrf.mxu0
  %v5057 = vadd.f32 %v923, %v5056
  %5058 = vdwg.mxu0
  %5059 = vmatpush.bf16.msra.mxu0 %v3596
  %5060 = vmatpush.bf16.msra.mxu0 %v3587
  %5061 = vmatpush.bf16.msra.mxu0 %v3578
  %5062 = vmatpush.bf16.msra.mxu0 %v3569
  %5063 = vmatpush.bf16.msra.mxu0 %v3560
  %5064 = vmatpush.bf16.msra.mxu0 %v3551
  %5065 = vmatpush.bf16.msra.mxu0 %v3542
  %5066 = vmatpush.bf16.msra.mxu0 %v3533
  %5067 = vmatmul.bf16.gmra.mxu0 %v976
  %v5068 = vpop.f32.mrf.mxu0
  %v5069 = vadd.f32 %v5055, %v5068
  %v5070 = vpop.f32.mrf.mxu0
  %v5071 = vadd.f32 %v5057, %v5070
  %5072 = vdwg.mxu0
  %5073 = vmatpush.bf16.msra.mxu0 %v3668
  %5074 = vmatpush.bf16.msra.mxu0 %v3659
  %5075 = vmatpush.bf16.msra.mxu0 %v3650
  %5076 = vmatpush.bf16.msra.mxu0 %v3641
  %5077 = vmatpush.bf16.msra.mxu0 %v3632
  %5078 = vmatpush.bf16.msra.mxu0 %v3623
  %5079 = vmatpush.bf16.msra.mxu0 %v3614
  %5080 = vmatpush.bf16.msra.mxu0 %v3605
  %5081 = vmatmul.bf16.gmra.mxu0 %v977
  %v5082 = vpop.f32.mrf.mxu0
  %v5083 = vadd.f32 %v5069, %v5082
  %v5084 = vpop.f32.mrf.mxu0
  %v5085 = vadd.f32 %v5071, %v5084
  %5086 = vdwg.mxu0
  %5087 = vmatpush.bf16.msra.mxu0 %v3740
  %5088 = vmatpush.bf16.msra.mxu0 %v3731
  %5089 = vmatpush.bf16.msra.mxu0 %v3722
  %5090 = vmatpush.bf16.msra.mxu0 %v3713
  %5091 = vmatpush.bf16.msra.mxu0 %v3704
  %5092 = vmatpush.bf16.msra.mxu0 %v3695
  %5093 = vmatpush.bf16.msra.mxu0 %v3686
  %5094 = vmatpush.bf16.msra.mxu0 %v3677
  %5095 = vmatmul.bf16.gmra.mxu0 %v978
  %v5096 = vpop.f32.mrf.mxu0
  %v5097 = vadd.f32 %v5083, %v5096
  %v5098 = vpop.f32.mrf.mxu0
  %v5099 = vadd.f32 %v5085, %v5098
  %5100 = vdwg.mxu0
  %5101 = vmatpush.bf16.msra.mxu0 %v3812
  %5102 = vmatpush.bf16.msra.mxu0 %v3803
  %5103 = vmatpush.bf16.msra.mxu0 %v3794
  %5104 = vmatpush.bf16.msra.mxu0 %v3785
  %5105 = vmatpush.bf16.msra.mxu0 %v3776
  %5106 = vmatpush.bf16.msra.mxu0 %v3767
  %5107 = vmatpush.bf16.msra.mxu0 %v3758
  %5108 = vmatpush.bf16.msra.mxu0 %v3749
  %5109 = vmatmul.bf16.gmra.mxu0 %v979
  %v5110 = vpop.f32.mrf.mxu0
  %v5111 = vadd.f32 %v5097, %v5110
  %v5112 = vpop.f32.mrf.mxu0
  %v5113 = vadd.f32 %v5099, %v5112
  %5114 = vdwg.mxu0
  %5115 = vmatpush.bf16.msra.mxu0 %v3884
  %5116 = vmatpush.bf16.msra.mxu0 %v3875
  %5117 = vmatpush.bf16.msra.mxu0 %v3866
  %5118 = vmatpush.bf16.msra.mxu0 %v3857
  %5119 = vmatpush.bf16.msra.mxu0 %v3848
  %5120 = vmatpush.bf16.msra.mxu0 %v3839
  %5121 = vmatpush.bf16.msra.mxu0 %v3830
  %5122 = vmatpush.bf16.msra.mxu0 %v3821
  %5123 = vmatmul.bf16.gmra.mxu0 %v980
  %v5124 = vpop.f32.mrf.mxu0
  %v5125 = vadd.f32 %v5111, %v5124
  %v5126 = vpop.f32.mrf.mxu0
  %v5127 = vadd.f32 %v5113, %v5126
  %5128 = vdwg.mxu0
  %5129 = vmatpush.bf16.msra.mxu0 %v3956
  %5130 = vmatpush.bf16.msra.mxu0 %v3947
  %5131 = vmatpush.bf16.msra.mxu0 %v3938
  %5132 = vmatpush.bf16.msra.mxu0 %v3929
  %5133 = vmatpush.bf16.msra.mxu0 %v3920
  %5134 = vmatpush.bf16.msra.mxu0 %v3911
  %5135 = vmatpush.bf16.msra.mxu0 %v3902
  %5136 = vmatpush.bf16.msra.mxu0 %v3893
  %5137 = vmatmul.bf16.gmra.mxu0 %v981
  %v5138 = vpop.f32.mrf.mxu0
  %v5139 = vadd.f32 %v5125, %v5138
  %v5140 = vpop.f32.mrf.mxu0
  %v5141 = vadd.f32 %v5127, %v5140
  %5142 = vdwg.mxu0
  %5143 = vmatpush.bf16.msra.mxu0 %v4028
  %5144 = vmatpush.bf16.msra.mxu0 %v4019
  %5145 = vmatpush.bf16.msra.mxu0 %v4010
  %5146 = vmatpush.bf16.msra.mxu0 %v4001
  %5147 = vmatpush.bf16.msra.mxu0 %v3992
  %5148 = vmatpush.bf16.msra.mxu0 %v3983
  %5149 = vmatpush.bf16.msra.mxu0 %v3974
  %5150 = vmatpush.bf16.msra.mxu0 %v3965
  %5151 = vmatmul.bf16.gmra.mxu0 %v982
  %v5152 = vpop.f32.mrf.mxu0
  %v5153 = vadd.f32 %v5139, %v5152
  %v5154 = vpop.f32.mrf.mxu0
  %v5155 = vadd.f32 %v5141, %v5154
  %5156 = vdwg.mxu0
  %5157 = vmatpush.bf16.msra.mxu0 %v4100
  %5158 = vmatpush.bf16.msra.mxu0 %v4091
  %5159 = vmatpush.bf16.msra.mxu0 %v4082
  %5160 = vmatpush.bf16.msra.mxu0 %v4073
  %5161 = vmatpush.bf16.msra.mxu0 %v4064
  %5162 = vmatpush.bf16.msra.mxu0 %v4055
  %5163 = vmatpush.bf16.msra.mxu0 %v4046
  %5164 = vmatpush.bf16.msra.mxu0 %v4037
  %5165 = vmatmul.bf16.gmra.mxu0 %v983
  %v5166 = vpop.f32.mrf.mxu0
  %v5167 = vadd.f32 %v5153, %v5166
  %v5168 = vpop.f32.mrf.mxu0
  %v5169 = vadd.f32 %v5155, %v5168
  %5170 = vdwg.mxu0
  %5171 = vmatpush.bf16.msra.mxu0 %v4172
  %5172 = vmatpush.bf16.msra.mxu0 %v4163
  %5173 = vmatpush.bf16.msra.mxu0 %v4154
  %5174 = vmatpush.bf16.msra.mxu0 %v4145
  %5175 = vmatpush.bf16.msra.mxu0 %v4136
  %5176 = vmatpush.bf16.msra.mxu0 %v4127
  %5177 = vmatpush.bf16.msra.mxu0 %v4118
  %5178 = vmatpush.bf16.msra.mxu0 %v4109
  %5179 = vmatmul.bf16.gmra.mxu0 %v984
  %v5180 = vpop.f32.mrf.mxu0
  %v5181 = vadd.f32 %v5167, %v5180
  %v5182 = vpop.f32.mrf.mxu0
  %v5183 = vadd.f32 %v5169, %v5182
  %5184 = vdwg.mxu0
  %5185 = vmatpush.bf16.msra.mxu0 %v4244
  %5186 = vmatpush.bf16.msra.mxu0 %v4235
  %5187 = vmatpush.bf16.msra.mxu0 %v4226
  %5188 = vmatpush.bf16.msra.mxu0 %v4217
  %5189 = vmatpush.bf16.msra.mxu0 %v4208
  %5190 = vmatpush.bf16.msra.mxu0 %v4199
  %5191 = vmatpush.bf16.msra.mxu0 %v4190
  %5192 = vmatpush.bf16.msra.mxu0 %v4181
  %5193 = vmatmul.bf16.gmra.mxu0 %v985
  %v5194 = vpop.f32.mrf.mxu0
  %v5195 = vadd.f32 %v5181, %v5194
  %v5196 = vpop.f32.mrf.mxu0
  %v5197 = vadd.f32 %v5183, %v5196
  %5198 = vdwg.mxu0
  %5199 = vmatpush.bf16.msra.mxu0 %v3525
  %5200 = vmatpush.bf16.msra.mxu0 %v3516
  %5201 = vmatpush.bf16.msra.mxu0 %v3507
  %5202 = vmatpush.bf16.msra.mxu0 %v3498
  %5203 = vmatpush.bf16.msra.mxu0 %v3489
  %5204 = vmatpush.bf16.msra.mxu0 %v3480
  %5205 = vmatpush.bf16.msra.mxu0 %v3471
  %5206 = vmatpush.bf16.msra.mxu0 %v3462
  %5207 = vmatmul.bf16.gmra.mxu0 %v975
  %v5208 = vpop.f32.mrf.mxu0
  %v5209 = vadd.f32 %v924, %v5208
  %v5210 = vpop.f32.mrf.mxu0
  %v5211 = vadd.f32 %v924, %v5210
  %5212 = vdwg.mxu0
  %5213 = vmatpush.bf16.msra.mxu0 %v3597
  %5214 = vmatpush.bf16.msra.mxu0 %v3588
  %5215 = vmatpush.bf16.msra.mxu0 %v3579
  %5216 = vmatpush.bf16.msra.mxu0 %v3570
  %5217 = vmatpush.bf16.msra.mxu0 %v3561
  %5218 = vmatpush.bf16.msra.mxu0 %v3552
  %5219 = vmatpush.bf16.msra.mxu0 %v3543
  %5220 = vmatpush.bf16.msra.mxu0 %v3534
  %5221 = vmatmul.bf16.gmra.mxu0 %v976
  %v5222 = vpop.f32.mrf.mxu0
  %v5223 = vadd.f32 %v5209, %v5222
  %v5224 = vpop.f32.mrf.mxu0
  %v5225 = vadd.f32 %v5211, %v5224
  %5226 = vdwg.mxu0
  %5227 = vmatpush.bf16.msra.mxu0 %v3669
  %5228 = vmatpush.bf16.msra.mxu0 %v3660
  %5229 = vmatpush.bf16.msra.mxu0 %v3651
  %5230 = vmatpush.bf16.msra.mxu0 %v3642
  %5231 = vmatpush.bf16.msra.mxu0 %v3633
  %5232 = vmatpush.bf16.msra.mxu0 %v3624
  %5233 = vmatpush.bf16.msra.mxu0 %v3615
  %5234 = vmatpush.bf16.msra.mxu0 %v3606
  %5235 = vmatmul.bf16.gmra.mxu0 %v977
  %v5236 = vpop.f32.mrf.mxu0
  %v5237 = vadd.f32 %v5223, %v5236
  %v5238 = vpop.f32.mrf.mxu0
  %v5239 = vadd.f32 %v5225, %v5238
  %5240 = vdwg.mxu0
  %5241 = vmatpush.bf16.msra.mxu0 %v3741
  %5242 = vmatpush.bf16.msra.mxu0 %v3732
  %5243 = vmatpush.bf16.msra.mxu0 %v3723
  %5244 = vmatpush.bf16.msra.mxu0 %v3714
  %5245 = vmatpush.bf16.msra.mxu0 %v3705
  %5246 = vmatpush.bf16.msra.mxu0 %v3696
  %5247 = vmatpush.bf16.msra.mxu0 %v3687
  %5248 = vmatpush.bf16.msra.mxu0 %v3678
  %5249 = vmatmul.bf16.gmra.mxu0 %v978
  %v5250 = vpop.f32.mrf.mxu0
  %v5251 = vadd.f32 %v5237, %v5250
  %v5252 = vpop.f32.mrf.mxu0
  %v5253 = vadd.f32 %v5239, %v5252
  %5254 = vdwg.mxu0
  %5255 = vmatpush.bf16.msra.mxu0 %v3813
  %5256 = vmatpush.bf16.msra.mxu0 %v3804
  %5257 = vmatpush.bf16.msra.mxu0 %v3795
  %5258 = vmatpush.bf16.msra.mxu0 %v3786
  %5259 = vmatpush.bf16.msra.mxu0 %v3777
  %5260 = vmatpush.bf16.msra.mxu0 %v3768
  %5261 = vmatpush.bf16.msra.mxu0 %v3759
  %5262 = vmatpush.bf16.msra.mxu0 %v3750
  %5263 = vmatmul.bf16.gmra.mxu0 %v979
  %v5264 = vpop.f32.mrf.mxu0
  %v5265 = vadd.f32 %v5251, %v5264
  %v5266 = vpop.f32.mrf.mxu0
  %v5267 = vadd.f32 %v5253, %v5266
  %5268 = vdwg.mxu0
  %5269 = vmatpush.bf16.msra.mxu0 %v3885
  %5270 = vmatpush.bf16.msra.mxu0 %v3876
  %5271 = vmatpush.bf16.msra.mxu0 %v3867
  %5272 = vmatpush.bf16.msra.mxu0 %v3858
  %5273 = vmatpush.bf16.msra.mxu0 %v3849
  %5274 = vmatpush.bf16.msra.mxu0 %v3840
  %5275 = vmatpush.bf16.msra.mxu0 %v3831
  %5276 = vmatpush.bf16.msra.mxu0 %v3822
  %5277 = vmatmul.bf16.gmra.mxu0 %v980
  %v5278 = vpop.f32.mrf.mxu0
  %v5279 = vadd.f32 %v5265, %v5278
  %v5280 = vpop.f32.mrf.mxu0
  %v5281 = vadd.f32 %v5267, %v5280
  %5282 = vdwg.mxu0
  %5283 = vmatpush.bf16.msra.mxu0 %v3957
  %5284 = vmatpush.bf16.msra.mxu0 %v3948
  %5285 = vmatpush.bf16.msra.mxu0 %v3939
  %5286 = vmatpush.bf16.msra.mxu0 %v3930
  %5287 = vmatpush.bf16.msra.mxu0 %v3921
  %5288 = vmatpush.bf16.msra.mxu0 %v3912
  %5289 = vmatpush.bf16.msra.mxu0 %v3903
  %5290 = vmatpush.bf16.msra.mxu0 %v3894
  %5291 = vmatmul.bf16.gmra.mxu0 %v981
  %v5292 = vpop.f32.mrf.mxu0
  %v5293 = vadd.f32 %v5279, %v5292
  %v5294 = vpop.f32.mrf.mxu0
  %v5295 = vadd.f32 %v5281, %v5294
  %5296 = vdwg.mxu0
  %5297 = vmatpush.bf16.msra.mxu0 %v4029
  %5298 = vmatpush.bf16.msra.mxu0 %v4020
  %5299 = vmatpush.bf16.msra.mxu0 %v4011
  %5300 = vmatpush.bf16.msra.mxu0 %v4002
  %5301 = vmatpush.bf16.msra.mxu0 %v3993
  %5302 = vmatpush.bf16.msra.mxu0 %v3984
  %5303 = vmatpush.bf16.msra.mxu0 %v3975
  %5304 = vmatpush.bf16.msra.mxu0 %v3966
  %5305 = vmatmul.bf16.gmra.mxu0 %v982
  %v5306 = vpop.f32.mrf.mxu0
  %v5307 = vadd.f32 %v5293, %v5306
  %v5308 = vpop.f32.mrf.mxu0
  %v5309 = vadd.f32 %v5295, %v5308
  %5310 = vdwg.mxu0
  %5311 = vmatpush.bf16.msra.mxu0 %v4101
  %5312 = vmatpush.bf16.msra.mxu0 %v4092
  %5313 = vmatpush.bf16.msra.mxu0 %v4083
  %5314 = vmatpush.bf16.msra.mxu0 %v4074
  %5315 = vmatpush.bf16.msra.mxu0 %v4065
  %5316 = vmatpush.bf16.msra.mxu0 %v4056
  %5317 = vmatpush.bf16.msra.mxu0 %v4047
  %5318 = vmatpush.bf16.msra.mxu0 %v4038
  %5319 = vmatmul.bf16.gmra.mxu0 %v983
  %v5320 = vpop.f32.mrf.mxu0
  %v5321 = vadd.f32 %v5307, %v5320
  %v5322 = vpop.f32.mrf.mxu0
  %v5323 = vadd.f32 %v5309, %v5322
  %5324 = vdwg.mxu0
  %5325 = vmatpush.bf16.msra.mxu0 %v4173
  %5326 = vmatpush.bf16.msra.mxu0 %v4164
  %5327 = vmatpush.bf16.msra.mxu0 %v4155
  %5328 = vmatpush.bf16.msra.mxu0 %v4146
  %5329 = vmatpush.bf16.msra.mxu0 %v4137
  %5330 = vmatpush.bf16.msra.mxu0 %v4128
  %5331 = vmatpush.bf16.msra.mxu0 %v4119
  %5332 = vmatpush.bf16.msra.mxu0 %v4110
  %5333 = vmatmul.bf16.gmra.mxu0 %v984
  %v5334 = vpop.f32.mrf.mxu0
  %v5335 = vadd.f32 %v5321, %v5334
  %v5336 = vpop.f32.mrf.mxu0
  %v5337 = vadd.f32 %v5323, %v5336
  %5338 = vdwg.mxu0
  %5339 = vmatpush.bf16.msra.mxu0 %v4245
  %5340 = vmatpush.bf16.msra.mxu0 %v4236
  %5341 = vmatpush.bf16.msra.mxu0 %v4227
  %5342 = vmatpush.bf16.msra.mxu0 %v4218
  %5343 = vmatpush.bf16.msra.mxu0 %v4209
  %5344 = vmatpush.bf16.msra.mxu0 %v4200
  %5345 = vmatpush.bf16.msra.mxu0 %v4191
  %5346 = vmatpush.bf16.msra.mxu0 %v4182
  %5347 = vmatmul.bf16.gmra.mxu0 %v985
  %v5348 = vpop.f32.mrf.mxu0
  %v5349 = vadd.f32 %v5335, %v5348
  %v5350 = vpop.f32.mrf.mxu0
  %v5351 = vadd.f32 %v5337, %v5350
  %5352 = vdwg.mxu0
  %5353 = vmatpush.bf16.msra.mxu0 %v3526
  %5354 = vmatpush.bf16.msra.mxu0 %v3517
  %5355 = vmatpush.bf16.msra.mxu0 %v3508
  %5356 = vmatpush.bf16.msra.mxu0 %v3499
  %5357 = vmatpush.bf16.msra.mxu0 %v3490
  %5358 = vmatpush.bf16.msra.mxu0 %v3481
  %5359 = vmatpush.bf16.msra.mxu0 %v3472
  %5360 = vmatpush.bf16.msra.mxu0 %v3463
  %5361 = vmatmul.bf16.gmra.mxu0 %v975
  %v5362 = vpop.f32.mrf.mxu0
  %v5363 = vadd.f32 %v925, %v5362
  %v5364 = vpop.f32.mrf.mxu0
  %v5365 = vadd.f32 %v925, %v5364
  %5366 = vdwg.mxu0
  %5367 = vmatpush.bf16.msra.mxu0 %v3598
  %5368 = vmatpush.bf16.msra.mxu0 %v3589
  %5369 = vmatpush.bf16.msra.mxu0 %v3580
  %5370 = vmatpush.bf16.msra.mxu0 %v3571
  %5371 = vmatpush.bf16.msra.mxu0 %v3562
  %5372 = vmatpush.bf16.msra.mxu0 %v3553
  %5373 = vmatpush.bf16.msra.mxu0 %v3544
  %5374 = vmatpush.bf16.msra.mxu0 %v3535
  %5375 = vmatmul.bf16.gmra.mxu0 %v976
  %v5376 = vpop.f32.mrf.mxu0
  %v5377 = vadd.f32 %v5363, %v5376
  %v5378 = vpop.f32.mrf.mxu0
  %v5379 = vadd.f32 %v5365, %v5378
  %5380 = vdwg.mxu0
  %5381 = vmatpush.bf16.msra.mxu0 %v3670
  %5382 = vmatpush.bf16.msra.mxu0 %v3661
  %5383 = vmatpush.bf16.msra.mxu0 %v3652
  %5384 = vmatpush.bf16.msra.mxu0 %v3643
  %5385 = vmatpush.bf16.msra.mxu0 %v3634
  %5386 = vmatpush.bf16.msra.mxu0 %v3625
  %5387 = vmatpush.bf16.msra.mxu0 %v3616
  %5388 = vmatpush.bf16.msra.mxu0 %v3607
  %5389 = vmatmul.bf16.gmra.mxu0 %v977
  %v5390 = vpop.f32.mrf.mxu0
  %v5391 = vadd.f32 %v5377, %v5390
  %v5392 = vpop.f32.mrf.mxu0
  %v5393 = vadd.f32 %v5379, %v5392
  %5394 = vdwg.mxu0
  %5395 = vmatpush.bf16.msra.mxu0 %v3742
  %5396 = vmatpush.bf16.msra.mxu0 %v3733
  %5397 = vmatpush.bf16.msra.mxu0 %v3724
  %5398 = vmatpush.bf16.msra.mxu0 %v3715
  %5399 = vmatpush.bf16.msra.mxu0 %v3706
  %5400 = vmatpush.bf16.msra.mxu0 %v3697
  %5401 = vmatpush.bf16.msra.mxu0 %v3688
  %5402 = vmatpush.bf16.msra.mxu0 %v3679
  %5403 = vmatmul.bf16.gmra.mxu0 %v978
  %v5404 = vpop.f32.mrf.mxu0
  %v5405 = vadd.f32 %v5391, %v5404
  %v5406 = vpop.f32.mrf.mxu0
  %v5407 = vadd.f32 %v5393, %v5406
  %5408 = vdwg.mxu0
  %5409 = vmatpush.bf16.msra.mxu0 %v3814
  %5410 = vmatpush.bf16.msra.mxu0 %v3805
  %5411 = vmatpush.bf16.msra.mxu0 %v3796
  %5412 = vmatpush.bf16.msra.mxu0 %v3787
  %5413 = vmatpush.bf16.msra.mxu0 %v3778
  %5414 = vmatpush.bf16.msra.mxu0 %v3769
  %5415 = vmatpush.bf16.msra.mxu0 %v3760
  %5416 = vmatpush.bf16.msra.mxu0 %v3751
  %5417 = vmatmul.bf16.gmra.mxu0 %v979
  %v5418 = vpop.f32.mrf.mxu0
  %v5419 = vadd.f32 %v5405, %v5418
  %v5420 = vpop.f32.mrf.mxu0
  %v5421 = vadd.f32 %v5407, %v5420
  %5422 = vdwg.mxu0
  %5423 = vmatpush.bf16.msra.mxu0 %v3886
  %5424 = vmatpush.bf16.msra.mxu0 %v3877
  %5425 = vmatpush.bf16.msra.mxu0 %v3868
  %5426 = vmatpush.bf16.msra.mxu0 %v3859
  %5427 = vmatpush.bf16.msra.mxu0 %v3850
  %5428 = vmatpush.bf16.msra.mxu0 %v3841
  %5429 = vmatpush.bf16.msra.mxu0 %v3832
  %5430 = vmatpush.bf16.msra.mxu0 %v3823
  %5431 = vmatmul.bf16.gmra.mxu0 %v980
  %v5432 = vpop.f32.mrf.mxu0
  %v5433 = vadd.f32 %v5419, %v5432
  %v5434 = vpop.f32.mrf.mxu0
  %v5435 = vadd.f32 %v5421, %v5434
  %5436 = vdwg.mxu0
  %5437 = vmatpush.bf16.msra.mxu0 %v3958
  %5438 = vmatpush.bf16.msra.mxu0 %v3949
  %5439 = vmatpush.bf16.msra.mxu0 %v3940
  %5440 = vmatpush.bf16.msra.mxu0 %v3931
  %5441 = vmatpush.bf16.msra.mxu0 %v3922
  %5442 = vmatpush.bf16.msra.mxu0 %v3913
  %5443 = vmatpush.bf16.msra.mxu0 %v3904
  %5444 = vmatpush.bf16.msra.mxu0 %v3895
  %5445 = vmatmul.bf16.gmra.mxu0 %v981
  %v5446 = vpop.f32.mrf.mxu0
  %v5447 = vadd.f32 %v5433, %v5446
  %v5448 = vpop.f32.mrf.mxu0
  %v5449 = vadd.f32 %v5435, %v5448
  %5450 = vdwg.mxu0
  %5451 = vmatpush.bf16.msra.mxu0 %v4030
  %5452 = vmatpush.bf16.msra.mxu0 %v4021
  %5453 = vmatpush.bf16.msra.mxu0 %v4012
  %5454 = vmatpush.bf16.msra.mxu0 %v4003
  %5455 = vmatpush.bf16.msra.mxu0 %v3994
  %5456 = vmatpush.bf16.msra.mxu0 %v3985
  %5457 = vmatpush.bf16.msra.mxu0 %v3976
  %5458 = vmatpush.bf16.msra.mxu0 %v3967
  %5459 = vmatmul.bf16.gmra.mxu0 %v982
  %v5460 = vpop.f32.mrf.mxu0
  %v5461 = vadd.f32 %v5447, %v5460
  %v5462 = vpop.f32.mrf.mxu0
  %v5463 = vadd.f32 %v5449, %v5462
  %5464 = vdwg.mxu0
  %5465 = vmatpush.bf16.msra.mxu0 %v4102
  %5466 = vmatpush.bf16.msra.mxu0 %v4093
  %5467 = vmatpush.bf16.msra.mxu0 %v4084
  %5468 = vmatpush.bf16.msra.mxu0 %v4075
  %5469 = vmatpush.bf16.msra.mxu0 %v4066
  %5470 = vmatpush.bf16.msra.mxu0 %v4057
  %5471 = vmatpush.bf16.msra.mxu0 %v4048
  %5472 = vmatpush.bf16.msra.mxu0 %v4039
  %5473 = vmatmul.bf16.gmra.mxu0 %v983
  %v5474 = vpop.f32.mrf.mxu0
  %v5475 = vadd.f32 %v5461, %v5474
  %v5476 = vpop.f32.mrf.mxu0
  %v5477 = vadd.f32 %v5463, %v5476
  %5478 = vdwg.mxu0
  %5479 = vmatpush.bf16.msra.mxu0 %v4174
  %5480 = vmatpush.bf16.msra.mxu0 %v4165
  %5481 = vmatpush.bf16.msra.mxu0 %v4156
  %5482 = vmatpush.bf16.msra.mxu0 %v4147
  %5483 = vmatpush.bf16.msra.mxu0 %v4138
  %5484 = vmatpush.bf16.msra.mxu0 %v4129
  %5485 = vmatpush.bf16.msra.mxu0 %v4120
  %5486 = vmatpush.bf16.msra.mxu0 %v4111
  %5487 = vmatmul.bf16.gmra.mxu0 %v984
  %v5488 = vpop.f32.mrf.mxu0
  %v5489 = vadd.f32 %v5475, %v5488
  %v5490 = vpop.f32.mrf.mxu0
  %v5491 = vadd.f32 %v5477, %v5490
  %5492 = vdwg.mxu0
  %5493 = vmatpush.bf16.msra.mxu0 %v4246
  %5494 = vmatpush.bf16.msra.mxu0 %v4237
  %5495 = vmatpush.bf16.msra.mxu0 %v4228
  %5496 = vmatpush.bf16.msra.mxu0 %v4219
  %5497 = vmatpush.bf16.msra.mxu0 %v4210
  %5498 = vmatpush.bf16.msra.mxu0 %v4201
  %5499 = vmatpush.bf16.msra.mxu0 %v4192
  %5500 = vmatpush.bf16.msra.mxu0 %v4183
  %5501 = vmatmul.bf16.gmra.mxu0 %v985
  %v5502 = vpop.f32.mrf.mxu0
  %v5503 = vadd.f32 %v5489, %v5502
  %v5504 = vpop.f32.mrf.mxu0
  %v5505 = vadd.f32 %v5491, %v5504
  %5506 = vdwg.mxu0
  %5507 = vmatpush.bf16.msra.mxu0 %v3527
  %5508 = vmatpush.bf16.msra.mxu0 %v3518
  %5509 = vmatpush.bf16.msra.mxu0 %v3509
  %5510 = vmatpush.bf16.msra.mxu0 %v3500
  %5511 = vmatpush.bf16.msra.mxu0 %v3491
  %5512 = vmatpush.bf16.msra.mxu0 %v3482
  %5513 = vmatpush.bf16.msra.mxu0 %v3473
  %5514 = vmatpush.bf16.msra.mxu0 %v3464
  %5515 = vmatmul.bf16.gmra.mxu0 %v975
  %v5516 = vpop.f32.mrf.mxu0
  %v5517 = vadd.f32 %v926, %v5516
  %v5518 = vpop.f32.mrf.mxu0
  %v5519 = vadd.f32 %v926, %v5518
  %5520 = vdwg.mxu0
  %5521 = vmatpush.bf16.msra.mxu0 %v3599
  %5522 = vmatpush.bf16.msra.mxu0 %v3590
  %5523 = vmatpush.bf16.msra.mxu0 %v3581
  %5524 = vmatpush.bf16.msra.mxu0 %v3572
  %5525 = vmatpush.bf16.msra.mxu0 %v3563
  %5526 = vmatpush.bf16.msra.mxu0 %v3554
  %5527 = vmatpush.bf16.msra.mxu0 %v3545
  %5528 = vmatpush.bf16.msra.mxu0 %v3536
  %5529 = vmatmul.bf16.gmra.mxu0 %v976
  %v5530 = vpop.f32.mrf.mxu0
  %v5531 = vadd.f32 %v5517, %v5530
  %v5532 = vpop.f32.mrf.mxu0
  %v5533 = vadd.f32 %v5519, %v5532
  %5534 = vdwg.mxu0
  %5535 = vmatpush.bf16.msra.mxu0 %v3671
  %5536 = vmatpush.bf16.msra.mxu0 %v3662
  %5537 = vmatpush.bf16.msra.mxu0 %v3653
  %5538 = vmatpush.bf16.msra.mxu0 %v3644
  %5539 = vmatpush.bf16.msra.mxu0 %v3635
  %5540 = vmatpush.bf16.msra.mxu0 %v3626
  %5541 = vmatpush.bf16.msra.mxu0 %v3617
  %5542 = vmatpush.bf16.msra.mxu0 %v3608
  %5543 = vmatmul.bf16.gmra.mxu0 %v977
  %v5544 = vpop.f32.mrf.mxu0
  %v5545 = vadd.f32 %v5531, %v5544
  %v5546 = vpop.f32.mrf.mxu0
  %v5547 = vadd.f32 %v5533, %v5546
  %5548 = vdwg.mxu0
  %5549 = vmatpush.bf16.msra.mxu0 %v3743
  %5550 = vmatpush.bf16.msra.mxu0 %v3734
  %5551 = vmatpush.bf16.msra.mxu0 %v3725
  %5552 = vmatpush.bf16.msra.mxu0 %v3716
  %5553 = vmatpush.bf16.msra.mxu0 %v3707
  %5554 = vmatpush.bf16.msra.mxu0 %v3698
  %5555 = vmatpush.bf16.msra.mxu0 %v3689
  %5556 = vmatpush.bf16.msra.mxu0 %v3680
  %5557 = vmatmul.bf16.gmra.mxu0 %v978
  %v5558 = vpop.f32.mrf.mxu0
  %v5559 = vadd.f32 %v5545, %v5558
  %v5560 = vpop.f32.mrf.mxu0
  %v5561 = vadd.f32 %v5547, %v5560
  %5562 = vdwg.mxu0
  %5563 = vmatpush.bf16.msra.mxu0 %v3815
  %5564 = vmatpush.bf16.msra.mxu0 %v3806
  %5565 = vmatpush.bf16.msra.mxu0 %v3797
  %5566 = vmatpush.bf16.msra.mxu0 %v3788
  %5567 = vmatpush.bf16.msra.mxu0 %v3779
  %5568 = vmatpush.bf16.msra.mxu0 %v3770
  %5569 = vmatpush.bf16.msra.mxu0 %v3761
  %5570 = vmatpush.bf16.msra.mxu0 %v3752
  %5571 = vmatmul.bf16.gmra.mxu0 %v979
  %v5572 = vpop.f32.mrf.mxu0
  %v5573 = vadd.f32 %v5559, %v5572
  %v5574 = vpop.f32.mrf.mxu0
  %v5575 = vadd.f32 %v5561, %v5574
  %5576 = vdwg.mxu0
  %5577 = vmatpush.bf16.msra.mxu0 %v3887
  %5578 = vmatpush.bf16.msra.mxu0 %v3878
  %5579 = vmatpush.bf16.msra.mxu0 %v3869
  %5580 = vmatpush.bf16.msra.mxu0 %v3860
  %5581 = vmatpush.bf16.msra.mxu0 %v3851
  %5582 = vmatpush.bf16.msra.mxu0 %v3842
  %5583 = vmatpush.bf16.msra.mxu0 %v3833
  %5584 = vmatpush.bf16.msra.mxu0 %v3824
  %5585 = vmatmul.bf16.gmra.mxu0 %v980
  %v5586 = vpop.f32.mrf.mxu0
  %v5587 = vadd.f32 %v5573, %v5586
  %v5588 = vpop.f32.mrf.mxu0
  %v5589 = vadd.f32 %v5575, %v5588
  %5590 = vdwg.mxu0
  %5591 = vmatpush.bf16.msra.mxu0 %v3959
  %5592 = vmatpush.bf16.msra.mxu0 %v3950
  %5593 = vmatpush.bf16.msra.mxu0 %v3941
  %5594 = vmatpush.bf16.msra.mxu0 %v3932
  %5595 = vmatpush.bf16.msra.mxu0 %v3923
  %5596 = vmatpush.bf16.msra.mxu0 %v3914
  %5597 = vmatpush.bf16.msra.mxu0 %v3905
  %5598 = vmatpush.bf16.msra.mxu0 %v3896
  %5599 = vmatmul.bf16.gmra.mxu0 %v981
  %v5600 = vpop.f32.mrf.mxu0
  %v5601 = vadd.f32 %v5587, %v5600
  %v5602 = vpop.f32.mrf.mxu0
  %v5603 = vadd.f32 %v5589, %v5602
  %5604 = vdwg.mxu0
  %5605 = vmatpush.bf16.msra.mxu0 %v4031
  %5606 = vmatpush.bf16.msra.mxu0 %v4022
  %5607 = vmatpush.bf16.msra.mxu0 %v4013
  %5608 = vmatpush.bf16.msra.mxu0 %v4004
  %5609 = vmatpush.bf16.msra.mxu0 %v3995
  %5610 = vmatpush.bf16.msra.mxu0 %v3986
  %5611 = vmatpush.bf16.msra.mxu0 %v3977
  %5612 = vmatpush.bf16.msra.mxu0 %v3968
  %5613 = vmatmul.bf16.gmra.mxu0 %v982
  %v5614 = vpop.f32.mrf.mxu0
  %v5615 = vadd.f32 %v5601, %v5614
  %v5616 = vpop.f32.mrf.mxu0
  %v5617 = vadd.f32 %v5603, %v5616
  %5618 = vdwg.mxu0
  %5619 = vmatpush.bf16.msra.mxu0 %v4103
  %5620 = vmatpush.bf16.msra.mxu0 %v4094
  %5621 = vmatpush.bf16.msra.mxu0 %v4085
  %5622 = vmatpush.bf16.msra.mxu0 %v4076
  %5623 = vmatpush.bf16.msra.mxu0 %v4067
  %5624 = vmatpush.bf16.msra.mxu0 %v4058
  %5625 = vmatpush.bf16.msra.mxu0 %v4049
  %5626 = vmatpush.bf16.msra.mxu0 %v4040
  %5627 = vmatmul.bf16.gmra.mxu0 %v983
  %v5628 = vpop.f32.mrf.mxu0
  %v5629 = vadd.f32 %v5615, %v5628
  %v5630 = vpop.f32.mrf.mxu0
  %v5631 = vadd.f32 %v5617, %v5630
  %5632 = vdwg.mxu0
  %5633 = vmatpush.bf16.msra.mxu0 %v4175
  %5634 = vmatpush.bf16.msra.mxu0 %v4166
  %5635 = vmatpush.bf16.msra.mxu0 %v4157
  %5636 = vmatpush.bf16.msra.mxu0 %v4148
  %5637 = vmatpush.bf16.msra.mxu0 %v4139
  %5638 = vmatpush.bf16.msra.mxu0 %v4130
  %5639 = vmatpush.bf16.msra.mxu0 %v4121
  %5640 = vmatpush.bf16.msra.mxu0 %v4112
  %5641 = vmatmul.bf16.gmra.mxu0 %v984
  %v5642 = vpop.f32.mrf.mxu0
  %v5643 = vadd.f32 %v5629, %v5642
  %v5644 = vpop.f32.mrf.mxu0
  %v5645 = vadd.f32 %v5631, %v5644
  %5646 = vdwg.mxu0
  %5647 = vmatpush.bf16.msra.mxu0 %v4247
  %5648 = vmatpush.bf16.msra.mxu0 %v4238
  %5649 = vmatpush.bf16.msra.mxu0 %v4229
  %5650 = vmatpush.bf16.msra.mxu0 %v4220
  %5651 = vmatpush.bf16.msra.mxu0 %v4211
  %5652 = vmatpush.bf16.msra.mxu0 %v4202
  %5653 = vmatpush.bf16.msra.mxu0 %v4193
  %5654 = vmatpush.bf16.msra.mxu0 %v4184
  %5655 = vmatmul.bf16.gmra.mxu0 %v985
  %v5656 = vpop.f32.mrf.mxu0
  %v5657 = vadd.f32 %v5643, %v5656
  %v5658 = vpop.f32.mrf.mxu0
  %v5659 = vadd.f32 %v5645, %v5658
  %5660 = vdwg.mxu0
  %5661 = vmatpush.bf16.msra.mxu0 %v3528
  %5662 = vmatpush.bf16.msra.mxu0 %v3519
  %5663 = vmatpush.bf16.msra.mxu0 %v3510
  %5664 = vmatpush.bf16.msra.mxu0 %v3501
  %5665 = vmatpush.bf16.msra.mxu0 %v3492
  %5666 = vmatpush.bf16.msra.mxu0 %v3483
  %5667 = vmatpush.bf16.msra.mxu0 %v3474
  %5668 = vmatpush.bf16.msra.mxu0 %v3465
  %5669 = vmatmul.bf16.gmra.mxu0 %v975
  %v5670 = vpop.f32.mrf.mxu0
  %v5671 = vadd.f32 %v927, %v5670
  %v5672 = vpop.f32.mrf.mxu0
  %v5673 = vadd.f32 %v927, %v5672
  %5674 = vdwg.mxu0
  %5675 = vmatpush.bf16.msra.mxu0 %v3600
  %5676 = vmatpush.bf16.msra.mxu0 %v3591
  %5677 = vmatpush.bf16.msra.mxu0 %v3582
  %5678 = vmatpush.bf16.msra.mxu0 %v3573
  %5679 = vmatpush.bf16.msra.mxu0 %v3564
  %5680 = vmatpush.bf16.msra.mxu0 %v3555
  %5681 = vmatpush.bf16.msra.mxu0 %v3546
  %5682 = vmatpush.bf16.msra.mxu0 %v3537
  %5683 = vmatmul.bf16.gmra.mxu0 %v976
  %v5684 = vpop.f32.mrf.mxu0
  %v5685 = vadd.f32 %v5671, %v5684
  %v5686 = vpop.f32.mrf.mxu0
  %v5687 = vadd.f32 %v5673, %v5686
  %5688 = vdwg.mxu0
  %5689 = vmatpush.bf16.msra.mxu0 %v3672
  %5690 = vmatpush.bf16.msra.mxu0 %v3663
  %5691 = vmatpush.bf16.msra.mxu0 %v3654
  %5692 = vmatpush.bf16.msra.mxu0 %v3645
  %5693 = vmatpush.bf16.msra.mxu0 %v3636
  %5694 = vmatpush.bf16.msra.mxu0 %v3627
  %5695 = vmatpush.bf16.msra.mxu0 %v3618
  %5696 = vmatpush.bf16.msra.mxu0 %v3609
  %5697 = vmatmul.bf16.gmra.mxu0 %v977
  %v5698 = vpop.f32.mrf.mxu0
  %v5699 = vadd.f32 %v5685, %v5698
  %v5700 = vpop.f32.mrf.mxu0
  %v5701 = vadd.f32 %v5687, %v5700
  %5702 = vdwg.mxu0
  %5703 = vmatpush.bf16.msra.mxu0 %v3744
  %5704 = vmatpush.bf16.msra.mxu0 %v3735
  %5705 = vmatpush.bf16.msra.mxu0 %v3726
  %5706 = vmatpush.bf16.msra.mxu0 %v3717
  %5707 = vmatpush.bf16.msra.mxu0 %v3708
  %5708 = vmatpush.bf16.msra.mxu0 %v3699
  %5709 = vmatpush.bf16.msra.mxu0 %v3690
  %5710 = vmatpush.bf16.msra.mxu0 %v3681
  %5711 = vmatmul.bf16.gmra.mxu0 %v978
  %v5712 = vpop.f32.mrf.mxu0
  %v5713 = vadd.f32 %v5699, %v5712
  %v5714 = vpop.f32.mrf.mxu0
  %v5715 = vadd.f32 %v5701, %v5714
  %5716 = vdwg.mxu0
  %5717 = vmatpush.bf16.msra.mxu0 %v3816
  %5718 = vmatpush.bf16.msra.mxu0 %v3807
  %5719 = vmatpush.bf16.msra.mxu0 %v3798
  %5720 = vmatpush.bf16.msra.mxu0 %v3789
  %5721 = vmatpush.bf16.msra.mxu0 %v3780
  %5722 = vmatpush.bf16.msra.mxu0 %v3771
  %5723 = vmatpush.bf16.msra.mxu0 %v3762
  %5724 = vmatpush.bf16.msra.mxu0 %v3753
  %5725 = vmatmul.bf16.gmra.mxu0 %v979
  %v5726 = vpop.f32.mrf.mxu0
  %v5727 = vadd.f32 %v5713, %v5726
  %v5728 = vpop.f32.mrf.mxu0
  %v5729 = vadd.f32 %v5715, %v5728
  %5730 = vdwg.mxu0
  %5731 = vmatpush.bf16.msra.mxu0 %v3888
  %5732 = vmatpush.bf16.msra.mxu0 %v3879
  %5733 = vmatpush.bf16.msra.mxu0 %v3870
  %5734 = vmatpush.bf16.msra.mxu0 %v3861
  %5735 = vmatpush.bf16.msra.mxu0 %v3852
  %5736 = vmatpush.bf16.msra.mxu0 %v3843
  %5737 = vmatpush.bf16.msra.mxu0 %v3834
  %5738 = vmatpush.bf16.msra.mxu0 %v3825
  %5739 = vmatmul.bf16.gmra.mxu0 %v980
  %v5740 = vpop.f32.mrf.mxu0
  %v5741 = vadd.f32 %v5727, %v5740
  %v5742 = vpop.f32.mrf.mxu0
  %v5743 = vadd.f32 %v5729, %v5742
  %5744 = vdwg.mxu0
  %5745 = vmatpush.bf16.msra.mxu0 %v3960
  %5746 = vmatpush.bf16.msra.mxu0 %v3951
  %5747 = vmatpush.bf16.msra.mxu0 %v3942
  %5748 = vmatpush.bf16.msra.mxu0 %v3933
  %5749 = vmatpush.bf16.msra.mxu0 %v3924
  %5750 = vmatpush.bf16.msra.mxu0 %v3915
  %5751 = vmatpush.bf16.msra.mxu0 %v3906
  %5752 = vmatpush.bf16.msra.mxu0 %v3897
  %5753 = vmatmul.bf16.gmra.mxu0 %v981
  %v5754 = vpop.f32.mrf.mxu0
  %v5755 = vadd.f32 %v5741, %v5754
  %v5756 = vpop.f32.mrf.mxu0
  %v5757 = vadd.f32 %v5743, %v5756
  %5758 = vdwg.mxu0
  %5759 = vmatpush.bf16.msra.mxu0 %v4032
  %5760 = vmatpush.bf16.msra.mxu0 %v4023
  %5761 = vmatpush.bf16.msra.mxu0 %v4014
  %5762 = vmatpush.bf16.msra.mxu0 %v4005
  %5763 = vmatpush.bf16.msra.mxu0 %v3996
  %5764 = vmatpush.bf16.msra.mxu0 %v3987
  %5765 = vmatpush.bf16.msra.mxu0 %v3978
  %5766 = vmatpush.bf16.msra.mxu0 %v3969
  %5767 = vmatmul.bf16.gmra.mxu0 %v982
  %v5768 = vpop.f32.mrf.mxu0
  %v5769 = vadd.f32 %v5755, %v5768
  %v5770 = vpop.f32.mrf.mxu0
  %v5771 = vadd.f32 %v5757, %v5770
  %5772 = vdwg.mxu0
  %5773 = vmatpush.bf16.msra.mxu0 %v4104
  %5774 = vmatpush.bf16.msra.mxu0 %v4095
  %5775 = vmatpush.bf16.msra.mxu0 %v4086
  %5776 = vmatpush.bf16.msra.mxu0 %v4077
  %5777 = vmatpush.bf16.msra.mxu0 %v4068
  %5778 = vmatpush.bf16.msra.mxu0 %v4059
  %5779 = vmatpush.bf16.msra.mxu0 %v4050
  %5780 = vmatpush.bf16.msra.mxu0 %v4041
  %5781 = vmatmul.bf16.gmra.mxu0 %v983
  %v5782 = vpop.f32.mrf.mxu0
  %v5783 = vadd.f32 %v5769, %v5782
  %v5784 = vpop.f32.mrf.mxu0
  %v5785 = vadd.f32 %v5771, %v5784
  %5786 = vdwg.mxu0
  %5787 = vmatpush.bf16.msra.mxu0 %v4176
  %5788 = vmatpush.bf16.msra.mxu0 %v4167
  %5789 = vmatpush.bf16.msra.mxu0 %v4158
  %5790 = vmatpush.bf16.msra.mxu0 %v4149
  %5791 = vmatpush.bf16.msra.mxu0 %v4140
  %5792 = vmatpush.bf16.msra.mxu0 %v4131
  %5793 = vmatpush.bf16.msra.mxu0 %v4122
  %5794 = vmatpush.bf16.msra.mxu0 %v4113
  %5795 = vmatmul.bf16.gmra.mxu0 %v984
  %v5796 = vpop.f32.mrf.mxu0
  %v5797 = vadd.f32 %v5783, %v5796
  %v5798 = vpop.f32.mrf.mxu0
  %v5799 = vadd.f32 %v5785, %v5798
  %5800 = vdwg.mxu0
  %5801 = vmatpush.bf16.msra.mxu0 %v4248
  %5802 = vmatpush.bf16.msra.mxu0 %v4239
  %5803 = vmatpush.bf16.msra.mxu0 %v4230
  %5804 = vmatpush.bf16.msra.mxu0 %v4221
  %5805 = vmatpush.bf16.msra.mxu0 %v4212
  %5806 = vmatpush.bf16.msra.mxu0 %v4203
  %5807 = vmatpush.bf16.msra.mxu0 %v4194
  %5808 = vmatpush.bf16.msra.mxu0 %v4185
  %5809 = vmatmul.bf16.gmra.mxu0 %v985
  %v5810 = vpop.f32.mrf.mxu0
  %v5811 = vadd.f32 %v5797, %v5810
  %v5812 = vpop.f32.mrf.mxu0
  %v5813 = vadd.f32 %v5799, %v5812
  %5814 = vdwg.mxu0
  %5815 = vmatpush.bf16.msra.mxu0 %v3529
  %5816 = vmatpush.bf16.msra.mxu0 %v3520
  %5817 = vmatpush.bf16.msra.mxu0 %v3511
  %5818 = vmatpush.bf16.msra.mxu0 %v3502
  %5819 = vmatpush.bf16.msra.mxu0 %v3493
  %5820 = vmatpush.bf16.msra.mxu0 %v3484
  %5821 = vmatpush.bf16.msra.mxu0 %v3475
  %5822 = vmatpush.bf16.msra.mxu0 %v3466
  %5823 = vmatmul.bf16.gmra.mxu0 %v975
  %v5824 = vpop.f32.mrf.mxu0
  %v5825 = vadd.f32 %v928, %v5824
  %v5826 = vpop.f32.mrf.mxu0
  %v5827 = vadd.f32 %v928, %v5826
  %5828 = vdwg.mxu0
  %5829 = vmatpush.bf16.msra.mxu0 %v3601
  %5830 = vmatpush.bf16.msra.mxu0 %v3592
  %5831 = vmatpush.bf16.msra.mxu0 %v3583
  %5832 = vmatpush.bf16.msra.mxu0 %v3574
  %5833 = vmatpush.bf16.msra.mxu0 %v3565
  %5834 = vmatpush.bf16.msra.mxu0 %v3556
  %5835 = vmatpush.bf16.msra.mxu0 %v3547
  %5836 = vmatpush.bf16.msra.mxu0 %v3538
  %5837 = vmatmul.bf16.gmra.mxu0 %v976
  %v5838 = vpop.f32.mrf.mxu0
  %v5839 = vadd.f32 %v5825, %v5838
  %v5840 = vpop.f32.mrf.mxu0
  %v5841 = vadd.f32 %v5827, %v5840
  %5842 = vdwg.mxu0
  %5843 = vmatpush.bf16.msra.mxu0 %v3673
  %5844 = vmatpush.bf16.msra.mxu0 %v3664
  %5845 = vmatpush.bf16.msra.mxu0 %v3655
  %5846 = vmatpush.bf16.msra.mxu0 %v3646
  %5847 = vmatpush.bf16.msra.mxu0 %v3637
  %5848 = vmatpush.bf16.msra.mxu0 %v3628
  %5849 = vmatpush.bf16.msra.mxu0 %v3619
  %5850 = vmatpush.bf16.msra.mxu0 %v3610
  %5851 = vmatmul.bf16.gmra.mxu0 %v977
  %v5852 = vpop.f32.mrf.mxu0
  %v5853 = vadd.f32 %v5839, %v5852
  %v5854 = vpop.f32.mrf.mxu0
  %v5855 = vadd.f32 %v5841, %v5854
  %5856 = vdwg.mxu0
  %5857 = vmatpush.bf16.msra.mxu0 %v3745
  %5858 = vmatpush.bf16.msra.mxu0 %v3736
  %5859 = vmatpush.bf16.msra.mxu0 %v3727
  %5860 = vmatpush.bf16.msra.mxu0 %v3718
  %5861 = vmatpush.bf16.msra.mxu0 %v3709
  %5862 = vmatpush.bf16.msra.mxu0 %v3700
  %5863 = vmatpush.bf16.msra.mxu0 %v3691
  %5864 = vmatpush.bf16.msra.mxu0 %v3682
  %5865 = vmatmul.bf16.gmra.mxu0 %v978
  %v5866 = vpop.f32.mrf.mxu0
  %v5867 = vadd.f32 %v5853, %v5866
  %v5868 = vpop.f32.mrf.mxu0
  %v5869 = vadd.f32 %v5855, %v5868
  %5870 = vdwg.mxu0
  %5871 = vmatpush.bf16.msra.mxu0 %v3817
  %5872 = vmatpush.bf16.msra.mxu0 %v3808
  %5873 = vmatpush.bf16.msra.mxu0 %v3799
  %5874 = vmatpush.bf16.msra.mxu0 %v3790
  %5875 = vmatpush.bf16.msra.mxu0 %v3781
  %5876 = vmatpush.bf16.msra.mxu0 %v3772
  %5877 = vmatpush.bf16.msra.mxu0 %v3763
  %5878 = vmatpush.bf16.msra.mxu0 %v3754
  %5879 = vmatmul.bf16.gmra.mxu0 %v979
  %v5880 = vpop.f32.mrf.mxu0
  %v5881 = vadd.f32 %v5867, %v5880
  %v5882 = vpop.f32.mrf.mxu0
  %v5883 = vadd.f32 %v5869, %v5882
  %5884 = vdwg.mxu0
  %5885 = vmatpush.bf16.msra.mxu0 %v3889
  %5886 = vmatpush.bf16.msra.mxu0 %v3880
  %5887 = vmatpush.bf16.msra.mxu0 %v3871
  %5888 = vmatpush.bf16.msra.mxu0 %v3862
  %5889 = vmatpush.bf16.msra.mxu0 %v3853
  %5890 = vmatpush.bf16.msra.mxu0 %v3844
  %5891 = vmatpush.bf16.msra.mxu0 %v3835
  %5892 = vmatpush.bf16.msra.mxu0 %v3826
  %5893 = vmatmul.bf16.gmra.mxu0 %v980
  %v5894 = vpop.f32.mrf.mxu0
  %v5895 = vadd.f32 %v5881, %v5894
  %v5896 = vpop.f32.mrf.mxu0
  %v5897 = vadd.f32 %v5883, %v5896
  %5898 = vdwg.mxu0
  %5899 = vmatpush.bf16.msra.mxu0 %v3961
  %5900 = vmatpush.bf16.msra.mxu0 %v3952
  %5901 = vmatpush.bf16.msra.mxu0 %v3943
  %5902 = vmatpush.bf16.msra.mxu0 %v3934
  %5903 = vmatpush.bf16.msra.mxu0 %v3925
  %5904 = vmatpush.bf16.msra.mxu0 %v3916
  %5905 = vmatpush.bf16.msra.mxu0 %v3907
  %5906 = vmatpush.bf16.msra.mxu0 %v3898
  %5907 = vmatmul.bf16.gmra.mxu0 %v981
  %v5908 = vpop.f32.mrf.mxu0
  %v5909 = vadd.f32 %v5895, %v5908
  %v5910 = vpop.f32.mrf.mxu0
  %v5911 = vadd.f32 %v5897, %v5910
  %5912 = vdwg.mxu0
  %5913 = vmatpush.bf16.msra.mxu0 %v4033
  %5914 = vmatpush.bf16.msra.mxu0 %v4024
  %5915 = vmatpush.bf16.msra.mxu0 %v4015
  %5916 = vmatpush.bf16.msra.mxu0 %v4006
  %5917 = vmatpush.bf16.msra.mxu0 %v3997
  %5918 = vmatpush.bf16.msra.mxu0 %v3988
  %5919 = vmatpush.bf16.msra.mxu0 %v3979
  %5920 = vmatpush.bf16.msra.mxu0 %v3970
  %5921 = vmatmul.bf16.gmra.mxu0 %v982
  %v5922 = vpop.f32.mrf.mxu0
  %v5923 = vadd.f32 %v5909, %v5922
  %v5924 = vpop.f32.mrf.mxu0
  %v5925 = vadd.f32 %v5911, %v5924
  %5926 = vdwg.mxu0
  %5927 = vmatpush.bf16.msra.mxu0 %v4105
  %5928 = vmatpush.bf16.msra.mxu0 %v4096
  %5929 = vmatpush.bf16.msra.mxu0 %v4087
  %5930 = vmatpush.bf16.msra.mxu0 %v4078
  %5931 = vmatpush.bf16.msra.mxu0 %v4069
  %5932 = vmatpush.bf16.msra.mxu0 %v4060
  %5933 = vmatpush.bf16.msra.mxu0 %v4051
  %5934 = vmatpush.bf16.msra.mxu0 %v4042
  %5935 = vmatmul.bf16.gmra.mxu0 %v983
  %v5936 = vpop.f32.mrf.mxu0
  %v5937 = vadd.f32 %v5923, %v5936
  %v5938 = vpop.f32.mrf.mxu0
  %v5939 = vadd.f32 %v5925, %v5938
  %5940 = vdwg.mxu0
  %5941 = vmatpush.bf16.msra.mxu0 %v4177
  %5942 = vmatpush.bf16.msra.mxu0 %v4168
  %5943 = vmatpush.bf16.msra.mxu0 %v4159
  %5944 = vmatpush.bf16.msra.mxu0 %v4150
  %5945 = vmatpush.bf16.msra.mxu0 %v4141
  %5946 = vmatpush.bf16.msra.mxu0 %v4132
  %5947 = vmatpush.bf16.msra.mxu0 %v4123
  %5948 = vmatpush.bf16.msra.mxu0 %v4114
  %5949 = vmatmul.bf16.gmra.mxu0 %v984
  %v5950 = vpop.f32.mrf.mxu0
  %v5951 = vadd.f32 %v5937, %v5950
  %v5952 = vpop.f32.mrf.mxu0
  %v5953 = vadd.f32 %v5939, %v5952
  %5954 = vdwg.mxu0
  %5955 = vmatpush.bf16.msra.mxu0 %v4249
  %5956 = vmatpush.bf16.msra.mxu0 %v4240
  %5957 = vmatpush.bf16.msra.mxu0 %v4231
  %5958 = vmatpush.bf16.msra.mxu0 %v4222
  %5959 = vmatpush.bf16.msra.mxu0 %v4213
  %5960 = vmatpush.bf16.msra.mxu0 %v4204
  %5961 = vmatpush.bf16.msra.mxu0 %v4195
  %5962 = vmatpush.bf16.msra.mxu0 %v4186
  %5963 = vmatmul.bf16.gmra.mxu0 %v985
  %v5964 = vpop.f32.mrf.mxu0
  %v5965 = vadd.f32 %v5951, %v5964
  %v5966 = vpop.f32.mrf.mxu0
  %v5967 = vadd.f32 %v5953, %v5966
  %5968 = vdwg.mxu0
  %5969 = vmatpush.bf16.msra.mxu0 %v3530
  %5970 = vmatpush.bf16.msra.mxu0 %v3521
  %5971 = vmatpush.bf16.msra.mxu0 %v3512
  %5972 = vmatpush.bf16.msra.mxu0 %v3503
  %5973 = vmatpush.bf16.msra.mxu0 %v3494
  %5974 = vmatpush.bf16.msra.mxu0 %v3485
  %5975 = vmatpush.bf16.msra.mxu0 %v3476
  %5976 = vmatpush.bf16.msra.mxu0 %v3467
  %5977 = vmatmul.bf16.gmra.mxu0 %v975
  %v5978 = vpop.f32.mrf.mxu0
  %v5979 = vadd.f32 %v929, %v5978
  %v5980 = vpop.f32.mrf.mxu0
  %v5981 = vadd.f32 %v929, %v5980
  %5982 = vdwg.mxu0
  %5983 = vmatpush.bf16.msra.mxu0 %v3602
  %5984 = vmatpush.bf16.msra.mxu0 %v3593
  %5985 = vmatpush.bf16.msra.mxu0 %v3584
  %5986 = vmatpush.bf16.msra.mxu0 %v3575
  %5987 = vmatpush.bf16.msra.mxu0 %v3566
  %5988 = vmatpush.bf16.msra.mxu0 %v3557
  %5989 = vmatpush.bf16.msra.mxu0 %v3548
  %5990 = vmatpush.bf16.msra.mxu0 %v3539
  %5991 = vmatmul.bf16.gmra.mxu0 %v976
  %v5992 = vpop.f32.mrf.mxu0
  %v5993 = vadd.f32 %v5979, %v5992
  %v5994 = vpop.f32.mrf.mxu0
  %v5995 = vadd.f32 %v5981, %v5994
  %5996 = vdwg.mxu0
  %5997 = vmatpush.bf16.msra.mxu0 %v3674
  %5998 = vmatpush.bf16.msra.mxu0 %v3665
  %5999 = vmatpush.bf16.msra.mxu0 %v3656
  %6000 = vmatpush.bf16.msra.mxu0 %v3647
  %6001 = vmatpush.bf16.msra.mxu0 %v3638
  %6002 = vmatpush.bf16.msra.mxu0 %v3629
  %6003 = vmatpush.bf16.msra.mxu0 %v3620
  %6004 = vmatpush.bf16.msra.mxu0 %v3611
  %6005 = vmatmul.bf16.gmra.mxu0 %v977
  %v6006 = vpop.f32.mrf.mxu0
  %v6007 = vadd.f32 %v5993, %v6006
  %v6008 = vpop.f32.mrf.mxu0
  %v6009 = vadd.f32 %v5995, %v6008
  %6010 = vdwg.mxu0
  %6011 = vmatpush.bf16.msra.mxu0 %v3746
  %6012 = vmatpush.bf16.msra.mxu0 %v3737
  %6013 = vmatpush.bf16.msra.mxu0 %v3728
  %6014 = vmatpush.bf16.msra.mxu0 %v3719
  %6015 = vmatpush.bf16.msra.mxu0 %v3710
  %6016 = vmatpush.bf16.msra.mxu0 %v3701
  %6017 = vmatpush.bf16.msra.mxu0 %v3692
  %6018 = vmatpush.bf16.msra.mxu0 %v3683
  %6019 = vmatmul.bf16.gmra.mxu0 %v978
  %v6020 = vpop.f32.mrf.mxu0
  %v6021 = vadd.f32 %v6007, %v6020
  %v6022 = vpop.f32.mrf.mxu0
  %v6023 = vadd.f32 %v6009, %v6022
  %6024 = vdwg.mxu0
  %6025 = vmatpush.bf16.msra.mxu0 %v3818
  %6026 = vmatpush.bf16.msra.mxu0 %v3809
  %6027 = vmatpush.bf16.msra.mxu0 %v3800
  %6028 = vmatpush.bf16.msra.mxu0 %v3791
  %6029 = vmatpush.bf16.msra.mxu0 %v3782
  %6030 = vmatpush.bf16.msra.mxu0 %v3773
  %6031 = vmatpush.bf16.msra.mxu0 %v3764
  %6032 = vmatpush.bf16.msra.mxu0 %v3755
  %6033 = vmatmul.bf16.gmra.mxu0 %v979
  %v6034 = vpop.f32.mrf.mxu0
  %v6035 = vadd.f32 %v6021, %v6034
  %v6036 = vpop.f32.mrf.mxu0
  %v6037 = vadd.f32 %v6023, %v6036
  %6038 = vdwg.mxu0
  %6039 = vmatpush.bf16.msra.mxu0 %v3890
  %6040 = vmatpush.bf16.msra.mxu0 %v3881
  %6041 = vmatpush.bf16.msra.mxu0 %v3872
  %6042 = vmatpush.bf16.msra.mxu0 %v3863
  %6043 = vmatpush.bf16.msra.mxu0 %v3854
  %6044 = vmatpush.bf16.msra.mxu0 %v3845
  %6045 = vmatpush.bf16.msra.mxu0 %v3836
  %6046 = vmatpush.bf16.msra.mxu0 %v3827
  %6047 = vmatmul.bf16.gmra.mxu0 %v980
  %v6048 = vpop.f32.mrf.mxu0
  %v6049 = vadd.f32 %v6035, %v6048
  %v6050 = vpop.f32.mrf.mxu0
  %v6051 = vadd.f32 %v6037, %v6050
  %6052 = vdwg.mxu0
  %6053 = vmatpush.bf16.msra.mxu0 %v3962
  %6054 = vmatpush.bf16.msra.mxu0 %v3953
  %6055 = vmatpush.bf16.msra.mxu0 %v3944
  %6056 = vmatpush.bf16.msra.mxu0 %v3935
  %6057 = vmatpush.bf16.msra.mxu0 %v3926
  %6058 = vmatpush.bf16.msra.mxu0 %v3917
  %6059 = vmatpush.bf16.msra.mxu0 %v3908
  %6060 = vmatpush.bf16.msra.mxu0 %v3899
  %6061 = vmatmul.bf16.gmra.mxu0 %v981
  %v6062 = vpop.f32.mrf.mxu0
  %v6063 = vadd.f32 %v6049, %v6062
  %v6064 = vpop.f32.mrf.mxu0
  %v6065 = vadd.f32 %v6051, %v6064
  %6066 = vdwg.mxu0
  %6067 = vmatpush.bf16.msra.mxu0 %v4034
  %6068 = vmatpush.bf16.msra.mxu0 %v4025
  %6069 = vmatpush.bf16.msra.mxu0 %v4016
  %6070 = vmatpush.bf16.msra.mxu0 %v4007
  %6071 = vmatpush.bf16.msra.mxu0 %v3998
  %6072 = vmatpush.bf16.msra.mxu0 %v3989
  %6073 = vmatpush.bf16.msra.mxu0 %v3980
  %6074 = vmatpush.bf16.msra.mxu0 %v3971
  %6075 = vmatmul.bf16.gmra.mxu0 %v982
  %v6076 = vpop.f32.mrf.mxu0
  %v6077 = vadd.f32 %v6063, %v6076
  %v6078 = vpop.f32.mrf.mxu0
  %v6079 = vadd.f32 %v6065, %v6078
  %6080 = vdwg.mxu0
  %6081 = vmatpush.bf16.msra.mxu0 %v4106
  %6082 = vmatpush.bf16.msra.mxu0 %v4097
  %6083 = vmatpush.bf16.msra.mxu0 %v4088
  %6084 = vmatpush.bf16.msra.mxu0 %v4079
  %6085 = vmatpush.bf16.msra.mxu0 %v4070
  %6086 = vmatpush.bf16.msra.mxu0 %v4061
  %6087 = vmatpush.bf16.msra.mxu0 %v4052
  %6088 = vmatpush.bf16.msra.mxu0 %v4043
  %6089 = vmatmul.bf16.gmra.mxu0 %v983
  %v6090 = vpop.f32.mrf.mxu0
  %v6091 = vadd.f32 %v6077, %v6090
  %v6092 = vpop.f32.mrf.mxu0
  %v6093 = vadd.f32 %v6079, %v6092
  %6094 = vdwg.mxu0
  %6095 = vmatpush.bf16.msra.mxu0 %v4178
  %6096 = vmatpush.bf16.msra.mxu0 %v4169
  %6097 = vmatpush.bf16.msra.mxu0 %v4160
  %6098 = vmatpush.bf16.msra.mxu0 %v4151
  %6099 = vmatpush.bf16.msra.mxu0 %v4142
  %6100 = vmatpush.bf16.msra.mxu0 %v4133
  %6101 = vmatpush.bf16.msra.mxu0 %v4124
  %6102 = vmatpush.bf16.msra.mxu0 %v4115
  %6103 = vmatmul.bf16.gmra.mxu0 %v984
  %v6104 = vpop.f32.mrf.mxu0
  %v6105 = vadd.f32 %v6091, %v6104
  %v6106 = vpop.f32.mrf.mxu0
  %v6107 = vadd.f32 %v6093, %v6106
  %6108 = vdwg.mxu0
  %6109 = vmatpush.bf16.msra.mxu0 %v4250
  %6110 = vmatpush.bf16.msra.mxu0 %v4241
  %6111 = vmatpush.bf16.msra.mxu0 %v4232
  %6112 = vmatpush.bf16.msra.mxu0 %v4223
  %6113 = vmatpush.bf16.msra.mxu0 %v4214
  %6114 = vmatpush.bf16.msra.mxu0 %v4205
  %6115 = vmatpush.bf16.msra.mxu0 %v4196
  %6116 = vmatpush.bf16.msra.mxu0 %v4187
  %6117 = vmatmul.bf16.gmra.mxu0 %v985
  %v6118 = vpop.f32.mrf.mxu0
  %v6119 = vadd.f32 %v6105, %v6118
  %v6120 = vpop.f32.mrf.mxu0
  %v6121 = vadd.f32 %v6107, %v6120
  %6122 = vdwg.mxu0
  %6123 = vmatpush.bf16.msra.mxu0 %v3531
  %6124 = vmatpush.bf16.msra.mxu0 %v3522
  %6125 = vmatpush.bf16.msra.mxu0 %v3513
  %6126 = vmatpush.bf16.msra.mxu0 %v3504
  %6127 = vmatpush.bf16.msra.mxu0 %v3495
  %6128 = vmatpush.bf16.msra.mxu0 %v3486
  %6129 = vmatpush.bf16.msra.mxu0 %v3477
  %6130 = vmatpush.bf16.msra.mxu0 %v3468
  %6131 = vmatmul.bf16.gmra.mxu0 %v975
  %v6132 = vpop.f32.mrf.mxu0
  %v6133 = vadd.f32 %v930, %v6132
  %v6134 = vpop.f32.mrf.mxu0
  %v6135 = vadd.f32 %v930, %v6134
  %6136 = vdwg.mxu0
  %6137 = vmatpush.bf16.msra.mxu0 %v3603
  %6138 = vmatpush.bf16.msra.mxu0 %v3594
  %6139 = vmatpush.bf16.msra.mxu0 %v3585
  %6140 = vmatpush.bf16.msra.mxu0 %v3576
  %6141 = vmatpush.bf16.msra.mxu0 %v3567
  %6142 = vmatpush.bf16.msra.mxu0 %v3558
  %6143 = vmatpush.bf16.msra.mxu0 %v3549
  %6144 = vmatpush.bf16.msra.mxu0 %v3540
  %6145 = vmatmul.bf16.gmra.mxu0 %v976
  %v6146 = vpop.f32.mrf.mxu0
  %v6147 = vadd.f32 %v6133, %v6146
  %v6148 = vpop.f32.mrf.mxu0
  %v6149 = vadd.f32 %v6135, %v6148
  %6150 = vdwg.mxu0
  %6151 = vmatpush.bf16.msra.mxu0 %v3675
  %6152 = vmatpush.bf16.msra.mxu0 %v3666
  %6153 = vmatpush.bf16.msra.mxu0 %v3657
  %6154 = vmatpush.bf16.msra.mxu0 %v3648
  %6155 = vmatpush.bf16.msra.mxu0 %v3639
  %6156 = vmatpush.bf16.msra.mxu0 %v3630
  %6157 = vmatpush.bf16.msra.mxu0 %v3621
  %6158 = vmatpush.bf16.msra.mxu0 %v3612
  %6159 = vmatmul.bf16.gmra.mxu0 %v977
  %v6160 = vpop.f32.mrf.mxu0
  %v6161 = vadd.f32 %v6147, %v6160
  %v6162 = vpop.f32.mrf.mxu0
  %v6163 = vadd.f32 %v6149, %v6162
  %6164 = vdwg.mxu0
  %6165 = vmatpush.bf16.msra.mxu0 %v3747
  %6166 = vmatpush.bf16.msra.mxu0 %v3738
  %6167 = vmatpush.bf16.msra.mxu0 %v3729
  %6168 = vmatpush.bf16.msra.mxu0 %v3720
  %6169 = vmatpush.bf16.msra.mxu0 %v3711
  %6170 = vmatpush.bf16.msra.mxu0 %v3702
  %6171 = vmatpush.bf16.msra.mxu0 %v3693
  %6172 = vmatpush.bf16.msra.mxu0 %v3684
  %6173 = vmatmul.bf16.gmra.mxu0 %v978
  %v6174 = vpop.f32.mrf.mxu0
  %v6175 = vadd.f32 %v6161, %v6174
  %v6176 = vpop.f32.mrf.mxu0
  %v6177 = vadd.f32 %v6163, %v6176
  %6178 = vdwg.mxu0
  %6179 = vmatpush.bf16.msra.mxu0 %v3819
  %6180 = vmatpush.bf16.msra.mxu0 %v3810
  %6181 = vmatpush.bf16.msra.mxu0 %v3801
  %6182 = vmatpush.bf16.msra.mxu0 %v3792
  %6183 = vmatpush.bf16.msra.mxu0 %v3783
  %6184 = vmatpush.bf16.msra.mxu0 %v3774
  %6185 = vmatpush.bf16.msra.mxu0 %v3765
  %6186 = vmatpush.bf16.msra.mxu0 %v3756
  %6187 = vmatmul.bf16.gmra.mxu0 %v979
  %v6188 = vpop.f32.mrf.mxu0
  %v6189 = vadd.f32 %v6175, %v6188
  %v6190 = vpop.f32.mrf.mxu0
  %v6191 = vadd.f32 %v6177, %v6190
  %6192 = vdwg.mxu0
  %6193 = vmatpush.bf16.msra.mxu0 %v3891
  %6194 = vmatpush.bf16.msra.mxu0 %v3882
  %6195 = vmatpush.bf16.msra.mxu0 %v3873
  %6196 = vmatpush.bf16.msra.mxu0 %v3864
  %6197 = vmatpush.bf16.msra.mxu0 %v3855
  %6198 = vmatpush.bf16.msra.mxu0 %v3846
  %6199 = vmatpush.bf16.msra.mxu0 %v3837
  %6200 = vmatpush.bf16.msra.mxu0 %v3828
  %6201 = vmatmul.bf16.gmra.mxu0 %v980
  %v6202 = vpop.f32.mrf.mxu0
  %v6203 = vadd.f32 %v6189, %v6202
  %v6204 = vpop.f32.mrf.mxu0
  %v6205 = vadd.f32 %v6191, %v6204
  %6206 = vdwg.mxu0
  %6207 = vmatpush.bf16.msra.mxu0 %v3963
  %6208 = vmatpush.bf16.msra.mxu0 %v3954
  %6209 = vmatpush.bf16.msra.mxu0 %v3945
  %6210 = vmatpush.bf16.msra.mxu0 %v3936
  %6211 = vmatpush.bf16.msra.mxu0 %v3927
  %6212 = vmatpush.bf16.msra.mxu0 %v3918
  %6213 = vmatpush.bf16.msra.mxu0 %v3909
  %6214 = vmatpush.bf16.msra.mxu0 %v3900
  %6215 = vmatmul.bf16.gmra.mxu0 %v981
  %v6216 = vpop.f32.mrf.mxu0
  %v6217 = vadd.f32 %v6203, %v6216
  %v6218 = vpop.f32.mrf.mxu0
  %v6219 = vadd.f32 %v6205, %v6218
  %6220 = vdwg.mxu0
  %6221 = vmatpush.bf16.msra.mxu0 %v4035
  %6222 = vmatpush.bf16.msra.mxu0 %v4026
  %6223 = vmatpush.bf16.msra.mxu0 %v4017
  %6224 = vmatpush.bf16.msra.mxu0 %v4008
  %6225 = vmatpush.bf16.msra.mxu0 %v3999
  %6226 = vmatpush.bf16.msra.mxu0 %v3990
  %6227 = vmatpush.bf16.msra.mxu0 %v3981
  %6228 = vmatpush.bf16.msra.mxu0 %v3972
  %6229 = vmatmul.bf16.gmra.mxu0 %v982
  %v6230 = vpop.f32.mrf.mxu0
  %v6231 = vadd.f32 %v6217, %v6230
  %v6232 = vpop.f32.mrf.mxu0
  %v6233 = vadd.f32 %v6219, %v6232
  %6234 = vdwg.mxu0
  %6235 = vmatpush.bf16.msra.mxu0 %v4107
  %6236 = vmatpush.bf16.msra.mxu0 %v4098
  %6237 = vmatpush.bf16.msra.mxu0 %v4089
  %6238 = vmatpush.bf16.msra.mxu0 %v4080
  %6239 = vmatpush.bf16.msra.mxu0 %v4071
  %6240 = vmatpush.bf16.msra.mxu0 %v4062
  %6241 = vmatpush.bf16.msra.mxu0 %v4053
  %6242 = vmatpush.bf16.msra.mxu0 %v4044
  %6243 = vmatmul.bf16.gmra.mxu0 %v983
  %v6244 = vpop.f32.mrf.mxu0
  %v6245 = vadd.f32 %v6231, %v6244
  %v6246 = vpop.f32.mrf.mxu0
  %v6247 = vadd.f32 %v6233, %v6246
  %6248 = vdwg.mxu0
  %6249 = vmatpush.bf16.msra.mxu0 %v4179
  %6250 = vmatpush.bf16.msra.mxu0 %v4170
  %6251 = vmatpush.bf16.msra.mxu0 %v4161
  %6252 = vmatpush.bf16.msra.mxu0 %v4152
  %6253 = vmatpush.bf16.msra.mxu0 %v4143
  %6254 = vmatpush.bf16.msra.mxu0 %v4134
  %6255 = vmatpush.bf16.msra.mxu0 %v4125
  %6256 = vmatpush.bf16.msra.mxu0 %v4116
  %6257 = vmatmul.bf16.gmra.mxu0 %v984
  %v6258 = vpop.f32.mrf.mxu0
  %v6259 = vadd.f32 %v6245, %v6258
  %v6260 = vpop.f32.mrf.mxu0
  %v6261 = vadd.f32 %v6247, %v6260
  %6262 = vdwg.mxu0
  %6263 = vmatpush.bf16.msra.mxu0 %v4251
  %6264 = vmatpush.bf16.msra.mxu0 %v4242
  %6265 = vmatpush.bf16.msra.mxu0 %v4233
  %6266 = vmatpush.bf16.msra.mxu0 %v4224
  %6267 = vmatpush.bf16.msra.mxu0 %v4215
  %6268 = vmatpush.bf16.msra.mxu0 %v4206
  %6269 = vmatpush.bf16.msra.mxu0 %v4197
  %6270 = vmatpush.bf16.msra.mxu0 %v4188
  %6271 = vmatmul.bf16.gmra.mxu0 %v985
  %v6272 = vpop.f32.mrf.mxu0
  %v6273 = vadd.f32 %v6259, %v6272
  %v6274 = vpop.f32.mrf.mxu0
  %v6275 = vadd.f32 %v6261, %v6274
  %6276 = vdwg.mxu0
  %6277 = vmatpush.bf16.msra.mxu0 %v3532
  %6278 = vmatpush.bf16.msra.mxu0 %v3523
  %6279 = vmatpush.bf16.msra.mxu0 %v3514
  %6280 = vmatpush.bf16.msra.mxu0 %v3505
  %6281 = vmatpush.bf16.msra.mxu0 %v3496
  %6282 = vmatpush.bf16.msra.mxu0 %v3487
  %6283 = vmatpush.bf16.msra.mxu0 %v3478
  %6284 = vmatpush.bf16.msra.mxu0 %v3469
  %6285 = vmatmul.bf16.gmra.mxu0 %v975
  %v6286 = vpop.f32.mrf.mxu0
  %v6287 = vadd.f32 %v931, %v6286
  %v6288 = vpop.f32.mrf.mxu0
  %v6289 = vadd.f32 %v931, %v6288
  %6290 = vdwg.mxu0
  %6291 = vmatpush.bf16.msra.mxu0 %v3604
  %6292 = vmatpush.bf16.msra.mxu0 %v3595
  %6293 = vmatpush.bf16.msra.mxu0 %v3586
  %6294 = vmatpush.bf16.msra.mxu0 %v3577
  %6295 = vmatpush.bf16.msra.mxu0 %v3568
  %6296 = vmatpush.bf16.msra.mxu0 %v3559
  %6297 = vmatpush.bf16.msra.mxu0 %v3550
  %6298 = vmatpush.bf16.msra.mxu0 %v3541
  %6299 = vmatmul.bf16.gmra.mxu0 %v976
  %v6300 = vpop.f32.mrf.mxu0
  %v6301 = vadd.f32 %v6287, %v6300
  %v6302 = vpop.f32.mrf.mxu0
  %v6303 = vadd.f32 %v6289, %v6302
  %6304 = vdwg.mxu0
  %6305 = vmatpush.bf16.msra.mxu0 %v3676
  %6306 = vmatpush.bf16.msra.mxu0 %v3667
  %6307 = vmatpush.bf16.msra.mxu0 %v3658
  %6308 = vmatpush.bf16.msra.mxu0 %v3649
  %6309 = vmatpush.bf16.msra.mxu0 %v3640
  %6310 = vmatpush.bf16.msra.mxu0 %v3631
  %6311 = vmatpush.bf16.msra.mxu0 %v3622
  %6312 = vmatpush.bf16.msra.mxu0 %v3613
  %6313 = vmatmul.bf16.gmra.mxu0 %v977
  %v6314 = vpop.f32.mrf.mxu0
  %v6315 = vadd.f32 %v6301, %v6314
  %v6316 = vpop.f32.mrf.mxu0
  %v6317 = vadd.f32 %v6303, %v6316
  %6318 = vdwg.mxu0
  %6319 = vmatpush.bf16.msra.mxu0 %v3748
  %6320 = vmatpush.bf16.msra.mxu0 %v3739
  %6321 = vmatpush.bf16.msra.mxu0 %v3730
  %6322 = vmatpush.bf16.msra.mxu0 %v3721
  %6323 = vmatpush.bf16.msra.mxu0 %v3712
  %6324 = vmatpush.bf16.msra.mxu0 %v3703
  %6325 = vmatpush.bf16.msra.mxu0 %v3694
  %6326 = vmatpush.bf16.msra.mxu0 %v3685
  %6327 = vmatmul.bf16.gmra.mxu0 %v978
  %v6328 = vpop.f32.mrf.mxu0
  %v6329 = vadd.f32 %v6315, %v6328
  %v6330 = vpop.f32.mrf.mxu0
  %v6331 = vadd.f32 %v6317, %v6330
  %6332 = vdwg.mxu0
  %6333 = vmatpush.bf16.msra.mxu0 %v3820
  %6334 = vmatpush.bf16.msra.mxu0 %v3811
  %6335 = vmatpush.bf16.msra.mxu0 %v3802
  %6336 = vmatpush.bf16.msra.mxu0 %v3793
  %6337 = vmatpush.bf16.msra.mxu0 %v3784
  %6338 = vmatpush.bf16.msra.mxu0 %v3775
  %6339 = vmatpush.bf16.msra.mxu0 %v3766
  %6340 = vmatpush.bf16.msra.mxu0 %v3757
  %6341 = vmatmul.bf16.gmra.mxu0 %v979
  %v6342 = vpop.f32.mrf.mxu0
  %v6343 = vadd.f32 %v6329, %v6342
  %v6344 = vpop.f32.mrf.mxu0
  %v6345 = vadd.f32 %v6331, %v6344
  %6346 = vdwg.mxu0
  %6347 = vmatpush.bf16.msra.mxu0 %v3892
  %6348 = vmatpush.bf16.msra.mxu0 %v3883
  %6349 = vmatpush.bf16.msra.mxu0 %v3874
  %6350 = vmatpush.bf16.msra.mxu0 %v3865
  %6351 = vmatpush.bf16.msra.mxu0 %v3856
  %6352 = vmatpush.bf16.msra.mxu0 %v3847
  %6353 = vmatpush.bf16.msra.mxu0 %v3838
  %6354 = vmatpush.bf16.msra.mxu0 %v3829
  %6355 = vmatmul.bf16.gmra.mxu0 %v980
  %v6356 = vpop.f32.mrf.mxu0
  %v6357 = vadd.f32 %v6343, %v6356
  %v6358 = vpop.f32.mrf.mxu0
  %v6359 = vadd.f32 %v6345, %v6358
  %6360 = vdwg.mxu0
  %6361 = vmatpush.bf16.msra.mxu0 %v3964
  %6362 = vmatpush.bf16.msra.mxu0 %v3955
  %6363 = vmatpush.bf16.msra.mxu0 %v3946
  %6364 = vmatpush.bf16.msra.mxu0 %v3937
  %6365 = vmatpush.bf16.msra.mxu0 %v3928
  %6366 = vmatpush.bf16.msra.mxu0 %v3919
  %6367 = vmatpush.bf16.msra.mxu0 %v3910
  %6368 = vmatpush.bf16.msra.mxu0 %v3901
  %6369 = vmatmul.bf16.gmra.mxu0 %v981
  %v6370 = vpop.f32.mrf.mxu0
  %v6371 = vadd.f32 %v6357, %v6370
  %v6372 = vpop.f32.mrf.mxu0
  %v6373 = vadd.f32 %v6359, %v6372
  %6374 = vdwg.mxu0
  %6375 = vmatpush.bf16.msra.mxu0 %v4036
  %6376 = vmatpush.bf16.msra.mxu0 %v4027
  %6377 = vmatpush.bf16.msra.mxu0 %v4018
  %6378 = vmatpush.bf16.msra.mxu0 %v4009
  %6379 = vmatpush.bf16.msra.mxu0 %v4000
  %6380 = vmatpush.bf16.msra.mxu0 %v3991
  %6381 = vmatpush.bf16.msra.mxu0 %v3982
  %6382 = vmatpush.bf16.msra.mxu0 %v3973
  %6383 = vmatmul.bf16.gmra.mxu0 %v982
  %v6384 = vpop.f32.mrf.mxu0
  %v6385 = vadd.f32 %v6371, %v6384
  %v6386 = vpop.f32.mrf.mxu0
  %v6387 = vadd.f32 %v6373, %v6386
  %6388 = vdwg.mxu0
  %6389 = vmatpush.bf16.msra.mxu0 %v4108
  %6390 = vmatpush.bf16.msra.mxu0 %v4099
  %6391 = vmatpush.bf16.msra.mxu0 %v4090
  %6392 = vmatpush.bf16.msra.mxu0 %v4081
  %6393 = vmatpush.bf16.msra.mxu0 %v4072
  %6394 = vmatpush.bf16.msra.mxu0 %v4063
  %6395 = vmatpush.bf16.msra.mxu0 %v4054
  %6396 = vmatpush.bf16.msra.mxu0 %v4045
  %6397 = vmatmul.bf16.gmra.mxu0 %v983
  %v6398 = vpop.f32.mrf.mxu0
  %v6399 = vadd.f32 %v6385, %v6398
  %v6400 = vpop.f32.mrf.mxu0
  %v6401 = vadd.f32 %v6387, %v6400
  %6402 = vdwg.mxu0
  %6403 = vmatpush.bf16.msra.mxu0 %v4180
  %6404 = vmatpush.bf16.msra.mxu0 %v4171
  %6405 = vmatpush.bf16.msra.mxu0 %v4162
  %6406 = vmatpush.bf16.msra.mxu0 %v4153
  %6407 = vmatpush.bf16.msra.mxu0 %v4144
  %6408 = vmatpush.bf16.msra.mxu0 %v4135
  %6409 = vmatpush.bf16.msra.mxu0 %v4126
  %6410 = vmatpush.bf16.msra.mxu0 %v4117
  %6411 = vmatmul.bf16.gmra.mxu0 %v984
  %v6412 = vpop.f32.mrf.mxu0
  %v6413 = vadd.f32 %v6399, %v6412
  %v6414 = vpop.f32.mrf.mxu0
  %v6415 = vadd.f32 %v6401, %v6414
  %6416 = vdwg.mxu0
  %6417 = vmatpush.bf16.msra.mxu0 %v4252
  %6418 = vmatpush.bf16.msra.mxu0 %v4243
  %6419 = vmatpush.bf16.msra.mxu0 %v4234
  %6420 = vmatpush.bf16.msra.mxu0 %v4225
  %6421 = vmatpush.bf16.msra.mxu0 %v4216
  %6422 = vmatpush.bf16.msra.mxu0 %v4207
  %6423 = vmatpush.bf16.msra.mxu0 %v4198
  %6424 = vmatpush.bf16.msra.mxu0 %v4189
  %6425 = vmatmul.bf16.gmra.mxu0 %v985
  %v6426 = vpop.f32.mrf.mxu0
  %v6427 = vadd.f32 %v6413, %v6426
  %v6428 = vpop.f32.mrf.mxu0
  %v6429 = vadd.f32 %v6415, %v6428
  %6430 = vdwg.mxu0
  %v6431 = vpack.c.bf16 %v5197, %v5195
  %v6432 = vpack.c.bf16 %v5351, %v5349
  %v6433 = vpack.c.bf16 %v5505, %v5503
  %v6434 = vpack.c.bf16 %v5659, %v5657
  %v6435 = vpack.c.bf16 %v5813, %v5811
  %v6436 = vpack.c.bf16 %v5967, %v5965
  %v6437 = vpack.c.bf16 %v6121, %v6119
  %v6438 = vpack.c.bf16 %v6275, %v6273
  %v6439 = vpack.c.bf16 %v6429, %v6427
  %v6440 = vld [vmem:[%s3] sm:$0xf]
  %v6441 = vld [vmem:[%s3 + $0x4] sm:$0xf]
  %v6442 = vld [vmem:[%s3 + $0x8] sm:$0xf]
  %v6443 = vld [vmem:[%s3 + $0xc] sm:$0xf]
  %v6444 = vld [vmem:[%s3 + $0x10] sm:$0xf]
  %v6445 = vld [vmem:[%s3 + $0x14] sm:$0xf]
  %v6446 = vld [vmem:[%s3 + $0x18] sm:$0xf]
  %v6447 = vld [vmem:[%s3 + $0x1c] sm:$0xf]
  %v6448 = vld [vmem:[%s3 + $0x20] sm:$0xf]
  %v6449 = vld [vmem:[%s3 + $0x24] sm:$0xf]
  %v6450 = vld [vmem:[%s3 + $0x28] sm:$0xf]
  %v6451 = vld [vmem:[%s3 + $0x2c] sm:$0xf]
  %v6452 = vld [vmem:[%s3 + $0x30] sm:$0xf]
  %v6453 = vld [vmem:[%s3 + $0x34] sm:$0xf]
  %v6454 = vld [vmem:[%s3 + $0x38] sm:$0xf]
  %v6455 = vld [vmem:[%s3 + $0x3c] sm:$0xf]
  %v6456 = vld [vmem:[%s3 + $0x40] sm:$0xf]
  %v6457 = vld [vmem:[%s3 + $0x44] sm:$0xf]
  %v6458 = vld [vmem:[%s3 + $0x48] sm:$0xf]
  %v6459 = vld [vmem:[%s3 + $0x4c] sm:$0xf]
  %v6460 = vld [vmem:[%s3 + $0x50] sm:$0xf]
  %v6461 = vld [vmem:[%s3 + $0x54] sm:$0xf]
  %v6462 = vld [vmem:[%s3 + $0x58] sm:$0xf]
  %v6463 = vld [vmem:[%s3 + $0x5c] sm:$0xf]
  %v6464 = vld [vmem:[%s3 + $0x60] sm:$0xf]
  %v6465 = vld [vmem:[%s3 + $0x64] sm:$0xf]
  %v6466 = vld [vmem:[%s3 + $0x68] sm:$0xf]
  %v6467 = vld [vmem:[%s3 + $0x6c] sm:$0xf]
  %v6468 = vld [vmem:[%s3 + $0x70] sm:$0xf]
  %v6469 = vld [vmem:[%s3 + $0x74] sm:$0xf]
  %v6470 = vld [vmem:[%s3 + $0x78] sm:$0xf]
  %v6471 = vld [vmem:[%s3 + $0x7c] sm:$0xf]
  %v6472 = vld [vmem:[%s3 + $0x80] sm:$0xf]
  %v6473 = vld [vmem:[%s3 + $0x84] sm:$0xf]
  %v6474 = vld [vmem:[%s3 + $0x88] sm:$0xf]
  %v6475 = vld [vmem:[%s3 + $0x8c] sm:$0xf]
  %v6476 = vld [vmem:[%s3 + $0x90] sm:$0xf]
  %v6477 = vld [vmem:[%s3 + $0x94] sm:$0xf]
  %v6478 = vld [vmem:[%s3 + $0x98] sm:$0xf]
  %v6479 = vld [vmem:[%s3 + $0x9c] sm:$0xf]
  %v6480 = vld [vmem:[%s3 + $0xa0] sm:$0xf]
  %v6481 = vld [vmem:[%s3 + $0xa4] sm:$0xf]
  %v6482 = vld [vmem:[%s3 + $0xa8] sm:$0xf]
  %v6483 = vld [vmem:[%s3 + $0xac] sm:$0xf]
  %v6484 = vld [vmem:[%s3 + $0xb0] sm:$0xf]
  %v6485 = vld [vmem:[%s3 + $0xb4] sm:$0xf]
  %v6486 = vld [vmem:[%s3 + $0xb8] sm:$0xf]
  %v6487 = vld [vmem:[%s3 + $0xbc] sm:$0xf]
  %v6488 = vld [vmem:[%s3 + $0xc0] sm:$0xf]
  %v6489 = vld [vmem:[%s3 + $0xc4] sm:$0xf]
  %v6490 = vld [vmem:[%s3 + $0xc8] sm:$0xf]
  %v6491 = vld [vmem:[%s3 + $0xcc] sm:$0xf]
  %v6492 = vld [vmem:[%s3 + $0xd0] sm:$0xf]
  %v6493 = vld [vmem:[%s3 + $0xd4] sm:$0xf]
  %v6494 = vld [vmem:[%s3 + $0xd8] sm:$0xf]
  %v6495 = vld [vmem:[%s3 + $0xdc] sm:$0xf]
  %v6496 = vld [vmem:[%s3 + $0xe0] sm:$0xf]
  %v6497 = vld [vmem:[%s3 + $0xe4] sm:$0xf]
  %v6498 = vld [vmem:[%s3 + $0xe8] sm:$0xf]
  %v6499 = vld [vmem:[%s3 + $0xec] sm:$0xf]
  %v6500 = vld [vmem:[%s3 + $0xf0] sm:$0xf]
  %v6501 = vld [vmem:[%s3 + $0xf4] sm:$0xf]
  %v6502 = vld [vmem:[%s3 + $0xf8] sm:$0xf]
  %v6503 = vld [vmem:[%s3 + $0xfc] sm:$0xf]
  %v6504 = vld [vmem:[%s3 + $0x100] sm:$0xf]
  %v6505 = vld [vmem:[%s3 + $0x104] sm:$0xf]
  %v6506 = vld [vmem:[%s3 + $0x108] sm:$0xf]
  %v6507 = vld [vmem:[%s3 + $0x10c] sm:$0xf]
  %v6508 = vld [vmem:[%s3 + $0x110] sm:$0xf]
  %v6509 = vld [vmem:[%s3 + $0x114] sm:$0xf]
  %v6510 = vld [vmem:[%s3 + $0x118] sm:$0xf]
  %v6511 = vld [vmem:[%s3 + $0x11c] sm:$0xf]
  %v6512 = vld [vmem:[%s3 + $0x120] sm:$0xf]
  %v6513 = vld [vmem:[%s3 + $0x124] sm:$0xf]
  %v6514 = vld [vmem:[%s3 + $0x128] sm:$0xf]
  %v6515 = vld [vmem:[%s3 + $0x12c] sm:$0xf]
  %v6516 = vld [vmem:[%s3 + $0x130] sm:$0xf]
  %v6517 = vld [vmem:[%s3 + $0x134] sm:$0xf]
  %v6518 = vld [vmem:[%s3 + $0x138] sm:$0xf]
  %v6519 = vld [vmem:[%s3 + $0x13c] sm:$0xf]
  %v6520 = vld [vmem:[%s3 + $0x140] sm:$0xf]
  %v6521 = vld [vmem:[%s3 + $0x144] sm:$0xf]
  %v6522 = vld [vmem:[%s3 + $0x148] sm:$0xf]
  %v6523 = vld [vmem:[%s3 + $0x14c] sm:$0xf]
  %v6524 = vld [vmem:[%s3 + $0x150] sm:$0xf]
  %v6525 = vld [vmem:[%s3 + $0x154] sm:$0xf]
  %v6526 = vld [vmem:[%s3 + $0x158] sm:$0xf]
  %v6527 = vld [vmem:[%s3 + $0x15c] sm:$0xf]
  %v6528 = vld [vmem:[%s3 + $0x160] sm:$0xf]
  %v6529 = vld [vmem:[%s3 + $0x164] sm:$0xf]
  %v6530 = vld [vmem:[%s3 + $0x168] sm:$0xf]
  %v6531 = vld [vmem:[%s3 + $0x16c] sm:$0xf]
  %v6532 = vld [vmem:[%s3 + $0x170] sm:$0xf]
  %v6533 = vld [vmem:[%s3 + $0x174] sm:$0xf]
  %v6534 = vld [vmem:[%s3 + $0x178] sm:$0xf]
  %v6535 = vld [vmem:[%s3 + $0x17c] sm:$0xf]
  %v6536 = vld [vmem:[%s3 + $0x180] sm:$0xf]
  %v6537 = vld [vmem:[%s3 + $0x184] sm:$0xf]
  %v6538 = vld [vmem:[%s3 + $0x188] sm:$0xf]
  %v6539 = vld [vmem:[%s3 + $0x18c] sm:$0xf]
  %v6540 = vld [vmem:[%s3 + $0x190] sm:$0xf]
  %v6541 = vld [vmem:[%s3 + $0x194] sm:$0xf]
  %v6542 = vld [vmem:[%s3 + $0x198] sm:$0xf]
  %v6543 = vld [vmem:[%s3 + $0x19c] sm:$0xf]
  %v6544 = vld [vmem:[%s3 + $0x1a0] sm:$0xf]
  %v6545 = vld [vmem:[%s3 + $0x1a4] sm:$0xf]
  %v6546 = vld [vmem:[%s3 + $0x1a8] sm:$0xf]
  %v6547 = vld [vmem:[%s3 + $0x1ac] sm:$0xf]
  %v6548 = vld [vmem:[%s3 + $0x1b0] sm:$0xf]
  %v6549 = vld [vmem:[%s3 + $0x1b4] sm:$0xf]
  %v6550 = vld [vmem:[%s3 + $0x1b8] sm:$0xf]
  %v6551 = vld [vmem:[%s3 + $0x1bc] sm:$0xf]
  %v6552 = vld [vmem:[%s3 + $0x1c0] sm:$0xf]
  %v6553 = vld [vmem:[%s3 + $0x1c4] sm:$0xf]
  %v6554 = vld [vmem:[%s3 + $0x1c8] sm:$0xf]
  %v6555 = vld [vmem:[%s3 + $0x1cc] sm:$0xf]
  %v6556 = vld [vmem:[%s3 + $0x1d0] sm:$0xf]
  %v6557 = vld [vmem:[%s3 + $0x1d4] sm:$0xf]
  %v6558 = vld [vmem:[%s3 + $0x1d8] sm:$0xf]
  %v6559 = vld [vmem:[%s3 + $0x1dc] sm:$0xf]
  %v6560 = vld [vmem:[%s3 + $0x1e0] sm:$0xf]
  %v6561 = vld [vmem:[%s3 + $0x1e4] sm:$0xf]
  %v6562 = vld [vmem:[%s3 + $0x1e8] sm:$0xf]
  %v6563 = vld [vmem:[%s3 + $0x1ec] sm:$0xf]
  %v6564 = vld [vmem:[%s3 + $0x1f0] sm:$0xf]
  %v6565 = vld [vmem:[%s3 + $0x1f4] sm:$0xf]
  %v6566 = vld [vmem:[%s3 + $0x1f8] sm:$0xf]
  %v6567 = vld [vmem:[%s3 + $0x1fc] sm:$0xf]
  %v6568 = vld [vmem:[%s3 + $0x200] sm:$0xf]
  %v6569 = vld [vmem:[%s3 + $0x204] sm:$0xf]
  %v6570 = vld [vmem:[%s3 + $0x208] sm:$0xf]
  %v6571 = vld [vmem:[%s3 + $0x20c] sm:$0xf]
  %v6572 = vld [vmem:[%s3 + $0x210] sm:$0xf]
  %v6573 = vld [vmem:[%s3 + $0x214] sm:$0xf]
  %v6574 = vld [vmem:[%s3 + $0x218] sm:$0xf]
  %v6575 = vld [vmem:[%s3 + $0x21c] sm:$0xf]
  %v6576 = vld [vmem:[%s4] sm:$0x1]
  %v6578 = vperm.slane %v6576, 0
  %v6716 = vunpack.c.l.b16 %v6440
  %v6717 = vunpack.c.l.b16 %v6441
  %v6718 = vunpack.c.l.b16 %v6442
  %v6719 = vunpack.c.l.b16 %v6443
  %v6720 = vunpack.c.l.b16 %v6444
  %v6721 = vunpack.c.l.b16 %v6445
  %v6722 = vunpack.c.l.b16 %v6446
  %v6723 = vunpack.c.l.b16 %v6447
  %v6724 = vunpack.c.l.b16 %v6448
  %v6725 = vunpack.c.l.b16 %v6449
  %v6726 = vunpack.c.l.b16 %v6450
  %v6727 = vunpack.c.l.b16 %v6451
  %v6728 = vunpack.c.l.b16 %v6452
  %v6729 = vunpack.c.l.b16 %v6453
  %v6730 = vunpack.c.l.b16 %v6454
  %v6731 = vunpack.c.l.b16 %v6455
  %v6732 = vunpack.c.l.b16 %v6456
  %v6733 = vunpack.c.l.b16 %v6457
  %v6734 = vunpack.c.l.b16 %v6458
  %v6735 = vunpack.c.l.b16 %v6459
  %v6736 = vunpack.c.l.b16 %v6460
  %v6737 = vunpack.c.l.b16 %v6461
  %v6738 = vunpack.c.l.b16 %v6462
  %v6739 = vunpack.c.l.b16 %v6463
  %v6740 = vunpack.c.l.b16 %v6464
  %v6741 = vunpack.c.l.b16 %v6465
  %v6742 = vunpack.c.l.b16 %v6466
  %v6743 = vunpack.c.l.b16 %v6467
  %v6744 = vunpack.c.l.b16 %v6468
  %v6745 = vunpack.c.l.b16 %v6469
  %v6746 = vunpack.c.l.b16 %v6470
  %v6747 = vunpack.c.l.b16 %v6471
  %v6748 = vunpack.c.l.b16 %v6472
  %v6749 = vunpack.c.l.b16 %v6473
  %v6750 = vunpack.c.l.b16 %v6474
  %v6751 = vunpack.c.l.b16 %v6475
  %v6752 = vunpack.c.l.b16 %v6476
  %v6753 = vunpack.c.l.b16 %v6477
  %v6754 = vunpack.c.l.b16 %v6478
  %v6755 = vunpack.c.l.b16 %v6479
  %v6756 = vunpack.c.l.b16 %v6480
  %v6757 = vunpack.c.l.b16 %v6481
  %v6758 = vunpack.c.l.b16 %v6482
  %v6759 = vunpack.c.l.b16 %v6483
  %v6760 = vunpack.c.l.b16 %v6484
  %v6761 = vunpack.c.l.b16 %v6485
  %v6762 = vunpack.c.l.b16 %v6486
  %v6763 = vunpack.c.l.b16 %v6487
  %v6764 = vunpack.c.l.b16 %v6488
  %v6765 = vunpack.c.l.b16 %v6489
  %v6766 = vunpack.c.l.b16 %v6490
  %v6767 = vunpack.c.l.b16 %v6491
  %v6768 = vunpack.c.l.b16 %v6492
  %v6769 = vunpack.c.l.b16 %v6493
  %v6770 = vunpack.c.l.b16 %v6494
  %v6771 = vunpack.c.l.b16 %v6495
  %v6772 = vunpack.c.l.b16 %v6496
  %v6773 = vunpack.c.l.b16 %v6497
  %v6774 = vunpack.c.l.b16 %v6498
  %v6775 = vunpack.c.l.b16 %v6499
  %v6776 = vunpack.c.l.b16 %v6500
  %v6777 = vunpack.c.l.b16 %v6501
  %v6778 = vunpack.c.l.b16 %v6502
  %v6779 = vunpack.c.l.b16 %v6503
  %v6780 = vunpack.c.l.b16 %v6504
  %v6781 = vunpack.c.l.b16 %v6505
  %v6782 = vunpack.c.l.b16 %v6506
  %v6783 = vunpack.c.l.b16 %v6507
  %v6784 = vunpack.c.l.b16 %v6508
  %v6785 = vunpack.c.l.b16 %v6509
  %v6786 = vunpack.c.l.b16 %v6510
  %v6787 = vunpack.c.l.b16 %v6511
  %v6788 = vunpack.c.l.b16 %v6512
  %v6789 = vunpack.c.l.b16 %v6513
  %v6790 = vunpack.c.l.b16 %v6514
  %v6791 = vunpack.c.l.b16 %v6515
  %v6792 = vunpack.c.l.b16 %v6516
  %v6793 = vunpack.c.l.b16 %v6517
  %v6794 = vunpack.c.l.b16 %v6518
  %v6795 = vunpack.c.l.b16 %v6519
  %v6796 = vunpack.c.l.b16 %v6520
  %v6797 = vunpack.c.l.b16 %v6521
  %v6798 = vunpack.c.l.b16 %v6522
  %v6799 = vunpack.c.l.b16 %v6523
  %v6800 = vunpack.c.l.b16 %v6524
  %v6801 = vunpack.c.l.b16 %v6525
  %v6802 = vunpack.c.l.b16 %v6526
  %v6803 = vunpack.c.l.b16 %v6527
  %v6804 = vunpack.c.l.b16 %v6528
  %v6805 = vunpack.c.l.b16 %v6529
  %v6806 = vunpack.c.l.b16 %v6530
  %v6807 = vunpack.c.l.b16 %v6531
  %v6808 = vunpack.c.l.b16 %v6532
  %v6809 = vunpack.c.l.b16 %v6533
  %v6810 = vunpack.c.l.b16 %v6534
  %v6811 = vunpack.c.l.b16 %v6535
  %v6812 = vunpack.c.l.b16 %v6536
  %v6813 = vunpack.c.l.b16 %v6537
  %v6814 = vunpack.c.l.b16 %v6538
  %v6815 = vunpack.c.l.b16 %v6539
  %v6816 = vunpack.c.l.b16 %v6540
  %v6817 = vunpack.c.l.b16 %v6541
  %v6818 = vunpack.c.l.b16 %v6542
  %v6819 = vunpack.c.l.b16 %v6543
  %v6820 = vunpack.c.l.b16 %v6544
  %v6821 = vunpack.c.l.b16 %v6545
  %v6822 = vunpack.c.l.b16 %v6546
  %v6823 = vunpack.c.l.b16 %v6547
  %v6824 = vunpack.c.l.b16 %v6548
  %v6825 = vunpack.c.l.b16 %v6549
  %v6826 = vunpack.c.l.b16 %v6550
  %v6827 = vunpack.c.l.b16 %v6551
  %v6828 = vunpack.c.l.b16 %v6552
  %v6829 = vunpack.c.l.b16 %v6553
  %v6830 = vunpack.c.l.b16 %v6554
  %v6831 = vunpack.c.l.b16 %v6555
  %v6832 = vunpack.c.l.b16 %v6556
  %v6833 = vunpack.c.l.b16 %v6557
  %v6834 = vunpack.c.l.b16 %v6558
  %v6835 = vunpack.c.l.b16 %v6559
  %v6836 = vunpack.c.l.b16 %v6560
  %v6837 = vunpack.c.l.b16 %v6561
  %v6838 = vunpack.c.l.b16 %v6562
  %v6839 = vunpack.c.l.b16 %v6563
  %v6840 = vunpack.c.l.b16 %v6564
  %v6841 = vunpack.c.l.b16 %v6565
  %v6842 = vunpack.c.l.b16 %v6566
  %v6843 = vunpack.c.l.b16 %v6567
  %v6844 = vunpack.c.l.b16 %v6568
  %v6845 = vunpack.c.l.b16 %v6569
  %v6846 = vunpack.c.l.b16 %v6570
  %v6847 = vunpack.c.l.b16 %v6571
  %v6848 = vunpack.c.l.b16 %v6572
  %v6849 = vunpack.c.l.b16 %v6573
  %v6850 = vunpack.c.l.b16 %v6574
  %v6851 = vunpack.c.l.b16 %v6575
  %v6852 = vpack.c.b16 %v6717, %v6716
  %v6853 = vpack.c.b16 %v6719, %v6718
  %v6854 = vpack.c.b16 %v6721, %v6720
  %v6855 = vpack.c.b16 %v6723, %v6722
  %v6856 = vpack.c.b16 %v6725, %v6724
  %v6857 = vpack.c.b16 %v6727, %v6726
  %v6858 = vpack.c.b16 %v6729, %v6728
  %v6859 = vpack.c.b16 %v6731, %v6730
  %v6860 = vpack.c.b16 %v6733, %v6732
  %v6861 = vpack.c.b16 %v6735, %v6734
  %v6862 = vpack.c.b16 %v6737, %v6736
  %v6863 = vpack.c.b16 %v6739, %v6738
  %v6864 = vpack.c.b16 %v6741, %v6740
  %v6865 = vpack.c.b16 %v6743, %v6742
  %v6866 = vpack.c.b16 %v6745, %v6744
  %v6867 = vpack.c.b16 %v6747, %v6746
  %v6868 = vpack.c.b16 %v6749, %v6748
  %v6869 = vpack.c.b16 %v6751, %v6750
  %v6870 = vpack.c.b16 %v6753, %v6752
  %v6871 = vpack.c.b16 %v6755, %v6754
  %v6872 = vpack.c.b16 %v6757, %v6756
  %v6873 = vpack.c.b16 %v6759, %v6758
  %v6874 = vpack.c.b16 %v6761, %v6760
  %v6875 = vpack.c.b16 %v6763, %v6762
  %v6876 = vpack.c.b16 %v6765, %v6764
  %v6877 = vpack.c.b16 %v6767, %v6766
  %v6878 = vpack.c.b16 %v6769, %v6768
  %v6879 = vpack.c.b16 %v6771, %v6770
  %v6880 = vpack.c.b16 %v6773, %v6772
  %v6881 = vpack.c.b16 %v6775, %v6774
  %v6882 = vpack.c.b16 %v6777, %v6776
  %v6883 = vpack.c.b16 %v6779, %v6778
  %v6884 = vpack.c.b16 %v6781, %v6780
  %v6885 = vpack.c.b16 %v6783, %v6782
  %v6886 = vpack.c.b16 %v6785, %v6784
  %v6887 = vpack.c.b16 %v6787, %v6786
  %v6888 = vpack.c.b16 %v6789, %v6788
  %v6889 = vpack.c.b16 %v6791, %v6790
  %v6890 = vpack.c.b16 %v6793, %v6792
  %v6891 = vpack.c.b16 %v6795, %v6794
  %v6892 = vpack.c.b16 %v6797, %v6796
  %v6893 = vpack.c.b16 %v6799, %v6798
  %v6894 = vpack.c.b16 %v6801, %v6800
  %v6895 = vpack.c.b16 %v6803, %v6802
  %v6896 = vpack.c.b16 %v6805, %v6804
  %v6897 = vpack.c.b16 %v6807, %v6806
  %v6898 = vpack.c.b16 %v6809, %v6808
  %v6899 = vpack.c.b16 %v6811, %v6810
  %v6900 = vpack.c.b16 %v6813, %v6812
  %v6901 = vpack.c.b16 %v6815, %v6814
  %v6902 = vpack.c.b16 %v6817, %v6816
  %v6903 = vpack.c.b16 %v6819, %v6818
  %v6904 = vpack.c.b16 %v6821, %v6820
  %v6905 = vpack.c.b16 %v6823, %v6822
  %v6906 = vpack.c.b16 %v6825, %v6824
  %v6907 = vpack.c.b16 %v6827, %v6826
  %v6908 = vpack.c.b16 %v6829, %v6828
  %v6909 = vpack.c.b16 %v6831, %v6830
  %v6910 = vpack.c.b16 %v6833, %v6832
  %v6911 = vpack.c.b16 %v6835, %v6834
  %v6912 = vpack.c.b16 %v6837, %v6836
  %v6913 = vpack.c.b16 %v6839, %v6838
  %v6914 = vpack.c.b16 %v6841, %v6840
  %v6915 = vpack.c.b16 %v6843, %v6842
  %v6916 = vpack.c.b16 %v6845, %v6844
  %v6917 = vpack.c.b16 %v6847, %v6846
  %v6918 = vpack.c.b16 %v6849, %v6848
  %v6919 = vpack.c.b16 %v6851, %v6850
  %vm6988 = vcmask 523264
  %v6990 = vsel %vm6988, %v6439, 0
  %6992 = vmatpush.bf16.msra.mxu0 %v6859
  %6993 = vmatpush.bf16.msra.mxu0 %v6858
  %6994 = vmatpush.bf16.msra.mxu0 %v6857
  %6995 = vmatpush.bf16.msra.mxu0 %v6856
  %6996 = vmatpush.bf16.msra.mxu0 %v6855
  %6997 = vmatpush.bf16.msra.mxu0 %v6854
  %6998 = vmatpush.bf16.msra.mxu0 %v6853
  %6999 = vmatpush.bf16.msra.mxu0 %v6852
  %7000 = vmatmul.bf16.gmra.mxu0 %v6431
  %v7001 = vpop.f32.mrf.mxu0
  %v7002 = vadd.f32 %v6578, %v7001
  %v7003 = vpop.f32.mrf.mxu0
  %v7004 = vadd.f32 %v6578, %v7003
  %7005 = vdwg.mxu0
  %7006 = vmatpush.bf16.msra.mxu0 %v6867
  %7007 = vmatpush.bf16.msra.mxu0 %v6866
  %7008 = vmatpush.bf16.msra.mxu0 %v6865
  %7009 = vmatpush.bf16.msra.mxu0 %v6864
  %7010 = vmatpush.bf16.msra.mxu0 %v6863
  %7011 = vmatpush.bf16.msra.mxu0 %v6862
  %7012 = vmatpush.bf16.msra.mxu0 %v6861
  %7013 = vmatpush.bf16.msra.mxu0 %v6860
  %7014 = vmatmul.bf16.gmra.mxu0 %v6432
  %v7015 = vpop.f32.mrf.mxu0
  %v7016 = vadd.f32 %v7002, %v7015
  %v7017 = vpop.f32.mrf.mxu0
  %v7018 = vadd.f32 %v7004, %v7017
  %7019 = vdwg.mxu0
  %7020 = vmatpush.bf16.msra.mxu0 %v6875
  %7021 = vmatpush.bf16.msra.mxu0 %v6874
  %7022 = vmatpush.bf16.msra.mxu0 %v6873
  %7023 = vmatpush.bf16.msra.mxu0 %v6872
  %7024 = vmatpush.bf16.msra.mxu0 %v6871
  %7025 = vmatpush.bf16.msra.mxu0 %v6870
  %7026 = vmatpush.bf16.msra.mxu0 %v6869
  %7027 = vmatpush.bf16.msra.mxu0 %v6868
  %7028 = vmatmul.bf16.gmra.mxu0 %v6433
  %v7029 = vpop.f32.mrf.mxu0
  %v7030 = vadd.f32 %v7016, %v7029
  %v7031 = vpop.f32.mrf.mxu0
  %v7032 = vadd.f32 %v7018, %v7031
  %7033 = vdwg.mxu0
  %7034 = vmatpush.bf16.msra.mxu0 %v6883
  %7035 = vmatpush.bf16.msra.mxu0 %v6882
  %7036 = vmatpush.bf16.msra.mxu0 %v6881
  %7037 = vmatpush.bf16.msra.mxu0 %v6880
  %7038 = vmatpush.bf16.msra.mxu0 %v6879
  %7039 = vmatpush.bf16.msra.mxu0 %v6878
  %7040 = vmatpush.bf16.msra.mxu0 %v6877
  %7041 = vmatpush.bf16.msra.mxu0 %v6876
  %7042 = vmatmul.bf16.gmra.mxu0 %v6434
  %v7043 = vpop.f32.mrf.mxu0
  %v7044 = vadd.f32 %v7030, %v7043
  %v7045 = vpop.f32.mrf.mxu0
  %v7046 = vadd.f32 %v7032, %v7045
  %7047 = vdwg.mxu0
  %7048 = vmatpush.bf16.msra.mxu0 %v6891
  %7049 = vmatpush.bf16.msra.mxu0 %v6890
  %7050 = vmatpush.bf16.msra.mxu0 %v6889
  %7051 = vmatpush.bf16.msra.mxu0 %v6888
  %7052 = vmatpush.bf16.msra.mxu0 %v6887
  %7053 = vmatpush.bf16.msra.mxu0 %v6886
  %7054 = vmatpush.bf16.msra.mxu0 %v6885
  %7055 = vmatpush.bf16.msra.mxu0 %v6884
  %7056 = vmatmul.bf16.gmra.mxu0 %v6435
  %v7057 = vpop.f32.mrf.mxu0
  %v7058 = vadd.f32 %v7044, %v7057
  %v7059 = vpop.f32.mrf.mxu0
  %v7060 = vadd.f32 %v7046, %v7059
  %7061 = vdwg.mxu0
  %7062 = vmatpush.bf16.msra.mxu0 %v6899
  %7063 = vmatpush.bf16.msra.mxu0 %v6898
  %7064 = vmatpush.bf16.msra.mxu0 %v6897
  %7065 = vmatpush.bf16.msra.mxu0 %v6896
  %7066 = vmatpush.bf16.msra.mxu0 %v6895
  %7067 = vmatpush.bf16.msra.mxu0 %v6894
  %7068 = vmatpush.bf16.msra.mxu0 %v6893
  %7069 = vmatpush.bf16.msra.mxu0 %v6892
  %7070 = vmatmul.bf16.gmra.mxu0 %v6436
  %v7071 = vpop.f32.mrf.mxu0
  %v7072 = vadd.f32 %v7058, %v7071
  %v7073 = vpop.f32.mrf.mxu0
  %v7074 = vadd.f32 %v7060, %v7073
  %7075 = vdwg.mxu0
  %7076 = vmatpush.bf16.msra.mxu0 %v6907
  %7077 = vmatpush.bf16.msra.mxu0 %v6906
  %7078 = vmatpush.bf16.msra.mxu0 %v6905
  %7079 = vmatpush.bf16.msra.mxu0 %v6904
  %7080 = vmatpush.bf16.msra.mxu0 %v6903
  %7081 = vmatpush.bf16.msra.mxu0 %v6902
  %7082 = vmatpush.bf16.msra.mxu0 %v6901
  %7083 = vmatpush.bf16.msra.mxu0 %v6900
  %7084 = vmatmul.bf16.gmra.mxu0 %v6437
  %v7085 = vpop.f32.mrf.mxu0
  %v7086 = vadd.f32 %v7072, %v7085
  %v7087 = vpop.f32.mrf.mxu0
  %v7088 = vadd.f32 %v7074, %v7087
  %7089 = vdwg.mxu0
  %7090 = vmatpush.bf16.msra.mxu0 %v6915
  %7091 = vmatpush.bf16.msra.mxu0 %v6914
  %7092 = vmatpush.bf16.msra.mxu0 %v6913
  %7093 = vmatpush.bf16.msra.mxu0 %v6912
  %7094 = vmatpush.bf16.msra.mxu0 %v6911
  %7095 = vmatpush.bf16.msra.mxu0 %v6910
  %7096 = vmatpush.bf16.msra.mxu0 %v6909
  %7097 = vmatpush.bf16.msra.mxu0 %v6908
  %7098 = vmatmul.bf16.gmra.mxu0 %v6438
  %v7099 = vpop.f32.mrf.mxu0
  %v7100 = vadd.f32 %v7086, %v7099
  %v7101 = vpop.f32.mrf.mxu0
  %v7102 = vadd.f32 %v7088, %v7101
  %7103 = vdwg.mxu0
  %7104 = vmatpush.bf16.msra.mxu0 0
  %7105 = vmatpush.bf16.msra.mxu0 0
  %7106 = vmatpush.bf16.msra.mxu0 0
  %7107 = vmatpush.bf16.msra.mxu0 0
  %7108 = vmatpush.bf16.msra.mxu0 %v6919
  %7109 = vmatpush.bf16.msra.mxu0 %v6918
  %7110 = vmatpush.bf16.msra.mxu0 %v6917
  %7111 = vmatpush.bf16.msra.mxu0 %v6916
  %7112 = vmatmul.bf16.gmra.mxu0 %v6990
  %v7113 = vpop.f32.mrf.mxu0
  %v7114 = vadd.f32 %v7100, %v7113
  %v7115 = vpop.f32.mrf.mxu0
  %v7116 = vadd.f32 %v7102, %v7115
  %7117 = vdwg.mxu0
  %v7118 = vld [vmem:[%s5] sm:$0x1]
  %v7119 = vld [vmem:[%s6] sm:$0x1]
  %vm7120 = vcmask 261120
  %v7121 = vsel %vm7120, %v7114, 0.0
  %7122 = vadd.xlane.f32.xlu0 %v7121
  %v7123 = vpop.xlane.xlu0 %7122
  %v7124 = vsel %vm7120, %v7116, 0.0
  %7125 = vadd.xlane.f32.xlu0 %v7124
  %v7126 = vpop.xlane.xlu0 %7125
  %v7127 = vrcp.pop 32.0
  %v7128 = vmul.f32 32.0, %v7127
  %v7129 = vsub.f32 1.0, %v7128
  %v7130 = vmul.f32 %v7127, %v7129
  %v7131 = vadd.f32 %v7127, %v7130
  %vm7132 = vweird.f32 %v7127
  %v7133 = vsel %vm7132, %v7127, %v7131
  %v7134 = vmul.f32 %v7123, %v7133
  %v7135 = vmul.f32 %v7126, %v7133
  %v7136 = vsub.f32 %v7114, %v7134
  %v7137 = vsub.f32 %v7116, %v7135
  %v7138 = vmul.f32 %v7136, %v7136
  %v7139 = vmul.f32 %v7137, %v7137
  %v7140 = vsel %vm7120, %v7138, 0.0
  %7141 = vadd.xlane.f32.xlu0 %v7140
  %v7142 = vpop.xlane.xlu0 %7141
  %v7143 = vsel %vm7120, %v7139, 0.0
  %7144 = vadd.xlane.f32.xlu0 %v7143
  %v7145 = vpop.xlane.xlu0 %7144
  %v7146 = vmul.f32 %v7142, %v7133
  %v7147 = vmul.f32 %v7145, %v7133
  %v7148 = vadd.f32 %v7146, 1e-05
  %v7149 = vadd.f32 %v7147, 1e-05
  %v7150 = vrsqrt.pop %v7148
  %v7151 = vmul.f32 %v7150, %v7148
  %v7152 = vmul.f32 %v7151, %v7150
  %v7153 = vmul.f32 0.5, %v7152
  %v7154 = vsub.f32 1.5, %v7153
  %v7155 = vmul.f32 %v7150, %v7154
  %vm7156 = vweird.f32 %v7148
  %vm7157 = vweird.f32 %v7150
  %vm7158 = vmor %vm7156, %vm7157
  %v7159 = vsel %vm7158, %v7150, %v7155
  %v7160 = vrsqrt.pop %v7149
  %v7161 = vmul.f32 %v7160, %v7149
  %v7162 = vmul.f32 %v7161, %v7160
  %v7163 = vmul.f32 0.5, %v7162
  %v7164 = vsub.f32 1.5, %v7163
  %v7165 = vmul.f32 %v7160, %v7164
  %vm7166 = vweird.f32 %v7149
  %vm7167 = vweird.f32 %v7160
  %vm7168 = vmor %vm7166, %vm7167
  %v7169 = vsel %vm7168, %v7160, %v7165
  %v7170 = vmul.f32 %v7136, %v7159
  %v7171 = vmul.f32 %v7137, %v7169
  %v7173 = vperm.slane %v7118, 0
  %v7175 = vmul.f32 %v7170, %v7173
  %v7176 = vmul.f32 %v7171, %v7173
  %v7178 = vperm.slane %v7119, 0
  %v7180 = vadd.f32 %v7175, %v7178
  %v7181 = vadd.f32 %v7176, %v7178
  %7182 = vst.msk [vmem:[%s7] sm:$0xff] %vm7120, %v7180
  %7183 = vst.msk [vmem:[%s7 + $0x8] sm:$0xff] %vm7120, %v7181
  // Predicated region
  $region30: #{modified_decoder_forward.2} parent=0 // pred_check
    _
  $region31: #{modified_decoder_forward.2} parent=0 // pred_check_branch
    %7185 = sbr.rel (0) target = $region33
  $region32: #{modified_decoder_forward.2} parent=0 // pred_region
    _
  $region33: #{modified_decoder_forward.2} parent=0 // pred_fallthru
    _
  // Predicated region
  $region34: #{modified_decoder_forward.2} parent=0 // pred_check
    _
  $region35: #{modified_decoder_forward.2} parent=0 // pred_check_branch
    %7187 = sbr.rel (0) target = $region37
  $region36: #{modified_decoder_forward.2} parent=0 // pred_region
    _
  $region37: #{modified_decoder_forward.2} parent=0 // pred_fallthru
    _

</llo_original>
